<compile_context>
chip_gen: v6e
topology: v6e:2x2x1
jax: 0.10.0
libtpu: 0.0.40
codegen_flags: <defaults>
</compile_context>

<pallas_src>
import functools

import jax
import jax.numpy as jnp
from jax.experimental import pallas as pl
from jax.experimental.pallas import tpu as pltpu

NEG_SLOPE = 0.01                  # nn.LeakyReLU() default
LANE = 128                        # TPU lane width; feature dims padded to this

# MXU / storage compute dtype: bf16 on real TPUs, f32 elsewhere (CPU interpret
# executors do not support BF16 x BF16 = F32 dots).
ON_TPU = jax.default_backend() == "tpu"
CDT = jnp.bfloat16 if ON_TPU else jnp.float32


def _hw_config():
    """Per-generation VMEM budget and row-tile cap."""
    try:
        if not ON_TPU:
            raise RuntimeError("not on TPU")
        info = pltpu.get_tpu_info()
        vmem = int(getattr(info, "vmem_capacity_bytes", 64 * 1024 * 1024))
    except Exception:
        return 48 * 1024 * 1024, 512
    if vmem >= 100 * 1024 * 1024:          # v5e / v6e: 128 MiB physical VMEM
        return 96 * 1024 * 1024, 1024
    return 40 * 1024 * 1024, 512           # v7x: 64 MiB physical VMEM


VMEM_LIMIT, TILE_ROWS_MAX = _hw_config()


# ----------------------------------------------------------------------------
# Small shape helpers
# ----------------------------------------------------------------------------
def _r128(n):
    return ((n + LANE - 1) // LANE) * LANE


def _row_tiles(m):
    """Round rows up to a multiple of 8, pick a tile, pad rows to the tile."""
    m8 = max(8, ((m + 7) // 8) * 8)
    tile = min(m8, TILE_ROWS_MAX)
    m_pad = ((m8 + tile - 1) // tile) * tile
    return m_pad, tile


def _pad2(x, rows, cols):
    out = jnp.zeros((rows, cols), x.dtype)
    return out.at[: x.shape[0], : x.shape[1]].set(x)


def _pad_idx(idx, n, fill):
    out = jnp.full((n,), fill, jnp.int32)
    return out.at[: idx.shape[0]].set(idx.astype(jnp.int32))


def _membership(idx, n_rows):
    """[n_rows, len(idx)] membership matrix in the compute dtype; -1 -> zero col."""
    return (idx[None, :] == jnp.arange(n_rows, dtype=jnp.int32)[:, None]).astype(CDT)


def _leaky(x):
    return jnp.where(x > 0, x, NEG_SLOPE * x)


def _cp(sem):
    return pltpu.CompilerParams(dimension_semantics=sem,
                                vmem_limit_bytes=VMEM_LIMIT)


# ----------------------------------------------------------------------------
# Pallas kernels
# ----------------------------------------------------------------------------
def _dense_kernel(x_ref, w_ref, b_ref, o_ref, *, act):
    """y = [leaky](x @ W + b); MXU dtype operands, f32 accumulate."""
    y = jnp.dot(x_ref[...].astype(CDT), w_ref[...].astype(CDT),
                preferred_element_type=jnp.float32) + b_ref[...]
    if act:
        y = _leaky(y)
    o_ref[...] = y.astype(o_ref.dtype)


def _agg_kernel(a_ref, x_ref, scale_ref, o_ref, acc_ref):
    """K-tiled incidence matmul with fused 1/scale epilogue (segment mean)."""
    k = pl.program_id(1)

    @pl.when(k == 0)
    def _():
        acc_ref[...] = jnp.zeros_like(acc_ref)

    acc_ref[...] += jnp.dot(a_ref[...].astype(CDT), x_ref[...].astype(CDT),
                            preferred_element_type=jnp.float32)

    @pl.when(k == pl.num_programs(1) - 1)
    def _():
        o_ref[...] = (acc_ref[...] / scale_ref[...]).astype(o_ref.dtype)


def _mlp2_kernel(*refs, n_add, n_in, act2, has_res, want_new):
    """Fused 2-layer MLP.

    h1 = leaky(concat(xs) @ W1 + sum(adds) + b1)     (h1 stays in vregs)
    y  = [leaky](h1 @ W2 + b2)
    outputs: [y] if want_new, [y + res] if has_res.
    """
    pos = 0
    adds = refs[pos:pos + n_add]; pos += n_add
    xs = refs[pos:pos + n_in]; pos += n_in
    w1_ref, b1_ref, w2_ref, b2_ref = refs[pos:pos + 4]; pos += 4
    res_ref = None
    if has_res:
        res_ref = refs[pos]; pos += 1
    out_refs = refs[pos:]

    if n_in == 1:
        xcat = xs[0][...].astype(CDT)
    else:
        xcat = jnp.concatenate([x[...].astype(CDT) for x in xs], axis=-1)
    h1 = jnp.dot(xcat, w1_ref[...].astype(CDT),
                 preferred_element_type=jnp.float32) + b1_ref[...]
    for a_ref in adds:
        h1 = h1 + a_ref[...].astype(jnp.float32)
    h1 = _leaky(h1)

    y = jnp.dot(h1.astype(CDT), w2_ref[...].astype(CDT),
                preferred_element_type=jnp.float32) + b2_ref[...]
    if act2:
        y = _leaky(y)

    oi = 0
    if want_new:
        out_refs[oi][...] = y.astype(out_refs[oi].dtype)
        oi += 1
    if has_res:
        out_refs[oi][...] = (y + res_ref[...].astype(jnp.float32)).astype(
            out_refs[oi].dtype)


def _lstm_kernel(q_ref, r_ref, hx_ref, cx_ref, wq_ref, wr_ref, wh_ref, b_ref,
                 h_out_ref, c_out_ref, *, d):
    """Single-step LSTM cell, gate order (i, f, g, o); gate slices 128-aligned."""
    gates = (jnp.dot(q_ref[...].astype(CDT), wq_ref[...].astype(CDT),
                     preferred_element_type=jnp.float32)
             + jnp.dot(r_ref[...].astype(CDT), wr_ref[...].astype(CDT),
                       preferred_element_type=jnp.float32)
             + jnp.dot(hx_ref[...].astype(CDT), wh_ref[...].astype(CDT),
                       preferred_element_type=jnp.float32)
             + b_ref[...])
    i = jax.nn.sigmoid(gates[:, 0:d])
    f = jax.nn.sigmoid(gates[:, d:2 * d])
    g = jnp.tanh(gates[:, 2 * d:3 * d])
    o = jax.nn.sigmoid(gates[:, 3 * d:4 * d])
    c_new = f * cx_ref[...] + i * g
    c_out_ref[...] = c_new
    h_out_ref[...] = o * jnp.tanh(c_new)


def _s2s_attn_kernel(a_ref, h_ref, q_ref, o_ref, m_sc, l_sc, acc_sc):
    """Set2Set attention, flash-style over the member axis (online softmax)."""
    mi = pl.program_id(0)

    @pl.when(mi == 0)
    def _():
        m_sc[...] = jnp.full_like(m_sc, -1e30)
        l_sc[...] = jnp.zeros_like(l_sc)
        acc_sc[...] = jnp.zeros_like(acc_sc)

    A = a_ref[...].astype(jnp.float32)                         # [G, tm]
    h_c = h_ref[...].astype(CDT)                               # [tm, d]
    # scores = q @ h^T without materializing the transpose
    s = jax.lax.dot_general(q_ref[...].astype(CDT), h_c,
                            dimension_numbers=(((1,), (1,)), ((), ())),
                            preferred_element_type=jnp.float32)  # [G, tm]
    s = jnp.where(A > 0, s, -1e30)
    m_new = jnp.maximum(m_sc[...], jnp.max(s, axis=1, keepdims=True))
    alpha_old = jnp.exp(m_sc[...] - m_new)
    p = jnp.where(A > 0, jnp.exp(s - m_new), 0.0)
    l_sc[...] = alpha_old * l_sc[...] + jnp.sum(p, axis=1, keepdims=True)
    acc_sc[...] = alpha_old * acc_sc[...] + jnp.dot(
        p.astype(CDT), h_c, preferred_element_type=jnp.float32)
    m_sc[...] = m_new

    @pl.when(mi == pl.num_programs(0) - 1)
    def _():
        o_ref[...] = (acc_sc[...] /
                      jnp.maximum(l_sc[...], 1.0)).astype(o_ref.dtype)


# ----------------------------------------------------------------------------
# pallas_call wrappers (row-tiled grids, parallel semantics)
# ----------------------------------------------------------------------------
def pallas_dense(x, w, b, *, act=False, tile, out_dtype=None):
    M, K = x.shape
    out_n = w.shape[1]
    out_dtype = CDT if out_dtype is None else out_dtype
    return pl.pallas_call(
        functools.partial(_dense_kernel, act=act),
        out_shape=jax.ShapeDtypeStruct((M, out_n), out_dtype),
        grid=(M // tile,),
        in_specs=[pl.BlockSpec((tile, K), lambda i: (i, 0)),
                  pl.BlockSpec(w.shape, lambda i: (0, 0)),
                  pl.BlockSpec((1, out_n), lambda i: (0, 0))],
        out_specs=pl.BlockSpec((tile, out_n), lambda i: (i, 0)),
        compiler_params=_cp(("parallel",)),
    )(x, w, b)


def pallas_agg(A, X, scale, *, row_tile, k_tile, out_dtype=None):
    """out = (A @ X) / scale, tiled over rows (parallel) and K (arbitrary)."""
    R, K = A.shape
    d = X.shape[1]
    out_dtype = CDT if out_dtype is None else out_dtype
    return pl.pallas_call(
        _agg_kernel,
        out_shape=jax.ShapeDtypeStruct((R, d), out_dtype),
        grid=(R // row_tile, K // k_tile),
        in_specs=[pl.BlockSpec((row_tile, k_tile), lambda i, k: (i, k)),
                  pl.BlockSpec((k_tile, d), lambda i, k: (k, 0)),
                  pl.BlockSpec((row_tile, 1), lambda i, k: (i, 0))],
        out_specs=pl.BlockSpec((row_tile, d), lambda i, k: (i, 0)),
        scratch_shapes=[pltpu.VMEM((row_tile, d), jnp.float32)],
        compiler_params=_cp(("parallel", "arbitrary")),
    )(A, X, scale)


def pallas_mlp2(xs, w1, b1, w2, b2, *, adds=(), act2=True, res=None,
                want_new=True, tile, out_dtype=None):
    n_in, n_add = len(xs), len(adds)
    M = xs[0].shape[0]
    out_n = w2.shape[1]
    out_dtype = CDT if out_dtype is None else out_dtype
    has_res = res is not None
    assert want_new or has_res

    in_specs = [pl.BlockSpec((tile, a.shape[1]), lambda i: (i, 0)) for a in adds]
    in_specs += [pl.BlockSpec((tile, x.shape[1]), lambda i: (i, 0)) for x in xs]
    in_specs += [pl.BlockSpec(w1.shape, lambda i: (0, 0)),
                 pl.BlockSpec((1, w1.shape[1]), lambda i: (0, 0)),
                 pl.BlockSpec(w2.shape, lambda i: (0, 0)),
                 pl.BlockSpec((1, out_n), lambda i: (0, 0))]
    args = list(adds) + list(xs) + [w1, b1, w2, b2]
    if has_res:
        in_specs.append(pl.BlockSpec((tile, out_n), lambda i: (i, 0)))
        args.append(res)

    out_shapes, out_specs = [], []
    if want_new:
        out_shapes.append(jax.ShapeDtypeStruct((M, out_n), out_dtype))
        out_specs.append(pl.BlockSpec((tile, out_n), lambda i: (i, 0)))
    if has_res:
        out_shapes.append(jax.ShapeDtypeStruct((M, out_n), out_dtype))
        out_specs.append(pl.BlockSpec((tile, out_n), lambda i: (i, 0)))
    single = len(out_shapes) == 1

    return pl.pallas_call(
        functools.partial(_mlp2_kernel, n_add=n_add, n_in=n_in, act2=act2,
                          has_res=has_res, want_new=want_new),
        out_shape=out_shapes[0] if single else tuple(out_shapes),
        grid=(M // tile,),
        in_specs=in_specs,
        out_specs=out_specs[0] if single else tuple(out_specs),
        compiler_params=_cp(("parallel",)),
    )(*args)


def pallas_lstm_cell(q, r, hx, cx, wq, wr, wh, b):
    G, d = hx.shape
    return pl.pallas_call(
        functools.partial(_lstm_kernel, d=d),
        out_shape=(jax.ShapeDtypeStruct((G, d), jnp.float32),
                   jax.ShapeDtypeStruct((G, d), jnp.float32)),
    )(q, r, hx, cx, wq, wr, wh, b)


def pallas_s2s_attention(A, h, q, tile_m):
    G, M = A.shape
    d = h.shape[1]
    return pl.pallas_call(
        _s2s_attn_kernel,
        out_shape=jax.ShapeDtypeStruct((G, d), CDT),
        grid=(M // tile_m,),
        in_specs=[pl.BlockSpec((G, tile_m), lambda i: (0, i)),
                  pl.BlockSpec((tile_m, d), lambda i: (i, 0)),
                  pl.BlockSpec((G, d), lambda i: (0, 0))],
        out_specs=pl.BlockSpec((G, d), lambda i: (0, 0)),
        scratch_shapes=[pltpu.VMEM((G, 1), jnp.float32),
                        pltpu.VMEM((G, 1), jnp.float32),
                        pltpu.VMEM((G, d), jnp.float32)],
        compiler_params=_cp(("arbitrary",)),
    )(A, h, q)


# ----------------------------------------------------------------------------
# Parameter initialization (deterministic, synthetic, padded to 128 lanes)
# ----------------------------------------------------------------------------
def init_params(key, node_dim, edge_dim, graph_dim, solv_dim, hidden,
                conv_layers, target_dim):
    dp = _r128(hidden)
    ki = iter(jax.random.split(key, 512))

    def wmat(din, dout=hidden):
        w = 0.1 * jax.random.normal(next(ki), (din, dout), jnp.float32)
        return _pad2(w, _r128(din), _r128(dout)).astype(CDT)

    def wstack_k(n):      # n hidden-chunks stacked along K -> (n*dp, dp)
        return jnp.concatenate([wmat(hidden) for _ in range(n)], axis=0)

    def wstack_n(n):      # n hidden-chunks stacked along N -> (dp, n*dp)
        return jnp.concatenate([wmat(hidden) for _ in range(n)], axis=1)

    def bias(dout=hidden):
        b = 0.01 * jax.random.normal(next(ki), (dout,), jnp.float32)
        return jnp.zeros((1, _r128(dout)), jnp.float32).at[0, :dout].set(b)

    p = {}
    p["node_emb"] = {"w": wmat(node_dim), "b": bias()}
    p["edge_emb"] = {"w": wmat(edge_dim), "b": bias()}
    p["graph_emb"] = {"w": wmat(graph_dim), "b": bias()}

    # MegNet blocks:
    #   phi_e([h_src, h_dst, e, u])  -- h/u chunks projected once per layer
    #   phi_v([agg, h, u])           -- u chunk projected once per layer
    #   phi_u([h_mean, e_mean, u])
    p["megnet"] = []
    for _ in range(conv_layers):
        blk = {
            "hp_w": wstack_n(2),          # h -> [phi_e src | phi_e dst]
            "up_w": wstack_n(2),          # u -> [phi_e u | phi_v u]
            "e1_w": wmat(hidden), "e1_b": bias(),
            "e2_w": wmat(hidden), "e2_b": bias(),
            "v1_w": wstack_k(2), "v1_b": bias(),   # [agg | h]
            "v2_w": wmat(hidden), "v2_b": bias(),
            "u1_w": wstack_k(3), "u1_b": bias(),   # [h_mean | e_mean | u]
            "u2_w": wmat(hidden), "u2_b": bias(),
        }
        p["megnet"].append(blk)

    # Set2Set LSTM (n_iters=2, n_layers=1); per-gate 128-aligned chunks
    def s2s():
        return {"wq": wstack_n(4), "wr": wstack_n(4), "wh": wstack_n(4),
                "b": jnp.concatenate([bias() for _ in range(4)], axis=1)}
    p["node_s2s"] = s2s()
    p["edge_s2s"] = s2s()

    # Linears: [q_n, r_n, q_e, r_e, u] (5*hidden) -> hidden -> hidden
    p["lin1_w"] = wstack_k(5)
    p["lin1_b"] = bias()
    p["lin2_w"] = wmat(hidden)
    p["lin2_b"] = bias()

    # SolventLayer (TODO(synk): internals reconstructed)
    p["solv_emb"] = {"w": wmat(solv_dim), "b": bias()}
    p["solv_l1_w"] = wstack_k(2)
    p["solv_l1_b"] = bias()
    p["solv_l2_w"] = wmat(hidden, target_dim)
    p["solv_l2_b"] = bias(target_dim)
    return p


# ----------------------------------------------------------------------------
# Model forward (index plumbing in JAX, all hot ops in Pallas)
# ----------------------------------------------------------------------------
def set2set(p, feats, A, G_pad, dp, tile_m, n_iters=2):
    q = jnp.zeros((G_pad, dp), jnp.float32)
    r = jnp.zeros((G_pad, dp), jnp.float32)
    hx = jnp.zeros((G_pad, dp), jnp.float32)
    cx = jnp.zeros((G_pad, dp), jnp.float32)
    for _ in range(n_iters):
        hx, cx = pallas_lstm_cell(q, r, hx, cx, p["wq"], p["wr"], p["wh"], p["b"])
        q = hx
        r = pallas_s2s_attention(A, feats, q, tile_m)   # fused masked softmax + readout
    return q.astype(CDT), r.astype(CDT)


def forward(params, node_feats, edge_feats, graph_feats, src, dst, node_graph,
            solv_node_feats, solv_node_graph, *, target_dim):
    dp = params["node_emb"]["w"].shape[1]
    n_graphs = graph_feats.shape[0]
    N_pad, tile_n = _row_tiles(node_feats.shape[0])
    E_pad, tile_e = _row_tiles(edge_feats.shape[0])
    G_pad, tile_g = _row_tiles(n_graphs)
    S_pad, tile_s = _row_tiles(solv_node_feats.shape[0])

    # row- and lane-padded inputs in the compute dtype
    nf = _pad2(node_feats, N_pad, _r128(node_feats.shape[1])).astype(CDT)
    ef = _pad2(edge_feats, E_pad, _r128(edge_feats.shape[1])).astype(CDT)
    gf = _pad2(graph_feats, G_pad, _r128(graph_feats.shape[1])).astype(CDT)
    sf = _pad2(solv_node_feats, S_pad, _r128(solv_node_feats.shape[1])).astype(CDT)

    edge_graph = node_graph[src]
    src_g = _pad_idx(src, E_pad, 0)
    dst_g = _pad_idx(dst, E_pad, 0)
    eg_g = _pad_idx(edge_graph, E_pad, 0)
    ng_g = _pad_idx(node_graph, N_pad, 0)
    dst_oh = _pad_idx(dst, E_pad, -1)
    ng_oh = _pad_idx(node_graph, N_pad, -1)
    eg_oh = _pad_idx(edge_graph, E_pad, -1)
    sg_oh = _pad_idx(solv_node_graph, S_pad, -1)

    # membership / incidence matrices directly in the compute dtype
    A_node = _membership(ng_oh, G_pad)      # [G, N]
    A_edge = _membership(eg_oh, G_pad)      # [G, E]
    A_solv = _membership(sg_oh, G_pad)      # [G, Ns]
    B_dst = _membership(dst_oh, N_pad)      # [N, E]

    # segment sizes straight from the index arrays (no dense reductions)
    deg = jnp.maximum(jnp.bincount(dst, length=N_pad), 1).astype(jnp.float32)[:, None]
    node_counts = jnp.maximum(jnp.bincount(node_graph, length=G_pad), 1
                              ).astype(jnp.float32)[:, None]
    edge_counts = jnp.maximum(jnp.bincount(edge_graph, length=G_pad), 1
                              ).astype(jnp.float32)[:, None]
    solv_counts = jnp.maximum(jnp.bincount(solv_node_graph, length=G_pad), 1
                              ).astype(jnp.float32)[:, None]

    zero_b2 = jnp.zeros((1, 2 * dp), jnp.float32)

    # embeddings
    h = pallas_dense(nf, params["node_emb"]["w"], params["node_emb"]["b"], tile=tile_n)
    e = pallas_dense(ef, params["edge_emb"]["w"], params["edge_emb"]["b"], tile=tile_e)
    u = pallas_dense(gf, params["graph_emb"]["w"], params["graph_emb"]["b"], tile=tile_g)

    # MegNet message passing (dropout = identity in eval mode), residual_sum=True
    for blk in params["megnet"]:
        # project-then-gather: N*d^2 / G*d^2 instead of E*d^2 layer-1 FLOPs
        Ph = pallas_dense(h, blk["hp_w"], zero_b2, tile=tile_n)     # [N, 2dp]
        Pu = pallas_dense(u, blk["up_w"], zero_b2, tile=tile_g)     # [G, 2dp]
        # TODO(synk): these gathers stay in XLA; scalar-prefetch in-kernel gathers
        #             would remove the HBM round trips.
        pre_e = Ph[src_g, :dp] + Ph[dst_g, dp:] + Pu[eg_g, :dp]     # [E, dp]
        pre_v = Pu[ng_g, dp:]                                       # [N, dp]

        # phi_e: fused L1 + leaky + L2, residual fused into the kernel
        e_new, e_res = pallas_mlp2([e], blk["e1_w"], blk["e1_b"],
                                   blk["e2_w"], blk["e2_b"],
                                   adds=[pre_e], act2=True, res=e, tile=tile_e)
        # mean of incoming edges per node (K-tiled, fused 1/deg epilogue)
        agg = pallas_agg(B_dst, e_new, deg, row_tile=tile_n, k_tile=tile_e)
        # phi_v
        h_new, h_res = pallas_mlp2([agg, h], blk["v1_w"], blk["v1_b"],
                                   blk["v2_w"], blk["v2_b"],
                                   adds=[pre_v], act2=True, res=h, tile=tile_n)
        # graph-level means of the pre-residual updates (canonical MEGNet block)
        # TODO(synk): verify pre- vs post-residual feeding of phi_u vs reference MegNets.
        e_mean = pallas_agg(A_edge, e_new, edge_counts, row_tile=tile_g, k_tile=tile_e)
        h_mean = pallas_agg(A_node, h_new, node_counts, row_tile=tile_g, k_tile=tile_n)
        # phi_u (only the residual output is consumed -> skip the other store)
        u_res = pallas_mlp2([h_mean, e_mean, u], blk["u1_w"], blk["u1_b"],
                            blk["u2_w"], blk["u2_b"], act2=True, res=u,
                            want_new=False, tile=tile_g)
        h, e, u = h_res, e_res, u_res

    # Megnet_pooling: Set2Set over nodes and edges, u passed through
    qn, rn = set2set(params["node_s2s"], h, A_node, G_pad, dp, tile_n)
    qe, re = set2set(params["edge_s2s"], e, A_edge, G_pad, dp, tile_e)

    # Linears over [h_pool | e_pool | u] (stacked K, no concat in HBM), last layer no act
    x = pallas_mlp2([qn, rn, qe, re, u], params["lin1_w"], params["lin1_b"],
                    params["lin2_w"], params["lin2_b"], act2=False, tile=tile_g)

    # SolventLayer: embed solvent nodes, mean-pool per graph, fused 2-layer head
    hs = pallas_dense(sf, params["solv_emb"]["w"], params["solv_emb"]["b"],
                      act=True, tile=tile_s)
    solv_pool = pallas_agg(A_solv, hs, solv_counts, row_tile=tile_g, k_tile=tile_s)
    out = pallas_mlp2([x, solv_pool], params["solv_l1_w"], params["solv_l1_b"],
                      params["solv_l2_w"], params["solv_l2_b"], act2=False,
                      tile=tile_g, out_dtype=jnp.float32)
    return out[:n_graphs, :target_dim]


# ----------------------------------------------------------------------------
if __name__ == "__main__":
    # small synthetic config / graph batch
    G, N, E, Ns = 2, 8, 12, 6
    node_dim, edge_dim, graph_dim, solv_dim = 6, 5, 3, 6
    hidden, conv_layers, target_dim = 32, 2, 1

    key = jax.random.PRNGKey(0)
    kp, k1, k2, k3, k4 = jax.random.split(key, 5)
    params = init_params(kp, node_dim, edge_dim, graph_dim, solv_dim,
                         hidden, conv_layers, target_dim)

    node_feats = jax.random.normal(k1, (N, node_dim), jnp.float32)
    edge_feats = jax.random.normal(k2, (E, edge_dim), jnp.float32)
    graph_feats = jax.random.normal(k3, (G, graph_dim), jnp.float32)
    solv_node_feats = jax.random.normal(k4, (Ns, solv_dim), jnp.float32)

    # chain graphs: graph 0 uses nodes 0..3, graph 1 uses nodes 4..7
    src = jnp.array([0, 1, 1, 2, 2, 3, 4, 5, 5, 6, 6, 7], jnp.int32)
    dst = jnp.array([1, 0, 2, 1, 3, 2, 5, 4, 6, 5, 7, 6], jnp.int32)
    node_graph = jnp.array([0, 0, 0, 0, 1, 1, 1, 1], jnp.int32)
    solv_node_graph = jnp.array([0, 0, 0, 1, 1, 1], jnp.int32)

    fwd = jax.jit(forward, static_argnames=("target_dim",))
    out = fwd(params, node_feats, edge_feats, graph_feats, src, dst, node_graph,
              solv_node_feats, solv_node_graph, target_dim=target_dim)
    out = jax.block_until_ready(out)
    assert out.shape == (G, target_dim)
    assert bool(jnp.all(jnp.isfinite(out)))
    print("KERNEL_OK")
</pallas_src>

<mosaic_0001>
module attributes {stable_mosaic.version = 11 : i64} {
  func.func private @main(%arg0: i32) attributes {dimension_semantics = [#tpu.dimension_semantics<core_parallel>], iteration_bounds = array<i64: 2>, tpu.core_type = #tpu.core_type<sc_scalar_subcore>, window_params = []} {
    return
  }
}

module attributes {stable_mosaic.version = 11 : i64} {
  func.func private @main(%arg0: i32) attributes {dimension_semantics = [#tpu.dimension_semantics<core_parallel>], iteration_bounds = array<i64: 2>, tpu.core_type = #tpu.core_type<sc_scalar_subcore>, window_params = []} {
    return
  }
}

module attributes {stable_mosaic.version = 11 : i64} {
  func.func @_dense_kernel(%arg0: i32, %arg1: memref<8x128xf32, #tpu.memory_space<vmem>>, %arg2: memref<128x128xf32, #tpu.memory_space<vmem>>, %arg3: memref<1x128xf32, #tpu.memory_space<vmem>>, %arg4: memref<8x128xf32, #tpu.memory_space<vmem>>) attributes {dimension_semantics = [#tpu.dimension_semantics<parallel>], iteration_bounds = array<i64: 1>, scalar_prefetch = 0 : i64, scratch_operands = 0 : i64, tpu.core_type = #tpu.core_type<tc>, window_params = [{transform_indices = @transform_0, window_bounds = array<i64: 8, 128>}, {pipeline_mode = #tpu.pipeline_mode<synchronous>, transform_indices = @transform_1, window_bounds = array<i64: 128, 128>}, {pipeline_mode = #tpu.pipeline_mode<synchronous>, transform_indices = @transform_2, window_bounds = array<i64: 1, 128>}, {transform_indices = @transform_3, window_bounds = array<i64: 8, 128>}]} {
    %c0 = arith.constant 0 : index
    %c0_0 = arith.constant 0 : index
    %0 = vector.load %arg1[%c0, %c0_0] : memref<8x128xf32, #tpu.memory_space<vmem>>, vector<8x128xf32>
    %c0_1 = arith.constant 0 : index
    %c0_2 = arith.constant 0 : index
    %1 = vector.load %arg2[%c0_1, %c0_2] : memref<128x128xf32, #tpu.memory_space<vmem>>, vector<128x128xf32>
    %cst = arith.constant dense<0.000000e+00> : vector<8x128xf32>
    %2 = tpu.matmul %0, %1, %cst {dimension_numbers = #tpu.dot_dimension_numbers<[1], [0], [0], [1], [0, 0, 1, 1], [], []>} : vector<8x128xf32>, vector<128x128xf32>, vector<8x128xf32> -> vector<8x128xf32>
    %c0_3 = arith.constant 0 : index
    %c0_4 = arith.constant 0 : index
    %3 = vector.load %arg3[%c0_3, %c0_4] : memref<1x128xf32, #tpu.memory_space<vmem>>, vector<1x128xf32>
    %4 = vector.broadcast %3 : vector<1x128xf32> to vector<8x128xf32>
    %5 = arith.addf %2, %4 : vector<8x128xf32>
    %c0_5 = arith.constant 0 : index
    %c0_6 = arith.constant 0 : index
    %6 = vector.load %arg4[%c0_5, %c0_6] : memref<8x128xf32, #tpu.memory_space<vmem>>, vector<8x128xf32>
    tpu.vector_store %arg4[%c0_5, %c0_6], %5 {strides = array<i32>} : memref<8x128xf32, #tpu.memory_space<vmem>>, vector<8x128xf32>,
    return
  }
  func.func @transform_0(%arg0: i32) -> (i32, i32) {
    %c0_i32 = arith.constant 0 : i32
    %c0_i32_0 = arith.constant 0 : i32
    return %arg0, %c0_i32 : i32, i32
  }
  func.func @transform_1(%arg0: i32) -> (i32, i32) {
    %c0_i32 = arith.constant 0 : i32
    %c0_i32_0 = arith.constant 0 : i32
    %c0_i32_1 = arith.constant 0 : i32
    return %c0_i32, %c0_i32_0 : i32, i32
  }
  func.func @transform_2(%arg0: i32) -> (i32, i32) {
    %c0_i32 = arith.constant 0 : i32
    %c0_i32_0 = arith.constant 0 : i32
    %c0_i32_1 = arith.constant 0 : i32
    return %c0_i32, %c0_i32_0 : i32, i32
  }
  func.func @transform_3(%arg0: i32) -> (i32, i32) {
    %c0_i32 = arith.constant 0 : i32
    %c0_i32_0 = arith.constant 0 : i32
    return %arg0, %c0_i32 : i32, i32
  }
}

module attributes {stable_mosaic.version = 11 : i64} {
  func.func @_dense_kernel(%arg0: i32, %arg1: memref<8x128xf32, #tpu.memory_space<vmem>>, %arg2: memref<128x256xf32, #tpu.memory_space<vmem>>, %arg3: memref<1x256xf32, #tpu.memory_space<vmem>>, %arg4: memref<8x256xf32, #tpu.memory_space<vmem>>) attributes {dimension_semantics = [#tpu.dimension_semantics<parallel>], iteration_bounds = array<i64: 1>, scalar_prefetch = 0 : i64, scratch_operands = 0 : i64, tpu.core_type = #tpu.core_type<tc>, window_params = [{transform_indices = @transform_0, window_bounds = array<i64: 8, 128>}, {pipeline_mode = #tpu.pipeline_mode<synchronous>, transform_indices = @transform_1, window_bounds = array<i64: 128, 256>}, {pipeline_mode = #tpu.pipeline_mode<synchronous>, transform_indices = @transform_2, window_bounds = array<i64: 1, 256>}, {transform_indices = @transform_3, window_bounds = array<i64: 8, 256>}]} {
    %c0 = arith.constant 0 : index
    %c0_0 = arith.constant 0 : index
    %0 = vector.load %arg1[%c0, %c0_0] : memref<8x128xf32, #tpu.memory_space<vmem>>, vector<8x128xf32>
    %c0_1 = arith.constant 0 : index
    %c0_2 = arith.constant 0 : index
    %1 = vector.load %arg2[%c0_1, %c0_2] : memref<128x256xf32, #tpu.memory_space<vmem>>, vector<128x256xf32>
    %cst = arith.constant dense<0.000000e+00> : vector<8x256xf32>
    %2 = tpu.matmul %0, %1, %cst {dimension_numbers = #tpu.dot_dimension_numbers<[1], [0], [0], [1], [0, 0, 1, 1], [], []>} : vector<8x128xf32>, vector<128x256xf32>, vector<8x256xf32> -> vector<8x256xf32>
    %c0_3 = arith.constant 0 : index
    %c0_4 = arith.constant 0 : index
    %3 = vector.load %arg3[%c0_3, %c0_4] : memref<1x256xf32, #tpu.memory_space<vmem>>, vector<1x256xf32>
    %4 = vector.broadcast %3 : vector<1x256xf32> to vector<8x256xf32>
    %5 = arith.addf %2, %4 : vector<8x256xf32>
    %c0_5 = arith.constant 0 : index
    %c0_6 = arith.constant 0 : index
    %6 = vector.load %arg4[%c0_5, %c0_6] : memref<8x256xf32, #tpu.memory_space<vmem>>, vector<8x256xf32>
    tpu.vector_store %arg4[%c0_5, %c0_6], %5 {strides = array<i32>} : memref<8x256xf32, #tpu.memory_space<vmem>>, vector<8x256xf32>,
    return
  }
  func.func @transform_0(%arg0: i32) -> (i32, i32) {
    %c0_i32 = arith.constant 0 : i32
    %c0_i32_0 = arith.constant 0 : i32
    return %arg0, %c0_i32 : i32, i32
  }
  func.func @transform_1(%arg0: i32) -> (i32, i32) {
    %c0_i32 = arith.constant 0 : i32
    %c0_i32_0 = arith.constant 0 : i32
    %c0_i32_1 = arith.constant 0 : i32
    return %c0_i32, %c0_i32_0 : i32, i32
  }
  func.func @transform_2(%arg0: i32) -> (i32, i32) {
    %c0_i32 = arith.constant 0 : i32
    %c0_i32_0 = arith.constant 0 : i32
    %c0_i32_1 = arith.constant 0 : i32
    return %c0_i32, %c0_i32_0 : i32, i32
  }
  func.func @transform_3(%arg0: i32) -> (i32, i32) {
    %c0_i32 = arith.constant 0 : i32
    %c0_i32_0 = arith.constant 0 : i32
    return %arg0, %c0_i32 : i32, i32
  }
}

module attributes {stable_mosaic.version = 11 : i64} {
  func.func @_mlp2_kernel(%arg0: i32, %arg1: memref<8x128xf32, #tpu.memory_space<vmem>>, %arg2: memref<8x128xf32, #tpu.memory_space<vmem>>, %arg3: memref<8x128xf32, #tpu.memory_space<vmem>>, %arg4: memref<256x128xf32, #tpu.memory_space<vmem>>, %arg5: memref<1x128xf32, #tpu.memory_space<vmem>>, %arg6: memref<128x128xf32, #tpu.memory_space<vmem>>, %arg7: memref<1x128xf32, #tpu.memory_space<vmem>>, %arg8: memref<8x128xf32, #tpu.memory_space<vmem>>, %arg9: memref<8x128xf32, #tpu.memory_space<vmem>>, %arg10: memref<8x128xf32, #tpu.memory_space<vmem>>) attributes {dimension_semantics = [#tpu.dimension_semantics<parallel>], iteration_bounds = array<i64: 1>, scalar_prefetch = 0 : i64, scratch_operands = 0 : i64, tpu.core_type = #tpu.core_type<tc>, window_params = [{transform_indices = @transform_0, window_bounds = array<i64: 8, 128>}, {transform_indices = @transform_1, window_bounds = array<i64: 8, 128>}, {transform_indices = @transform_2, window_bounds = array<i64: 8, 128>}, {pipeline_mode = #tpu.pipeline_mode<synchronous>, transform_indices = @transform_3, window_bounds = array<i64: 256, 128>}, {pipeline_mode = #tpu.pipeline_mode<synchronous>, transform_indices = @transform_4, window_bounds = array<i64: 1, 128>}, {pipeline_mode = #tpu.pipeline_mode<synchronous>, transform_indices = @transform_5, window_bounds = array<i64: 128, 128>}, {pipeline_mode = #tpu.pipeline_mode<synchronous>, transform_indices = @transform_6, window_bounds = array<i64: 1, 128>}, {transform_indices = @transform_7, window_bounds = array<i64: 8, 128>}, {transform_indices = @transform_8, window_bounds = array<i64: 8, 128>}, {transform_indices = @transform_9, window_bounds = array<i64: 8, 128>}]} {
    %c0 = arith.constant 0 : index
    %c0_0 = arith.constant 0 : index
    %0 = vector.load %arg2[%c0, %c0_0] : memref<8x128xf32, #tpu.memory_space<vmem>>, vector<8x128xf32>
    %c0_1 = arith.constant 0 : index
    %c0_2 = arith.constant 0 : index
    %1 = vector.load %arg3[%c0_1, %c0_2] : memref<8x128xf32, #tpu.memory_space<vmem>>, vector<8x128xf32>
    %2 = tpu.concatenate %0, %1 in 1 : vector<8x128xf32>, vector<8x128xf32> -> vector<8x256xf32>
    %c0_3 = arith.constant 0 : index
    %c0_4 = arith.constant 0 : index
    %3 = vector.load %arg4[%c0_3, %c0_4] : memref<256x128xf32, #tpu.memory_space<vmem>>, vector<256x128xf32>
    %cst = arith.constant dense<0.000000e+00> : vector<8x128xf32>
    %4 = tpu.matmul %2, %3, %cst {dimension_numbers = #tpu.dot_dimension_numbers<[1], [0], [0], [1], [0, 0, 1, 1], [], []>} : vector<8x256xf32>, vector<256x128xf32>, vector<8x128xf32> -> vector<8x128xf32>
    %c0_5 = arith.constant 0 : index
    %c0_6 = arith.constant 0 : index
    %5 = vector.load %arg5[%c0_5, %c0_6] : memref<1x128xf32, #tpu.memory_space<vmem>>, vector<1x128xf32>
    %6 = vector.broadcast %5 : vector<1x128xf32> to vector<8x128xf32>
    %7 = arith.addf %4, %6 : vector<8x128xf32>
    %c0_7 = arith.constant 0 : index
    %c0_8 = arith.constant 0 : index
    %8 = vector.load %arg1[%c0_7, %c0_8] : memref<8x128xf32, #tpu.memory_space<vmem>>, vector<8x128xf32>
    %9 = arith.addf %7, %8 : vector<8x128xf32>
    %cst_9 = arith.constant 0.000000e+00 : f32
    %10 = vector.broadcast %cst_9 : f32 to vector<8x128xf32>
    %11 = arith.cmpf ogt, %9, %10 : vector<8x128xf32>
    %cst_10 = arith.constant 0.00999999977 : f32
    %12 = vector.broadcast %cst_10 : f32 to vector<8x128xf32>
    %13 = arith.mulf %12, %9 : vector<8x128xf32>
    %14 = arith.select %11, %9, %13 : vector<8x128xi1>, vector<8x128xf32>
    %c0_11 = arith.constant 0 : index
    %c0_12 = arith.constant 0 : index
    %15 = vector.load %arg6[%c0_11, %c0_12] : memref<128x128xf32, #tpu.memory_space<vmem>>, vector<128x128xf32>
    %cst_13 = arith.constant dense<0.000000e+00> : vector<8x128xf32>
    %16 = tpu.matmul %14, %15, %cst_13 {dimension_numbers = #tpu.dot_dimension_numbers<[1], [0], [0], [1], [0, 0, 1, 1], [], []>} : vector<8x128xf32>, vector<128x128xf32>, vector<8x128xf32> -> vector<8x128xf32>
    %c0_14 = arith.constant 0 : index
    %c0_15 = arith.constant 0 : index
    %17 = vector.load %arg7[%c0_14, %c0_15] : memref<1x128xf32, #tpu.memory_space<vmem>>, vector<1x128xf32>
    %18 = vector.broadcast %17 : vector<1x128xf32> to vector<8x128xf32>
    %19 = arith.addf %16, %18 : vector<8x128xf32>
    %cst_16 = arith.constant 0.000000e+00 : f32
    %20 = vector.broadcast %cst_16 : f32 to vector<8x128xf32>
    %21 = arith.cmpf ogt, %19, %20 : vector<8x128xf32>
    %cst_17 = arith.constant 0.00999999977 : f32
    %22 = vector.broadcast %cst_17 : f32 to vector<8x128xf32>
    %23 = arith.mulf %22, %19 : vector<8x128xf32>
    %24 = arith.select %21, %19, %23 : vector<8x128xi1>, vector<8x128xf32>
    %c0_18 = arith.constant 0 : index
    %c0_19 = arith.constant 0 : index
    %25 = vector.load %arg9[%c0_18, %c0_19] : memref<8x128xf32, #tpu.memory_space<vmem>>, vector<8x128xf32>
    tpu.vector_store %arg9[%c0_18, %c0_19], %24 {strides = array<i32>} : memref<8x128xf32, #tpu.memory_space<vmem>>, vector<8x128xf32>,
    %c0_20 = arith.constant 0 : index
    %c0_21 = arith.constant 0 : index
    %26 = vector.load %arg8[%c0_20, %c0_21] : memref<8x128xf32, #tpu.memory_space<vmem>>, vector<8x128xf32>
    %27 = arith.addf %24, %26 : vector<8x128xf32>
    %c0_22 = arith.constant 0 : index
    %c0_23 = arith.constant 0 : index
    %28 = vector.load %arg10[%c0_22, %c0_23] : memref<8x128xf32, #tpu.memory_space<vmem>>, vector<8x128xf32>
    tpu.vector_store %arg10[%c0_22, %c0_23], %27 {strides = array<i32>} : memref<8x128xf32, #tpu.memory_space<vmem>>, vector<8x128xf32>,
    return
  }
  func.func @transform_0(%arg0: i32) -> (i32, i32) {
    %c0_i32 = arith.constant 0 : i32
    %c0_i32_0 = arith.constant 0 : i32
    return %arg0, %c0_i32 : i32, i32
  }
  func.func @transform_1(%arg0: i32) -> (i32, i32) {
    %c0_i32 = arith.constant 0 : i32
    %c0_i32_0 = arith.constant 0 : i32
    return %arg0, %c0_i32 : i32, i32
  }
  func.func @transform_2(%arg0: i32) -> (i32, i32) {
    %c0_i32 = arith.constant 0 : i32
    %c0_i32_0 = arith.constant 0 : i32
    return %arg0, %c0_i32 : i32, i32
  }
  func.func @transform_3(%arg0: i32) -> (i32, i32) {
    %c0_i32 = arith.constant 0 : i32
    %c0_i32_0 = arith.constant 0 : i32
    %c0_i32_1 = arith.constant 0 : i32
    return %c0_i32, %c0_i32_0 : i32, i32
  }
  func.func @transform_4(%arg0: i32) -> (i32, i32) {
    %c0_i32 = arith.constant 0 : i32
    %c0_i32_0 = arith.constant 0 : i32
    %c0_i32_1 = arith.constant 0 : i32
    return %c0_i32, %c0_i32_0 : i32, i32
  }
  func.func @transform_5(%arg0: i32) -> (i32, i32) {
    %c0_i32 = arith.constant 0 : i32
    %c0_i32_0 = arith.constant 0 : i32
    %c0_i32_1 = arith.constant 0 : i32
    return %c0_i32, %c0_i32_0 : i32, i32
  }
  func.func @transform_6(%arg0: i32) -> (i32, i32) {
    %c0_i32 = arith.constant 0 : i32
    %c0_i32_0 = arith.constant 0 : i32
    %c0_i32_1 = arith.constant 0 : i32
    return %c0_i32, %c0_i32_0 : i32, i32
  }
  func.func @transform_7(%arg0: i32) -> (i32, i32) {
    %c0_i32 = arith.constant 0 : i32
    %c0_i32_0 = arith.constant 0 : i32
    return %arg0, %c0_i32 : i32, i32
  }
  func.func @transform_8(%arg0: i32) -> (i32, i32) {
    %c0_i32 = arith.constant 0 : i32
    %c0_i32_0 = arith.constant 0 : i32
    return %arg0, %c0_i32 : i32, i32
  }
  func.func @transform_9(%arg0: i32) -> (i32, i32) {
    %c0_i32 = arith.constant 0 : i32
    %c0_i32_0 = arith.constant 0 : i32
    return %arg0, %c0_i32 : i32, i32
  }
}

module attributes {stable_mosaic.version = 11 : i64} {
  func.func @_dense_kernel(%arg0: i32, %arg1: memref<16x128xf32, #tpu.memory_space<vmem>>, %arg2: memref<128x128xf32, #tpu.memory_space<vmem>>, %arg3: memref<1x128xf32, #tpu.memory_space<vmem>>, %arg4: memref<16x128xf32, #tpu.memory_space<vmem>>) attributes {dimension_semantics = [#tpu.dimension_semantics<parallel>], iteration_bounds = array<i64: 1>, scalar_prefetch = 0 : i64, scratch_operands = 0 : i64, tpu.core_type = #tpu.core_type<tc>, window_params = [{transform_indices = @transform_0, window_bounds = array<i64: 16, 128>}, {pipeline_mode = #tpu.pipeline_mode<synchronous>, transform_indices = @transform_1, window_bounds = array<i64: 128, 128>}, {pipeline_mode = #tpu.pipeline_mode<synchronous>, transform_indices = @transform_2, window_bounds = array<i64: 1, 128>}, {transform_indices = @transform_3, window_bounds = array<i64: 16, 128>}]} {
    %c0 = arith.constant 0 : index
    %c0_0 = arith.constant 0 : index
    %0 = vector.load %arg1[%c0, %c0_0] : memref<16x128xf32, #tpu.memory_space<vmem>>, vector<16x128xf32>
    %c0_1 = arith.constant 0 : index
    %c0_2 = arith.constant 0 : index
    %1 = vector.load %arg2[%c0_1, %c0_2] : memref<128x128xf32, #tpu.memory_space<vmem>>, vector<128x128xf32>
    %cst = arith.constant dense<0.000000e+00> : vector<16x128xf32>
    %2 = tpu.matmul %0, %1, %cst {dimension_numbers = #tpu.dot_dimension_numbers<[1], [0], [0], [1], [0, 0, 1, 1], [], []>} : vector<16x128xf32>, vector<128x128xf32>, vector<16x128xf32> -> vector<16x128xf32>
    %c0_3 = arith.constant 0 : index
    %c0_4 = arith.constant 0 : index
    %3 = vector.load %arg3[%c0_3, %c0_4] : memref<1x128xf32, #tpu.memory_space<vmem>>, vector<1x128xf32>
    %4 = vector.broadcast %3 : vector<1x128xf32> to vector<16x128xf32>
    %5 = arith.addf %2, %4 : vector<16x128xf32>
    %c0_5 = arith.constant 0 : index
    %c0_6 = arith.constant 0 : index
    %6 = vector.load %arg4[%c0_5, %c0_6] : memref<16x128xf32, #tpu.memory_space<vmem>>, vector<16x128xf32>
    tpu.vector_store %arg4[%c0_5, %c0_6], %5 {strides = array<i32>} : memref<16x128xf32, #tpu.memory_space<vmem>>, vector<16x128xf32>,
    return
  }
  func.func @transform_0(%arg0: i32) -> (i32, i32) {
    %c0_i32 = arith.constant 0 : i32
    %c0_i32_0 = arith.constant 0 : i32
    return %arg0, %c0_i32 : i32, i32
  }
  func.func @transform_1(%arg0: i32) -> (i32, i32) {
    %c0_i32 = arith.constant 0 : i32
    %c0_i32_0 = arith.constant 0 : i32
    %c0_i32_1 = arith.constant 0 : i32
    return %c0_i32, %c0_i32_0 : i32, i32
  }
  func.func @transform_2(%arg0: i32) -> (i32, i32) {
    %c0_i32 = arith.constant 0 : i32
    %c0_i32_0 = arith.constant 0 : i32
    %c0_i32_1 = arith.constant 0 : i32
    return %c0_i32, %c0_i32_0 : i32, i32
  }
  func.func @transform_3(%arg0: i32) -> (i32, i32) {
    %c0_i32 = arith.constant 0 : i32
    %c0_i32_0 = arith.constant 0 : i32
    return %arg0, %c0_i32 : i32, i32
  }
}

module attributes {stable_mosaic.version = 11 : i64} {
  func.func @_agg_kernel(%arg0: i32, %arg1: i32, %arg2: memref<8x16xf32, #tpu.memory_space<vmem>>, %arg3: memref<16x128xf32, #tpu.memory_space<vmem>>, %arg4: memref<8x1xf32, #tpu.memory_space<vmem>>, %arg5: memref<8x128xf32, #tpu.memory_space<vmem>>, %arg6: memref<8x128xf32, #tpu.memory_space<vmem>>) attributes {dimension_semantics = [#tpu.dimension_semantics<parallel>, #tpu.dimension_semantics<arbitrary>], iteration_bounds = array<i64: 1, 1>, scalar_prefetch = 0 : i64, scratch_operands = 1 : i64, tpu.core_type = #tpu.core_type<tc>, window_params = [{transform_indices = @transform_0, window_bounds = array<i64: 8, 16>}, {transform_indices = @transform_1, window_bounds = array<i64: 16, 128>}, {transform_indices = @transform_2, window_bounds = array<i64: 8, 1>}, {transform_indices = @transform_3, window_bounds = array<i64: 8, 128>}]} {
    %c0_i32 = arith.constant 0 : i32
    %0 = arith.cmpi eq, %arg1, %c0_i32 : i32
    %1 = arith.extui %0 : i1 to i32
    %c0_i32_0 = arith.constant 0 : i32
    %2 = arith.cmpi ne, %1, %c0_i32_0 : i32
    scf.if %2 {
      %cst_10 = arith.constant 0.000000e+00 : f32
      %12 = vector.broadcast %cst_10 : f32 to vector<8x128xf32>
      %c0_11 = arith.constant 0 : index
      %c0_12 = arith.constant 0 : index
      %13 = vector.load %arg6[%c0_11, %c0_12] : memref<8x128xf32, #tpu.memory_space<vmem>>, vector<8x128xf32>
      tpu.vector_store %arg6[%c0_11, %c0_12], %12 {strides = array<i32>} : memref<8x128xf32, #tpu.memory_space<vmem>>, vector<8x128xf32>,
    } else {
    }
    %c0 = arith.constant 0 : index
    %c0_1 = arith.constant 0 : index
    %3 = vector.load %arg6[%c0, %c0_1] : memref<8x128xf32, #tpu.memory_space<vmem>>, vector<8x128xf32>
    %c0_2 = arith.constant 0 : index
    %c0_3 = arith.constant 0 : index
    %4 = vector.load %arg2[%c0_2, %c0_3] : memref<8x16xf32, #tpu.memory_space<vmem>>, vector<8x16xf32>
    %c0_4 = arith.constant 0 : index
    %c0_5 = arith.constant 0 : index
    %5 = vector.load %arg3[%c0_4, %c0_5] : memref<16x128xf32, #tpu.memory_space<vmem>>, vector<16x128xf32>
    %cst = arith.constant dense<0.000000e+00> : vector<8x128xf32>
    %6 = tpu.matmul %4, %5, %cst {dimension_numbers = #tpu.dot_dimension_numbers<[1], [0], [0], [1], [0, 0, 1, 1], [], []>} : vector<8x16xf32>, vector<16x128xf32>, vector<8x128xf32> -> vector<8x128xf32>
    %7 = arith.addf %3, %6 : vector<8x128xf32>
    %c0_6 = arith.constant 0 : index
    %c0_7 = arith.constant 0 : index
    %8 = vector.load %arg6[%c0_6, %c0_7] : memref<8x128xf32, #tpu.memory_space<vmem>>, vector<8x128xf32>
    tpu.vector_store %arg6[%c0_6, %c0_7], %7 {strides = array<i32>} : memref<8x128xf32, #tpu.memory_space<vmem>>, vector<8x128xf32>,
    %c0_i32_8 = arith.constant 0 : i32
    %9 = arith.cmpi eq, %arg1, %c0_i32_8 : i32
    %10 = arith.extui %9 : i1 to i32
    %c0_i32_9 = arith.constant 0 : i32
    %11 = arith.cmpi ne, %10, %c0_i32_9 : i32
    scf.if %11 {
      %c0_10 = arith.constant 0 : index
      %c0_11 = arith.constant 0 : index
      %12 = vector.load %arg6[%c0_10, %c0_11] : memref<8x128xf32, #tpu.memory_space<vmem>>, vector<8x128xf32>
      %c0_12 = arith.constant 0 : index
      %c0_13 = arith.constant 0 : index
      %13 = vector.load %arg4[%c0_12, %c0_13] : memref<8x1xf32, #tpu.memory_space<vmem>>, vector<8x1xf32>
      %14 = vector.broadcast %13 : vector<8x1xf32> to vector<8x128xf32>
      %15 = arith.divf %12, %14 : vector<8x128xf32>
      %c0_14 = arith.constant 0 : index
      %c0_15 = arith.constant 0 : index
      %16 = vector.load %arg5[%c0_14, %c0_15] : memref<8x128xf32, #tpu.memory_space<vmem>>, vector<8x128xf32>
      tpu.vector_store %arg5[%c0_14, %c0_15], %15 {strides = array<i32>} : memref<8x128xf32, #tpu.memory_space<vmem>>, vector<8x128xf32>,
    } else {
    }
    return
  }
  func.func @transform_0(%arg0: i32, %arg1: i32) -> (i32, i32) {
    %c0_i32 = arith.constant 0 : i32
    return %arg0, %arg1 : i32, i32
  }
  func.func @transform_1(%arg0: i32, %arg1: i32) -> (i32, i32) {
    %c0_i32 = arith.constant 0 : i32
    %c0_i32_0 = arith.constant 0 : i32
    return %arg1, %c0_i32 : i32, i32
  }
  func.func @transform_2(%arg0: i32, %arg1: i32) -> (i32, i32) {
    %c0_i32 = arith.constant 0 : i32
    %c0_i32_0 = arith.constant 0 : i32
    return %arg0, %c0_i32 : i32, i32
  }
  func.func @transform_3(%arg0: i32, %arg1: i32) -> (i32, i32) {
    %c0_i32 = arith.constant 0 : i32
    %c0_i32_0 = arith.constant 0 : i32
    return %arg0, %c0_i32 : i32, i32
  }
}

module attributes {stable_mosaic.version = 11 : i64} {
  func.func @_mlp2_kernel(%arg0: i32, %arg1: memref<16x128xf32, #tpu.memory_space<vmem>>, %arg2: memref<16x128xf32, #tpu.memory_space<vmem>>, %arg3: memref<128x128xf32, #tpu.memory_space<vmem>>, %arg4: memref<1x128xf32, #tpu.memory_space<vmem>>, %arg5: memref<128x128xf32, #tpu.memory_space<vmem>>, %arg6: memref<1x128xf32, #tpu.memory_space<vmem>>, %arg7: memref<16x128xf32, #tpu.memory_space<vmem>>, %arg8: memref<16x128xf32, #tpu.memory_space<vmem>>, %arg9: memref<16x128xf32, #tpu.memory_space<vmem>>) attributes {dimension_semantics = [#tpu.dimension_semantics<parallel>], iteration_bounds = array<i64: 1>, scalar_prefetch = 0 : i64, scratch_operands = 0 : i64, tpu.core_type = #tpu.core_type<tc>, window_params = [{transform_indices = @transform_0, window_bounds = array<i64: 16, 128>}, {transform_indices = @transform_1, window_bounds = array<i64: 16, 128>}, {pipeline_mode = #tpu.pipeline_mode<synchronous>, transform_indices = @transform_2, window_bounds = array<i64: 128, 128>}, {pipeline_mode = #tpu.pipeline_mode<synchronous>, transform_indices = @transform_3, window_bounds = array<i64: 1, 128>}, {pipeline_mode = #tpu.pipeline_mode<synchronous>, transform_indices = @transform_4, window_bounds = array<i64: 128, 128>}, {pipeline_mode = #tpu.pipeline_mode<synchronous>, transform_indices = @transform_5, window_bounds = array<i64: 1, 128>}, {transform_indices = @transform_6, window_bounds = array<i64: 16, 128>}, {transform_indices = @transform_7, window_bounds = array<i64: 16, 128>}, {transform_indices = @transform_8, window_bounds = array<i64: 16, 128>}]} {
    %c0 = arith.constant 0 : index
    %c0_0 = arith.constant 0 : index
    %0 = vector.load %arg2[%c0, %c0_0] : memref<16x128xf32, #tpu.memory_space<vmem>>, vector<16x128xf32>
    %c0_1 = arith.constant 0 : index
    %c0_2 = arith.constant 0 : index
    %1 = vector.load %arg3[%c0_1, %c0_2] : memref<128x128xf32, #tpu.memory_space<vmem>>, vector<128x128xf32>
    %cst = arith.constant dense<0.000000e+00> : vector<16x128xf32>
    %2 = tpu.matmul %0, %1, %cst {dimension_numbers = #tpu.dot_dimension_numbers<[1], [0], [0], [1], [0, 0, 1, 1], [], []>} : vector<16x128xf32>, vector<128x128xf32>, vector<16x128xf32> -> vector<16x128xf32>
    %c0_3 = arith.constant 0 : index
    %c0_4 = arith.constant 0 : index
    %3 = vector.load %arg4[%c0_3, %c0_4] : memref<1x128xf32, #tpu.memory_space<vmem>>, vector<1x128xf32>
    %4 = vector.broadcast %3 : vector<1x128xf32> to vector<16x128xf32>
    %5 = arith.addf %2, %4 : vector<16x128xf32>
    %c0_5 = arith.constant 0 : index
    %c0_6 = arith.constant 0 : index
    %6 = vector.load %arg1[%c0_5, %c0_6] : memref<16x128xf32, #tpu.memory_space<vmem>>, vector<16x128xf32>
    %7 = arith.addf %5, %6 : vector<16x128xf32>
    %cst_7 = arith.constant 0.000000e+00 : f32
    %8 = vector.broadcast %cst_7 : f32 to vector<16x128xf32>
    %9 = arith.cmpf ogt, %7, %8 : vector<16x128xf32>
    %cst_8 = arith.constant 0.00999999977 : f32
    %10 = vector.broadcast %cst_8 : f32 to vector<16x128xf32>
    %11 = arith.mulf %10, %7 : vector<16x128xf32>
    %12 = arith.select %9, %7, %11 : vector<16x128xi1>, vector<16x128xf32>
    %c0_9 = arith.constant 0 : index
    %c0_10 = arith.constant 0 : index
    %13 = vector.load %arg5[%c0_9, %c0_10] : memref<128x128xf32, #tpu.memory_space<vmem>>, vector<128x128xf32>
    %cst_11 = arith.constant dense<0.000000e+00> : vector<16x128xf32>
    %14 = tpu.matmul %12, %13, %cst_11 {dimension_numbers = #tpu.dot_dimension_numbers<[1], [0], [0], [1], [0, 0, 1, 1], [], []>} : vector<16x128xf32>, vector<128x128xf32>, vector<16x128xf32> -> vector<16x128xf32>
    %c0_12 = arith.constant 0 : index
    %c0_13 = arith.constant 0 : index
    %15 = vector.load %arg6[%c0_12, %c0_13] : memref<1x128xf32, #tpu.memory_space<vmem>>, vector<1x128xf32>
    %16 = vector.broadcast %15 : vector<1x128xf32> to vector<16x128xf32>
    %17 = arith.addf %14, %16 : vector<16x128xf32>
    %cst_14 = arith.constant 0.000000e+00 : f32
    %18 = vector.broadcast %cst_14 : f32 to vector<16x128xf32>
    %19 = arith.cmpf ogt, %17, %18 : vector<16x128xf32>
    %cst_15 = arith.constant 0.00999999977 : f32
    %20 = vector.broadcast %cst_15 : f32 to vector<16x128xf32>
    %21 = arith.mulf %20, %17 : vector<16x128xf32>
    %22 = arith.select %19, %17, %21 : vector<16x128xi1>, vector<16x128xf32>
    %c0_16 = arith.constant 0 : index
    %c0_17 = arith.constant 0 : index
    %23 = vector.load %arg8[%c0_16, %c0_17] : memref<16x128xf32, #tpu.memory_space<vmem>>, vector<16x128xf32>
    tpu.vector_store %arg8[%c0_16, %c0_17], %22 {strides = array<i32>} : memref<16x128xf32, #tpu.memory_space<vmem>>, vector<16x128xf32>,
    %c0_18 = arith.constant 0 : index
    %c0_19 = arith.constant 0 : index
    %24 = vector.load %arg7[%c0_18, %c0_19] : memref<16x128xf32, #tpu.memory_space<vmem>>, vector<16x128xf32>
    %25 = arith.addf %22, %24 : vector<16x128xf32>
    %c0_20 = arith.constant 0 : index
    %c0_21 = arith.constant 0 : index
    %26 = vector.load %arg9[%c0_20, %c0_21] : memref<16x128xf32, #tpu.memory_space<vmem>>, vector<16x128xf32>
    tpu.vector_store %arg9[%c0_20, %c0_21], %25 {strides = array<i32>} : memref<16x128xf32, #tpu.memory_space<vmem>>, vector<16x128xf32>,
    return
  }
  func.func @transform_0(%arg0: i32) -> (i32, i32) {
    %c0_i32 = arith.constant 0 : i32
    %c0_i32_0 = arith.constant 0 : i32
    return %arg0, %c0_i32 : i32, i32
  }
  func.func @transform_1(%arg0: i32) -> (i32, i32) {
    %c0_i32 = arith.constant 0 : i32
    %c0_i32_0 = arith.constant 0 : i32
    return %arg0, %c0_i32 : i32, i32
  }
  func.func @transform_2(%arg0: i32) -> (i32, i32) {
    %c0_i32 = arith.constant 0 : i32
    %c0_i32_0 = arith.constant 0 : i32
    %c0_i32_1 = arith.constant 0 : i32
    return %c0_i32, %c0_i32_0 : i32, i32
  }
  func.func @transform_3(%arg0: i32) -> (i32, i32) {
    %c0_i32 = arith.constant 0 : i32
    %c0_i32_0 = arith.constant 0 : i32
    %c0_i32_1 = arith.constant 0 : i32
    return %c0_i32, %c0_i32_0 : i32, i32
  }
  func.func @transform_4(%arg0: i32) -> (i32, i32) {
    %c0_i32 = arith.constant 0 : i32
    %c0_i32_0 = arith.constant 0 : i32
    %c0_i32_1 = arith.constant 0 : i32
    return %c0_i32, %c0_i32_0 : i32, i32
  }
  func.func @transform_5(%arg0: i32) -> (i32, i32) {
    %c0_i32 = arith.constant 0 : i32
    %c0_i32_0 = arith.constant 0 : i32
    %c0_i32_1 = arith.constant 0 : i32
    return %c0_i32, %c0_i32_0 : i32, i32
  }
  func.func @transform_6(%arg0: i32) -> (i32, i32) {
    %c0_i32 = arith.constant 0 : i32
    %c0_i32_0 = arith.constant 0 : i32
    return %arg0, %c0_i32 : i32, i32
  }
  func.func @transform_7(%arg0: i32) -> (i32, i32) {
    %c0_i32 = arith.constant 0 : i32
    %c0_i32_0 = arith.constant 0 : i32
    return %arg0, %c0_i32 : i32, i32
  }
  func.func @transform_8(%arg0: i32) -> (i32, i32) {
    %c0_i32 = arith.constant 0 : i32
    %c0_i32_0 = arith.constant 0 : i32
    return %arg0, %c0_i32 : i32, i32
  }
}

module attributes {stable_mosaic.version = 11 : i64} {
  func.func @_dense_kernel(%arg0: i32, %arg1: memref<8x128xf32, #tpu.memory_space<vmem>>, %arg2: memref<128x128xf32, #tpu.memory_space<vmem>>, %arg3: memref<1x128xf32, #tpu.memory_space<vmem>>, %arg4: memref<8x128xf32, #tpu.memory_space<vmem>>) attributes {dimension_semantics = [#tpu.dimension_semantics<parallel>], iteration_bounds = array<i64: 1>, scalar_prefetch = 0 : i64, scratch_operands = 0 : i64, tpu.core_type = #tpu.core_type<tc>, window_params = [{transform_indices = @transform_0, window_bounds = array<i64: 8, 128>}, {pipeline_mode = #tpu.pipeline_mode<synchronous>, transform_indices = @transform_1, window_bounds = array<i64: 128, 128>}, {pipeline_mode = #tpu.pipeline_mode<synchronous>, transform_indices = @transform_2, window_bounds = array<i64: 1, 128>}, {transform_indices = @transform_3, window_bounds = array<i64: 8, 128>}]} {
    %c0 = arith.constant 0 : index
    %c0_0 = arith.constant 0 : index
    %0 = vector.load %arg1[%c0, %c0_0] : memref<8x128xf32, #tpu.memory_space<vmem>>, vector<8x128xf32>
    %c0_1 = arith.constant 0 : index
    %c0_2 = arith.constant 0 : index
    %1 = vector.load %arg2[%c0_1, %c0_2] : memref<128x128xf32, #tpu.memory_space<vmem>>, vector<128x128xf32>
    %cst = arith.constant dense<0.000000e+00> : vector<8x128xf32>
    %2 = tpu.matmul %0, %1, %cst {dimension_numbers = #tpu.dot_dimension_numbers<[1], [0], [0], [1], [0, 0, 1, 1], [], []>} : vector<8x128xf32>, vector<128x128xf32>, vector<8x128xf32> -> vector<8x128xf32>
    %c0_3 = arith.constant 0 : index
    %c0_4 = arith.constant 0 : index
    %3 = vector.load %arg3[%c0_3, %c0_4] : memref<1x128xf32, #tpu.memory_space<vmem>>, vector<1x128xf32>
    %4 = vector.broadcast %3 : vector<1x128xf32> to vector<8x128xf32>
    %5 = arith.addf %2, %4 : vector<8x128xf32>
    %cst_5 = arith.constant 0.000000e+00 : f32
    %6 = vector.broadcast %cst_5 : f32 to vector<8x128xf32>
    %7 = arith.cmpf ogt, %5, %6 : vector<8x128xf32>
    %cst_6 = arith.constant 0.00999999977 : f32
    %8 = vector.broadcast %cst_6 : f32 to vector<8x128xf32>
    %9 = arith.mulf %8, %5 : vector<8x128xf32>
    %10 = arith.select %7, %5, %9 : vector<8x128xi1>, vector<8x128xf32>
    %c0_7 = arith.constant 0 : index
    %c0_8 = arith.constant 0 : index
    %11 = vector.load %arg4[%c0_7, %c0_8] : memref<8x128xf32, #tpu.memory_space<vmem>>, vector<8x128xf32>
    tpu.vector_store %arg4[%c0_7, %c0_8], %10 {strides = array<i32>} : memref<8x128xf32, #tpu.memory_space<vmem>>, vector<8x128xf32>,
    return
  }
  func.func @transform_0(%arg0: i32) -> (i32, i32) {
    %c0_i32 = arith.constant 0 : i32
    %c0_i32_0 = arith.constant 0 : i32
    return %arg0, %c0_i32 : i32, i32
  }
  func.func @transform_1(%arg0: i32) -> (i32, i32) {
    %c0_i32 = arith.constant 0 : i32
    %c0_i32_0 = arith.constant 0 : i32
    %c0_i32_1 = arith.constant 0 : i32
    return %c0_i32, %c0_i32_0 : i32, i32
  }
  func.func @transform_2(%arg0: i32) -> (i32, i32) {
    %c0_i32 = arith.constant 0 : i32
    %c0_i32_0 = arith.constant 0 : i32
    %c0_i32_1 = arith.constant 0 : i32
    return %c0_i32, %c0_i32_0 : i32, i32
  }
  func.func @transform_3(%arg0: i32) -> (i32, i32) {
    %c0_i32 = arith.constant 0 : i32
    %c0_i32_0 = arith.constant 0 : i32
    return %arg0, %c0_i32 : i32, i32
  }
}

module attributes {stable_mosaic.version = 11 : i64} {
  func.func @_mlp2_kernel(%arg0: i32, %arg1: memref<8x128xf32, #tpu.memory_space<vmem>>, %arg2: memref<8x128xf32, #tpu.memory_space<vmem>>, %arg3: memref<8x128xf32, #tpu.memory_space<vmem>>, %arg4: memref<384x128xf32, #tpu.memory_space<vmem>>, %arg5: memref<1x128xf32, #tpu.memory_space<vmem>>, %arg6: memref<128x128xf32, #tpu.memory_space<vmem>>, %arg7: memref<1x128xf32, #tpu.memory_space<vmem>>, %arg8: memref<8x128xf32, #tpu.memory_space<vmem>>, %arg9: memref<8x128xf32, #tpu.memory_space<vmem>>) attributes {dimension_semantics = [#tpu.dimension_semantics<parallel>], iteration_bounds = array<i64: 1>, scalar_prefetch = 0 : i64, scratch_operands = 0 : i64, tpu.core_type = #tpu.core_type<tc>, window_params = [{transform_indices = @transform_0, window_bounds = array<i64: 8, 128>}, {transform_indices = @transform_1, window_bounds = array<i64: 8, 128>}, {transform_indices = @transform_2, window_bounds = array<i64: 8, 128>}, {pipeline_mode = #tpu.pipeline_mode<synchronous>, transform_indices = @transform_3, window_bounds = array<i64: 384, 128>}, {pipeline_mode = #tpu.pipeline_mode<synchronous>, transform_indices = @transform_4, window_bounds = array<i64: 1, 128>}, {pipeline_mode = #tpu.pipeline_mode<synchronous>, transform_indices = @transform_5, window_bounds = array<i64: 128, 128>}, {pipeline_mode = #tpu.pipeline_mode<synchronous>, transform_indices = @transform_6, window_bounds = array<i64: 1, 128>}, {transform_indices = @transform_7, window_bounds = array<i64: 8, 128>}, {transform_indices = @transform_8, window_bounds = array<i64: 8, 128>}]} {
    %c0 = arith.constant 0 : index
    %c0_0 = arith.constant 0 : index
    %0 = vector.load %arg1[%c0, %c0_0] : memref<8x128xf32, #tpu.memory_space<vmem>>, vector<8x128xf32>
    %c0_1 = arith.constant 0 : index
    %c0_2 = arith.constant 0 : index
    %1 = vector.load %arg2[%c0_1, %c0_2] : memref<8x128xf32, #tpu.memory_space<vmem>>, vector<8x128xf32>
    %c0_3 = arith.constant 0 : index
    %c0_4 = arith.constant 0 : index
    %2 = vector.load %arg3[%c0_3, %c0_4] : memref<8x128xf32, #tpu.memory_space<vmem>>, vector<8x128xf32>
    %3 = tpu.concatenate %0, %1, %2 in 1 : vector<8x128xf32>, vector<8x128xf32>, vector<8x128xf32> -> vector<8x384xf32>
    %c0_5 = arith.constant 0 : index
    %c0_6 = arith.constant 0 : index
    %4 = vector.load %arg4[%c0_5, %c0_6] : memref<384x128xf32, #tpu.memory_space<vmem>>, vector<384x128xf32>
    %cst = arith.constant dense<0.000000e+00> : vector<8x128xf32>
    %5 = tpu.matmul %3, %4, %cst {dimension_numbers = #tpu.dot_dimension_numbers<[1], [0], [0], [1], [0, 0, 1, 1], [], []>} : vector<8x384xf32>, vector<384x128xf32>, vector<8x128xf32> -> vector<8x128xf32>
    %c0_7 = arith.constant 0 : index
    %c0_8 = arith.constant 0 : index
    %6 = vector.load %arg5[%c0_7, %c0_8] : memref<1x128xf32, #tpu.memory_space<vmem>>, vector<1x128xf32>
    %7 = vector.broadcast %6 : vector<1x128xf32> to vector<8x128xf32>
    %8 = arith.addf %5, %7 : vector<8x128xf32>
    %cst_9 = arith.constant 0.000000e+00 : f32
    %9 = vector.broadcast %cst_9 : f32 to vector<8x128xf32>
    %10 = arith.cmpf ogt, %8, %9 : vector<8x128xf32>
    %cst_10 = arith.constant 0.00999999977 : f32
    %11 = vector.broadcast %cst_10 : f32 to vector<8x128xf32>
    %12 = arith.mulf %11, %8 : vector<8x128xf32>
    %13 = arith.select %10, %8, %12 : vector<8x128xi1>, vector<8x128xf32>
    %c0_11 = arith.constant 0 : index
    %c0_12 = arith.constant 0 : index
    %14 = vector.load %arg6[%c0_11, %c0_12] : memref<128x128xf32, #tpu.memory_space<vmem>>, vector<128x128xf32>
    %cst_13 = arith.constant dense<0.000000e+00> : vector<8x128xf32>
    %15 = tpu.matmul %13, %14, %cst_13 {dimension_numbers = #tpu.dot_dimension_numbers<[1], [0], [0], [1], [0, 0, 1, 1], [], []>} : vector<8x128xf32>, vector<128x128xf32>, vector<8x128xf32> -> vector<8x128xf32>
    %c0_14 = arith.constant 0 : index
    %c0_15 = arith.constant 0 : index
    %16 = vector.load %arg7[%c0_14, %c0_15] : memref<1x128xf32, #tpu.memory_space<vmem>>, vector<1x128xf32>
    %17 = vector.broadcast %16 : vector<1x128xf32> to vector<8x128xf32>
    %18 = arith.addf %15, %17 : vector<8x128xf32>
    %cst_16 = arith.constant 0.000000e+00 : f32
    %19 = vector.broadcast %cst_16 : f32 to vector<8x128xf32>
    %20 = arith.cmpf ogt, %18, %19 : vector<8x128xf32>
    %cst_17 = arith.constant 0.00999999977 : f32
    %21 = vector.broadcast %cst_17 : f32 to vector<8x128xf32>
    %22 = arith.mulf %21, %18 : vector<8x128xf32>
    %23 = arith.select %20, %18, %22 : vector<8x128xi1>, vector<8x128xf32>
    %c0_18 = arith.constant 0 : index
    %c0_19 = arith.constant 0 : index
    %24 = vector.load %arg8[%c0_18, %c0_19] : memref<8x128xf32, #tpu.memory_space<vmem>>, vector<8x128xf32>
    %25 = arith.addf %23, %24 : vector<8x128xf32>
    %c0_20 = arith.constant 0 : index
    %c0_21 = arith.constant 0 : index
    %26 = vector.load %arg9[%c0_20, %c0_21] : memref<8x128xf32, #tpu.memory_space<vmem>>, vector<8x128xf32>
    tpu.vector_store %arg9[%c0_20, %c0_21], %25 {strides = array<i32>} : memref<8x128xf32, #tpu.memory_space<vmem>>, vector<8x128xf32>,
    return
  }
  func.func @transform_0(%arg0: i32) -> (i32, i32) {
    %c0_i32 = arith.constant 0 : i32
    %c0_i32_0 = arith.constant 0 : i32
    return %arg0, %c0_i32 : i32, i32
  }
  func.func @transform_1(%arg0: i32) -> (i32, i32) {
    %c0_i32 = arith.constant 0 : i32
    %c0_i32_0 = arith.constant 0 : i32
    return %arg0, %c0_i32 : i32, i32
  }
  func.func @transform_2(%arg0: i32) -> (i32, i32) {
    %c0_i32 = arith.constant 0 : i32
    %c0_i32_0 = arith.constant 0 : i32
    return %arg0, %c0_i32 : i32, i32
  }
  func.func @transform_3(%arg0: i32) -> (i32, i32) {
    %c0_i32 = arith.constant 0 : i32
    %c0_i32_0 = arith.constant 0 : i32
    %c0_i32_1 = arith.constant 0 : i32
    return %c0_i32, %c0_i32_0 : i32, i32
  }
  func.func @transform_4(%arg0: i32) -> (i32, i32) {
    %c0_i32 = arith.constant 0 : i32
    %c0_i32_0 = arith.constant 0 : i32
    %c0_i32_1 = arith.constant 0 : i32
    return %c0_i32, %c0_i32_0 : i32, i32
  }
  func.func @transform_5(%arg0: i32) -> (i32, i32) {
    %c0_i32 = arith.constant 0 : i32
    %c0_i32_0 = arith.constant 0 : i32
    %c0_i32_1 = arith.constant 0 : i32
    return %c0_i32, %c0_i32_0 : i32, i32
  }
  func.func @transform_6(%arg0: i32) -> (i32, i32) {
    %c0_i32 = arith.constant 0 : i32
    %c0_i32_0 = arith.constant 0 : i32
    %c0_i32_1 = arith.constant 0 : i32
    return %c0_i32, %c0_i32_0 : i32, i32
  }
  func.func @transform_7(%arg0: i32) -> (i32, i32) {
    %c0_i32 = arith.constant 0 : i32
    %c0_i32_0 = arith.constant 0 : i32
    return %arg0, %c0_i32 : i32, i32
  }
  func.func @transform_8(%arg0: i32) -> (i32, i32) {
    %c0_i32 = arith.constant 0 : i32
    %c0_i32_0 = arith.constant 0 : i32
    return %arg0, %c0_i32 : i32, i32
  }
}

module attributes {stable_mosaic.version = 11 : i64} {
  func.func @_agg_kernel(%arg0: i32, %arg1: i32, %arg2: memref<8x8xf32, #tpu.memory_space<vmem>>, %arg3: memref<8x128xf32, #tpu.memory_space<vmem>>, %arg4: memref<8x1xf32, #tpu.memory_space<vmem>>, %arg5: memref<8x128xf32, #tpu.memory_space<vmem>>, %arg6: memref<8x128xf32, #tpu.memory_space<vmem>>) attributes {dimension_semantics = [#tpu.dimension_semantics<parallel>, #tpu.dimension_semantics<arbitrary>], iteration_bounds = array<i64: 1, 1>, scalar_prefetch = 0 : i64, scratch_operands = 1 : i64, tpu.core_type = #tpu.core_type<tc>, window_params = [{transform_indices = @transform_0, window_bounds = array<i64: 8, 8>}, {transform_indices = @transform_1, window_bounds = array<i64: 8, 128>}, {transform_indices = @transform_2, window_bounds = array<i64: 8, 1>}, {transform_indices = @transform_3, window_bounds = array<i64: 8, 128>}]} {
    %c0_i32 = arith.constant 0 : i32
    %0 = arith.cmpi eq, %arg1, %c0_i32 : i32
    %1 = arith.extui %0 : i1 to i32
    %c0_i32_0 = arith.constant 0 : i32
    %2 = arith.cmpi ne, %1, %c0_i32_0 : i32
    scf.if %2 {
      %cst_10 = arith.constant 0.000000e+00 : f32
      %12 = vector.broadcast %cst_10 : f32 to vector<8x128xf32>
      %c0_11 = arith.constant 0 : index
      %c0_12 = arith.constant 0 : index
      %13 = vector.load %arg6[%c0_11, %c0_12] : memref<8x128xf32, #tpu.memory_space<vmem>>, vector<8x128xf32>
      tpu.vector_store %arg6[%c0_11, %c0_12], %12 {strides = array<i32>} : memref<8x128xf32, #tpu.memory_space<vmem>>, vector<8x128xf32>,
    } else {
    }
    %c0 = arith.constant 0 : index
    %c0_1 = arith.constant 0 : index
    %3 = vector.load %arg6[%c0, %c0_1] : memref<8x128xf32, #tpu.memory_space<vmem>>, vector<8x128xf32>
    %c0_2 = arith.constant 0 : index
    %c0_3 = arith.constant 0 : index
    %4 = vector.load %arg2[%c0_2, %c0_3] : memref<8x8xf32, #tpu.memory_space<vmem>>, vector<8x8xf32>
    %c0_4 = arith.constant 0 : index
    %c0_5 = arith.constant 0 : index
    %5 = vector.load %arg3[%c0_4, %c0_5] : memref<8x128xf32, #tpu.memory_space<vmem>>, vector<8x128xf32>
    %cst = arith.constant dense<0.000000e+00> : vector<8x128xf32>
    %6 = tpu.matmul %4, %5, %cst {dimension_numbers = #tpu.dot_dimension_numbers<[1], [0], [0], [1], [0, 0, 1, 1], [], []>} : vector<8x8xf32>, vector<8x128xf32>, vector<8x128xf32> -> vector<8x128xf32>
    %7 = arith.addf %3, %6 : vector<8x128xf32>
    %c0_6 = arith.constant 0 : index
    %c0_7 = arith.constant 0 : index
    %8 = vector.load %arg6[%c0_6, %c0_7] : memref<8x128xf32, #tpu.memory_space<vmem>>, vector<8x128xf32>
    tpu.vector_store %arg6[%c0_6, %c0_7], %7 {strides = array<i32>} : memref<8x128xf32, #tpu.memory_space<vmem>>, vector<8x128xf32>,
    %c0_i32_8 = arith.constant 0 : i32
    %9 = arith.cmpi eq, %arg1, %c0_i32_8 : i32
    %10 = arith.extui %9 : i1 to i32
    %c0_i32_9 = arith.constant 0 : i32
    %11 = arith.cmpi ne, %10, %c0_i32_9 : i32
    scf.if %11 {
      %c0_10 = arith.constant 0 : index
      %c0_11 = arith.constant 0 : index
      %12 = vector.load %arg6[%c0_10, %c0_11] : memref<8x128xf32, #tpu.memory_space<vmem>>, vector<8x128xf32>
      %c0_12 = arith.constant 0 : index
      %c0_13 = arith.constant 0 : index
      %13 = vector.load %arg4[%c0_12, %c0_13] : memref<8x1xf32, #tpu.memory_space<vmem>>, vector<8x1xf32>
      %14 = vector.broadcast %13 : vector<8x1xf32> to vector<8x128xf32>
      %15 = arith.divf %12, %14 : vector<8x128xf32>
      %c0_14 = arith.constant 0 : index
      %c0_15 = arith.constant 0 : index
      %16 = vector.load %arg5[%c0_14, %c0_15] : memref<8x128xf32, #tpu.memory_space<vmem>>, vector<8x128xf32>
      tpu.vector_store %arg5[%c0_14, %c0_15], %15 {strides = array<i32>} : memref<8x128xf32, #tpu.memory_space<vmem>>, vector<8x128xf32>,
    } else {
    }
    return
  }
  func.func @transform_0(%arg0: i32, %arg1: i32) -> (i32, i32) {
    %c0_i32 = arith.constant 0 : i32
    return %arg0, %arg1 : i32, i32
  }
  func.func @transform_1(%arg0: i32, %arg1: i32) -> (i32, i32) {
    %c0_i32 = arith.constant 0 : i32
    %c0_i32_0 = arith.constant 0 : i32
    return %arg1, %c0_i32 : i32, i32
  }
  func.func @transform_2(%arg0: i32, %arg1: i32) -> (i32, i32) {
    %c0_i32 = arith.constant 0 : i32
    %c0_i32_0 = arith.constant 0 : i32
    return %arg0, %c0_i32 : i32, i32
  }
  func.func @transform_3(%arg0: i32, %arg1: i32) -> (i32, i32) {
    %c0_i32 = arith.constant 0 : i32
    %c0_i32_0 = arith.constant 0 : i32
    return %arg0, %c0_i32 : i32, i32
  }
}

module attributes {stable_mosaic.version = 11 : i64} {
  func.func @_lstm_kernel(%arg0: memref<8x128xf32, #tpu.memory_space<vmem>>, %arg1: memref<8x128xf32, #tpu.memory_space<vmem>>, %arg2: memref<8x128xf32, #tpu.memory_space<vmem>>, %arg3: memref<8x128xf32, #tpu.memory_space<vmem>>, %arg4: memref<128x512xf32, #tpu.memory_space<vmem>>, %arg5: memref<128x512xf32, #tpu.memory_space<vmem>>, %arg6: memref<128x512xf32, #tpu.memory_space<vmem>>, %arg7: memref<1x512xf32, #tpu.memory_space<vmem>>, %arg8: memref<8x128xf32, #tpu.memory_space<vmem>>, %arg9: memref<8x128xf32, #tpu.memory_space<vmem>>) attributes {dimension_semantics = [], scalar_prefetch = 0 : i64, scratch_operands = 0 : i64, tpu.core_type = #tpu.core_type<tc>} {
    %c0 = arith.constant 0 : index
    %c0_0 = arith.constant 0 : index
    %0 = vector.load %arg0[%c0, %c0_0] : memref<8x128xf32, #tpu.memory_space<vmem>>, vector<8x128xf32>
    %c0_1 = arith.constant 0 : index
    %c0_2 = arith.constant 0 : index
    %1 = vector.load %arg4[%c0_1, %c0_2] : memref<128x512xf32, #tpu.memory_space<vmem>>, vector<128x512xf32>
    %cst = arith.constant dense<0.000000e+00> : vector<8x512xf32>
    %2 = tpu.matmul %0, %1, %cst {dimension_numbers = #tpu.dot_dimension_numbers<[1], [0], [0], [1], [0, 0, 1, 1], [], []>} : vector<8x128xf32>, vector<128x512xf32>, vector<8x512xf32> -> vector<8x512xf32>
    %c0_3 = arith.constant 0 : index
    %c0_4 = arith.constant 0 : index
    %3 = vector.load %arg1[%c0_3, %c0_4] : memref<8x128xf32, #tpu.memory_space<vmem>>, vector<8x128xf32>
    %c0_5 = arith.constant 0 : index
    %c0_6 = arith.constant 0 : index
    %4 = vector.load %arg5[%c0_5, %c0_6] : memref<128x512xf32, #tpu.memory_space<vmem>>, vector<128x512xf32>
    %cst_7 = arith.constant dense<0.000000e+00> : vector<8x512xf32>
    %5 = tpu.matmul %3, %4, %cst_7 {dimension_numbers = #tpu.dot_dimension_numbers<[1], [0], [0], [1], [0, 0, 1, 1], [], []>} : vector<8x128xf32>, vector<128x512xf32>, vector<8x512xf32> -> vector<8x512xf32>
    %6 = arith.addf %2, %5 : vector<8x512xf32>
    %c0_8 = arith.constant 0 : index
    %c0_9 = arith.constant 0 : index
    %7 = vector.load %arg2[%c0_8, %c0_9] : memref<8x128xf32, #tpu.memory_space<vmem>>, vector<8x128xf32>
    %c0_10 = arith.constant 0 : index
    %c0_11 = arith.constant 0 : index
    %8 = vector.load %arg6[%c0_10, %c0_11] : memref<128x512xf32, #tpu.memory_space<vmem>>, vector<128x512xf32>
    %cst_12 = arith.constant dense<0.000000e+00> : vector<8x512xf32>
    %9 = tpu.matmul %7, %8, %cst_12 {dimension_numbers = #tpu.dot_dimension_numbers<[1], [0], [0], [1], [0, 0, 1, 1], [], []>} : vector<8x128xf32>, vector<128x512xf32>, vector<8x512xf32> -> vector<8x512xf32>
    %10 = arith.addf %6, %9 : vector<8x512xf32>
    %c0_13 = arith.constant 0 : index
    %c0_14 = arith.constant 0 : index
    %11 = vector.load %arg7[%c0_13, %c0_14] : memref<1x512xf32, #tpu.memory_space<vmem>>, vector<1x512xf32>
    %12 = vector.broadcast %11 : vector<1x512xf32> to vector<8x512xf32>
    %13 = arith.addf %10, %12 : vector<8x512xf32>
    %14 = vector.extract_strided_slice %13 {offsets = [0, 0], sizes = [8, 128], strides = [1, 1]} : vector<8x512xf32> to vector<8x128xf32>
    %15 = arith.negf %14 : vector<8x128xf32>
    %16 = math.exp %15 : vector<8x128xf32>
    %cst_15 = arith.constant 1.000000e+00 : f32
    %17 = vector.broadcast %cst_15 : f32 to vector<8x128xf32>
    %18 = arith.addf %17, %16 : vector<8x128xf32>
    %19 = arith.divf %17, %18 : vector<8x128xf32>
    %20 = vector.extract_strided_slice %13 {offsets = [0, 128], sizes = [8, 128], strides = [1, 1]} : vector<8x512xf32> to vector<8x128xf32>
    %21 = arith.negf %20 : vector<8x128xf32>
    %22 = math.exp %21 : vector<8x128xf32>
    %cst_16 = arith.constant 1.000000e+00 : f32
    %23 = vector.broadcast %cst_16 : f32 to vector<8x128xf32>
    %24 = arith.addf %23, %22 : vector<8x128xf32>
    %25 = arith.divf %23, %24 : vector<8x128xf32>
    %26 = vector.extract_strided_slice %13 {offsets = [0, 256], sizes = [8, 128], strides = [1, 1]} : vector<8x512xf32> to vector<8x128xf32>
    %27 = math.tanh %26 : vector<8x128xf32>
    %28 = vector.extract_strided_slice %13 {offsets = [0, 384], sizes = [8, 128], strides = [1, 1]} : vector<8x512xf32> to vector<8x128xf32>
    %29 = arith.negf %28 : vector<8x128xf32>
    %30 = math.exp %29 : vector<8x128xf32>
    %cst_17 = arith.constant 1.000000e+00 : f32
    %31 = vector.broadcast %cst_17 : f32 to vector<8x128xf32>
    %32 = arith.addf %31, %30 : vector<8x128xf32>
    %33 = arith.divf %31, %32 : vector<8x128xf32>
    %c0_18 = arith.constant 0 : index
    %c0_19 = arith.constant 0 : index
    %34 = vector.load %arg3[%c0_18, %c0_19] : memref<8x128xf32, #tpu.memory_space<vmem>>, vector<8x128xf32>
    %35 = arith.mulf %25, %34 : vector<8x128xf32>
    %36 = arith.mulf %19, %27 : vector<8x128xf32>
    %37 = arith.addf %35, %36 : vector<8x128xf32>
    %c0_20 = arith.constant 0 : index
    %c0_21 = arith.constant 0 : index
    %38 = vector.load %arg9[%c0_20, %c0_21] : memref<8x128xf32, #tpu.memory_space<vmem>>, vector<8x128xf32>
    tpu.vector_store %arg9[%c0_20, %c0_21], %37 {strides = array<i32>} : memref<8x128xf32, #tpu.memory_space<vmem>>, vector<8x128xf32>,
    %39 = math.tanh %37 : vector<8x128xf32>
    %40 = arith.mulf %33, %39 : vector<8x128xf32>
    %c0_22 = arith.constant 0 : index
    %c0_23 = arith.constant 0 : index
    %41 = vector.load %arg8[%c0_22, %c0_23] : memref<8x128xf32, #tpu.memory_space<vmem>>, vector<8x128xf32>
    tpu.vector_store %arg8[%c0_22, %c0_23], %40 {strides = array<i32>} : memref<8x128xf32, #tpu.memory_space<vmem>>, vector<8x128xf32>,
    return
  }
}

module attributes {stable_mosaic.version = 11 : i64} {
  func.func @_s2s_attn_kernel(%arg0: i32, %arg1: memref<8x16xf32, #tpu.memory_space<vmem>>, %arg2: memref<16x128xf32, #tpu.memory_space<vmem>>, %arg3: memref<8x128xf32, #tpu.memory_space<vmem>>, %arg4: memref<8x128xf32, #tpu.memory_space<vmem>>, %arg5: memref<8x1xf32, #tpu.memory_space<vmem>>, %arg6: memref<8x1xf32, #tpu.memory_space<vmem>>, %arg7: memref<8x128xf32, #tpu.memory_space<vmem>>) attributes {dimension_semantics = [#tpu.dimension_semantics<arbitrary>], iteration_bounds = array<i64: 1>, scalar_prefetch = 0 : i64, scratch_operands = 3 : i64, tpu.core_type = #tpu.core_type<tc>, window_params = [{transform_indices = @transform_0, window_bounds = array<i64: 8, 16>}, {transform_indices = @transform_1, window_bounds = array<i64: 16, 128>}, {pipeline_mode = #tpu.pipeline_mode<synchronous>, transform_indices = @transform_2, window_bounds = array<i64: 8, 128>}, {pipeline_mode = #tpu.pipeline_mode<synchronous>, transform_indices = @transform_3, window_bounds = array<i64: 8, 128>}]} {
    %c0_i32 = arith.constant 0 : i32
    %0 = arith.cmpi eq, %arg0, %c0_i32 : i32
    %1 = arith.extui %0 : i1 to i32
    %c0_i32_0 = arith.constant 0 : i32
    %2 = arith.cmpi ne, %1, %c0_i32_0 : i32
    scf.if %2 {
      %cst_29 = arith.constant -1.000000e+30 : f32
      %41 = vector.broadcast %cst_29 : f32 to vector<8x1xf32>
      %c0_30 = arith.constant 0 : index
      %c0_31 = arith.constant 0 : index
      %42 = vector.load %arg5[%c0_30, %c0_31] : memref<8x1xf32, #tpu.memory_space<vmem>>, vector<8x1xf32>
      tpu.vector_store %arg5[%c0_30, %c0_31], %41 {strides = array<i32>} : memref<8x1xf32, #tpu.memory_space<vmem>>, vector<8x1xf32>,
      %cst_32 = arith.constant 0.000000e+00 : f32
      %43 = vector.broadcast %cst_32 : f32 to vector<8x1xf32>
      %c0_33 = arith.constant 0 : index
      %c0_34 = arith.constant 0 : index
      %44 = vector.load %arg6[%c0_33, %c0_34] : memref<8x1xf32, #tpu.memory_space<vmem>>, vector<8x1xf32>
      tpu.vector_store %arg6[%c0_33, %c0_34], %43 {strides = array<i32>} : memref<8x1xf32, #tpu.memory_space<vmem>>, vector<8x1xf32>,
      %cst_35 = arith.constant 0.000000e+00 : f32
      %45 = vector.broadcast %cst_35 : f32 to vector<8x128xf32>
      %c0_36 = arith.constant 0 : index
      %c0_37 = arith.constant 0 : index
      %46 = vector.load %arg7[%c0_36, %c0_37] : memref<8x128xf32, #tpu.memory_space<vmem>>, vector<8x128xf32>
      tpu.vector_store %arg7[%c0_36, %c0_37], %45 {strides = array<i32>} : memref<8x128xf32, #tpu.memory_space<vmem>>, vector<8x128xf32>,
    } else {
    }
    %c0 = arith.constant 0 : index
    %c0_1 = arith.constant 0 : index
    %3 = vector.load %arg1[%c0, %c0_1] : memref<8x16xf32, #tpu.memory_space<vmem>>, vector<8x16xf32>
    %c0_2 = arith.constant 0 : index
    %c0_3 = arith.constant 0 : index
    %4 = vector.load %arg2[%c0_2, %c0_3] : memref<16x128xf32, #tpu.memory_space<vmem>>, vector<16x128xf32>
    %c0_4 = arith.constant 0 : index
    %c0_5 = arith.constant 0 : index
    %5 = vector.load %arg3[%c0_4, %c0_5] : memref<8x128xf32, #tpu.memory_space<vmem>>, vector<8x128xf32>
    %cst = arith.constant dense<0.000000e+00> : vector<8x16xf32>
    %6 = tpu.matmul %5, %4, %cst {dimension_numbers = #tpu.dot_dimension_numbers<[1], [1], [0], [0], [0, 0, 1, 0], [], []>} : vector<8x128xf32>, vector<16x128xf32>, vector<8x16xf32> -> vector<8x16xf32>
    %cst_6 = arith.constant 0.000000e+00 : f32
    %7 = vector.broadcast %cst_6 : f32 to vector<8x16xf32>
    %8 = arith.cmpf ogt, %3, %7 : vector<8x16xf32>
    %cst_7 = arith.constant -1.000000e+30 : f32
    %9 = vector.broadcast %cst_7 : f32 to vector<8x16xf32>
    %10 = arith.select %8, %6, %9 : vector<8x16xi1>, vector<8x16xf32>
    %c0_8 = arith.constant 0 : index
    %c0_9 = arith.constant 0 : index
    %11 = vector.load %arg5[%c0_8, %c0_9] : memref<8x1xf32, #tpu.memory_space<vmem>>, vector<8x1xf32>
    %cst_10 = arith.constant dense<0xFF800000> : vector<8xf32>
    %12 = vector.multi_reduction <maximumf>, %10, %cst_10 [1] : vector<8x16xf32> to vector<8xf32>
    %13 = vector.shape_cast %12 : vector<8xf32> to vector<8x1xf32>
    %14 = arith.maximumf %11, %13 : vector<8x1xf32>
    %c0_11 = arith.constant 0 : index
    %c0_12 = arith.constant 0 : index
    %15 = vector.load %arg5[%c0_11, %c0_12] : memref<8x1xf32, #tpu.memory_space<vmem>>, vector<8x1xf32>
    %16 = arith.subf %15, %14 : vector<8x1xf32>
    %17 = math.exp %16 : vector<8x1xf32>
    %cst_13 = arith.constant 0.000000e+00 : f32
    %18 = vector.broadcast %cst_13 : f32 to vector<8x16xf32>
    %19 = arith.cmpf ogt, %3, %18 : vector<8x16xf32>
    %20 = vector.broadcast %14 : vector<8x1xf32> to vector<8x16xf32>
    %21 = arith.subf %10, %20 : vector<8x16xf32>
    %22 = math.exp %21 : vector<8x16xf32>
    %cst_14 = arith.constant 0.000000e+00 : f32
    %23 = vector.broadcast %cst_14 : f32 to vector<8x16xf32>
    %24 = arith.select %19, %22, %23 : vector<8x16xi1>, vector<8x16xf32>
    %c0_15 = arith.constant 0 : index
    %c0_16 = arith.constant 0 : index
    %25 = vector.load %arg6[%c0_15, %c0_16] : memref<8x1xf32, #tpu.memory_space<vmem>>, vector<8x1xf32>
    %26 = arith.mulf %17, %25 : vector<8x1xf32>
    %cst_17 = arith.constant dense<0.000000e+00> : vector<8xf32>
    %27 = vector.multi_reduction <add>, %24, %cst_17 [1] : vector<8x16xf32> to vector<8xf32>
    %28 = vector.shape_cast %27 : vector<8xf32> to vector<8x1xf32>
    %29 = arith.addf %26, %28 : vector<8x1xf32>
    %c0_18 = arith.constant 0 : index
    %c0_19 = arith.constant 0 : index
    %30 = vector.load %arg6[%c0_18, %c0_19] : memref<8x1xf32, #tpu.memory_space<vmem>>, vector<8x1xf32>
    tpu.vector_store %arg6[%c0_18, %c0_19], %29 {strides = array<i32>} : memref<8x1xf32, #tpu.memory_space<vmem>>, vector<8x1xf32>,
    %c0_20 = arith.constant 0 : index
    %c0_21 = arith.constant 0 : index
    %31 = vector.load %arg7[%c0_20, %c0_21] : memref<8x128xf32, #tpu.memory_space<vmem>>, vector<8x128xf32>
    %32 = vector.broadcast %17 : vector<8x1xf32> to vector<8x128xf32>
    %33 = arith.mulf %32, %31 : vector<8x128xf32>
    %cst_22 = arith.constant dense<0.000000e+00> : vector<8x128xf32>
    %34 = tpu.matmul %24, %4, %cst_22 {dimension_numbers = #tpu.dot_dimension_numbers<[1], [0], [0], [1], [0, 0, 1, 1], [], []>} : vector<8x16xf32>, vector<16x128xf32>, vector<8x128xf32> -> vector<8x128xf32>
    %35 = arith.addf %33, %34 : vector<8x128xf32>
    %c0_23 = arith.constant 0 : index
    %c0_24 = arith.constant 0 : index
    %36 = vector.load %arg7[%c0_23, %c0_24] : memref<8x128xf32, #tpu.memory_space<vmem>>, vector<8x128xf32>
    tpu.vector_store %arg7[%c0_23, %c0_24], %35 {strides = array<i32>} : memref<8x128xf32, #tpu.memory_space<vmem>>, vector<8x128xf32>,
    %c0_25 = arith.constant 0 : index
    %c0_26 = arith.constant 0 : index
    %37 = vector.load %arg5[%c0_25, %c0_26] : memref<8x1xf32, #tpu.memory_space<vmem>>, vector<8x1xf32>
    tpu.vector_store %arg5[%c0_25, %c0_26], %14 {strides = array<i32>} : memref<8x1xf32, #tpu.memory_space<vmem>>, vector<8x1xf32>,
    %c0_i32_27 = arith.constant 0 : i32
    %38 = arith.cmpi eq, %arg0, %c0_i32_27 : i32
    %39 = arith.extui %38 : i1 to i32
    %c0_i32_28 = arith.constant 0 : i32
    %40 = arith.cmpi ne, %39, %c0_i32_28 : i32
    scf.if %40 {
      %c0_29 = arith.constant 0 : index
      %c0_30 = arith.constant 0 : index
      %41 = vector.load %arg7[%c0_29, %c0_30] : memref<8x128xf32, #tpu.memory_space<vmem>>, vector<8x128xf32>
      %c0_31 = arith.constant 0 : index
      %c0_32 = arith.constant 0 : index
      %42 = vector.load %arg6[%c0_31, %c0_32] : memref<8x1xf32, #tpu.memory_space<vmem>>, vector<8x1xf32>
      %cst_33 = arith.constant 1.000000e+00 : f32
      %43 = vector.broadcast %cst_33 : f32 to vector<8x1xf32>
      %44 = arith.maximumf %42, %43 : vector<8x1xf32>
      %45 = vector.broadcast %44 : vector<8x1xf32> to vector<8x128xf32>
      %46 = arith.divf %41, %45 : vector<8x128xf32>
      %c0_34 = arith.constant 0 : index
      %c0_35 = arith.constant 0 : index
      %47 = vector.load %arg4[%c0_34, %c0_35] : memref<8x128xf32, #tpu.memory_space<vmem>>, vector<8x128xf32>
      tpu.vector_store %arg4[%c0_34, %c0_35], %46 {strides = array<i32>} : memref<8x128xf32, #tpu.memory_space<vmem>>, vector<8x128xf32>,
    } else {
    }
    return
  }
  func.func @transform_0(%arg0: i32) -> (i32, i32) {
    %c0_i32 = arith.constant 0 : i32
    %c0_i32_0 = arith.constant 0 : i32
    return %c0_i32, %arg0 : i32, i32
  }
  func.func @transform_1(%arg0: i32) -> (i32, i32) {
    %c0_i32 = arith.constant 0 : i32
    %c0_i32_0 = arith.constant 0 : i32
    return %arg0, %c0_i32 : i32, i32
  }
  func.func @transform_2(%arg0: i32) -> (i32, i32) {
    %c0_i32 = arith.constant 0 : i32
    %c0_i32_0 = arith.constant 0 : i32
    %c0_i32_1 = arith.constant 0 : i32
    return %c0_i32, %c0_i32_0 : i32, i32
  }
  func.func @transform_3(%arg0: i32) -> (i32, i32) {
    %c0_i32 = arith.constant 0 : i32
    %c0_i32_0 = arith.constant 0 : i32
    %c0_i32_1 = arith.constant 0 : i32
    return %c0_i32, %c0_i32_0 : i32, i32
  }
}

module attributes {stable_mosaic.version = 11 : i64} {
  func.func @_s2s_attn_kernel(%arg0: i32, %arg1: memref<8x8xf32, #tpu.memory_space<vmem>>, %arg2: memref<8x128xf32, #tpu.memory_space<vmem>>, %arg3: memref<8x128xf32, #tpu.memory_space<vmem>>, %arg4: memref<8x128xf32, #tpu.memory_space<vmem>>, %arg5: memref<8x1xf32, #tpu.memory_space<vmem>>, %arg6: memref<8x1xf32, #tpu.memory_space<vmem>>, %arg7: memref<8x128xf32, #tpu.memory_space<vmem>>) attributes {dimension_semantics = [#tpu.dimension_semantics<arbitrary>], iteration_bounds = array<i64: 1>, scalar_prefetch = 0 : i64, scratch_operands = 3 : i64, tpu.core_type = #tpu.core_type<tc>, window_params = [{transform_indices = @transform_0, window_bounds = array<i64: 8, 8>}, {transform_indices = @transform_1, window_bounds = array<i64: 8, 128>}, {pipeline_mode = #tpu.pipeline_mode<synchronous>, transform_indices = @transform_2, window_bounds = array<i64: 8, 128>}, {pipeline_mode = #tpu.pipeline_mode<synchronous>, transform_indices = @transform_3, window_bounds = array<i64: 8, 128>}]} {
    %c0_i32 = arith.constant 0 : i32
    %0 = arith.cmpi eq, %arg0, %c0_i32 : i32
    %1 = arith.extui %0 : i1 to i32
    %c0_i32_0 = arith.constant 0 : i32
    %2 = arith.cmpi ne, %1, %c0_i32_0 : i32
    scf.if %2 {
      %cst_29 = arith.constant -1.000000e+30 : f32
      %41 = vector.broadcast %cst_29 : f32 to vector<8x1xf32>
      %c0_30 = arith.constant 0 : index
      %c0_31 = arith.constant 0 : index
      %42 = vector.load %arg5[%c0_30, %c0_31] : memref<8x1xf32, #tpu.memory_space<vmem>>, vector<8x1xf32>
      tpu.vector_store %arg5[%c0_30, %c0_31], %41 {strides = array<i32>} : memref<8x1xf32, #tpu.memory_space<vmem>>, vector<8x1xf32>,
      %cst_32 = arith.constant 0.000000e+00 : f32
      %43 = vector.broadcast %cst_32 : f32 to vector<8x1xf32>
      %c0_33 = arith.constant 0 : index
      %c0_34 = arith.constant 0 : index
      %44 = vector.load %arg6[%c0_33, %c0_34] : memref<8x1xf32, #tpu.memory_space<vmem>>, vector<8x1xf32>
      tpu.vector_store %arg6[%c0_33, %c0_34], %43 {strides = array<i32>} : memref<8x1xf32, #tpu.memory_space<vmem>>, vector<8x1xf32>,
      %cst_35 = arith.constant 0.000000e+00 : f32
      %45 = vector.broadcast %cst_35 : f32 to vector<8x128xf32>
      %c0_36 = arith.constant 0 : index
      %c0_37 = arith.constant 0 : index
      %46 = vector.load %arg7[%c0_36, %c0_37] : memref<8x128xf32, #tpu.memory_space<vmem>>, vector<8x128xf32>
      tpu.vector_store %arg7[%c0_36, %c0_37], %45 {strides = array<i32>} : memref<8x128xf32, #tpu.memory_space<vmem>>, vector<8x128xf32>,
    } else {
    }
    %c0 = arith.constant 0 : index
    %c0_1 = arith.constant 0 : index
    %3 = vector.load %arg1[%c0, %c0_1] : memref<8x8xf32, #tpu.memory_space<vmem>>, vector<8x8xf32>
    %c0_2 = arith.constant 0 : index
    %c0_3 = arith.constant 0 : index
    %4 = vector.load %arg2[%c0_2, %c0_3] : memref<8x128xf32, #tpu.memory_space<vmem>>, vector<8x128xf32>
    %c0_4 = arith.constant 0 : index
    %c0_5 = arith.constant 0 : index
    %5 = vector.load %arg3[%c0_4, %c0_5] : memref<8x128xf32, #tpu.memory_space<vmem>>, vector<8x128xf32>
    %cst = arith.constant dense<0.000000e+00> : vector<8x8xf32>
    %6 = tpu.matmul %5, %4, %cst {dimension_numbers = #tpu.dot_dimension_numbers<[1], [1], [0], [0], [0, 0, 1, 0], [], []>} : vector<8x128xf32>, vector<8x128xf32>, vector<8x8xf32> -> vector<8x8xf32>
    %cst_6 = arith.constant 0.000000e+00 : f32
    %7 = vector.broadcast %cst_6 : f32 to vector<8x8xf32>
    %8 = arith.cmpf ogt, %3, %7 : vector<8x8xf32>
    %cst_7 = arith.constant -1.000000e+30 : f32
    %9 = vector.broadcast %cst_7 : f32 to vector<8x8xf32>
    %10 = arith.select %8, %6, %9 : vector<8x8xi1>, vector<8x8xf32>
    %c0_8 = arith.constant 0 : index
    %c0_9 = arith.constant 0 : index
    %11 = vector.load %arg5[%c0_8, %c0_9] : memref<8x1xf32, #tpu.memory_space<vmem>>, vector<8x1xf32>
    %cst_10 = arith.constant dense<0xFF800000> : vector<8xf32>
    %12 = vector.multi_reduction <maximumf>, %10, %cst_10 [1] : vector<8x8xf32> to vector<8xf32>
    %13 = vector.shape_cast %12 : vector<8xf32> to vector<8x1xf32>
    %14 = arith.maximumf %11, %13 : vector<8x1xf32>
    %c0_11 = arith.constant 0 : index
    %c0_12 = arith.constant 0 : index
    %15 = vector.load %arg5[%c0_11, %c0_12] : memref<8x1xf32, #tpu.memory_space<vmem>>, vector<8x1xf32>
    %16 = arith.subf %15, %14 : vector<8x1xf32>
    %17 = math.exp %16 : vector<8x1xf32>
    %cst_13 = arith.constant 0.000000e+00 : f32
    %18 = vector.broadcast %cst_13 : f32 to vector<8x8xf32>
    %19 = arith.cmpf ogt, %3, %18 : vector<8x8xf32>
    %20 = vector.broadcast %14 : vector<8x1xf32> to vector<8x8xf32>
    %21 = arith.subf %10, %20 : vector<8x8xf32>
    %22 = math.exp %21 : vector<8x8xf32>
    %cst_14 = arith.constant 0.000000e+00 : f32
    %23 = vector.broadcast %cst_14 : f32 to vector<8x8xf32>
    %24 = arith.select %19, %22, %23 : vector<8x8xi1>, vector<8x8xf32>
    %c0_15 = arith.constant 0 : index
    %c0_16 = arith.constant 0 : index
    %25 = vector.load %arg6[%c0_15, %c0_16] : memref<8x1xf32, #tpu.memory_space<vmem>>, vector<8x1xf32>
    %26 = arith.mulf %17, %25 : vector<8x1xf32>
    %cst_17 = arith.constant dense<0.000000e+00> : vector<8xf32>
    %27 = vector.multi_reduction <add>, %24, %cst_17 [1] : vector<8x8xf32> to vector<8xf32>
    %28 = vector.shape_cast %27 : vector<8xf32> to vector<8x1xf32>
    %29 = arith.addf %26, %28 : vector<8x1xf32>
    %c0_18 = arith.constant 0 : index
    %c0_19 = arith.constant 0 : index
    %30 = vector.load %arg6[%c0_18, %c0_19] : memref<8x1xf32, #tpu.memory_space<vmem>>, vector<8x1xf32>
    tpu.vector_store %arg6[%c0_18, %c0_19], %29 {strides = array<i32>} : memref<8x1xf32, #tpu.memory_space<vmem>>, vector<8x1xf32>,
    %c0_20 = arith.constant 0 : index
    %c0_21 = arith.constant 0 : index
    %31 = vector.load %arg7[%c0_20, %c0_21] : memref<8x128xf32, #tpu.memory_space<vmem>>, vector<8x128xf32>
    %32 = vector.broadcast %17 : vector<8x1xf32> to vector<8x128xf32>
    %33 = arith.mulf %32, %31 : vector<8x128xf32>
    %cst_22 = arith.constant dense<0.000000e+00> : vector<8x128xf32>
    %34 = tpu.matmul %24, %4, %cst_22 {dimension_numbers = #tpu.dot_dimension_numbers<[1], [0], [0], [1], [0, 0, 1, 1], [], []>} : vector<8x8xf32>, vector<8x128xf32>, vector<8x128xf32> -> vector<8x128xf32>
    %35 = arith.addf %33, %34 : vector<8x128xf32>
    %c0_23 = arith.constant 0 : index
    %c0_24 = arith.constant 0 : index
    %36 = vector.load %arg7[%c0_23, %c0_24] : memref<8x128xf32, #tpu.memory_space<vmem>>, vector<8x128xf32>
    tpu.vector_store %arg7[%c0_23, %c0_24], %35 {strides = array<i32>} : memref<8x128xf32, #tpu.memory_space<vmem>>, vector<8x128xf32>,
    %c0_25 = arith.constant 0 : index
    %c0_26 = arith.constant 0 : index
    %37 = vector.load %arg5[%c0_25, %c0_26] : memref<8x1xf32, #tpu.memory_space<vmem>>, vector<8x1xf32>
    tpu.vector_store %arg5[%c0_25, %c0_26], %14 {strides = array<i32>} : memref<8x1xf32, #tpu.memory_space<vmem>>, vector<8x1xf32>,
    %c0_i32_27 = arith.constant 0 : i32
    %38 = arith.cmpi eq, %arg0, %c0_i32_27 : i32
    %39 = arith.extui %38 : i1 to i32
    %c0_i32_28 = arith.constant 0 : i32
    %40 = arith.cmpi ne, %39, %c0_i32_28 : i32
    scf.if %40 {
      %c0_29 = arith.constant 0 : index
      %c0_30 = arith.constant 0 : index
      %41 = vector.load %arg7[%c0_29, %c0_30] : memref<8x128xf32, #tpu.memory_space<vmem>>, vector<8x128xf32>
      %c0_31 = arith.constant 0 : index
      %c0_32 = arith.constant 0 : index
      %42 = vector.load %arg6[%c0_31, %c0_32] : memref<8x1xf32, #tpu.memory_space<vmem>>, vector<8x1xf32>
      %cst_33 = arith.constant 1.000000e+00 : f32
      %43 = vector.broadcast %cst_33 : f32 to vector<8x1xf32>
      %44 = arith.maximumf %42, %43 : vector<8x1xf32>
      %45 = vector.broadcast %44 : vector<8x1xf32> to vector<8x128xf32>
      %46 = arith.divf %41, %45 : vector<8x128xf32>
      %c0_34 = arith.constant 0 : index
      %c0_35 = arith.constant 0 : index
      %47 = vector.load %arg4[%c0_34, %c0_35] : memref<8x128xf32, #tpu.memory_space<vmem>>, vector<8x128xf32>
      tpu.vector_store %arg4[%c0_34, %c0_35], %46 {strides = array<i32>} : memref<8x128xf32, #tpu.memory_space<vmem>>, vector<8x128xf32>,
    } else {
    }
    return
  }
  func.func @transform_0(%arg0: i32) -> (i32, i32) {
    %c0_i32 = arith.constant 0 : i32
    %c0_i32_0 = arith.constant 0 : i32
    return %c0_i32, %arg0 : i32, i32
  }
  func.func @transform_1(%arg0: i32) -> (i32, i32) {
    %c0_i32 = arith.constant 0 : i32
    %c0_i32_0 = arith.constant 0 : i32
    return %arg0, %c0_i32 : i32, i32
  }
  func.func @transform_2(%arg0: i32) -> (i32, i32) {
    %c0_i32 = arith.constant 0 : i32
    %c0_i32_0 = arith.constant 0 : i32
    %c0_i32_1 = arith.constant 0 : i32
    return %c0_i32, %c0_i32_0 : i32, i32
  }
  func.func @transform_3(%arg0: i32) -> (i32, i32) {
    %c0_i32 = arith.constant 0 : i32
    %c0_i32_0 = arith.constant 0 : i32
    %c0_i32_1 = arith.constant 0 : i32
    return %c0_i32, %c0_i32_0 : i32, i32
  }
}

module attributes {stable_mosaic.version = 11 : i64} {
  func.func @_lstm_kernel(%arg0: memref<8x128xf32, #tpu.memory_space<vmem>>, %arg1: memref<8x128xf32, #tpu.memory_space<vmem>>, %arg2: memref<8x128xf32, #tpu.memory_space<vmem>>, %arg3: memref<8x128xf32, #tpu.memory_space<vmem>>, %arg4: memref<128x512xf32, #tpu.memory_space<vmem>>, %arg5: memref<128x512xf32, #tpu.memory_space<vmem>>, %arg6: memref<128x512xf32, #tpu.memory_space<vmem>>, %arg7: memref<1x512xf32, #tpu.memory_space<vmem>>, %arg8: memref<8x128xf32, #tpu.memory_space<vmem>>, %arg9: memref<8x128xf32, #tpu.memory_space<vmem>>) attributes {dimension_semantics = [], scalar_prefetch = 0 : i64, scratch_operands = 0 : i64, tpu.core_type = #tpu.core_type<tc>} {
    %c0 = arith.constant 0 : index
    %c0_0 = arith.constant 0 : index
    %0 = vector.load %arg0[%c0, %c0_0] : memref<8x128xf32, #tpu.memory_space<vmem>>, vector<8x128xf32>
    %c0_1 = arith.constant 0 : index
    %c0_2 = arith.constant 0 : index
    %1 = vector.load %arg4[%c0_1, %c0_2] : memref<128x512xf32, #tpu.memory_space<vmem>>, vector<128x512xf32>
    %cst = arith.constant dense<0.000000e+00> : vector<8x512xf32>
    %2 = tpu.matmul %0, %1, %cst {dimension_numbers = #tpu.dot_dimension_numbers<[1], [0], [0], [1], [0, 0, 1, 1], [], []>} : vector<8x128xf32>, vector<128x512xf32>, vector<8x512xf32> -> vector<8x512xf32>
    %c0_3 = arith.constant 0 : index
    %c0_4 = arith.constant 0 : index
    %3 = vector.load %arg1[%c0_3, %c0_4] : memref<8x128xf32, #tpu.memory_space<vmem>>, vector<8x128xf32>
    %c0_5 = arith.constant 0 : index
    %c0_6 = arith.constant 0 : index
    %4 = vector.load %arg5[%c0_5, %c0_6] : memref<128x512xf32, #tpu.memory_space<vmem>>, vector<128x512xf32>
    %cst_7 = arith.constant dense<0.000000e+00> : vector<8x512xf32>
    %5 = tpu.matmul %3, %4, %cst_7 {dimension_numbers = #tpu.dot_dimension_numbers<[1], [0], [0], [1], [0, 0, 1, 1], [], []>} : vector<8x128xf32>, vector<128x512xf32>, vector<8x512xf32> -> vector<8x512xf32>
    %6 = arith.addf %2, %5 : vector<8x512xf32>
    %c0_8 = arith.constant 0 : index
    %c0_9 = arith.constant 0 : index
    %7 = vector.load %arg2[%c0_8, %c0_9] : memref<8x128xf32, #tpu.memory_space<vmem>>, vector<8x128xf32>
    %c0_10 = arith.constant 0 : index
    %c0_11 = arith.constant 0 : index
    %8 = vector.load %arg6[%c0_10, %c0_11] : memref<128x512xf32, #tpu.memory_space<vmem>>, vector<128x512xf32>
    %cst_12 = arith.constant dense<0.000000e+00> : vector<8x512xf32>
    %9 = tpu.matmul %7, %8, %cst_12 {dimension_numbers = #tpu.dot_dimension_numbers<[1], [0], [0], [1], [0, 0, 1, 1], [], []>} : vector<8x128xf32>, vector<128x512xf32>, vector<8x512xf32> -> vector<8x512xf32>
    %10 = arith.addf %6, %9 : vector<8x512xf32>
    %c0_13 = arith.constant 0 : index
    %c0_14 = arith.constant 0 : index
    %11 = vector.load %arg7[%c0_13, %c0_14] : memref<1x512xf32, #tpu.memory_space<vmem>>, vector<1x512xf32>
    %12 = vector.broadcast %11 : vector<1x512xf32> to vector<8x512xf32>
    %13 = arith.addf %10, %12 : vector<8x512xf32>
    %14 = vector.extract_strided_slice %13 {offsets = [0, 0], sizes = [8, 128], strides = [1, 1]} : vector<8x512xf32> to vector<8x128xf32>
    %15 = arith.negf %14 : vector<8x128xf32>
    %16 = math.exp %15 : vector<8x128xf32>
    %cst_15 = arith.constant 1.000000e+00 : f32
    %17 = vector.broadcast %cst_15 : f32 to vector<8x128xf32>
    %18 = arith.addf %17, %16 : vector<8x128xf32>
    %19 = arith.divf %17, %18 : vector<8x128xf32>
    %20 = vector.extract_strided_slice %13 {offsets = [0, 128], sizes = [8, 128], strides = [1, 1]} : vector<8x512xf32> to vector<8x128xf32>
    %21 = arith.negf %20 : vector<8x128xf32>
    %22 = math.exp %21 : vector<8x128xf32>
    %cst_16 = arith.constant 1.000000e+00 : f32
    %23 = vector.broadcast %cst_16 : f32 to vector<8x128xf32>
    %24 = arith.addf %23, %22 : vector<8x128xf32>
    %25 = arith.divf %23, %24 : vector<8x128xf32>
    %26 = vector.extract_strided_slice %13 {offsets = [0, 256], sizes = [8, 128], strides = [1, 1]} : vector<8x512xf32> to vector<8x128xf32>
    %27 = math.tanh %26 : vector<8x128xf32>
    %28 = vector.extract_strided_slice %13 {offsets = [0, 384], sizes = [8, 128], strides = [1, 1]} : vector<8x512xf32> to vector<8x128xf32>
    %29 = arith.negf %28 : vector<8x128xf32>
    %30 = math.exp %29 : vector<8x128xf32>
    %cst_17 = arith.constant 1.000000e+00 : f32
    %31 = vector.broadcast %cst_17 : f32 to vector<8x128xf32>
    %32 = arith.addf %31, %30 : vector<8x128xf32>
    %33 = arith.divf %31, %32 : vector<8x128xf32>
    %c0_18 = arith.constant 0 : index
    %c0_19 = arith.constant 0 : index
    %34 = vector.load %arg3[%c0_18, %c0_19] : memref<8x128xf32, #tpu.memory_space<vmem>>, vector<8x128xf32>
    %35 = arith.mulf %25, %34 : vector<8x128xf32>
    %36 = arith.mulf %19, %27 : vector<8x128xf32>
    %37 = arith.addf %35, %36 : vector<8x128xf32>
    %c0_20 = arith.constant 0 : index
    %c0_21 = arith.constant 0 : index
    %38 = vector.load %arg9[%c0_20, %c0_21] : memref<8x128xf32, #tpu.memory_space<vmem>>, vector<8x128xf32>
    tpu.vector_store %arg9[%c0_20, %c0_21], %37 {strides = array<i32>} : memref<8x128xf32, #tpu.memory_space<vmem>>, vector<8x128xf32>,
    %39 = math.tanh %37 : vector<8x128xf32>
    %40 = arith.mulf %33, %39 : vector<8x128xf32>
    %c0_22 = arith.constant 0 : index
    %c0_23 = arith.constant 0 : index
    %41 = vector.load %arg8[%c0_22, %c0_23] : memref<8x128xf32, #tpu.memory_space<vmem>>, vector<8x128xf32>
    tpu.vector_store %arg8[%c0_22, %c0_23], %40 {strides = array<i32>} : memref<8x128xf32, #tpu.memory_space<vmem>>, vector<8x128xf32>,
    return
  }
}

module attributes {stable_mosaic.version = 11 : i64} {
  func.func @_mlp2_kernel(%arg0: i32, %arg1: memref<8x128xf32, #tpu.memory_space<vmem>>, %arg2: memref<8x128xf32, #tpu.memory_space<vmem>>, %arg3: memref<256x128xf32, #tpu.memory_space<vmem>>, %arg4: memref<1x128xf32, #tpu.memory_space<vmem>>, %arg5: memref<128x128xf32, #tpu.memory_space<vmem>>, %arg6: memref<1x128xf32, #tpu.memory_space<vmem>>, %arg7: memref<8x128xf32, #tpu.memory_space<vmem>>) attributes {dimension_semantics = [#tpu.dimension_semantics<parallel>], iteration_bounds = array<i64: 1>, scalar_prefetch = 0 : i64, scratch_operands = 0 : i64, tpu.core_type = #tpu.core_type<tc>, window_params = [{transform_indices = @transform_0, window_bounds = array<i64: 8, 128>}, {transform_indices = @transform_1, window_bounds = array<i64: 8, 128>}, {pipeline_mode = #tpu.pipeline_mode<synchronous>, transform_indices = @transform_2, window_bounds = array<i64: 256, 128>}, {pipeline_mode = #tpu.pipeline_mode<synchronous>, transform_indices = @transform_3, window_bounds = array<i64: 1, 128>}, {pipeline_mode = #tpu.pipeline_mode<synchronous>, transform_indices = @transform_4, window_bounds = array<i64: 128, 128>}, {pipeline_mode = #tpu.pipeline_mode<synchronous>, transform_indices = @transform_5, window_bounds = array<i64: 1, 128>}, {transform_indices = @transform_6, window_bounds = array<i64: 8, 128>}]} {
    %c0 = arith.constant 0 : index
    %c0_0 = arith.constant 0 : index
    %0 = vector.load %arg1[%c0, %c0_0] : memref<8x128xf32, #tpu.memory_space<vmem>>, vector<8x128xf32>
    %c0_1 = arith.constant 0 : index
    %c0_2 = arith.constant 0 : index
    %1 = vector.load %arg2[%c0_1, %c0_2] : memref<8x128xf32, #tpu.memory_space<vmem>>, vector<8x128xf32>
    %2 = tpu.concatenate %0, %1 in 1 : vector<8x128xf32>, vector<8x128xf32> -> vector<8x256xf32>
    %c0_3 = arith.constant 0 : index
    %c0_4 = arith.constant 0 : index
    %3 = vector.load %arg3[%c0_3, %c0_4] : memref<256x128xf32, #tpu.memory_space<vmem>>, vector<256x128xf32>
    %cst = arith.constant dense<0.000000e+00> : vector<8x128xf32>
    %4 = tpu.matmul %2, %3, %cst {dimension_numbers = #tpu.dot_dimension_numbers<[1], [0], [0], [1], [0, 0, 1, 1], [], []>} : vector<8x256xf32>, vector<256x128xf32>, vector<8x128xf32> -> vector<8x128xf32>
    %c0_5 = arith.constant 0 : index
    %c0_6 = arith.constant 0 : index
    %5 = vector.load %arg4[%c0_5, %c0_6] : memref<1x128xf32, #tpu.memory_space<vmem>>, vector<1x128xf32>
    %6 = vector.broadcast %5 : vector<1x128xf32> to vector<8x128xf32>
    %7 = arith.addf %4, %6 : vector<8x128xf32>
    %cst_7 = arith.constant 0.000000e+00 : f32
    %8 = vector.broadcast %cst_7 : f32 to vector<8x128xf32>
    %9 = arith.cmpf ogt, %7, %8 : vector<8x128xf32>
    %cst_8 = arith.constant 0.00999999977 : f32
    %10 = vector.broadcast %cst_8 : f32 to vector<8x128xf32>
    %11 = arith.mulf %10, %7 : vector<8x128xf32>
    %12 = arith.select %9, %7, %11 : vector<8x128xi1>, vector<8x128xf32>
    %c0_9 = arith.constant 0 : index
    %c0_10 = arith.constant 0 : index
    %13 = vector.load %arg5[%c0_9, %c0_10] : memref<128x128xf32, #tpu.memory_space<vmem>>, vector<128x128xf32>
    %cst_11 = arith.constant dense<0.000000e+00> : vector<8x128xf32>
    %14 = tpu.matmul %12, %13, %cst_11 {dimension_numbers = #tpu.dot_dimension_numbers<[1], [0], [0], [1], [0, 0, 1, 1], [], []>} : vector<8x128xf32>, vector<128x128xf32>, vector<8x128xf32> -> vector<8x128xf32>
    %c0_12 = arith.constant 0 : index
    %c0_13 = arith.constant 0 : index
    %15 = vector.load %arg6[%c0_12, %c0_13] : memref<1x128xf32, #tpu.memory_space<vmem>>, vector<1x128xf32>
    %16 = vector.broadcast %15 : vector<1x128xf32> to vector<8x128xf32>
    %17 = arith.addf %14, %16 : vector<8x128xf32>
    %c0_14 = arith.constant 0 : index
    %c0_15 = arith.constant 0 : index
    %18 = vector.load %arg7[%c0_14, %c0_15] : memref<8x128xf32, #tpu.memory_space<vmem>>, vector<8x128xf32>
    tpu.vector_store %arg7[%c0_14, %c0_15], %17 {strides = array<i32>} : memref<8x128xf32, #tpu.memory_space<vmem>>, vector<8x128xf32>,
    return
  }
  func.func @transform_0(%arg0: i32) -> (i32, i32) {
    %c0_i32 = arith.constant 0 : i32
    %c0_i32_0 = arith.constant 0 : i32
    return %arg0, %c0_i32 : i32, i32
  }
  func.func @transform_1(%arg0: i32) -> (i32, i32) {
    %c0_i32 = arith.constant 0 : i32
    %c0_i32_0 = arith.constant 0 : i32
    return %arg0, %c0_i32 : i32, i32
  }
  func.func @transform_2(%arg0: i32) -> (i32, i32) {
    %c0_i32 = arith.constant 0 : i32
    %c0_i32_0 = arith.constant 0 : i32
    %c0_i32_1 = arith.constant 0 : i32
    return %c0_i32, %c0_i32_0 : i32, i32
  }
  func.func @transform_3(%arg0: i32) -> (i32, i32) {
    %c0_i32 = arith.constant 0 : i32
    %c0_i32_0 = arith.constant 0 : i32
    %c0_i32_1 = arith.constant 0 : i32
    return %c0_i32, %c0_i32_0 : i32, i32
  }
  func.func @transform_4(%arg0: i32) -> (i32, i32) {
    %c0_i32 = arith.constant 0 : i32
    %c0_i32_0 = arith.constant 0 : i32
    %c0_i32_1 = arith.constant 0 : i32
    return %c0_i32, %c0_i32_0 : i32, i32
  }
  func.func @transform_5(%arg0: i32) -> (i32, i32) {
    %c0_i32 = arith.constant 0 : i32
    %c0_i32_0 = arith.constant 0 : i32
    %c0_i32_1 = arith.constant 0 : i32
    return %c0_i32, %c0_i32_0 : i32, i32
  }
  func.func @transform_6(%arg0: i32) -> (i32, i32) {
    %c0_i32 = arith.constant 0 : i32
    %c0_i32_0 = arith.constant 0 : i32
    return %arg0, %c0_i32 : i32, i32
  }
}

module attributes {stable_mosaic.version = 11 : i64} {
  func.func @_mlp2_kernel(%arg0: i32, %arg1: memref<8x128xf32, #tpu.memory_space<vmem>>, %arg2: memref<8x128xf32, #tpu.memory_space<vmem>>, %arg3: memref<8x128xf32, #tpu.memory_space<vmem>>, %arg4: memref<8x128xf32, #tpu.memory_space<vmem>>, %arg5: memref<8x128xf32, #tpu.memory_space<vmem>>, %arg6: memref<640x128xf32, #tpu.memory_space<vmem>>, %arg7: memref<1x128xf32, #tpu.memory_space<vmem>>, %arg8: memref<128x128xf32, #tpu.memory_space<vmem>>, %arg9: memref<1x128xf32, #tpu.memory_space<vmem>>, %arg10: memref<8x128xf32, #tpu.memory_space<vmem>>) attributes {dimension_semantics = [#tpu.dimension_semantics<parallel>], iteration_bounds = array<i64: 1>, scalar_prefetch = 0 : i64, scratch_operands = 0 : i64, tpu.core_type = #tpu.core_type<tc>, window_params = [{transform_indices = @transform_0, window_bounds = array<i64: 8, 128>}, {transform_indices = @transform_1, window_bounds = array<i64: 8, 128>}, {transform_indices = @transform_2, window_bounds = array<i64: 8, 128>}, {transform_indices = @transform_3, window_bounds = array<i64: 8, 128>}, {transform_indices = @transform_4, window_bounds = array<i64: 8, 128>}, {pipeline_mode = #tpu.pipeline_mode<synchronous>, transform_indices = @transform_5, window_bounds = array<i64: 640, 128>}, {pipeline_mode = #tpu.pipeline_mode<synchronous>, transform_indices = @transform_6, window_bounds = array<i64: 1, 128>}, {pipeline_mode = #tpu.pipeline_mode<synchronous>, transform_indices = @transform_7, window_bounds = array<i64: 128, 128>}, {pipeline_mode = #tpu.pipeline_mode<synchronous>, transform_indices = @transform_8, window_bounds = array<i64: 1, 128>}, {transform_indices = @transform_9, window_bounds = array<i64: 8, 128>}]} {
    %c0 = arith.constant 0 : index
    %c0_0 = arith.constant 0 : index
    %0 = vector.load %arg1[%c0, %c0_0] : memref<8x128xf32, #tpu.memory_space<vmem>>, vector<8x128xf32>
    %c0_1 = arith.constant 0 : index
    %c0_2 = arith.constant 0 : index
    %1 = vector.load %arg2[%c0_1, %c0_2] : memref<8x128xf32, #tpu.memory_space<vmem>>, vector<8x128xf32>
    %c0_3 = arith.constant 0 : index
    %c0_4 = arith.constant 0 : index
    %2 = vector.load %arg3[%c0_3, %c0_4] : memref<8x128xf32, #tpu.memory_space<vmem>>, vector<8x128xf32>
    %c0_5 = arith.constant 0 : index
    %c0_6 = arith.constant 0 : index
    %3 = vector.load %arg4[%c0_5, %c0_6] : memref<8x128xf32, #tpu.memory_space<vmem>>, vector<8x128xf32>
    %c0_7 = arith.constant 0 : index
    %c0_8 = arith.constant 0 : index
    %4 = vector.load %arg5[%c0_7, %c0_8] : memref<8x128xf32, #tpu.memory_space<vmem>>, vector<8x128xf32>
    %5 = tpu.concatenate %0, %1, %2, %3, %4 in 1 : vector<8x128xf32>, vector<8x128xf32>, vector<8x128xf32>, vector<8x128xf32>, vector<8x128xf32> -> vector<8x640xf32>
    %c0_9 = arith.constant 0 : index
    %c0_10 = arith.constant 0 : index
    %6 = vector.load %arg6[%c0_9, %c0_10] : memref<640x128xf32, #tpu.memory_space<vmem>>, vector<640x128xf32>
    %cst = arith.constant dense<0.000000e+00> : vector<8x128xf32>
    %7 = tpu.matmul %5, %6, %cst {dimension_numbers = #tpu.dot_dimension_numbers<[1], [0], [0], [1], [0, 0, 1, 1], [], []>} : vector<8x640xf32>, vector<640x128xf32>, vector<8x128xf32> -> vector<8x128xf32>
    %c0_11 = arith.constant 0 : index
    %c0_12 = arith.constant 0 : index
    %8 = vector.load %arg7[%c0_11, %c0_12] : memref<1x128xf32, #tpu.memory_space<vmem>>, vector<1x128xf32>
    %9 = vector.broadcast %8 : vector<1x128xf32> to vector<8x128xf32>
    %10 = arith.addf %7, %9 : vector<8x128xf32>
    %cst_13 = arith.constant 0.000000e+00 : f32
    %11 = vector.broadcast %cst_13 : f32 to vector<8x128xf32>
    %12 = arith.cmpf ogt, %10, %11 : vector<8x128xf32>
    %cst_14 = arith.constant 0.00999999977 : f32
    %13 = vector.broadcast %cst_14 : f32 to vector<8x128xf32>
    %14 = arith.mulf %13, %10 : vector<8x128xf32>
    %15 = arith.select %12, %10, %14 : vector<8x128xi1>, vector<8x128xf32>
    %c0_15 = arith.constant 0 : index
    %c0_16 = arith.constant 0 : index
    %16 = vector.load %arg8[%c0_15, %c0_16] : memref<128x128xf32, #tpu.memory_space<vmem>>, vector<128x128xf32>
    %cst_17 = arith.constant dense<0.000000e+00> : vector<8x128xf32>
    %17 = tpu.matmul %15, %16, %cst_17 {dimension_numbers = #tpu.dot_dimension_numbers<[1], [0], [0], [1], [0, 0, 1, 1], [], []>} : vector<8x128xf32>, vector<128x128xf32>, vector<8x128xf32> -> vector<8x128xf32>
    %c0_18 = arith.constant 0 : index
    %c0_19 = arith.constant 0 : index
    %18 = vector.load %arg9[%c0_18, %c0_19] : memref<1x128xf32, #tpu.memory_space<vmem>>, vector<1x128xf32>
    %19 = vector.broadcast %18 : vector<1x128xf32> to vector<8x128xf32>
    %20 = arith.addf %17, %19 : vector<8x128xf32>
    %c0_20 = arith.constant 0 : index
    %c0_21 = arith.constant 0 : index
    %21 = vector.load %arg10[%c0_20, %c0_21] : memref<8x128xf32, #tpu.memory_space<vmem>>, vector<8x128xf32>
    tpu.vector_store %arg10[%c0_20, %c0_21], %20 {strides = array<i32>} : memref<8x128xf32, #tpu.memory_space<vmem>>, vector<8x128xf32>,
    return
  }
  func.func @transform_0(%arg0: i32) -> (i32, i32) {
    %c0_i32 = arith.constant 0 : i32
    %c0_i32_0 = arith.constant 0 : i32
    return %arg0, %c0_i32 : i32, i32
  }
  func.func @transform_1(%arg0: i32) -> (i32, i32) {
    %c0_i32 = arith.constant 0 : i32
    %c0_i32_0 = arith.constant 0 : i32
    return %arg0, %c0_i32 : i32, i32
  }
  func.func @transform_2(%arg0: i32) -> (i32, i32) {
    %c0_i32 = arith.constant 0 : i32
    %c0_i32_0 = arith.constant 0 : i32
    return %arg0, %c0_i32 : i32, i32
  }
  func.func @transform_3(%arg0: i32) -> (i32, i32) {
    %c0_i32 = arith.constant 0 : i32
    %c0_i32_0 = arith.constant 0 : i32
    return %arg0, %c0_i32 : i32, i32
  }
  func.func @transform_4(%arg0: i32) -> (i32, i32) {
    %c0_i32 = arith.constant 0 : i32
    %c0_i32_0 = arith.constant 0 : i32
    return %arg0, %c0_i32 : i32, i32
  }
  func.func @transform_5(%arg0: i32) -> (i32, i32) {
    %c0_i32 = arith.constant 0 : i32
    %c0_i32_0 = arith.constant 0 : i32
    %c0_i32_1 = arith.constant 0 : i32
    return %c0_i32, %c0_i32_0 : i32, i32
  }
  func.func @transform_6(%arg0: i32) -> (i32, i32) {
    %c0_i32 = arith.constant 0 : i32
    %c0_i32_0 = arith.constant 0 : i32
    %c0_i32_1 = arith.constant 0 : i32
    return %c0_i32, %c0_i32_0 : i32, i32
  }
  func.func @transform_7(%arg0: i32) -> (i32, i32) {
    %c0_i32 = arith.constant 0 : i32
    %c0_i32_0 = arith.constant 0 : i32
    %c0_i32_1 = arith.constant 0 : i32
    return %c0_i32, %c0_i32_0 : i32, i32
  }
  func.func @transform_8(%arg0: i32) -> (i32, i32) {
    %c0_i32 = arith.constant 0 : i32
    %c0_i32_0 = arith.constant 0 : i32
    %c0_i32_1 = arith.constant 0 : i32
    return %c0_i32, %c0_i32_0 : i32, i32
  }
  func.func @transform_9(%arg0: i32) -> (i32, i32) {
    %c0_i32 = arith.constant 0 : i32
    %c0_i32_0 = arith.constant 0 : i32
    return %arg0, %c0_i32 : i32, i32
  }
}

</mosaic_0001>

<llo_original>
// kernel: forward.31
$region0: #{forward.31}
  #allocation0 [shape = 'u32[]', space=smem, size = 0x4, offset = 0x4, fixed_abs, tag = 'smem constant byte address 0x4 - core index']
  #allocation1 [shape = 'u32[144,128]{1,0:T(1,128)}', space=vmem, size = 0x12000, scoped, tag = 'internal scratch']
  %s0 = inlined_call_operand.vmem [shape: f32[8,128], index: 0, kind: input, shape index: {}]
  %s1 = inlined_call_operand.vmem [shape: f32[128,128], index: 1, kind: input, shape index: {}]
  %s2 = inlined_call_operand.vmem [shape: f32[1,128], index: 2, kind: input, shape index: {}]
  %s3 = inlined_call_operand.vmem [shape: f32[8,128], index: 3, kind: output, shape index: {}]
  %s4 = sld [smem:[#allocation0]]
  $region22: #{forward.31} parent=0
    _
  %s6 = ssub.s32 1, %s4
  %s7 = scalar_select 0, %s6, %s4
  // Predicated region
  $region2: #{forward.31} parent=0 // pred_check
    _
  $region3: #{forward.31} parent=0 // pred_check_branch
    %9 = sbr.rel (0) target = $region5
  $region4: #{forward.31} parent=0 // pred_region
    _
  $region5: #{forward.31} parent=0 // pred_fallthru
    _
  // Predicated region
  $region6: #{forward.31} parent=0 // pred_check
    _
  $region7: #{forward.31} parent=0 // pred_check_branch
    %11 = sbr.rel (0) target = $region9
  $region8: #{forward.31} parent=0 // pred_region
    _
  $region9: #{forward.31} parent=0 // pred_fallthru
    _
  // Predicated region
  $region10: #{forward.31} parent=0 // pred_check
    _
  $region11: #{forward.31} parent=0 // pred_check_branch
    %13 = sbr.rel (0) target = $region13
  $region12: #{forward.31} parent=0 // pred_region
    _
  $region13: #{forward.31} parent=0 // pred_fallthru
    _
  %v14 = vld [vmem:[%s0] sm:$0xff]
  %v15 = vld [vmem:[%s1] sm:$0xff]
  %v16 = vld [vmem:[%s1 + $0x8] sm:$0xff]
  %v17 = vld [vmem:[%s1 + $0x10] sm:$0xff]
  %v18 = vld [vmem:[%s1 + $0x18] sm:$0xff]
  %v19 = vld [vmem:[%s1 + $0x20] sm:$0xff]
  %v20 = vld [vmem:[%s1 + $0x28] sm:$0xff]
  %v21 = vld [vmem:[%s1 + $0x30] sm:$0xff]
  %v22 = vld [vmem:[%s1 + $0x38] sm:$0xff]
  %v23 = vld [vmem:[%s1 + $0x40] sm:$0xff]
  %v24 = vld [vmem:[%s1 + $0x48] sm:$0xff]
  %v25 = vld [vmem:[%s1 + $0x50] sm:$0xff]
  %v26 = vld [vmem:[%s1 + $0x58] sm:$0xff]
  %v27 = vld [vmem:[%s1 + $0x60] sm:$0xff]
  %v28 = vld [vmem:[%s1 + $0x68] sm:$0xff]
  %v29 = vld [vmem:[%s1 + $0x70] sm:$0xff]
  %v30 = vld [vmem:[%s1 + $0x78] sm:$0xff]
  %v31 = vld [vmem:[%s2] sm:$0x1]
  %v33 = vlaneseq
  %v34 = vshrl.u32 %v33, 7
  %v35 = vsub.s32 0, %v34
  %v36 = vrot.slane %v31, %v35
  %38 = vmatprep.subr.mxu0 0.0
  %39 = vmatpush1.msra.mxu0 %v30
  %40 = vmatprep.subr.mxu0 0.0
  %41 = vmatpush1.msra.mxu0 %v29
  %42 = vmatprep.subr.mxu0 0.0
  %43 = vmatpush1.msra.mxu0 %v28
  %44 = vmatprep.subr.mxu0 0.0
  %45 = vmatpush1.msra.mxu0 %v27
  %46 = vmatprep.subr.mxu0 0.0
  %47 = vmatpush1.msra.mxu0 %v26
  %48 = vmatprep.subr.mxu0 0.0
  %49 = vmatpush1.msra.mxu0 %v25
  %50 = vmatprep.subr.mxu0 0.0
  %51 = vmatpush1.msra.mxu0 %v24
  %52 = vmatprep.subr.mxu0 0.0
  %53 = vmatpush1.msra.mxu0 %v23
  %54 = vmatprep.subr.mxu0 0.0
  %55 = vmatpush1.msra.mxu0 %v22
  %56 = vmatprep.subr.mxu0 0.0
  %57 = vmatpush1.msra.mxu0 %v21
  %58 = vmatprep.subr.mxu0 0.0
  %59 = vmatpush1.msra.mxu0 %v20
  %60 = vmatprep.subr.mxu0 0.0
  %61 = vmatpush1.msra.mxu0 %v19
  %62 = vmatprep.subr.mxu0 0.0
  %63 = vmatpush1.msra.mxu0 %v18
  %64 = vmatprep.subr.mxu0 0.0
  %65 = vmatpush1.msra.mxu0 %v17
  %66 = vmatprep.subr.mxu0 0.0
  %67 = vmatpush1.msra.mxu0 %v16
  %68 = vmatprep.subr.mxu0 0.0
  %69 = vmatpush1.msra.mxu0 %v15
  %70 = vmatprep.subr.mxu0 0.0
  %71 = vmatpush2.msra.mxu0 0.0
  %72 = vmatprep.subr.mxu0 0.0
  %73 = vmatpush2.msra.mxu0 0.0
  %74 = vmatprep.subr.mxu0 0.0
  %75 = vmatpush2.msra.mxu0 0.0
  %76 = vmatprep.subr.mxu0 0.0
  %77 = vmatpush2.msra.mxu0 0.0
  %78 = vmatprep.subr.mxu0 0.0
  %79 = vmatpush2.msra.mxu0 0.0
  %80 = vmatprep.subr.mxu0 0.0
  %81 = vmatpush2.msra.mxu0 0.0
  %82 = vmatprep.subr.mxu0 0.0
  %83 = vmatpush2.msra.mxu0 0.0
  %84 = vmatprep.subr.mxu0 0.0
  %85 = vmatpush2.msra.mxu0 0.0
  %86 = vmatprep.subr.mxu0 0.0
  %87 = vmatpush2.msra.mxu0 0.0
  %88 = vmatprep.subr.mxu0 0.0
  %89 = vmatpush2.msra.mxu0 0.0
  %90 = vmatprep.subr.mxu0 0.0
  %91 = vmatpush2.msra.mxu0 0.0
  %92 = vmatprep.subr.mxu0 0.0
  %93 = vmatpush2.msra.mxu0 0.0
  %94 = vmatprep.subr.mxu0 0.0
  %95 = vmatpush2.msra.mxu0 0.0
  %96 = vmatprep.subr.mxu0 0.0
  %97 = vmatpush2.msra.mxu0 0.0
  %98 = vmatprep.subr.mxu0 0.0
  %99 = vmatpush2.msra.mxu0 0.0
  %100 = vmatprep.subr.mxu0 0.0
  %101 = vmatpush2.msra.mxu0 0.0
  %102 = vmatprep.mubr.f32.mxu0 0.0
  %103 = vmatmul.mubr.f32.gmra.mxu0 %v14
  %v104 = vpop.f32.mrf.mxu0
  %v105 = vadd.f32 %v36, %v104
  %v106 = vpop.f32.mrf.mxu0
  %107 = vdwg.mxu0
  %108 = vst [vmem:[%s3] sm:$0xff] %v105
  // Predicated region
  $region14: #{forward.31} parent=0 // pred_check
    _
  $region15: #{forward.31} parent=0 // pred_check_branch
    %110 = sbr.rel (0) target = $region17
  $region16: #{forward.31} parent=0 // pred_region
    _
  $region17: #{forward.31} parent=0 // pred_fallthru
    _
  // Predicated region
  $region18: #{forward.31} parent=0 // pred_check
    _
  $region19: #{forward.31} parent=0 // pred_check_branch
    %112 = sbr.rel (0) target = $region21
  $region20: #{forward.31} parent=0 // pred_region
    _
  $region21: #{forward.31} parent=0 // pred_fallthru
    _

// kernel: forward.34
$region0: #{forward.34}
  #allocation0 [shape = 'u32[]', space=smem, size = 0x4, offset = 0x4, fixed_abs, tag = 'smem constant byte address 0x4 - core index']
  #allocation1 [shape = 'u32[144,128]{1,0:T(1,128)}', space=vmem, size = 0x12000, scoped, tag = 'internal scratch']
  %s0 = inlined_call_operand.vmem [shape: f32[8,128], index: 0, kind: input, shape index: {}]
  %s1 = inlined_call_operand.vmem [shape: f32[128,256], index: 1, kind: input, shape index: {}]
  %s2 = inlined_call_operand.vmem [shape: f32[1,256], index: 2, kind: input, shape index: {}]
  %s3 = inlined_call_operand.vmem [shape: f32[8,256], index: 3, kind: output, shape index: {}]
  %s4 = sld [smem:[#allocation0]]
  $region22: #{forward.34} parent=0
    _
  %s6 = ssub.s32 1, %s4
  %s7 = scalar_select 0, %s6, %s4
  // Predicated region
  $region2: #{forward.34} parent=0 // pred_check
    _
  $region3: #{forward.34} parent=0 // pred_check_branch
    %9 = sbr.rel (0) target = $region5
  $region4: #{forward.34} parent=0 // pred_region
    _
  $region5: #{forward.34} parent=0 // pred_fallthru
    _
  // Predicated region
  $region6: #{forward.34} parent=0 // pred_check
    _
  $region7: #{forward.34} parent=0 // pred_check_branch
    %11 = sbr.rel (0) target = $region9
  $region8: #{forward.34} parent=0 // pred_region
    _
  $region9: #{forward.34} parent=0 // pred_fallthru
    _
  // Predicated region
  $region10: #{forward.34} parent=0 // pred_check
    _
  $region11: #{forward.34} parent=0 // pred_check_branch
    %13 = sbr.rel (0) target = $region13
  $region12: #{forward.34} parent=0 // pred_region
    _
  $region13: #{forward.34} parent=0 // pred_fallthru
    _
  %v14 = vld [vmem:[%s0] sm:$0xff]
  %v15 = vld [vmem:[%s1] sm:$0xff]
  %v16 = vld [vmem:[%s1 + $0x8] sm:$0xff]
  %v17 = vld [vmem:[%s1 + $0x10] sm:$0xff]
  %v18 = vld [vmem:[%s1 + $0x18] sm:$0xff]
  %v19 = vld [vmem:[%s1 + $0x20] sm:$0xff]
  %v20 = vld [vmem:[%s1 + $0x28] sm:$0xff]
  %v21 = vld [vmem:[%s1 + $0x30] sm:$0xff]
  %v22 = vld [vmem:[%s1 + $0x38] sm:$0xff]
  %v23 = vld [vmem:[%s1 + $0x40] sm:$0xff]
  %v24 = vld [vmem:[%s1 + $0x48] sm:$0xff]
  %v25 = vld [vmem:[%s1 + $0x50] sm:$0xff]
  %v26 = vld [vmem:[%s1 + $0x58] sm:$0xff]
  %v27 = vld [vmem:[%s1 + $0x60] sm:$0xff]
  %v28 = vld [vmem:[%s1 + $0x68] sm:$0xff]
  %v29 = vld [vmem:[%s1 + $0x70] sm:$0xff]
  %v30 = vld [vmem:[%s1 + $0x78] sm:$0xff]
  %v31 = vld [vmem:[%s1 + $0x80] sm:$0xff]
  %v32 = vld [vmem:[%s1 + $0x88] sm:$0xff]
  %v33 = vld [vmem:[%s1 + $0x90] sm:$0xff]
  %v34 = vld [vmem:[%s1 + $0x98] sm:$0xff]
  %v35 = vld [vmem:[%s1 + $0xa0] sm:$0xff]
  %v36 = vld [vmem:[%s1 + $0xa8] sm:$0xff]
  %v37 = vld [vmem:[%s1 + $0xb0] sm:$0xff]
  %v38 = vld [vmem:[%s1 + $0xb8] sm:$0xff]
  %v39 = vld [vmem:[%s1 + $0xc0] sm:$0xff]
  %v40 = vld [vmem:[%s1 + $0xc8] sm:$0xff]
  %v41 = vld [vmem:[%s1 + $0xd0] sm:$0xff]
  %v42 = vld [vmem:[%s1 + $0xd8] sm:$0xff]
  %v43 = vld [vmem:[%s1 + $0xe0] sm:$0xff]
  %v44 = vld [vmem:[%s1 + $0xe8] sm:$0xff]
  %v45 = vld [vmem:[%s1 + $0xf0] sm:$0xff]
  %v46 = vld [vmem:[%s1 + $0xf8] sm:$0xff]
  %v47 = vld [vmem:[%s2] sm:$0x3]
  %v49 = vlaneseq
  %v50 = vshrl.u32 %v49, 7
  %v51 = vsub.s32 0, %v50
  %v52 = vrot.slane %v47, %v51
  %v53 = vlaneseq
  %v54 = vshrl.u32 %v53, 7
  %v55 = vsub.s32 1, %v54
  %v56 = vrot.slane %v47, %v55
  %59 = vmatprep.subr.mxu0 %v46
  %60 = vmatpush1.msra.mxu0 %v45
  %61 = vmatprep.subr.mxu0 %v44
  %62 = vmatpush1.msra.mxu0 %v43
  %63 = vmatprep.subr.mxu0 %v42
  %64 = vmatpush1.msra.mxu0 %v41
  %65 = vmatprep.subr.mxu0 %v40
  %66 = vmatpush1.msra.mxu0 %v39
  %67 = vmatprep.subr.mxu0 %v38
  %68 = vmatpush1.msra.mxu0 %v37
  %69 = vmatprep.subr.mxu0 %v36
  %70 = vmatpush1.msra.mxu0 %v35
  %71 = vmatprep.subr.mxu0 %v34
  %72 = vmatpush1.msra.mxu0 %v33
  %73 = vmatprep.subr.mxu0 %v32
  %74 = vmatpush1.msra.mxu0 %v31
  %75 = vmatprep.subr.mxu0 %v30
  %76 = vmatpush1.msra.mxu0 %v29
  %77 = vmatprep.subr.mxu0 %v28
  %78 = vmatpush1.msra.mxu0 %v27
  %79 = vmatprep.subr.mxu0 %v26
  %80 = vmatpush1.msra.mxu0 %v25
  %81 = vmatprep.subr.mxu0 %v24
  %82 = vmatpush1.msra.mxu0 %v23
  %83 = vmatprep.subr.mxu0 %v22
  %84 = vmatpush1.msra.mxu0 %v21
  %85 = vmatprep.subr.mxu0 %v20
  %86 = vmatpush1.msra.mxu0 %v19
  %87 = vmatprep.subr.mxu0 %v18
  %88 = vmatpush1.msra.mxu0 %v17
  %89 = vmatprep.subr.mxu0 %v16
  %90 = vmatpush1.msra.mxu0 %v15
  %91 = vmatprep.subr.mxu0 0.0
  %92 = vmatpush2.msra.mxu0 0.0
  %93 = vmatprep.subr.mxu0 0.0
  %94 = vmatpush2.msra.mxu0 0.0
  %95 = vmatprep.subr.mxu0 0.0
  %96 = vmatpush2.msra.mxu0 0.0
  %97 = vmatprep.subr.mxu0 0.0
  %98 = vmatpush2.msra.mxu0 0.0
  %99 = vmatprep.subr.mxu0 0.0
  %100 = vmatpush2.msra.mxu0 0.0
  %101 = vmatprep.subr.mxu0 0.0
  %102 = vmatpush2.msra.mxu0 0.0
  %103 = vmatprep.subr.mxu0 0.0
  %104 = vmatpush2.msra.mxu0 0.0
  %105 = vmatprep.subr.mxu0 0.0
  %106 = vmatpush2.msra.mxu0 0.0
  %107 = vmatprep.subr.mxu0 0.0
  %108 = vmatpush2.msra.mxu0 0.0
  %109 = vmatprep.subr.mxu0 0.0
  %110 = vmatpush2.msra.mxu0 0.0
  %111 = vmatprep.subr.mxu0 0.0
  %112 = vmatpush2.msra.mxu0 0.0
  %113 = vmatprep.subr.mxu0 0.0
  %114 = vmatpush2.msra.mxu0 0.0
  %115 = vmatprep.subr.mxu0 0.0
  %116 = vmatpush2.msra.mxu0 0.0
  %117 = vmatprep.subr.mxu0 0.0
  %118 = vmatpush2.msra.mxu0 0.0
  %119 = vmatprep.subr.mxu0 0.0
  %120 = vmatpush2.msra.mxu0 0.0
  %121 = vmatprep.subr.mxu0 0.0
  %122 = vmatpush2.msra.mxu0 0.0
  %123 = vmatprep.mubr.f32.mxu0 0.0
  %124 = vmatmul.mubr.f32.gmra.mxu0 %v14
  %v125 = vpop.f32.mrf.mxu0
  %v126 = vadd.f32 %v52, %v125
  %v127 = vpop.f32.mrf.mxu0
  %v128 = vadd.f32 %v56, %v127
  %129 = vdwg.mxu0
  %130 = vst [vmem:[%s3] sm:$0xff] %v126
  %131 = vst [vmem:[%s3 + $0x8] sm:$0xff] %v128
  // Predicated region
  $region14: #{forward.34} parent=0 // pred_check
    _
  $region15: #{forward.34} parent=0 // pred_check_branch
    %133 = sbr.rel (0) target = $region17
  $region16: #{forward.34} parent=0 // pred_region
    _
  $region17: #{forward.34} parent=0 // pred_fallthru
    _
  // Predicated region
  $region18: #{forward.34} parent=0 // pred_check
    _
  $region19: #{forward.34} parent=0 // pred_check_branch
    %135 = sbr.rel (0) target = $region21
  $region20: #{forward.34} parent=0 // pred_region
    _
  $region21: #{forward.34} parent=0 // pred_fallthru
    _

// kernel: forward.38
$region0: #{forward.38}
  #allocation0 [shape = 'u32[]', space=smem, size = 0x4, offset = 0x4, fixed_abs, tag = 'smem constant byte address 0x4 - core index']
  #allocation1 [shape = 'u32[144,128]{1,0:T(1,128)}', space=vmem, size = 0x12000, scoped, tag = 'internal scratch']
  %s0 = inlined_call_operand.vmem [shape: f32[8,128], index: 0, kind: input, shape index: {}]
  %s1 = inlined_call_operand.vmem [shape: f32[8,128], index: 1, kind: input, shape index: {}]
  %s2 = inlined_call_operand.vmem [shape: f32[8,128], index: 2, kind: input, shape index: {}, may-alias: {2,7}]
  %s3 = inlined_call_operand.vmem [shape: f32[256,128], index: 3, kind: input, shape index: {}]
  %s4 = inlined_call_operand.vmem [shape: f32[1,128], index: 4, kind: input, shape index: {}]
  %s5 = inlined_call_operand.vmem [shape: f32[128,128], index: 5, kind: input, shape index: {}]
  %s6 = inlined_call_operand.vmem [shape: f32[1,128], index: 6, kind: input, shape index: {}]
  %s7 = inlined_call_operand.vmem [shape: f32[8,128], index: 7, kind: input, shape index: {}, may-alias: {2,7}]
  %s8 = inlined_call_operand.vmem [shape: f32[8,128], index: 8, kind: output, shape index: {0}]
  %s9 = inlined_call_operand.vmem [shape: f32[8,128], index: 9, kind: output, shape index: {1}]
  %10 = xla_tuple %s8, %s9
  %s11 = sld [smem:[#allocation0]]
  $region50: #{forward.38} parent=0
    _
  %s13 = ssub.s32 1, %s11
  %s14 = scalar_select 0, %s13, %s11
  // Predicated region
  $region2: #{forward.38} parent=0 // pred_check
    _
  $region3: #{forward.38} parent=0 // pred_check_branch
    %16 = sbr.rel (0) target = $region5
  $region4: #{forward.38} parent=0 // pred_region
    _
  $region5: #{forward.38} parent=0 // pred_fallthru
    _
  // Predicated region
  $region6: #{forward.38} parent=0 // pred_check
    _
  $region7: #{forward.38} parent=0 // pred_check_branch
    %18 = sbr.rel (0) target = $region9
  $region8: #{forward.38} parent=0 // pred_region
    _
  $region9: #{forward.38} parent=0 // pred_fallthru
    _
  // Predicated region
  $region10: #{forward.38} parent=0 // pred_check
    _
  $region11: #{forward.38} parent=0 // pred_check_branch
    %20 = sbr.rel (0) target = $region13
  $region12: #{forward.38} parent=0 // pred_region
    _
  $region13: #{forward.38} parent=0 // pred_fallthru
    _
  // Predicated region
  $region14: #{forward.38} parent=0 // pred_check
    _
  $region15: #{forward.38} parent=0 // pred_check_branch
    %22 = sbr.rel (0) target = $region17
  $region16: #{forward.38} parent=0 // pred_region
    _
  $region17: #{forward.38} parent=0 // pred_fallthru
    _
  // Predicated region
  $region18: #{forward.38} parent=0 // pred_check
    _
  $region19: #{forward.38} parent=0 // pred_check_branch
    %24 = sbr.rel (0) target = $region21
  $region20: #{forward.38} parent=0 // pred_region
    _
  $region21: #{forward.38} parent=0 // pred_fallthru
    _
  // Predicated region
  $region22: #{forward.38} parent=0 // pred_check
    _
  $region23: #{forward.38} parent=0 // pred_check_branch
    %26 = sbr.rel (0) target = $region25
  $region24: #{forward.38} parent=0 // pred_region
    _
  $region25: #{forward.38} parent=0 // pred_fallthru
    _
  // Predicated region
  $region26: #{forward.38} parent=0 // pred_check
    _
  $region27: #{forward.38} parent=0 // pred_check_branch
    %28 = sbr.rel (0) target = $region29
  $region28: #{forward.38} parent=0 // pred_region
    _
  $region29: #{forward.38} parent=0 // pred_fallthru
    _
  // Predicated region
  $region30: #{forward.38} parent=0 // pred_check
    _
  $region31: #{forward.38} parent=0 // pred_check_branch
    %30 = sbr.rel (0) target = $region33
  $region32: #{forward.38} parent=0 // pred_region
    _
  $region33: #{forward.38} parent=0 // pred_fallthru
    _
  %v31 = vld [vmem:[%s1] sm:$0xff]
  %v32 = vld [vmem:[%s2] sm:$0xff]
  %v33 = vld [vmem:[%s3] sm:$0xff]
  %v34 = vld [vmem:[%s3 + $0x8] sm:$0xff]
  %v35 = vld [vmem:[%s3 + $0x10] sm:$0xff]
  %v36 = vld [vmem:[%s3 + $0x18] sm:$0xff]
  %v37 = vld [vmem:[%s3 + $0x20] sm:$0xff]
  %v38 = vld [vmem:[%s3 + $0x28] sm:$0xff]
  %v39 = vld [vmem:[%s3 + $0x30] sm:$0xff]
  %v40 = vld [vmem:[%s3 + $0x38] sm:$0xff]
  %v41 = vld [vmem:[%s3 + $0x40] sm:$0xff]
  %v42 = vld [vmem:[%s3 + $0x48] sm:$0xff]
  %v43 = vld [vmem:[%s3 + $0x50] sm:$0xff]
  %v44 = vld [vmem:[%s3 + $0x58] sm:$0xff]
  %v45 = vld [vmem:[%s3 + $0x60] sm:$0xff]
  %v46 = vld [vmem:[%s3 + $0x68] sm:$0xff]
  %v47 = vld [vmem:[%s3 + $0x70] sm:$0xff]
  %v48 = vld [vmem:[%s3 + $0x78] sm:$0xff]
  %v49 = vld [vmem:[%s3 + $0x80] sm:$0xff]
  %v50 = vld [vmem:[%s3 + $0x88] sm:$0xff]
  %v51 = vld [vmem:[%s3 + $0x90] sm:$0xff]
  %v52 = vld [vmem:[%s3 + $0x98] sm:$0xff]
  %v53 = vld [vmem:[%s3 + $0xa0] sm:$0xff]
  %v54 = vld [vmem:[%s3 + $0xa8] sm:$0xff]
  %v55 = vld [vmem:[%s3 + $0xb0] sm:$0xff]
  %v56 = vld [vmem:[%s3 + $0xb8] sm:$0xff]
  %v57 = vld [vmem:[%s3 + $0xc0] sm:$0xff]
  %v58 = vld [vmem:[%s3 + $0xc8] sm:$0xff]
  %v59 = vld [vmem:[%s3 + $0xd0] sm:$0xff]
  %v60 = vld [vmem:[%s3 + $0xd8] sm:$0xff]
  %v61 = vld [vmem:[%s3 + $0xe0] sm:$0xff]
  %v62 = vld [vmem:[%s3 + $0xe8] sm:$0xff]
  %v63 = vld [vmem:[%s3 + $0xf0] sm:$0xff]
  %v64 = vld [vmem:[%s3 + $0xf8] sm:$0xff]
  %v65 = vld [vmem:[%s4] sm:$0x1]
  %v67 = vlaneseq
  %v68 = vshrl.u32 %v67, 7
  %v69 = vsub.s32 0, %v68
  %v70 = vrot.slane %v65, %v69
  %72 = vmatprep.subr.mxu0 0.0
  %73 = vmatpush1.msra.mxu0 %v48
  %74 = vmatprep.subr.mxu0 0.0
  %75 = vmatpush1.msra.mxu0 %v47
  %76 = vmatprep.subr.mxu0 0.0
  %77 = vmatpush1.msra.mxu0 %v46
  %78 = vmatprep.subr.mxu0 0.0
  %79 = vmatpush1.msra.mxu0 %v45
  %80 = vmatprep.subr.mxu0 0.0
  %81 = vmatpush1.msra.mxu0 %v44
  %82 = vmatprep.subr.mxu0 0.0
  %83 = vmatpush1.msra.mxu0 %v43
  %84 = vmatprep.subr.mxu0 0.0
  %85 = vmatpush1.msra.mxu0 %v42
  %86 = vmatprep.subr.mxu0 0.0
  %87 = vmatpush1.msra.mxu0 %v41
  %88 = vmatprep.subr.mxu0 0.0
  %89 = vmatpush1.msra.mxu0 %v40
  %90 = vmatprep.subr.mxu0 0.0
  %91 = vmatpush1.msra.mxu0 %v39
  %92 = vmatprep.subr.mxu0 0.0
  %93 = vmatpush1.msra.mxu0 %v38
  %94 = vmatprep.subr.mxu0 0.0
  %95 = vmatpush1.msra.mxu0 %v37
  %96 = vmatprep.subr.mxu0 0.0
  %97 = vmatpush1.msra.mxu0 %v36
  %98 = vmatprep.subr.mxu0 0.0
  %99 = vmatpush1.msra.mxu0 %v35
  %100 = vmatprep.subr.mxu0 0.0
  %101 = vmatpush1.msra.mxu0 %v34
  %102 = vmatprep.subr.mxu0 0.0
  %103 = vmatpush1.msra.mxu0 %v33
  %104 = vmatprep.subr.mxu0 0.0
  %105 = vmatpush2.msra.mxu0 %v64
  %106 = vmatprep.subr.mxu0 0.0
  %107 = vmatpush2.msra.mxu0 %v63
  %108 = vmatprep.subr.mxu0 0.0
  %109 = vmatpush2.msra.mxu0 %v62
  %110 = vmatprep.subr.mxu0 0.0
  %111 = vmatpush2.msra.mxu0 %v61
  %112 = vmatprep.subr.mxu0 0.0
  %113 = vmatpush2.msra.mxu0 %v60
  %114 = vmatprep.subr.mxu0 0.0
  %115 = vmatpush2.msra.mxu0 %v59
  %116 = vmatprep.subr.mxu0 0.0
  %117 = vmatpush2.msra.mxu0 %v58
  %118 = vmatprep.subr.mxu0 0.0
  %119 = vmatpush2.msra.mxu0 %v57
  %120 = vmatprep.subr.mxu0 0.0
  %121 = vmatpush2.msra.mxu0 %v56
  %122 = vmatprep.subr.mxu0 0.0
  %123 = vmatpush2.msra.mxu0 %v55
  %124 = vmatprep.subr.mxu0 0.0
  %125 = vmatpush2.msra.mxu0 %v54
  %126 = vmatprep.subr.mxu0 0.0
  %127 = vmatpush2.msra.mxu0 %v53
  %128 = vmatprep.subr.mxu0 0.0
  %129 = vmatpush2.msra.mxu0 %v52
  %130 = vmatprep.subr.mxu0 0.0
  %131 = vmatpush2.msra.mxu0 %v51
  %132 = vmatprep.subr.mxu0 0.0
  %133 = vmatpush2.msra.mxu0 %v50
  %134 = vmatprep.subr.mxu0 0.0
  %135 = vmatpush2.msra.mxu0 %v49
  %136 = vmatprep.mubr.f32.mxu0 %v32
  %137 = vmatmul.mubr.f32.gmra.mxu0 %v31
  %v138 = vpop.f32.mrf.mxu0
  %v139 = vadd.f32 %v70, %v138
  %v140 = vpop.f32.mrf.mxu0
  %141 = vdwg.mxu0
  %v142 = vld [vmem:[%s0] sm:$0xff]
  %v143 = vadd.f32 %v139, %v142
  %vm144 = vcmp.gt.f32.partialorder %v143, 0.0
  %v145 = vmul.f32 %v143, 0.01
  %v146 = vsel %vm144, %v143, %v145
  %v147 = vld [vmem:[%s5] sm:$0xff]
  %v148 = vld [vmem:[%s5 + $0x8] sm:$0xff]
  %v149 = vld [vmem:[%s5 + $0x10] sm:$0xff]
  %v150 = vld [vmem:[%s5 + $0x18] sm:$0xff]
  %v151 = vld [vmem:[%s5 + $0x20] sm:$0xff]
  %v152 = vld [vmem:[%s5 + $0x28] sm:$0xff]
  %v153 = vld [vmem:[%s5 + $0x30] sm:$0xff]
  %v154 = vld [vmem:[%s5 + $0x38] sm:$0xff]
  %v155 = vld [vmem:[%s5 + $0x40] sm:$0xff]
  %v156 = vld [vmem:[%s5 + $0x48] sm:$0xff]
  %v157 = vld [vmem:[%s5 + $0x50] sm:$0xff]
  %v158 = vld [vmem:[%s5 + $0x58] sm:$0xff]
  %v159 = vld [vmem:[%s5 + $0x60] sm:$0xff]
  %v160 = vld [vmem:[%s5 + $0x68] sm:$0xff]
  %v161 = vld [vmem:[%s5 + $0x70] sm:$0xff]
  %v162 = vld [vmem:[%s5 + $0x78] sm:$0xff]
  %v163 = vld [vmem:[%s6] sm:$0x1]
  %v165 = vlaneseq
  %v166 = vshrl.u32 %v165, 7
  %v167 = vsub.s32 0, %v166
  %v168 = vrot.slane %v163, %v167
  %170 = vmatprep.subr.mxu0 0.0
  %171 = vmatpush1.msra.mxu0 %v162
  %172 = vmatprep.subr.mxu0 0.0
  %173 = vmatpush1.msra.mxu0 %v161
  %174 = vmatprep.subr.mxu0 0.0
  %175 = vmatpush1.msra.mxu0 %v160
  %176 = vmatprep.subr.mxu0 0.0
  %177 = vmatpush1.msra.mxu0 %v159
  %178 = vmatprep.subr.mxu0 0.0
  %179 = vmatpush1.msra.mxu0 %v158
  %180 = vmatprep.subr.mxu0 0.0
  %181 = vmatpush1.msra.mxu0 %v157
  %182 = vmatprep.subr.mxu0 0.0
  %183 = vmatpush1.msra.mxu0 %v156
  %184 = vmatprep.subr.mxu0 0.0
  %185 = vmatpush1.msra.mxu0 %v155
  %186 = vmatprep.subr.mxu0 0.0
  %187 = vmatpush1.msra.mxu0 %v154
  %188 = vmatprep.subr.mxu0 0.0
  %189 = vmatpush1.msra.mxu0 %v153
  %190 = vmatprep.subr.mxu0 0.0
  %191 = vmatpush1.msra.mxu0 %v152
  %192 = vmatprep.subr.mxu0 0.0
  %193 = vmatpush1.msra.mxu0 %v151
  %194 = vmatprep.subr.mxu0 0.0
  %195 = vmatpush1.msra.mxu0 %v150
  %196 = vmatprep.subr.mxu0 0.0
  %197 = vmatpush1.msra.mxu0 %v149
  %198 = vmatprep.subr.mxu0 0.0
  %199 = vmatpush1.msra.mxu0 %v148
  %200 = vmatprep.subr.mxu0 0.0
  %201 = vmatpush1.msra.mxu0 %v147
  %202 = vmatprep.subr.mxu0 0.0
  %203 = vmatpush2.msra.mxu0 0.0
  %204 = vmatprep.subr.mxu0 0.0
  %205 = vmatpush2.msra.mxu0 0.0
  %206 = vmatprep.subr.mxu0 0.0
  %207 = vmatpush2.msra.mxu0 0.0
  %208 = vmatprep.subr.mxu0 0.0
  %209 = vmatpush2.msra.mxu0 0.0
  %210 = vmatprep.subr.mxu0 0.0
  %211 = vmatpush2.msra.mxu0 0.0
  %212 = vmatprep.subr.mxu0 0.0
  %213 = vmatpush2.msra.mxu0 0.0
  %214 = vmatprep.subr.mxu0 0.0
  %215 = vmatpush2.msra.mxu0 0.0
  %216 = vmatprep.subr.mxu0 0.0
  %217 = vmatpush2.msra.mxu0 0.0
  %218 = vmatprep.subr.mxu0 0.0
  %219 = vmatpush2.msra.mxu0 0.0
  %220 = vmatprep.subr.mxu0 0.0
  %221 = vmatpush2.msra.mxu0 0.0
  %222 = vmatprep.subr.mxu0 0.0
  %223 = vmatpush2.msra.mxu0 0.0
  %224 = vmatprep.subr.mxu0 0.0
  %225 = vmatpush2.msra.mxu0 0.0
  %226 = vmatprep.subr.mxu0 0.0
  %227 = vmatpush2.msra.mxu0 0.0
  %228 = vmatprep.subr.mxu0 0.0
  %229 = vmatpush2.msra.mxu0 0.0
  %230 = vmatprep.subr.mxu0 0.0
  %231 = vmatpush2.msra.mxu0 0.0
  %232 = vmatprep.subr.mxu0 0.0
  %233 = vmatpush2.msra.mxu0 0.0
  %234 = vmatprep.mubr.f32.mxu0 0.0
  %235 = vmatmul.mubr.f32.gmra.mxu0 %v146
  %v236 = vpop.f32.mrf.mxu0
  %v237 = vadd.f32 %v168, %v236
  %v238 = vpop.f32.mrf.mxu0
  %239 = vdwg.mxu0
  %vm240 = vcmp.gt.f32.partialorder %v237, 0.0
  %v241 = vmul.f32 %v237, 0.01
  %v242 = vsel %vm240, %v237, %v241
  %243 = vst [vmem:[%s8] sm:$0xff] %v242
  %v244 = vld [vmem:[%s7] sm:$0xff]
  %v245 = vadd.f32 %v242, %v244
  %246 = vst [vmem:[%s9] sm:$0xff] %v245
  // Predicated region
  $region34: #{forward.38} parent=0 // pred_check
    _
  $region35: #{forward.38} parent=0 // pred_check_branch
    %248 = sbr.rel (0) target = $region37
  $region36: #{forward.38} parent=0 // pred_region
    _
  $region37: #{forward.38} parent=0 // pred_fallthru
    _
  // Predicated region
  $region38: #{forward.38} parent=0 // pred_check
    _
  $region39: #{forward.38} parent=0 // pred_check_branch
    %250 = sbr.rel (0) target = $region41
  $region40: #{forward.38} parent=0 // pred_region
    _
  $region41: #{forward.38} parent=0 // pred_fallthru
    _
  // Predicated region
  $region42: #{forward.38} parent=0 // pred_check
    _
  $region43: #{forward.38} parent=0 // pred_check_branch
    %252 = sbr.rel (0) target = $region45
  $region44: #{forward.38} parent=0 // pred_region
    _
  $region45: #{forward.38} parent=0 // pred_fallthru
    _
  // Predicated region
  $region46: #{forward.38} parent=0 // pred_check
    _
  $region47: #{forward.38} parent=0 // pred_check_branch
    %254 = sbr.rel (0) target = $region49
  $region48: #{forward.38} parent=0 // pred_region
    _
  $region49: #{forward.38} parent=0 // pred_fallthru
    _

// kernel: forward.32
$region0: #{forward.32}
  #allocation0 [shape = 'u32[]', space=smem, size = 0x4, offset = 0x4, fixed_abs, tag = 'smem constant byte address 0x4 - core index']
  #allocation1 [shape = 'u32[144,128]{1,0:T(1,128)}', space=vmem, size = 0x12000, scoped, tag = 'internal scratch']
  %s0 = inlined_call_operand.vmem [shape: f32[16,128], index: 0, kind: input, shape index: {}]
  %s1 = inlined_call_operand.vmem [shape: f32[128,128], index: 1, kind: input, shape index: {}]
  %s2 = inlined_call_operand.vmem [shape: f32[1,128], index: 2, kind: input, shape index: {}]
  %s3 = inlined_call_operand.vmem [shape: f32[16,128], index: 3, kind: output, shape index: {}]
  %s4 = sld [smem:[#allocation0]]
  $region22: #{forward.32} parent=0
    _
  %s6 = ssub.s32 1, %s4
  %s7 = scalar_select 0, %s6, %s4
  // Predicated region
  $region2: #{forward.32} parent=0 // pred_check
    _
  $region3: #{forward.32} parent=0 // pred_check_branch
    %9 = sbr.rel (0) target = $region5
  $region4: #{forward.32} parent=0 // pred_region
    _
  $region5: #{forward.32} parent=0 // pred_fallthru
    _
  // Predicated region
  $region6: #{forward.32} parent=0 // pred_check
    _
  $region7: #{forward.32} parent=0 // pred_check_branch
    %11 = sbr.rel (0) target = $region9
  $region8: #{forward.32} parent=0 // pred_region
    _
  $region9: #{forward.32} parent=0 // pred_fallthru
    _
  // Predicated region
  $region10: #{forward.32} parent=0 // pred_check
    _
  $region11: #{forward.32} parent=0 // pred_check_branch
    %13 = sbr.rel (0) target = $region13
  $region12: #{forward.32} parent=0 // pred_region
    _
  $region13: #{forward.32} parent=0 // pred_fallthru
    _
  %v14 = vld [vmem:[%s0] sm:$0xff]
  %v15 = vld [vmem:[%s0 + $0x8] sm:$0xff]
  %v16 = vld [vmem:[%s1] sm:$0xff]
  %v17 = vld [vmem:[%s1 + $0x8] sm:$0xff]
  %v18 = vld [vmem:[%s1 + $0x10] sm:$0xff]
  %v19 = vld [vmem:[%s1 + $0x18] sm:$0xff]
  %v20 = vld [vmem:[%s1 + $0x20] sm:$0xff]
  %v21 = vld [vmem:[%s1 + $0x28] sm:$0xff]
  %v22 = vld [vmem:[%s1 + $0x30] sm:$0xff]
  %v23 = vld [vmem:[%s1 + $0x38] sm:$0xff]
  %v24 = vld [vmem:[%s1 + $0x40] sm:$0xff]
  %v25 = vld [vmem:[%s1 + $0x48] sm:$0xff]
  %v26 = vld [vmem:[%s1 + $0x50] sm:$0xff]
  %v27 = vld [vmem:[%s1 + $0x58] sm:$0xff]
  %v28 = vld [vmem:[%s1 + $0x60] sm:$0xff]
  %v29 = vld [vmem:[%s1 + $0x68] sm:$0xff]
  %v30 = vld [vmem:[%s1 + $0x70] sm:$0xff]
  %v31 = vld [vmem:[%s1 + $0x78] sm:$0xff]
  %v32 = vld [vmem:[%s2] sm:$0x1]
  %v34 = vlaneseq
  %v35 = vshrl.u32 %v34, 7
  %v36 = vsub.s32 0, %v35
  %v37 = vrot.slane %v32, %v36
  %39 = vmatprep.subr.mxu0 0.0
  %40 = vmatpush1.msra.mxu0 %v31
  %41 = vmatprep.subr.mxu0 0.0
  %42 = vmatpush1.msra.mxu0 %v30
  %43 = vmatprep.subr.mxu0 0.0
  %44 = vmatpush1.msra.mxu0 %v29
  %45 = vmatprep.subr.mxu0 0.0
  %46 = vmatpush1.msra.mxu0 %v28
  %47 = vmatprep.subr.mxu0 0.0
  %48 = vmatpush1.msra.mxu0 %v27
  %49 = vmatprep.subr.mxu0 0.0
  %50 = vmatpush1.msra.mxu0 %v26
  %51 = vmatprep.subr.mxu0 0.0
  %52 = vmatpush1.msra.mxu0 %v25
  %53 = vmatprep.subr.mxu0 0.0
  %54 = vmatpush1.msra.mxu0 %v24
  %55 = vmatprep.subr.mxu0 0.0
  %56 = vmatpush1.msra.mxu0 %v23
  %57 = vmatprep.subr.mxu0 0.0
  %58 = vmatpush1.msra.mxu0 %v22
  %59 = vmatprep.subr.mxu0 0.0
  %60 = vmatpush1.msra.mxu0 %v21
  %61 = vmatprep.subr.mxu0 0.0
  %62 = vmatpush1.msra.mxu0 %v20
  %63 = vmatprep.subr.mxu0 0.0
  %64 = vmatpush1.msra.mxu0 %v19
  %65 = vmatprep.subr.mxu0 0.0
  %66 = vmatpush1.msra.mxu0 %v18
  %67 = vmatprep.subr.mxu0 0.0
  %68 = vmatpush1.msra.mxu0 %v17
  %69 = vmatprep.subr.mxu0 0.0
  %70 = vmatpush1.msra.mxu0 %v16
  %71 = vmatprep.subr.mxu0 0.0
  %72 = vmatpush2.msra.mxu0 0.0
  %73 = vmatprep.subr.mxu0 0.0
  %74 = vmatpush2.msra.mxu0 0.0
  %75 = vmatprep.subr.mxu0 0.0
  %76 = vmatpush2.msra.mxu0 0.0
  %77 = vmatprep.subr.mxu0 0.0
  %78 = vmatpush2.msra.mxu0 0.0
  %79 = vmatprep.subr.mxu0 0.0
  %80 = vmatpush2.msra.mxu0 0.0
  %81 = vmatprep.subr.mxu0 0.0
  %82 = vmatpush2.msra.mxu0 0.0
  %83 = vmatprep.subr.mxu0 0.0
  %84 = vmatpush2.msra.mxu0 0.0
  %85 = vmatprep.subr.mxu0 0.0
  %86 = vmatpush2.msra.mxu0 0.0
  %87 = vmatprep.subr.mxu0 0.0
  %88 = vmatpush2.msra.mxu0 0.0
  %89 = vmatprep.subr.mxu0 0.0
  %90 = vmatpush2.msra.mxu0 0.0
  %91 = vmatprep.subr.mxu0 0.0
  %92 = vmatpush2.msra.mxu0 0.0
  %93 = vmatprep.subr.mxu0 0.0
  %94 = vmatpush2.msra.mxu0 0.0
  %95 = vmatprep.subr.mxu0 0.0
  %96 = vmatpush2.msra.mxu0 0.0
  %97 = vmatprep.subr.mxu0 0.0
  %98 = vmatpush2.msra.mxu0 0.0
  %99 = vmatprep.subr.mxu0 0.0
  %100 = vmatpush2.msra.mxu0 0.0
  %101 = vmatprep.subr.mxu0 0.0
  %102 = vmatpush2.msra.mxu0 0.0
  %103 = vmatprep.mubr.f32.mxu0 0.0
  %104 = vmatmul.mubr.f32.gmra.mxu0 %v14
  %v105 = vpop.f32.mrf.mxu0
  %v106 = vadd.f32 %v37, %v105
  %v107 = vpop.f32.mrf.mxu0
  %108 = vmatprep.mubr.f32.mxu0 0.0
  %109 = vmatmul.mubr.f32.gmra.mxu0 %v15
  %v110 = vpop.f32.mrf.mxu0
  %v111 = vadd.f32 %v37, %v110
  %v112 = vpop.f32.mrf.mxu0
  %113 = vdwg.mxu0
  %114 = vst [vmem:[%s3] sm:$0xff] %v106
  %115 = vst [vmem:[%s3 + $0x8] sm:$0xff] %v111
  // Predicated region
  $region14: #{forward.32} parent=0 // pred_check
    _
  $region15: #{forward.32} parent=0 // pred_check_branch
    %117 = sbr.rel (0) target = $region17
  $region16: #{forward.32} parent=0 // pred_region
    _
  $region17: #{forward.32} parent=0 // pred_fallthru
    _
  // Predicated region
  $region18: #{forward.32} parent=0 // pred_check
    _
  $region19: #{forward.32} parent=0 // pred_check_branch
    %119 = sbr.rel (0) target = $region21
  $region20: #{forward.32} parent=0 // pred_region
    _
  $region21: #{forward.32} parent=0 // pred_fallthru
    _

// kernel: forward.37
$region0: #{forward.37}
  #allocation0 [shape = 'u32[]', space=smem, size = 0x4, offset = 0x4, fixed_abs, tag = 'smem constant byte address 0x4 - core index']
  #allocation1 [shape = 'u32[144,128]{1,0:T(1,128)}', space=vmem, size = 0x12000, scoped, tag = 'internal scratch']
  #allocation2 [shape = 'f32[8,128]{1,0:T(8,128)}', space=vmem, size = 0x1000, scoped, tag = 'scratch operand']
  %s0 = inlined_call_operand.vmem [shape: f32[8,16], index: 0, kind: input, shape index: {}]
  %s1 = inlined_call_operand.vmem [shape: f32[16,128], index: 1, kind: input, shape index: {}]
  %s2 = inlined_call_operand.vmem [shape: f32[8,1], index: 2, kind: input, shape index: {}]
  %s3 = inlined_call_operand.vmem [shape: f32[8,128], index: 3, kind: output, shape index: {}]
  %s4 = sld [smem:[#allocation0]]
  $region30: #{forward.37} parent=0
    _
  %s6 = ssub.s32 1, %s4
  %s7 = scalar_select 0, %s6, %s4
  // Predicated region
  $region2: #{forward.37} parent=0 // pred_check
    _
  $region3: #{forward.37} parent=0 // pred_check_branch
    %9 = sbr.rel (0) target = $region5
  $region4: #{forward.37} parent=0 // pred_region
    _
  $region5: #{forward.37} parent=0 // pred_fallthru
    _
  // Predicated region
  $region6: #{forward.37} parent=0 // pred_check
    _
  $region7: #{forward.37} parent=0 // pred_check_branch
    %11 = sbr.rel (0) target = $region9
  $region8: #{forward.37} parent=0 // pred_region
    _
  $region9: #{forward.37} parent=0 // pred_fallthru
    _
  // Predicated region
  $region10: #{forward.37} parent=0 // pred_check
    _
  $region11: #{forward.37} parent=0 // pred_check_branch
    %13 = sbr.rel (0) target = $region13
  $region12: #{forward.37} parent=0 // pred_region
    _
  $region13: #{forward.37} parent=0 // pred_fallthru
    _
  %p14 = scmp.eq.s32.totalorder 0, 0
  // Predicated region
  $region14: #{forward.37} parent=0 // pred_check
    %p15 = pneg %p14
  $region15: #{forward.37} parent=0 // pred_check_branch
    %17 = sbr.rel (%p15) target = $region17
  $region16: #{forward.37} parent=0 // pred_region
    %18 = vst [vmem:[#allocation2] sm:$0xff] 0.0
  $region17: #{forward.37} parent=0 // pred_fallthru
    _
  %v19 = vld [vmem:[#allocation2] sm:$0xff]
  %v20 = vld [vmem:[%s0] sm:$0xff]
  %v21 = vld [vmem:[%s1] sm:$0xff]
  %v22 = vld [vmem:[%s1 + $0x8] sm:$0xff]
  %vm23 = vcmask 130048
  %v25 = vsel %vm23, %v20, 0
  %27 = vmatprep.subr.mxu0 0.0
  %28 = vmatpush1.msra.mxu0 0.0
  %29 = vmatprep.subr.mxu0 0.0
  %30 = vmatpush1.msra.mxu0 0.0
  %31 = vmatprep.subr.mxu0 0.0
  %32 = vmatpush1.msra.mxu0 0.0
  %33 = vmatprep.subr.mxu0 0.0
  %34 = vmatpush1.msra.mxu0 0.0
  %35 = vmatprep.subr.mxu0 0.0
  %36 = vmatpush1.msra.mxu0 0.0
  %37 = vmatprep.subr.mxu0 0.0
  %38 = vmatpush1.msra.mxu0 0.0
  %39 = vmatprep.subr.mxu0 0.0
  %40 = vmatpush1.msra.mxu0 0.0
  %41 = vmatprep.subr.mxu0 0.0
  %42 = vmatpush1.msra.mxu0 0.0
  %43 = vmatprep.subr.mxu0 0.0
  %44 = vmatpush1.msra.mxu0 0.0
  %45 = vmatprep.subr.mxu0 0.0
  %46 = vmatpush1.msra.mxu0 0.0
  %47 = vmatprep.subr.mxu0 0.0
  %48 = vmatpush1.msra.mxu0 0.0
  %49 = vmatprep.subr.mxu0 0.0
  %50 = vmatpush1.msra.mxu0 0.0
  %51 = vmatprep.subr.mxu0 0.0
  %52 = vmatpush1.msra.mxu0 0.0
  %53 = vmatprep.subr.mxu0 0.0
  %54 = vmatpush1.msra.mxu0 0.0
  %55 = vmatprep.subr.mxu0 0.0
  %56 = vmatpush1.msra.mxu0 %v22
  %57 = vmatprep.subr.mxu0 0.0
  %58 = vmatpush1.msra.mxu0 %v21
  %59 = vmatprep.subr.mxu0 0.0
  %60 = vmatpush2.msra.mxu0 0.0
  %61 = vmatprep.subr.mxu0 0.0
  %62 = vmatpush2.msra.mxu0 0.0
  %63 = vmatprep.subr.mxu0 0.0
  %64 = vmatpush2.msra.mxu0 0.0
  %65 = vmatprep.subr.mxu0 0.0
  %66 = vmatpush2.msra.mxu0 0.0
  %67 = vmatprep.subr.mxu0 0.0
  %68 = vmatpush2.msra.mxu0 0.0
  %69 = vmatprep.subr.mxu0 0.0
  %70 = vmatpush2.msra.mxu0 0.0
  %71 = vmatprep.subr.mxu0 0.0
  %72 = vmatpush2.msra.mxu0 0.0
  %73 = vmatprep.subr.mxu0 0.0
  %74 = vmatpush2.msra.mxu0 0.0
  %75 = vmatprep.subr.mxu0 0.0
  %76 = vmatpush2.msra.mxu0 0.0
  %77 = vmatprep.subr.mxu0 0.0
  %78 = vmatpush2.msra.mxu0 0.0
  %79 = vmatprep.subr.mxu0 0.0
  %80 = vmatpush2.msra.mxu0 0.0
  %81 = vmatprep.subr.mxu0 0.0
  %82 = vmatpush2.msra.mxu0 0.0
  %83 = vmatprep.subr.mxu0 0.0
  %84 = vmatpush2.msra.mxu0 0.0
  %85 = vmatprep.subr.mxu0 0.0
  %86 = vmatpush2.msra.mxu0 0.0
  %87 = vmatprep.subr.mxu0 0.0
  %88 = vmatpush2.msra.mxu0 0.0
  %89 = vmatprep.subr.mxu0 0.0
  %90 = vmatpush2.msra.mxu0 0.0
  %91 = vmatprep.mubr.f32.mxu0 0.0
  %92 = vmatmul.mubr.f32.gmra.mxu0 %v25
  %v93 = vpop.f32.mrf.mxu0
  %v94 = vadd.f32 0.0, %v93
  %v95 = vpop.f32.mrf.mxu0
  %96 = vdwg.mxu0
  %v97 = vadd.f32 %v19, %v94
  %98 = vst [vmem:[#allocation2] sm:$0xff] %v97
  // Predicated region
  $region18: #{forward.37} parent=0 // pred_check
    %p99 = pneg %p14
  $region19: #{forward.37} parent=0 // pred_check_branch
    %101 = sbr.rel (%p99) target = $region21
  $region20: #{forward.37} parent=0 // pred_region
    %v102 = vld [vmem:[#allocation2] sm:$0xff]
    %v103 = vld [vmem:[%s2] sm:$0xff]
    %105 = vset.pattern.permute.xlu0 0
    %106 = vperm.xlu0 %105, %v103
    %v107 = vpop.permute.xlu0 %106
    %v109 = vrcp.pop %v107
    %v110 = vmul.f32 %v102, %v109
    %111 = vst [vmem:[%s3] sm:$0xff] %v110
  $region21: #{forward.37} parent=0 // pred_fallthru
    _
  // Predicated region
  $region22: #{forward.37} parent=0 // pred_check
    _
  $region23: #{forward.37} parent=0 // pred_check_branch
    %113 = sbr.rel (0) target = $region25
  $region24: #{forward.37} parent=0 // pred_region
    _
  $region25: #{forward.37} parent=0 // pred_fallthru
    _
  // Predicated region
  $region26: #{forward.37} parent=0 // pred_check
    _
  $region27: #{forward.37} parent=0 // pred_check_branch
    %115 = sbr.rel (0) target = $region29
  $region28: #{forward.37} parent=0 // pred_region
    _
  $region29: #{forward.37} parent=0 // pred_fallthru
    _

// kernel: forward.36
$region0: #{forward.36}
  #allocation0 [shape = 'u32[]', space=smem, size = 0x4, offset = 0x4, fixed_abs, tag = 'smem constant byte address 0x4 - core index']
  #allocation1 [shape = 'u32[144,128]{1,0:T(1,128)}', space=vmem, size = 0x12000, scoped, tag = 'internal scratch']
  %s0 = inlined_call_operand.vmem [shape: f32[16,128], index: 0, kind: input, shape index: {}]
  %s1 = inlined_call_operand.vmem [shape: f32[16,128], index: 1, kind: input, shape index: {}, may-alias: {1,6}]
  %s2 = inlined_call_operand.vmem [shape: f32[128,128], index: 2, kind: input, shape index: {}]
  %s3 = inlined_call_operand.vmem [shape: f32[1,128], index: 3, kind: input, shape index: {}]
  %s4 = inlined_call_operand.vmem [shape: f32[128,128], index: 4, kind: input, shape index: {}]
  %s5 = inlined_call_operand.vmem [shape: f32[1,128], index: 5, kind: input, shape index: {}]
  %s6 = inlined_call_operand.vmem [shape: f32[16,128], index: 6, kind: input, shape index: {}, may-alias: {1,6}]
  %s7 = inlined_call_operand.vmem [shape: f32[16,128], index: 7, kind: output, shape index: {0}]
  %s8 = inlined_call_operand.vmem [shape: f32[16,128], index: 8, kind: output, shape index: {1}]
  %9 = xla_tuple %s7, %s8
  %s10 = sld [smem:[#allocation0]]
  $region46: #{forward.36} parent=0
    _
  %s12 = ssub.s32 1, %s10
  %s13 = scalar_select 0, %s12, %s10
  // Predicated region
  $region2: #{forward.36} parent=0 // pred_check
    _
  $region3: #{forward.36} parent=0 // pred_check_branch
    %15 = sbr.rel (0) target = $region5
  $region4: #{forward.36} parent=0 // pred_region
    _
  $region5: #{forward.36} parent=0 // pred_fallthru
    _
  // Predicated region
  $region6: #{forward.36} parent=0 // pred_check
    _
  $region7: #{forward.36} parent=0 // pred_check_branch
    %17 = sbr.rel (0) target = $region9
  $region8: #{forward.36} parent=0 // pred_region
    _
  $region9: #{forward.36} parent=0 // pred_fallthru
    _
  // Predicated region
  $region10: #{forward.36} parent=0 // pred_check
    _
  $region11: #{forward.36} parent=0 // pred_check_branch
    %19 = sbr.rel (0) target = $region13
  $region12: #{forward.36} parent=0 // pred_region
    _
  $region13: #{forward.36} parent=0 // pred_fallthru
    _
  // Predicated region
  $region14: #{forward.36} parent=0 // pred_check
    _
  $region15: #{forward.36} parent=0 // pred_check_branch
    %21 = sbr.rel (0) target = $region17
  $region16: #{forward.36} parent=0 // pred_region
    _
  $region17: #{forward.36} parent=0 // pred_fallthru
    _
  // Predicated region
  $region18: #{forward.36} parent=0 // pred_check
    _
  $region19: #{forward.36} parent=0 // pred_check_branch
    %23 = sbr.rel (0) target = $region21
  $region20: #{forward.36} parent=0 // pred_region
    _
  $region21: #{forward.36} parent=0 // pred_fallthru
    _
  // Predicated region
  $region22: #{forward.36} parent=0 // pred_check
    _
  $region23: #{forward.36} parent=0 // pred_check_branch
    %25 = sbr.rel (0) target = $region25
  $region24: #{forward.36} parent=0 // pred_region
    _
  $region25: #{forward.36} parent=0 // pred_fallthru
    _
  // Predicated region
  $region26: #{forward.36} parent=0 // pred_check
    _
  $region27: #{forward.36} parent=0 // pred_check_branch
    %27 = sbr.rel (0) target = $region29
  $region28: #{forward.36} parent=0 // pred_region
    _
  $region29: #{forward.36} parent=0 // pred_fallthru
    _
  %v28 = vld [vmem:[%s1] sm:$0xff]
  %v29 = vld [vmem:[%s1 + $0x8] sm:$0xff]
  %v30 = vld [vmem:[%s2] sm:$0xff]
  %v31 = vld [vmem:[%s2 + $0x8] sm:$0xff]
  %v32 = vld [vmem:[%s2 + $0x10] sm:$0xff]
  %v33 = vld [vmem:[%s2 + $0x18] sm:$0xff]
  %v34 = vld [vmem:[%s2 + $0x20] sm:$0xff]
  %v35 = vld [vmem:[%s2 + $0x28] sm:$0xff]
  %v36 = vld [vmem:[%s2 + $0x30] sm:$0xff]
  %v37 = vld [vmem:[%s2 + $0x38] sm:$0xff]
  %v38 = vld [vmem:[%s2 + $0x40] sm:$0xff]
  %v39 = vld [vmem:[%s2 + $0x48] sm:$0xff]
  %v40 = vld [vmem:[%s2 + $0x50] sm:$0xff]
  %v41 = vld [vmem:[%s2 + $0x58] sm:$0xff]
  %v42 = vld [vmem:[%s2 + $0x60] sm:$0xff]
  %v43 = vld [vmem:[%s2 + $0x68] sm:$0xff]
  %v44 = vld [vmem:[%s2 + $0x70] sm:$0xff]
  %v45 = vld [vmem:[%s2 + $0x78] sm:$0xff]
  %v46 = vld [vmem:[%s3] sm:$0x1]
  %v48 = vlaneseq
  %v49 = vshrl.u32 %v48, 7
  %v50 = vsub.s32 0, %v49
  %v51 = vrot.slane %v46, %v50
  %53 = vmatprep.subr.mxu0 0.0
  %54 = vmatpush1.msra.mxu0 %v45
  %55 = vmatprep.subr.mxu0 0.0
  %56 = vmatpush1.msra.mxu0 %v44
  %57 = vmatprep.subr.mxu0 0.0
  %58 = vmatpush1.msra.mxu0 %v43
  %59 = vmatprep.subr.mxu0 0.0
  %60 = vmatpush1.msra.mxu0 %v42
  %61 = vmatprep.subr.mxu0 0.0
  %62 = vmatpush1.msra.mxu0 %v41
  %63 = vmatprep.subr.mxu0 0.0
  %64 = vmatpush1.msra.mxu0 %v40
  %65 = vmatprep.subr.mxu0 0.0
  %66 = vmatpush1.msra.mxu0 %v39
  %67 = vmatprep.subr.mxu0 0.0
  %68 = vmatpush1.msra.mxu0 %v38
  %69 = vmatprep.subr.mxu0 0.0
  %70 = vmatpush1.msra.mxu0 %v37
  %71 = vmatprep.subr.mxu0 0.0
  %72 = vmatpush1.msra.mxu0 %v36
  %73 = vmatprep.subr.mxu0 0.0
  %74 = vmatpush1.msra.mxu0 %v35
  %75 = vmatprep.subr.mxu0 0.0
  %76 = vmatpush1.msra.mxu0 %v34
  %77 = vmatprep.subr.mxu0 0.0
  %78 = vmatpush1.msra.mxu0 %v33
  %79 = vmatprep.subr.mxu0 0.0
  %80 = vmatpush1.msra.mxu0 %v32
  %81 = vmatprep.subr.mxu0 0.0
  %82 = vmatpush1.msra.mxu0 %v31
  %83 = vmatprep.subr.mxu0 0.0
  %84 = vmatpush1.msra.mxu0 %v30
  %85 = vmatprep.subr.mxu0 0.0
  %86 = vmatpush2.msra.mxu0 0.0
  %87 = vmatprep.subr.mxu0 0.0
  %88 = vmatpush2.msra.mxu0 0.0
  %89 = vmatprep.subr.mxu0 0.0
  %90 = vmatpush2.msra.mxu0 0.0
  %91 = vmatprep.subr.mxu0 0.0
  %92 = vmatpush2.msra.mxu0 0.0
  %93 = vmatprep.subr.mxu0 0.0
  %94 = vmatpush2.msra.mxu0 0.0
  %95 = vmatprep.subr.mxu0 0.0
  %96 = vmatpush2.msra.mxu0 0.0
  %97 = vmatprep.subr.mxu0 0.0
  %98 = vmatpush2.msra.mxu0 0.0
  %99 = vmatprep.subr.mxu0 0.0
  %100 = vmatpush2.msra.mxu0 0.0
  %101 = vmatprep.subr.mxu0 0.0
  %102 = vmatpush2.msra.mxu0 0.0
  %103 = vmatprep.subr.mxu0 0.0
  %104 = vmatpush2.msra.mxu0 0.0
  %105 = vmatprep.subr.mxu0 0.0
  %106 = vmatpush2.msra.mxu0 0.0
  %107 = vmatprep.subr.mxu0 0.0
  %108 = vmatpush2.msra.mxu0 0.0
  %109 = vmatprep.subr.mxu0 0.0
  %110 = vmatpush2.msra.mxu0 0.0
  %111 = vmatprep.subr.mxu0 0.0
  %112 = vmatpush2.msra.mxu0 0.0
  %113 = vmatprep.subr.mxu0 0.0
  %114 = vmatpush2.msra.mxu0 0.0
  %115 = vmatprep.subr.mxu0 0.0
  %116 = vmatpush2.msra.mxu0 0.0
  %117 = vmatprep.mubr.f32.mxu0 0.0
  %118 = vmatmul.mubr.f32.gmra.mxu0 %v28
  %v119 = vpop.f32.mrf.mxu0
  %v120 = vadd.f32 %v51, %v119
  %v121 = vpop.f32.mrf.mxu0
  %122 = vmatprep.mubr.f32.mxu0 0.0
  %123 = vmatmul.mubr.f32.gmra.mxu0 %v29
  %v124 = vpop.f32.mrf.mxu0
  %v125 = vadd.f32 %v51, %v124
  %v126 = vpop.f32.mrf.mxu0
  %127 = vdwg.mxu0
  %v128 = vld [vmem:[%s0] sm:$0xff]
  %v129 = vld [vmem:[%s0 + $0x8] sm:$0xff]
  %v130 = vadd.f32 %v120, %v128
  %v131 = vadd.f32 %v125, %v129
  %vm132 = vcmp.gt.f32.partialorder %v130, 0.0
  %vm133 = vcmp.gt.f32.partialorder %v131, 0.0
  %v134 = vmul.f32 %v130, 0.01
  %v135 = vmul.f32 %v131, 0.01
  %v136 = vsel %vm132, %v130, %v134
  %v137 = vsel %vm133, %v131, %v135
  %v138 = vld [vmem:[%s4] sm:$0xff]
  %v139 = vld [vmem:[%s4 + $0x8] sm:$0xff]
  %v140 = vld [vmem:[%s4 + $0x10] sm:$0xff]
  %v141 = vld [vmem:[%s4 + $0x18] sm:$0xff]
  %v142 = vld [vmem:[%s4 + $0x20] sm:$0xff]
  %v143 = vld [vmem:[%s4 + $0x28] sm:$0xff]
  %v144 = vld [vmem:[%s4 + $0x30] sm:$0xff]
  %v145 = vld [vmem:[%s4 + $0x38] sm:$0xff]
  %v146 = vld [vmem:[%s4 + $0x40] sm:$0xff]
  %v147 = vld [vmem:[%s4 + $0x48] sm:$0xff]
  %v148 = vld [vmem:[%s4 + $0x50] sm:$0xff]
  %v149 = vld [vmem:[%s4 + $0x58] sm:$0xff]
  %v150 = vld [vmem:[%s4 + $0x60] sm:$0xff]
  %v151 = vld [vmem:[%s4 + $0x68] sm:$0xff]
  %v152 = vld [vmem:[%s4 + $0x70] sm:$0xff]
  %v153 = vld [vmem:[%s4 + $0x78] sm:$0xff]
  %v154 = vld [vmem:[%s5] sm:$0x1]
  %v156 = vlaneseq
  %v157 = vshrl.u32 %v156, 7
  %v158 = vsub.s32 0, %v157
  %v159 = vrot.slane %v154, %v158
  %161 = vmatprep.subr.mxu0 0.0
  %162 = vmatpush1.msra.mxu0 %v153
  %163 = vmatprep.subr.mxu0 0.0
  %164 = vmatpush1.msra.mxu0 %v152
  %165 = vmatprep.subr.mxu0 0.0
  %166 = vmatpush1.msra.mxu0 %v151
  %167 = vmatprep.subr.mxu0 0.0
  %168 = vmatpush1.msra.mxu0 %v150
  %169 = vmatprep.subr.mxu0 0.0
  %170 = vmatpush1.msra.mxu0 %v149
  %171 = vmatprep.subr.mxu0 0.0
  %172 = vmatpush1.msra.mxu0 %v148
  %173 = vmatprep.subr.mxu0 0.0
  %174 = vmatpush1.msra.mxu0 %v147
  %175 = vmatprep.subr.mxu0 0.0
  %176 = vmatpush1.msra.mxu0 %v146
  %177 = vmatprep.subr.mxu0 0.0
  %178 = vmatpush1.msra.mxu0 %v145
  %179 = vmatprep.subr.mxu0 0.0
  %180 = vmatpush1.msra.mxu0 %v144
  %181 = vmatprep.subr.mxu0 0.0
  %182 = vmatpush1.msra.mxu0 %v143
  %183 = vmatprep.subr.mxu0 0.0
  %184 = vmatpush1.msra.mxu0 %v142
  %185 = vmatprep.subr.mxu0 0.0
  %186 = vmatpush1.msra.mxu0 %v141
  %187 = vmatprep.subr.mxu0 0.0
  %188 = vmatpush1.msra.mxu0 %v140
  %189 = vmatprep.subr.mxu0 0.0
  %190 = vmatpush1.msra.mxu0 %v139
  %191 = vmatprep.subr.mxu0 0.0
  %192 = vmatpush1.msra.mxu0 %v138
  %193 = vmatprep.subr.mxu0 0.0
  %194 = vmatpush2.msra.mxu0 0.0
  %195 = vmatprep.subr.mxu0 0.0
  %196 = vmatpush2.msra.mxu0 0.0
  %197 = vmatprep.subr.mxu0 0.0
  %198 = vmatpush2.msra.mxu0 0.0
  %199 = vmatprep.subr.mxu0 0.0
  %200 = vmatpush2.msra.mxu0 0.0
  %201 = vmatprep.subr.mxu0 0.0
  %202 = vmatpush2.msra.mxu0 0.0
  %203 = vmatprep.subr.mxu0 0.0
  %204 = vmatpush2.msra.mxu0 0.0
  %205 = vmatprep.subr.mxu0 0.0
  %206 = vmatpush2.msra.mxu0 0.0
  %207 = vmatprep.subr.mxu0 0.0
  %208 = vmatpush2.msra.mxu0 0.0
  %209 = vmatprep.subr.mxu0 0.0
  %210 = vmatpush2.msra.mxu0 0.0
  %211 = vmatprep.subr.mxu0 0.0
  %212 = vmatpush2.msra.mxu0 0.0
  %213 = vmatprep.subr.mxu0 0.0
  %214 = vmatpush2.msra.mxu0 0.0
  %215 = vmatprep.subr.mxu0 0.0
  %216 = vmatpush2.msra.mxu0 0.0
  %217 = vmatprep.subr.mxu0 0.0
  %218 = vmatpush2.msra.mxu0 0.0
  %219 = vmatprep.subr.mxu0 0.0
  %220 = vmatpush2.msra.mxu0 0.0
  %221 = vmatprep.subr.mxu0 0.0
  %222 = vmatpush2.msra.mxu0 0.0
  %223 = vmatprep.subr.mxu0 0.0
  %224 = vmatpush2.msra.mxu0 0.0
  %225 = vmatprep.mubr.f32.mxu0 0.0
  %226 = vmatmul.mubr.f32.gmra.mxu0 %v136
  %v227 = vpop.f32.mrf.mxu0
  %v228 = vadd.f32 %v159, %v227
  %v229 = vpop.f32.mrf.mxu0
  %230 = vmatprep.mubr.f32.mxu0 0.0
  %231 = vmatmul.mubr.f32.gmra.mxu0 %v137
  %v232 = vpop.f32.mrf.mxu0
  %v233 = vadd.f32 %v159, %v232
  %v234 = vpop.f32.mrf.mxu0
  %235 = vdwg.mxu0
  %vm236 = vcmp.gt.f32.partialorder %v228, 0.0
  %vm237 = vcmp.gt.f32.partialorder %v233, 0.0
  %v238 = vmul.f32 %v228, 0.01
  %v239 = vmul.f32 %v233, 0.01
  %v240 = vsel %vm236, %v228, %v238
  %v241 = vsel %vm237, %v233, %v239
  %242 = vst [vmem:[%s7] sm:$0xff] %v240
  %243 = vst [vmem:[%s7 + $0x8] sm:$0xff] %v241
  %v244 = vld [vmem:[%s6] sm:$0xff]
  %v245 = vld [vmem:[%s6 + $0x8] sm:$0xff]
  %v246 = vadd.f32 %v240, %v244
  %v247 = vadd.f32 %v241, %v245
  %248 = vst [vmem:[%s8] sm:$0xff] %v246
  %249 = vst [vmem:[%s8 + $0x8] sm:$0xff] %v247
  // Predicated region
  $region30: #{forward.36} parent=0 // pred_check
    _
  $region31: #{forward.36} parent=0 // pred_check_branch
    %251 = sbr.rel (0) target = $region33
  $region32: #{forward.36} parent=0 // pred_region
    _
  $region33: #{forward.36} parent=0 // pred_fallthru
    _
  // Predicated region
  $region34: #{forward.36} parent=0 // pred_check
    _
  $region35: #{forward.36} parent=0 // pred_check_branch
    %253 = sbr.rel (0) target = $region37
  $region36: #{forward.36} parent=0 // pred_region
    _
  $region37: #{forward.36} parent=0 // pred_fallthru
    _
  // Predicated region
  $region38: #{forward.36} parent=0 // pred_check
    _
  $region39: #{forward.36} parent=0 // pred_check_branch
    %255 = sbr.rel (0) target = $region41
  $region40: #{forward.36} parent=0 // pred_region
    _
  $region41: #{forward.36} parent=0 // pred_fallthru
    _
  // Predicated region
  $region42: #{forward.36} parent=0 // pred_check
    _
  $region43: #{forward.36} parent=0 // pred_check_branch
    %257 = sbr.rel (0) target = $region45
  $region44: #{forward.36} parent=0 // pred_region
    _
  $region45: #{forward.36} parent=0 // pred_fallthru
    _

// kernel: forward.59
$region0: #{forward.59}
  #allocation0 [shape = 'u32[]', space=smem, size = 0x4, offset = 0x4, fixed_abs, tag = 'smem constant byte address 0x4 - core index']
  #allocation1 [shape = 'u32[144,128]{1,0:T(1,128)}', space=vmem, size = 0x12000, scoped, tag = 'internal scratch']
  %s0 = inlined_call_operand.vmem [shape: f32[8,128], index: 0, kind: input, shape index: {}]
  %s1 = inlined_call_operand.vmem [shape: f32[128,128], index: 1, kind: input, shape index: {}]
  %s2 = inlined_call_operand.vmem [shape: f32[1,128], index: 2, kind: input, shape index: {}]
  %s3 = inlined_call_operand.vmem [shape: f32[8,128], index: 3, kind: output, shape index: {}]
  %s4 = sld [smem:[#allocation0]]
  $region22: #{forward.59} parent=0
    _
  %s6 = ssub.s32 1, %s4
  %s7 = scalar_select 0, %s6, %s4
  // Predicated region
  $region2: #{forward.59} parent=0 // pred_check
    _
  $region3: #{forward.59} parent=0 // pred_check_branch
    %9 = sbr.rel (0) target = $region5
  $region4: #{forward.59} parent=0 // pred_region
    _
  $region5: #{forward.59} parent=0 // pred_fallthru
    _
  // Predicated region
  $region6: #{forward.59} parent=0 // pred_check
    _
  $region7: #{forward.59} parent=0 // pred_check_branch
    %11 = sbr.rel (0) target = $region9
  $region8: #{forward.59} parent=0 // pred_region
    _
  $region9: #{forward.59} parent=0 // pred_fallthru
    _
  // Predicated region
  $region10: #{forward.59} parent=0 // pred_check
    _
  $region11: #{forward.59} parent=0 // pred_check_branch
    %13 = sbr.rel (0) target = $region13
  $region12: #{forward.59} parent=0 // pred_region
    _
  $region13: #{forward.59} parent=0 // pred_fallthru
    _
  %v14 = vld [vmem:[%s0] sm:$0xff]
  %v15 = vld [vmem:[%s1] sm:$0xff]
  %v16 = vld [vmem:[%s1 + $0x8] sm:$0xff]
  %v17 = vld [vmem:[%s1 + $0x10] sm:$0xff]
  %v18 = vld [vmem:[%s1 + $0x18] sm:$0xff]
  %v19 = vld [vmem:[%s1 + $0x20] sm:$0xff]
  %v20 = vld [vmem:[%s1 + $0x28] sm:$0xff]
  %v21 = vld [vmem:[%s1 + $0x30] sm:$0xff]
  %v22 = vld [vmem:[%s1 + $0x38] sm:$0xff]
  %v23 = vld [vmem:[%s1 + $0x40] sm:$0xff]
  %v24 = vld [vmem:[%s1 + $0x48] sm:$0xff]
  %v25 = vld [vmem:[%s1 + $0x50] sm:$0xff]
  %v26 = vld [vmem:[%s1 + $0x58] sm:$0xff]
  %v27 = vld [vmem:[%s1 + $0x60] sm:$0xff]
  %v28 = vld [vmem:[%s1 + $0x68] sm:$0xff]
  %v29 = vld [vmem:[%s1 + $0x70] sm:$0xff]
  %v30 = vld [vmem:[%s1 + $0x78] sm:$0xff]
  %v31 = vld [vmem:[%s2] sm:$0x1]
  %v33 = vlaneseq
  %v34 = vshrl.u32 %v33, 7
  %v35 = vsub.s32 0, %v34
  %v36 = vrot.slane %v31, %v35
  %38 = vmatprep.subr.mxu0 0.0
  %39 = vmatpush1.msra.mxu0 %v30
  %40 = vmatprep.subr.mxu0 0.0
  %41 = vmatpush1.msra.mxu0 %v29
  %42 = vmatprep.subr.mxu0 0.0
  %43 = vmatpush1.msra.mxu0 %v28
  %44 = vmatprep.subr.mxu0 0.0
  %45 = vmatpush1.msra.mxu0 %v27
  %46 = vmatprep.subr.mxu0 0.0
  %47 = vmatpush1.msra.mxu0 %v26
  %48 = vmatprep.subr.mxu0 0.0
  %49 = vmatpush1.msra.mxu0 %v25
  %50 = vmatprep.subr.mxu0 0.0
  %51 = vmatpush1.msra.mxu0 %v24
  %52 = vmatprep.subr.mxu0 0.0
  %53 = vmatpush1.msra.mxu0 %v23
  %54 = vmatprep.subr.mxu0 0.0
  %55 = vmatpush1.msra.mxu0 %v22
  %56 = vmatprep.subr.mxu0 0.0
  %57 = vmatpush1.msra.mxu0 %v21
  %58 = vmatprep.subr.mxu0 0.0
  %59 = vmatpush1.msra.mxu0 %v20
  %60 = vmatprep.subr.mxu0 0.0
  %61 = vmatpush1.msra.mxu0 %v19
  %62 = vmatprep.subr.mxu0 0.0
  %63 = vmatpush1.msra.mxu0 %v18
  %64 = vmatprep.subr.mxu0 0.0
  %65 = vmatpush1.msra.mxu0 %v17
  %66 = vmatprep.subr.mxu0 0.0
  %67 = vmatpush1.msra.mxu0 %v16
  %68 = vmatprep.subr.mxu0 0.0
  %69 = vmatpush1.msra.mxu0 %v15
  %70 = vmatprep.subr.mxu0 0.0
  %71 = vmatpush2.msra.mxu0 0.0
  %72 = vmatprep.subr.mxu0 0.0
  %73 = vmatpush2.msra.mxu0 0.0
  %74 = vmatprep.subr.mxu0 0.0
  %75 = vmatpush2.msra.mxu0 0.0
  %76 = vmatprep.subr.mxu0 0.0
  %77 = vmatpush2.msra.mxu0 0.0
  %78 = vmatprep.subr.mxu0 0.0
  %79 = vmatpush2.msra.mxu0 0.0
  %80 = vmatprep.subr.mxu0 0.0
  %81 = vmatpush2.msra.mxu0 0.0
  %82 = vmatprep.subr.mxu0 0.0
  %83 = vmatpush2.msra.mxu0 0.0
  %84 = vmatprep.subr.mxu0 0.0
  %85 = vmatpush2.msra.mxu0 0.0
  %86 = vmatprep.subr.mxu0 0.0
  %87 = vmatpush2.msra.mxu0 0.0
  %88 = vmatprep.subr.mxu0 0.0
  %89 = vmatpush2.msra.mxu0 0.0
  %90 = vmatprep.subr.mxu0 0.0
  %91 = vmatpush2.msra.mxu0 0.0
  %92 = vmatprep.subr.mxu0 0.0
  %93 = vmatpush2.msra.mxu0 0.0
  %94 = vmatprep.subr.mxu0 0.0
  %95 = vmatpush2.msra.mxu0 0.0
  %96 = vmatprep.subr.mxu0 0.0
  %97 = vmatpush2.msra.mxu0 0.0
  %98 = vmatprep.subr.mxu0 0.0
  %99 = vmatpush2.msra.mxu0 0.0
  %100 = vmatprep.subr.mxu0 0.0
  %101 = vmatpush2.msra.mxu0 0.0
  %102 = vmatprep.mubr.f32.mxu0 0.0
  %103 = vmatmul.mubr.f32.gmra.mxu0 %v14
  %v104 = vpop.f32.mrf.mxu0
  %v105 = vadd.f32 %v36, %v104
  %v106 = vpop.f32.mrf.mxu0
  %107 = vdwg.mxu0
  %vm108 = vcmp.gt.f32.partialorder %v105, 0.0
  %v109 = vmul.f32 %v105, 0.01
  %v110 = vsel %vm108, %v105, %v109
  %111 = vst [vmem:[%s3] sm:$0xff] %v110
  // Predicated region
  $region14: #{forward.59} parent=0 // pred_check
    _
  $region15: #{forward.59} parent=0 // pred_check_branch
    %113 = sbr.rel (0) target = $region17
  $region16: #{forward.59} parent=0 // pred_region
    _
  $region17: #{forward.59} parent=0 // pred_fallthru
    _
  // Predicated region
  $region18: #{forward.59} parent=0 // pred_check
    _
  $region19: #{forward.59} parent=0 // pred_check_branch
    %115 = sbr.rel (0) target = $region21
  $region20: #{forward.59} parent=0 // pred_region
    _
  $region21: #{forward.59} parent=0 // pred_fallthru
    _

// kernel: forward.60
$region0: #{forward.60}
  #allocation0 [shape = 'u32[]', space=smem, size = 0x4, offset = 0x4, fixed_abs, tag = 'smem constant byte address 0x4 - core index']
  #allocation1 [shape = 'u32[144,128]{1,0:T(1,128)}', space=vmem, size = 0x12000, scoped, tag = 'internal scratch']
  #allocation2 [shape = 'f32[8,128]{1,0:T(8,128)}', space=vmem, size = 0x1000, scoped, tag = 'scratch operand']
  %s0 = inlined_call_operand.vmem [shape: f32[8,8], index: 0, kind: input, shape index: {}]
  %s1 = inlined_call_operand.vmem [shape: f32[8,128], index: 1, kind: input, shape index: {}]
  %s2 = inlined_call_operand.vmem [shape: f32[8,1], index: 2, kind: input, shape index: {}]
  %s3 = inlined_call_operand.vmem [shape: f32[8,128], index: 3, kind: output, shape index: {}]
  %s4 = sld [smem:[#allocation0]]
  $region30: #{forward.60} parent=0
    _
  %s6 = ssub.s32 1, %s4
  %s7 = scalar_select 0, %s6, %s4
  // Predicated region
  $region2: #{forward.60} parent=0 // pred_check
    _
  $region3: #{forward.60} parent=0 // pred_check_branch
    %9 = sbr.rel (0) target = $region5
  $region4: #{forward.60} parent=0 // pred_region
    _
  $region5: #{forward.60} parent=0 // pred_fallthru
    _
  // Predicated region
  $region6: #{forward.60} parent=0 // pred_check
    _
  $region7: #{forward.60} parent=0 // pred_check_branch
    %11 = sbr.rel (0) target = $region9
  $region8: #{forward.60} parent=0 // pred_region
    _
  $region9: #{forward.60} parent=0 // pred_fallthru
    _
  // Predicated region
  $region10: #{forward.60} parent=0 // pred_check
    _
  $region11: #{forward.60} parent=0 // pred_check_branch
    %13 = sbr.rel (0) target = $region13
  $region12: #{forward.60} parent=0 // pred_region
    _
  $region13: #{forward.60} parent=0 // pred_fallthru
    _
  %p14 = scmp.eq.s32.totalorder 0, 0
  // Predicated region
  $region14: #{forward.60} parent=0 // pred_check
    %p15 = pneg %p14
  $region15: #{forward.60} parent=0 // pred_check_branch
    %17 = sbr.rel (%p15) target = $region17
  $region16: #{forward.60} parent=0 // pred_region
    %18 = vst [vmem:[#allocation2] sm:$0xff] 0.0
  $region17: #{forward.60} parent=0 // pred_fallthru
    _
  %v19 = vld [vmem:[#allocation2] sm:$0xff]
  %v20 = vld [vmem:[%s0] sm:$0xff]
  %v21 = vld [vmem:[%s1] sm:$0xff]
  %vm22 = vcmask 64512
  %v24 = vsel %vm22, %v20, 0
  %26 = vmatprep.subr.mxu0 0.0
  %27 = vmatpush1.msra.mxu0 0.0
  %28 = vmatprep.subr.mxu0 0.0
  %29 = vmatpush1.msra.mxu0 0.0
  %30 = vmatprep.subr.mxu0 0.0
  %31 = vmatpush1.msra.mxu0 0.0
  %32 = vmatprep.subr.mxu0 0.0
  %33 = vmatpush1.msra.mxu0 0.0
  %34 = vmatprep.subr.mxu0 0.0
  %35 = vmatpush1.msra.mxu0 0.0
  %36 = vmatprep.subr.mxu0 0.0
  %37 = vmatpush1.msra.mxu0 0.0
  %38 = vmatprep.subr.mxu0 0.0
  %39 = vmatpush1.msra.mxu0 0.0
  %40 = vmatprep.subr.mxu0 0.0
  %41 = vmatpush1.msra.mxu0 0.0
  %42 = vmatprep.subr.mxu0 0.0
  %43 = vmatpush1.msra.mxu0 0.0
  %44 = vmatprep.subr.mxu0 0.0
  %45 = vmatpush1.msra.mxu0 0.0
  %46 = vmatprep.subr.mxu0 0.0
  %47 = vmatpush1.msra.mxu0 0.0
  %48 = vmatprep.subr.mxu0 0.0
  %49 = vmatpush1.msra.mxu0 0.0
  %50 = vmatprep.subr.mxu0 0.0
  %51 = vmatpush1.msra.mxu0 0.0
  %52 = vmatprep.subr.mxu0 0.0
  %53 = vmatpush1.msra.mxu0 0.0
  %54 = vmatprep.subr.mxu0 0.0
  %55 = vmatpush1.msra.mxu0 0.0
  %56 = vmatprep.subr.mxu0 0.0
  %57 = vmatpush1.msra.mxu0 %v21
  %58 = vmatprep.subr.mxu0 0.0
  %59 = vmatpush2.msra.mxu0 0.0
  %60 = vmatprep.subr.mxu0 0.0
  %61 = vmatpush2.msra.mxu0 0.0
  %62 = vmatprep.subr.mxu0 0.0
  %63 = vmatpush2.msra.mxu0 0.0
  %64 = vmatprep.subr.mxu0 0.0
  %65 = vmatpush2.msra.mxu0 0.0
  %66 = vmatprep.subr.mxu0 0.0
  %67 = vmatpush2.msra.mxu0 0.0
  %68 = vmatprep.subr.mxu0 0.0
  %69 = vmatpush2.msra.mxu0 0.0
  %70 = vmatprep.subr.mxu0 0.0
  %71 = vmatpush2.msra.mxu0 0.0
  %72 = vmatprep.subr.mxu0 0.0
  %73 = vmatpush2.msra.mxu0 0.0
  %74 = vmatprep.subr.mxu0 0.0
  %75 = vmatpush2.msra.mxu0 0.0
  %76 = vmatprep.subr.mxu0 0.0
  %77 = vmatpush2.msra.mxu0 0.0
  %78 = vmatprep.subr.mxu0 0.0
  %79 = vmatpush2.msra.mxu0 0.0
  %80 = vmatprep.subr.mxu0 0.0
  %81 = vmatpush2.msra.mxu0 0.0
  %82 = vmatprep.subr.mxu0 0.0
  %83 = vmatpush2.msra.mxu0 0.0
  %84 = vmatprep.subr.mxu0 0.0
  %85 = vmatpush2.msra.mxu0 0.0
  %86 = vmatprep.subr.mxu0 0.0
  %87 = vmatpush2.msra.mxu0 0.0
  %88 = vmatprep.subr.mxu0 0.0
  %89 = vmatpush2.msra.mxu0 0.0
  %90 = vmatprep.mubr.f32.mxu0 0.0
  %91 = vmatmul.mubr.f32.gmra.mxu0 %v24
  %v92 = vpop.f32.mrf.mxu0
  %v93 = vadd.f32 0.0, %v92
  %v94 = vpop.f32.mrf.mxu0
  %95 = vdwg.mxu0
  %v96 = vadd.f32 %v19, %v93
  %97 = vst [vmem:[#allocation2] sm:$0xff] %v96
  // Predicated region
  $region18: #{forward.60} parent=0 // pred_check
    %p98 = pneg %p14
  $region19: #{forward.60} parent=0 // pred_check_branch
    %100 = sbr.rel (%p98) target = $region21
  $region20: #{forward.60} parent=0 // pred_region
    %v101 = vld [vmem:[#allocation2] sm:$0xff]
    %v102 = vld [vmem:[%s2] sm:$0xff]
    %104 = vset.pattern.permute.xlu0 0
    %105 = vperm.xlu0 %104, %v102
    %v106 = vpop.permute.xlu0 %105
    %v108 = vrcp.pop %v106
    %v109 = vmul.f32 %v101, %v108
    %110 = vst [vmem:[%s3] sm:$0xff] %v109
  $region21: #{forward.60} parent=0 // pred_fallthru
    _
  // Predicated region
  $region22: #{forward.60} parent=0 // pred_check
    _
  $region23: #{forward.60} parent=0 // pred_check_branch
    %112 = sbr.rel (0) target = $region25
  $region24: #{forward.60} parent=0 // pred_region
    _
  $region25: #{forward.60} parent=0 // pred_fallthru
    _
  // Predicated region
  $region26: #{forward.60} parent=0 // pred_check
    _
  $region27: #{forward.60} parent=0 // pred_check_branch
    %114 = sbr.rel (0) target = $region29
  $region28: #{forward.60} parent=0 // pred_region
    _
  $region29: #{forward.60} parent=0 // pred_fallthru
    _

// kernel: forward.41
$region0: #{forward.41}
  #allocation0 [shape = 'u32[]', space=smem, size = 0x4, offset = 0x4, fixed_abs, tag = 'smem constant byte address 0x4 - core index']
  #allocation1 [shape = 'u32[144,128]{1,0:T(1,128)}', space=vmem, size = 0x12000, scoped, tag = 'internal scratch']
  %s0 = inlined_call_operand.vmem [shape: f32[8,128], index: 0, kind: input, shape index: {}]
  %s1 = inlined_call_operand.vmem [shape: f32[8,128], index: 1, kind: input, shape index: {}]
  %s2 = inlined_call_operand.vmem [shape: f32[8,128], index: 2, kind: input, shape index: {}, may-alias: {2,7}]
  %s3 = inlined_call_operand.vmem [shape: f32[384,128], index: 3, kind: input, shape index: {}]
  %s4 = inlined_call_operand.vmem [shape: f32[1,128], index: 4, kind: input, shape index: {}]
  %s5 = inlined_call_operand.vmem [shape: f32[128,128], index: 5, kind: input, shape index: {}]
  %s6 = inlined_call_operand.vmem [shape: f32[1,128], index: 6, kind: input, shape index: {}]
  %s7 = inlined_call_operand.vmem [shape: f32[8,128], index: 7, kind: input, shape index: {}, may-alias: {2,7}]
  %s8 = inlined_call_operand.vmem [shape: f32[8,128], index: 8, kind: output, shape index: {}]
  %s9 = sld [smem:[#allocation0]]
  $region42: #{forward.41} parent=0
    _
  %s11 = ssub.s32 1, %s9
  %s12 = scalar_select 0, %s11, %s9
  // Predicated region
  $region2: #{forward.41} parent=0 // pred_check
    _
  $region3: #{forward.41} parent=0 // pred_check_branch
    %14 = sbr.rel (0) target = $region5
  $region4: #{forward.41} parent=0 // pred_region
    _
  $region5: #{forward.41} parent=0 // pred_fallthru
    _
  // Predicated region
  $region6: #{forward.41} parent=0 // pred_check
    _
  $region7: #{forward.41} parent=0 // pred_check_branch
    %16 = sbr.rel (0) target = $region9
  $region8: #{forward.41} parent=0 // pred_region
    _
  $region9: #{forward.41} parent=0 // pred_fallthru
    _
  // Predicated region
  $region10: #{forward.41} parent=0 // pred_check
    _
  $region11: #{forward.41} parent=0 // pred_check_branch
    %18 = sbr.rel (0) target = $region13
  $region12: #{forward.41} parent=0 // pred_region
    _
  $region13: #{forward.41} parent=0 // pred_fallthru
    _
  // Predicated region
  $region14: #{forward.41} parent=0 // pred_check
    _
  $region15: #{forward.41} parent=0 // pred_check_branch
    %20 = sbr.rel (0) target = $region17
  $region16: #{forward.41} parent=0 // pred_region
    _
  $region17: #{forward.41} parent=0 // pred_fallthru
    _
  // Predicated region
  $region18: #{forward.41} parent=0 // pred_check
    _
  $region19: #{forward.41} parent=0 // pred_check_branch
    %22 = sbr.rel (0) target = $region21
  $region20: #{forward.41} parent=0 // pred_region
    _
  $region21: #{forward.41} parent=0 // pred_fallthru
    _
  // Predicated region
  $region22: #{forward.41} parent=0 // pred_check
    _
  $region23: #{forward.41} parent=0 // pred_check_branch
    %24 = sbr.rel (0) target = $region25
  $region24: #{forward.41} parent=0 // pred_region
    _
  $region25: #{forward.41} parent=0 // pred_fallthru
    _
  // Predicated region
  $region26: #{forward.41} parent=0 // pred_check
    _
  $region27: #{forward.41} parent=0 // pred_check_branch
    %26 = sbr.rel (0) target = $region29
  $region28: #{forward.41} parent=0 // pred_region
    _
  $region29: #{forward.41} parent=0 // pred_fallthru
    _
  // Predicated region
  $region30: #{forward.41} parent=0 // pred_check
    _
  $region31: #{forward.41} parent=0 // pred_check_branch
    %28 = sbr.rel (0) target = $region33
  $region32: #{forward.41} parent=0 // pred_region
    _
  $region33: #{forward.41} parent=0 // pred_fallthru
    _
  %v29 = vld [vmem:[%s0] sm:$0xff]
  %v30 = vld [vmem:[%s1] sm:$0xff]
  %v31 = vld [vmem:[%s2] sm:$0xff]
  %v32 = vld [vmem:[%s3] sm:$0xff]
  %v33 = vld [vmem:[%s3 + $0x8] sm:$0xff]
  %v34 = vld [vmem:[%s3 + $0x10] sm:$0xff]
  %v35 = vld [vmem:[%s3 + $0x18] sm:$0xff]
  %v36 = vld [vmem:[%s3 + $0x20] sm:$0xff]
  %v37 = vld [vmem:[%s3 + $0x28] sm:$0xff]
  %v38 = vld [vmem:[%s3 + $0x30] sm:$0xff]
  %v39 = vld [vmem:[%s3 + $0x38] sm:$0xff]
  %v40 = vld [vmem:[%s3 + $0x40] sm:$0xff]
  %v41 = vld [vmem:[%s3 + $0x48] sm:$0xff]
  %v42 = vld [vmem:[%s3 + $0x50] sm:$0xff]
  %v43 = vld [vmem:[%s3 + $0x58] sm:$0xff]
  %v44 = vld [vmem:[%s3 + $0x60] sm:$0xff]
  %v45 = vld [vmem:[%s3 + $0x68] sm:$0xff]
  %v46 = vld [vmem:[%s3 + $0x70] sm:$0xff]
  %v47 = vld [vmem:[%s3 + $0x78] sm:$0xff]
  %v48 = vld [vmem:[%s3 + $0x80] sm:$0xff]
  %v49 = vld [vmem:[%s3 + $0x88] sm:$0xff]
  %v50 = vld [vmem:[%s3 + $0x90] sm:$0xff]
  %v51 = vld [vmem:[%s3 + $0x98] sm:$0xff]
  %v52 = vld [vmem:[%s3 + $0xa0] sm:$0xff]
  %v53 = vld [vmem:[%s3 + $0xa8] sm:$0xff]
  %v54 = vld [vmem:[%s3 + $0xb0] sm:$0xff]
  %v55 = vld [vmem:[%s3 + $0xb8] sm:$0xff]
  %v56 = vld [vmem:[%s3 + $0xc0] sm:$0xff]
  %v57 = vld [vmem:[%s3 + $0xc8] sm:$0xff]
  %v58 = vld [vmem:[%s3 + $0xd0] sm:$0xff]
  %v59 = vld [vmem:[%s3 + $0xd8] sm:$0xff]
  %v60 = vld [vmem:[%s3 + $0xe0] sm:$0xff]
  %v61 = vld [vmem:[%s3 + $0xe8] sm:$0xff]
  %v62 = vld [vmem:[%s3 + $0xf0] sm:$0xff]
  %v63 = vld [vmem:[%s3 + $0xf8] sm:$0xff]
  %v64 = vld [vmem:[%s3 + $0x100] sm:$0xff]
  %v65 = vld [vmem:[%s3 + $0x108] sm:$0xff]
  %v66 = vld [vmem:[%s3 + $0x110] sm:$0xff]
  %v67 = vld [vmem:[%s3 + $0x118] sm:$0xff]
  %v68 = vld [vmem:[%s3 + $0x120] sm:$0xff]
  %v69 = vld [vmem:[%s3 + $0x128] sm:$0xff]
  %v70 = vld [vmem:[%s3 + $0x130] sm:$0xff]
  %v71 = vld [vmem:[%s3 + $0x138] sm:$0xff]
  %v72 = vld [vmem:[%s3 + $0x140] sm:$0xff]
  %v73 = vld [vmem:[%s3 + $0x148] sm:$0xff]
  %v74 = vld [vmem:[%s3 + $0x150] sm:$0xff]
  %v75 = vld [vmem:[%s3 + $0x158] sm:$0xff]
  %v76 = vld [vmem:[%s3 + $0x160] sm:$0xff]
  %v77 = vld [vmem:[%s3 + $0x168] sm:$0xff]
  %v78 = vld [vmem:[%s3 + $0x170] sm:$0xff]
  %v79 = vld [vmem:[%s3 + $0x178] sm:$0xff]
  %v80 = vld [vmem:[%s4] sm:$0x1]
  %v82 = vlaneseq
  %v83 = vshrl.u32 %v82, 7
  %v84 = vsub.s32 0, %v83
  %v85 = vrot.slane %v80, %v84
  %87 = vmatprep.subr.mxu0 0.0
  %88 = vmatpush1.msra.mxu0 %v47
  %89 = vmatprep.subr.mxu0 0.0
  %90 = vmatpush1.msra.mxu0 %v46
  %91 = vmatprep.subr.mxu0 0.0
  %92 = vmatpush1.msra.mxu0 %v45
  %93 = vmatprep.subr.mxu0 0.0
  %94 = vmatpush1.msra.mxu0 %v44
  %95 = vmatprep.subr.mxu0 0.0
  %96 = vmatpush1.msra.mxu0 %v43
  %97 = vmatprep.subr.mxu0 0.0
  %98 = vmatpush1.msra.mxu0 %v42
  %99 = vmatprep.subr.mxu0 0.0
  %100 = vmatpush1.msra.mxu0 %v41
  %101 = vmatprep.subr.mxu0 0.0
  %102 = vmatpush1.msra.mxu0 %v40
  %103 = vmatprep.subr.mxu0 0.0
  %104 = vmatpush1.msra.mxu0 %v39
  %105 = vmatprep.subr.mxu0 0.0
  %106 = vmatpush1.msra.mxu0 %v38
  %107 = vmatprep.subr.mxu0 0.0
  %108 = vmatpush1.msra.mxu0 %v37
  %109 = vmatprep.subr.mxu0 0.0
  %110 = vmatpush1.msra.mxu0 %v36
  %111 = vmatprep.subr.mxu0 0.0
  %112 = vmatpush1.msra.mxu0 %v35
  %113 = vmatprep.subr.mxu0 0.0
  %114 = vmatpush1.msra.mxu0 %v34
  %115 = vmatprep.subr.mxu0 0.0
  %116 = vmatpush1.msra.mxu0 %v33
  %117 = vmatprep.subr.mxu0 0.0
  %118 = vmatpush1.msra.mxu0 %v32
  %119 = vmatprep.subr.mxu0 0.0
  %120 = vmatpush2.msra.mxu0 %v63
  %121 = vmatprep.subr.mxu0 0.0
  %122 = vmatpush2.msra.mxu0 %v62
  %123 = vmatprep.subr.mxu0 0.0
  %124 = vmatpush2.msra.mxu0 %v61
  %125 = vmatprep.subr.mxu0 0.0
  %126 = vmatpush2.msra.mxu0 %v60
  %127 = vmatprep.subr.mxu0 0.0
  %128 = vmatpush2.msra.mxu0 %v59
  %129 = vmatprep.subr.mxu0 0.0
  %130 = vmatpush2.msra.mxu0 %v58
  %131 = vmatprep.subr.mxu0 0.0
  %132 = vmatpush2.msra.mxu0 %v57
  %133 = vmatprep.subr.mxu0 0.0
  %134 = vmatpush2.msra.mxu0 %v56
  %135 = vmatprep.subr.mxu0 0.0
  %136 = vmatpush2.msra.mxu0 %v55
  %137 = vmatprep.subr.mxu0 0.0
  %138 = vmatpush2.msra.mxu0 %v54
  %139 = vmatprep.subr.mxu0 0.0
  %140 = vmatpush2.msra.mxu0 %v53
  %141 = vmatprep.subr.mxu0 0.0
  %142 = vmatpush2.msra.mxu0 %v52
  %143 = vmatprep.subr.mxu0 0.0
  %144 = vmatpush2.msra.mxu0 %v51
  %145 = vmatprep.subr.mxu0 0.0
  %146 = vmatpush2.msra.mxu0 %v50
  %147 = vmatprep.subr.mxu0 0.0
  %148 = vmatpush2.msra.mxu0 %v49
  %149 = vmatprep.subr.mxu0 0.0
  %150 = vmatpush2.msra.mxu0 %v48
  %151 = vmatprep.mubr.f32.mxu0 %v30
  %152 = vmatmul.mubr.f32.gmra.mxu0 %v29
  %v153 = vpop.f32.mrf.mxu0
  %v154 = vadd.f32 %v85, %v153
  %v155 = vpop.f32.mrf.mxu0
  %156 = vdwg.mxu0
  %157 = vmatprep.subr.mxu0 0.0
  %158 = vmatpush1.msra.mxu0 %v79
  %159 = vmatprep.subr.mxu0 0.0
  %160 = vmatpush1.msra.mxu0 %v78
  %161 = vmatprep.subr.mxu0 0.0
  %162 = vmatpush1.msra.mxu0 %v77
  %163 = vmatprep.subr.mxu0 0.0
  %164 = vmatpush1.msra.mxu0 %v76
  %165 = vmatprep.subr.mxu0 0.0
  %166 = vmatpush1.msra.mxu0 %v75
  %167 = vmatprep.subr.mxu0 0.0
  %168 = vmatpush1.msra.mxu0 %v74
  %169 = vmatprep.subr.mxu0 0.0
  %170 = vmatpush1.msra.mxu0 %v73
  %171 = vmatprep.subr.mxu0 0.0
  %172 = vmatpush1.msra.mxu0 %v72
  %173 = vmatprep.subr.mxu0 0.0
  %174 = vmatpush1.msra.mxu0 %v71
  %175 = vmatprep.subr.mxu0 0.0
  %176 = vmatpush1.msra.mxu0 %v70
  %177 = vmatprep.subr.mxu0 0.0
  %178 = vmatpush1.msra.mxu0 %v69
  %179 = vmatprep.subr.mxu0 0.0
  %180 = vmatpush1.msra.mxu0 %v68
  %181 = vmatprep.subr.mxu0 0.0
  %182 = vmatpush1.msra.mxu0 %v67
  %183 = vmatprep.subr.mxu0 0.0
  %184 = vmatpush1.msra.mxu0 %v66
  %185 = vmatprep.subr.mxu0 0.0
  %186 = vmatpush1.msra.mxu0 %v65
  %187 = vmatprep.subr.mxu0 0.0
  %188 = vmatpush1.msra.mxu0 %v64
  %189 = vmatprep.subr.mxu0 0.0
  %190 = vmatpush2.msra.mxu0 0.0
  %191 = vmatprep.subr.mxu0 0.0
  %192 = vmatpush2.msra.mxu0 0.0
  %193 = vmatprep.subr.mxu0 0.0
  %194 = vmatpush2.msra.mxu0 0.0
  %195 = vmatprep.subr.mxu0 0.0
  %196 = vmatpush2.msra.mxu0 0.0
  %197 = vmatprep.subr.mxu0 0.0
  %198 = vmatpush2.msra.mxu0 0.0
  %199 = vmatprep.subr.mxu0 0.0
  %200 = vmatpush2.msra.mxu0 0.0
  %201 = vmatprep.subr.mxu0 0.0
  %202 = vmatpush2.msra.mxu0 0.0
  %203 = vmatprep.subr.mxu0 0.0
  %204 = vmatpush2.msra.mxu0 0.0
  %205 = vmatprep.subr.mxu0 0.0
  %206 = vmatpush2.msra.mxu0 0.0
  %207 = vmatprep.subr.mxu0 0.0
  %208 = vmatpush2.msra.mxu0 0.0
  %209 = vmatprep.subr.mxu0 0.0
  %210 = vmatpush2.msra.mxu0 0.0
  %211 = vmatprep.subr.mxu0 0.0
  %212 = vmatpush2.msra.mxu0 0.0
  %213 = vmatprep.subr.mxu0 0.0
  %214 = vmatpush2.msra.mxu0 0.0
  %215 = vmatprep.subr.mxu0 0.0
  %216 = vmatpush2.msra.mxu0 0.0
  %217 = vmatprep.subr.mxu0 0.0
  %218 = vmatpush2.msra.mxu0 0.0
  %219 = vmatprep.subr.mxu0 0.0
  %220 = vmatpush2.msra.mxu0 0.0
  %221 = vmatprep.mubr.f32.mxu0 0.0
  %222 = vmatmul.mubr.f32.gmra.mxu0 %v31
  %v223 = vpop.f32.mrf.mxu0
  %v224 = vadd.f32 %v154, %v223
  %v225 = vpop.f32.mrf.mxu0
  %226 = vdwg.mxu0
  %vm227 = vcmp.gt.f32.partialorder %v224, 0.0
  %v228 = vmul.f32 %v224, 0.01
  %v229 = vsel %vm227, %v224, %v228
  %v230 = vld [vmem:[%s5] sm:$0xff]
  %v231 = vld [vmem:[%s5 + $0x8] sm:$0xff]
  %v232 = vld [vmem:[%s5 + $0x10] sm:$0xff]
  %v233 = vld [vmem:[%s5 + $0x18] sm:$0xff]
  %v234 = vld [vmem:[%s5 + $0x20] sm:$0xff]
  %v235 = vld [vmem:[%s5 + $0x28] sm:$0xff]
  %v236 = vld [vmem:[%s5 + $0x30] sm:$0xff]
  %v237 = vld [vmem:[%s5 + $0x38] sm:$0xff]
  %v238 = vld [vmem:[%s5 + $0x40] sm:$0xff]
  %v239 = vld [vmem:[%s5 + $0x48] sm:$0xff]
  %v240 = vld [vmem:[%s5 + $0x50] sm:$0xff]
  %v241 = vld [vmem:[%s5 + $0x58] sm:$0xff]
  %v242 = vld [vmem:[%s5 + $0x60] sm:$0xff]
  %v243 = vld [vmem:[%s5 + $0x68] sm:$0xff]
  %v244 = vld [vmem:[%s5 + $0x70] sm:$0xff]
  %v245 = vld [vmem:[%s5 + $0x78] sm:$0xff]
  %v246 = vld [vmem:[%s6] sm:$0x1]
  %v248 = vlaneseq
  %v249 = vshrl.u32 %v248, 7
  %v250 = vsub.s32 0, %v249
  %v251 = vrot.slane %v246, %v250
  %253 = vmatprep.subr.mxu0 0.0
  %254 = vmatpush1.msra.mxu0 %v245
  %255 = vmatprep.subr.mxu0 0.0
  %256 = vmatpush1.msra.mxu0 %v244
  %257 = vmatprep.subr.mxu0 0.0
  %258 = vmatpush1.msra.mxu0 %v243
  %259 = vmatprep.subr.mxu0 0.0
  %260 = vmatpush1.msra.mxu0 %v242
  %261 = vmatprep.subr.mxu0 0.0
  %262 = vmatpush1.msra.mxu0 %v241
  %263 = vmatprep.subr.mxu0 0.0
  %264 = vmatpush1.msra.mxu0 %v240
  %265 = vmatprep.subr.mxu0 0.0
  %266 = vmatpush1.msra.mxu0 %v239
  %267 = vmatprep.subr.mxu0 0.0
  %268 = vmatpush1.msra.mxu0 %v238
  %269 = vmatprep.subr.mxu0 0.0
  %270 = vmatpush1.msra.mxu0 %v237
  %271 = vmatprep.subr.mxu0 0.0
  %272 = vmatpush1.msra.mxu0 %v236
  %273 = vmatprep.subr.mxu0 0.0
  %274 = vmatpush1.msra.mxu0 %v235
  %275 = vmatprep.subr.mxu0 0.0
  %276 = vmatpush1.msra.mxu0 %v234
  %277 = vmatprep.subr.mxu0 0.0
  %278 = vmatpush1.msra.mxu0 %v233
  %279 = vmatprep.subr.mxu0 0.0
  %280 = vmatpush1.msra.mxu0 %v232
  %281 = vmatprep.subr.mxu0 0.0
  %282 = vmatpush1.msra.mxu0 %v231
  %283 = vmatprep.subr.mxu0 0.0
  %284 = vmatpush1.msra.mxu0 %v230
  %285 = vmatprep.subr.mxu0 0.0
  %286 = vmatpush2.msra.mxu0 0.0
  %287 = vmatprep.subr.mxu0 0.0
  %288 = vmatpush2.msra.mxu0 0.0
  %289 = vmatprep.subr.mxu0 0.0
  %290 = vmatpush2.msra.mxu0 0.0
  %291 = vmatprep.subr.mxu0 0.0
  %292 = vmatpush2.msra.mxu0 0.0
  %293 = vmatprep.subr.mxu0 0.0
  %294 = vmatpush2.msra.mxu0 0.0
  %295 = vmatprep.subr.mxu0 0.0
  %296 = vmatpush2.msra.mxu0 0.0
  %297 = vmatprep.subr.mxu0 0.0
  %298 = vmatpush2.msra.mxu0 0.0
  %299 = vmatprep.subr.mxu0 0.0
  %300 = vmatpush2.msra.mxu0 0.0
  %301 = vmatprep.subr.mxu0 0.0
  %302 = vmatpush2.msra.mxu0 0.0
  %303 = vmatprep.subr.mxu0 0.0
  %304 = vmatpush2.msra.mxu0 0.0
  %305 = vmatprep.subr.mxu0 0.0
  %306 = vmatpush2.msra.mxu0 0.0
  %307 = vmatprep.subr.mxu0 0.0
  %308 = vmatpush2.msra.mxu0 0.0
  %309 = vmatprep.subr.mxu0 0.0
  %310 = vmatpush2.msra.mxu0 0.0
  %311 = vmatprep.subr.mxu0 0.0
  %312 = vmatpush2.msra.mxu0 0.0
  %313 = vmatprep.subr.mxu0 0.0
  %314 = vmatpush2.msra.mxu0 0.0
  %315 = vmatprep.subr.mxu0 0.0
  %316 = vmatpush2.msra.mxu0 0.0
  %317 = vmatprep.mubr.f32.mxu0 0.0
  %318 = vmatmul.mubr.f32.gmra.mxu0 %v229
  %v319 = vpop.f32.mrf.mxu0
  %v320 = vadd.f32 %v251, %v319
  %v321 = vpop.f32.mrf.mxu0
  %322 = vdwg.mxu0
  %vm323 = vcmp.gt.f32.partialorder %v320, 0.0
  %v324 = vmul.f32 %v320, 0.01
  %v325 = vsel %vm323, %v320, %v324
  %v326 = vld [vmem:[%s7] sm:$0xff]
  %v327 = vadd.f32 %v325, %v326
  %328 = vst [vmem:[%s8] sm:$0xff] %v327
  // Predicated region
  $region34: #{forward.41} parent=0 // pred_check
    _
  $region35: #{forward.41} parent=0 // pred_check_branch
    %330 = sbr.rel (0) target = $region37
  $region36: #{forward.41} parent=0 // pred_region
    _
  $region37: #{forward.41} parent=0 // pred_fallthru
    _
  // Predicated region
  $region38: #{forward.41} parent=0 // pred_check
    _
  $region39: #{forward.41} parent=0 // pred_check_branch
    %332 = sbr.rel (0) target = $region41
  $region40: #{forward.41} parent=0 // pred_region
    _
  $region41: #{forward.41} parent=0 // pred_fallthru
    _

// kernel: forward.54
$region0: #{forward.54}
  #allocation0 [shape = 'u32[]', space=smem, size = 0x4, offset = 0x4, fixed_abs, tag = 'smem constant byte address 0x4 - core index']
  #allocation1 [shape = 'u32[144,128]{1,0:T(1,128)}', space=vmem, size = 0x12000, scoped, tag = 'internal scratch']
  %s0 = inlined_call_operand.vmem [shape: f32[8,128], index: 0, kind: input, shape index: {}, may-alias: {0,1,2,3}]
  %s1 = inlined_call_operand.vmem [shape: f32[8,128], index: 1, kind: input, shape index: {}, may-alias: {0,1,2,3}]
  %s2 = inlined_call_operand.vmem [shape: f32[8,128], index: 2, kind: input, shape index: {}, may-alias: {0,1,2,3}]
  %s3 = inlined_call_operand.vmem [shape: f32[8,128], index: 3, kind: input, shape index: {}, may-alias: {0,1,2,3}]
  %s4 = inlined_call_operand.vmem [shape: f32[128,512], index: 4, kind: input, shape index: {}]
  %s5 = inlined_call_operand.vmem [shape: f32[128,512], index: 5, kind: input, shape index: {}]
  %s6 = inlined_call_operand.vmem [shape: f32[128,512], index: 6, kind: input, shape index: {}]
  %s7 = inlined_call_operand.vmem [shape: f32[1,512], index: 7, kind: input, shape index: {}]
  %s8 = inlined_call_operand.vmem [shape: f32[8,128], index: 8, kind: output, shape index: {0}]
  %s9 = inlined_call_operand.vmem [shape: f32[8,128], index: 9, kind: output, shape index: {1}]
  %10 = xla_tuple %s8, %s9
  %s11 = sld [smem:[#allocation0]]
  $region50: #{forward.54} parent=0
    _
  %s13 = ssub.s32 1, %s11
  %s14 = scalar_select 0, %s13, %s11
  // Predicated region
  $region2: #{forward.54} parent=0 // pred_check
    _
  $region3: #{forward.54} parent=0 // pred_check_branch
    %16 = sbr.rel (0) target = $region5
  $region4: #{forward.54} parent=0 // pred_region
    _
  $region5: #{forward.54} parent=0 // pred_fallthru
    _
  // Predicated region
  $region6: #{forward.54} parent=0 // pred_check
    _
  $region7: #{forward.54} parent=0 // pred_check_branch
    %18 = sbr.rel (0) target = $region9
  $region8: #{forward.54} parent=0 // pred_region
    _
  $region9: #{forward.54} parent=0 // pred_fallthru
    _
  // Predicated region
  $region10: #{forward.54} parent=0 // pred_check
    _
  $region11: #{forward.54} parent=0 // pred_check_branch
    %20 = sbr.rel (0) target = $region13
  $region12: #{forward.54} parent=0 // pred_region
    _
  $region13: #{forward.54} parent=0 // pred_fallthru
    _
  // Predicated region
  $region14: #{forward.54} parent=0 // pred_check
    _
  $region15: #{forward.54} parent=0 // pred_check_branch
    %22 = sbr.rel (0) target = $region17
  $region16: #{forward.54} parent=0 // pred_region
    _
  $region17: #{forward.54} parent=0 // pred_fallthru
    _
  // Predicated region
  $region18: #{forward.54} parent=0 // pred_check
    _
  $region19: #{forward.54} parent=0 // pred_check_branch
    %24 = sbr.rel (0) target = $region21
  $region20: #{forward.54} parent=0 // pred_region
    _
  $region21: #{forward.54} parent=0 // pred_fallthru
    _
  // Predicated region
  $region22: #{forward.54} parent=0 // pred_check
    _
  $region23: #{forward.54} parent=0 // pred_check_branch
    %26 = sbr.rel (0) target = $region25
  $region24: #{forward.54} parent=0 // pred_region
    _
  $region25: #{forward.54} parent=0 // pred_fallthru
    _
  // Predicated region
  $region26: #{forward.54} parent=0 // pred_check
    _
  $region27: #{forward.54} parent=0 // pred_check_branch
    %28 = sbr.rel (0) target = $region29
  $region28: #{forward.54} parent=0 // pred_region
    _
  $region29: #{forward.54} parent=0 // pred_fallthru
    _
  // Predicated region
  $region30: #{forward.54} parent=0 // pred_check
    _
  $region31: #{forward.54} parent=0 // pred_check_branch
    %30 = sbr.rel (0) target = $region33
  $region32: #{forward.54} parent=0 // pred_region
    _
  $region33: #{forward.54} parent=0 // pred_fallthru
    _
  %v31 = vld [vmem:[%s0] sm:$0xff]
  %v32 = vld [vmem:[%s4] sm:$0xff]
  %v33 = vld [vmem:[%s4 + $0x8] sm:$0xff]
  %v34 = vld [vmem:[%s4 + $0x10] sm:$0xff]
  %v35 = vld [vmem:[%s4 + $0x18] sm:$0xff]
  %v36 = vld [vmem:[%s4 + $0x20] sm:$0xff]
  %v37 = vld [vmem:[%s4 + $0x28] sm:$0xff]
  %v38 = vld [vmem:[%s4 + $0x30] sm:$0xff]
  %v39 = vld [vmem:[%s4 + $0x38] sm:$0xff]
  %v40 = vld [vmem:[%s4 + $0x40] sm:$0xff]
  %v41 = vld [vmem:[%s4 + $0x48] sm:$0xff]
  %v42 = vld [vmem:[%s4 + $0x50] sm:$0xff]
  %v43 = vld [vmem:[%s4 + $0x58] sm:$0xff]
  %v44 = vld [vmem:[%s4 + $0x60] sm:$0xff]
  %v45 = vld [vmem:[%s4 + $0x68] sm:$0xff]
  %v46 = vld [vmem:[%s4 + $0x70] sm:$0xff]
  %v47 = vld [vmem:[%s4 + $0x78] sm:$0xff]
  %v48 = vld [vmem:[%s4 + $0x80] sm:$0xff]
  %v49 = vld [vmem:[%s4 + $0x88] sm:$0xff]
  %v50 = vld [vmem:[%s4 + $0x90] sm:$0xff]
  %v51 = vld [vmem:[%s4 + $0x98] sm:$0xff]
  %v52 = vld [vmem:[%s4 + $0xa0] sm:$0xff]
  %v53 = vld [vmem:[%s4 + $0xa8] sm:$0xff]
  %v54 = vld [vmem:[%s4 + $0xb0] sm:$0xff]
  %v55 = vld [vmem:[%s4 + $0xb8] sm:$0xff]
  %v56 = vld [vmem:[%s4 + $0xc0] sm:$0xff]
  %v57 = vld [vmem:[%s4 + $0xc8] sm:$0xff]
  %v58 = vld [vmem:[%s4 + $0xd0] sm:$0xff]
  %v59 = vld [vmem:[%s4 + $0xd8] sm:$0xff]
  %v60 = vld [vmem:[%s4 + $0xe0] sm:$0xff]
  %v61 = vld [vmem:[%s4 + $0xe8] sm:$0xff]
  %v62 = vld [vmem:[%s4 + $0xf0] sm:$0xff]
  %v63 = vld [vmem:[%s4 + $0xf8] sm:$0xff]
  %v64 = vld [vmem:[%s4 + $0x100] sm:$0xff]
  %v65 = vld [vmem:[%s4 + $0x108] sm:$0xff]
  %v66 = vld [vmem:[%s4 + $0x110] sm:$0xff]
  %v67 = vld [vmem:[%s4 + $0x118] sm:$0xff]
  %v68 = vld [vmem:[%s4 + $0x120] sm:$0xff]
  %v69 = vld [vmem:[%s4 + $0x128] sm:$0xff]
  %v70 = vld [vmem:[%s4 + $0x130] sm:$0xff]
  %v71 = vld [vmem:[%s4 + $0x138] sm:$0xff]
  %v72 = vld [vmem:[%s4 + $0x140] sm:$0xff]
  %v73 = vld [vmem:[%s4 + $0x148] sm:$0xff]
  %v74 = vld [vmem:[%s4 + $0x150] sm:$0xff]
  %v75 = vld [vmem:[%s4 + $0x158] sm:$0xff]
  %v76 = vld [vmem:[%s4 + $0x160] sm:$0xff]
  %v77 = vld [vmem:[%s4 + $0x168] sm:$0xff]
  %v78 = vld [vmem:[%s4 + $0x170] sm:$0xff]
  %v79 = vld [vmem:[%s4 + $0x178] sm:$0xff]
  %v80 = vld [vmem:[%s4 + $0x180] sm:$0xff]
  %v81 = vld [vmem:[%s4 + $0x188] sm:$0xff]
  %v82 = vld [vmem:[%s4 + $0x190] sm:$0xff]
  %v83 = vld [vmem:[%s4 + $0x198] sm:$0xff]
  %v84 = vld [vmem:[%s4 + $0x1a0] sm:$0xff]
  %v85 = vld [vmem:[%s4 + $0x1a8] sm:$0xff]
  %v86 = vld [vmem:[%s4 + $0x1b0] sm:$0xff]
  %v87 = vld [vmem:[%s4 + $0x1b8] sm:$0xff]
  %v88 = vld [vmem:[%s4 + $0x1c0] sm:$0xff]
  %v89 = vld [vmem:[%s4 + $0x1c8] sm:$0xff]
  %v90 = vld [vmem:[%s4 + $0x1d0] sm:$0xff]
  %v91 = vld [vmem:[%s4 + $0x1d8] sm:$0xff]
  %v92 = vld [vmem:[%s4 + $0x1e0] sm:$0xff]
  %v93 = vld [vmem:[%s4 + $0x1e8] sm:$0xff]
  %v94 = vld [vmem:[%s4 + $0x1f0] sm:$0xff]
  %v95 = vld [vmem:[%s4 + $0x1f8] sm:$0xff]
  %v96 = vld [vmem:[%s1] sm:$0xff]
  %v97 = vld [vmem:[%s5] sm:$0xff]
  %v98 = vld [vmem:[%s5 + $0x8] sm:$0xff]
  %v99 = vld [vmem:[%s5 + $0x10] sm:$0xff]
  %v100 = vld [vmem:[%s5 + $0x18] sm:$0xff]
  %v101 = vld [vmem:[%s5 + $0x20] sm:$0xff]
  %v102 = vld [vmem:[%s5 + $0x28] sm:$0xff]
  %v103 = vld [vmem:[%s5 + $0x30] sm:$0xff]
  %v104 = vld [vmem:[%s5 + $0x38] sm:$0xff]
  %v105 = vld [vmem:[%s5 + $0x40] sm:$0xff]
  %v106 = vld [vmem:[%s5 + $0x48] sm:$0xff]
  %v107 = vld [vmem:[%s5 + $0x50] sm:$0xff]
  %v108 = vld [vmem:[%s5 + $0x58] sm:$0xff]
  %v109 = vld [vmem:[%s5 + $0x60] sm:$0xff]
  %v110 = vld [vmem:[%s5 + $0x68] sm:$0xff]
  %v111 = vld [vmem:[%s5 + $0x70] sm:$0xff]
  %v112 = vld [vmem:[%s5 + $0x78] sm:$0xff]
  %v113 = vld [vmem:[%s5 + $0x80] sm:$0xff]
  %v114 = vld [vmem:[%s5 + $0x88] sm:$0xff]
  %v115 = vld [vmem:[%s5 + $0x90] sm:$0xff]
  %v116 = vld [vmem:[%s5 + $0x98] sm:$0xff]
  %v117 = vld [vmem:[%s5 + $0xa0] sm:$0xff]
  %v118 = vld [vmem:[%s5 + $0xa8] sm:$0xff]
  %v119 = vld [vmem:[%s5 + $0xb0] sm:$0xff]
  %v120 = vld [vmem:[%s5 + $0xb8] sm:$0xff]
  %v121 = vld [vmem:[%s5 + $0xc0] sm:$0xff]
  %v122 = vld [vmem:[%s5 + $0xc8] sm:$0xff]
  %v123 = vld [vmem:[%s5 + $0xd0] sm:$0xff]
  %v124 = vld [vmem:[%s5 + $0xd8] sm:$0xff]
  %v125 = vld [vmem:[%s5 + $0xe0] sm:$0xff]
  %v126 = vld [vmem:[%s5 + $0xe8] sm:$0xff]
  %v127 = vld [vmem:[%s5 + $0xf0] sm:$0xff]
  %v128 = vld [vmem:[%s5 + $0xf8] sm:$0xff]
  %v129 = vld [vmem:[%s5 + $0x100] sm:$0xff]
  %v130 = vld [vmem:[%s5 + $0x108] sm:$0xff]
  %v131 = vld [vmem:[%s5 + $0x110] sm:$0xff]
  %v132 = vld [vmem:[%s5 + $0x118] sm:$0xff]
  %v133 = vld [vmem:[%s5 + $0x120] sm:$0xff]
  %v134 = vld [vmem:[%s5 + $0x128] sm:$0xff]
  %v135 = vld [vmem:[%s5 + $0x130] sm:$0xff]
  %v136 = vld [vmem:[%s5 + $0x138] sm:$0xff]
  %v137 = vld [vmem:[%s5 + $0x140] sm:$0xff]
  %v138 = vld [vmem:[%s5 + $0x148] sm:$0xff]
  %v139 = vld [vmem:[%s5 + $0x150] sm:$0xff]
  %v140 = vld [vmem:[%s5 + $0x158] sm:$0xff]
  %v141 = vld [vmem:[%s5 + $0x160] sm:$0xff]
  %v142 = vld [vmem:[%s5 + $0x168] sm:$0xff]
  %v143 = vld [vmem:[%s5 + $0x170] sm:$0xff]
  %v144 = vld [vmem:[%s5 + $0x178] sm:$0xff]
  %v145 = vld [vmem:[%s5 + $0x180] sm:$0xff]
  %v146 = vld [vmem:[%s5 + $0x188] sm:$0xff]
  %v147 = vld [vmem:[%s5 + $0x190] sm:$0xff]
  %v148 = vld [vmem:[%s5 + $0x198] sm:$0xff]
  %v149 = vld [vmem:[%s5 + $0x1a0] sm:$0xff]
  %v150 = vld [vmem:[%s5 + $0x1a8] sm:$0xff]
  %v151 = vld [vmem:[%s5 + $0x1b0] sm:$0xff]
  %v152 = vld [vmem:[%s5 + $0x1b8] sm:$0xff]
  %v153 = vld [vmem:[%s5 + $0x1c0] sm:$0xff]
  %v154 = vld [vmem:[%s5 + $0x1c8] sm:$0xff]
  %v155 = vld [vmem:[%s5 + $0x1d0] sm:$0xff]
  %v156 = vld [vmem:[%s5 + $0x1d8] sm:$0xff]
  %v157 = vld [vmem:[%s5 + $0x1e0] sm:$0xff]
  %v158 = vld [vmem:[%s5 + $0x1e8] sm:$0xff]
  %v159 = vld [vmem:[%s5 + $0x1f0] sm:$0xff]
  %v160 = vld [vmem:[%s5 + $0x1f8] sm:$0xff]
  %161 = vmatprep.subr.mxu0 %v158
  %162 = vmatpush1.msra.mxu0 %v157
  %163 = vmatprep.subr.mxu0 %v154
  %164 = vmatpush1.msra.mxu0 %v153
  %165 = vmatprep.subr.mxu0 %v150
  %166 = vmatpush1.msra.mxu0 %v149
  %167 = vmatprep.subr.mxu0 %v146
  %168 = vmatpush1.msra.mxu0 %v145
  %169 = vmatprep.subr.mxu0 %v142
  %170 = vmatpush1.msra.mxu0 %v141
  %171 = vmatprep.subr.mxu0 %v138
  %172 = vmatpush1.msra.mxu0 %v137
  %173 = vmatprep.subr.mxu0 %v134
  %174 = vmatpush1.msra.mxu0 %v133
  %175 = vmatprep.subr.mxu0 %v130
  %176 = vmatpush1.msra.mxu0 %v129
  %177 = vmatprep.subr.mxu0 %v126
  %178 = vmatpush1.msra.mxu0 %v125
  %179 = vmatprep.subr.mxu0 %v122
  %180 = vmatpush1.msra.mxu0 %v121
  %181 = vmatprep.subr.mxu0 %v118
  %182 = vmatpush1.msra.mxu0 %v117
  %183 = vmatprep.subr.mxu0 %v114
  %184 = vmatpush1.msra.mxu0 %v113
  %185 = vmatprep.subr.mxu0 %v110
  %186 = vmatpush1.msra.mxu0 %v109
  %187 = vmatprep.subr.mxu0 %v106
  %188 = vmatpush1.msra.mxu0 %v105
  %189 = vmatprep.subr.mxu0 %v102
  %190 = vmatpush1.msra.mxu0 %v101
  %191 = vmatprep.subr.mxu0 %v98
  %192 = vmatpush1.msra.mxu0 %v97
  %193 = vmatprep.subr.mxu0 0.0
  %194 = vmatpush2.msra.mxu0 0.0
  %195 = vmatprep.subr.mxu0 0.0
  %196 = vmatpush2.msra.mxu0 0.0
  %197 = vmatprep.subr.mxu0 0.0
  %198 = vmatpush2.msra.mxu0 0.0
  %199 = vmatprep.subr.mxu0 0.0
  %200 = vmatpush2.msra.mxu0 0.0
  %201 = vmatprep.subr.mxu0 0.0
  %202 = vmatpush2.msra.mxu0 0.0
  %203 = vmatprep.subr.mxu0 0.0
  %204 = vmatpush2.msra.mxu0 0.0
  %205 = vmatprep.subr.mxu0 0.0
  %206 = vmatpush2.msra.mxu0 0.0
  %207 = vmatprep.subr.mxu0 0.0
  %208 = vmatpush2.msra.mxu0 0.0
  %209 = vmatprep.subr.mxu0 0.0
  %210 = vmatpush2.msra.mxu0 0.0
  %211 = vmatprep.subr.mxu0 0.0
  %212 = vmatpush2.msra.mxu0 0.0
  %213 = vmatprep.subr.mxu0 0.0
  %214 = vmatpush2.msra.mxu0 0.0
  %215 = vmatprep.subr.mxu0 0.0
  %216 = vmatpush2.msra.mxu0 0.0
  %217 = vmatprep.subr.mxu0 0.0
  %218 = vmatpush2.msra.mxu0 0.0
  %219 = vmatprep.subr.mxu0 0.0
  %220 = vmatpush2.msra.mxu0 0.0
  %221 = vmatprep.subr.mxu0 0.0
  %222 = vmatpush2.msra.mxu0 0.0
  %223 = vmatprep.subr.mxu0 0.0
  %224 = vmatpush2.msra.mxu0 0.0
  %225 = vmatprep.mubr.f32.mxu0 0.0
  %226 = vmatmul.mubr.f32.gmra.mxu0 %v96
  %v227 = vpop.f32.mrf.mxu0
  %v228 = vadd.f32 0.0, %v227
  %v229 = vpop.f32.mrf.mxu0
  %v230 = vadd.f32 0.0, %v229
  %231 = vdwg.mxu0
  %232 = vmatprep.subr.mxu0 %v160
  %233 = vmatpush1.msra.mxu0 %v159
  %234 = vmatprep.subr.mxu0 %v156
  %235 = vmatpush1.msra.mxu0 %v155
  %236 = vmatprep.subr.mxu0 %v152
  %237 = vmatpush1.msra.mxu0 %v151
  %238 = vmatprep.subr.mxu0 %v148
  %239 = vmatpush1.msra.mxu0 %v147
  %240 = vmatprep.subr.mxu0 %v144
  %241 = vmatpush1.msra.mxu0 %v143
  %242 = vmatprep.subr.mxu0 %v140
  %243 = vmatpush1.msra.mxu0 %v139
  %244 = vmatprep.subr.mxu0 %v136
  %245 = vmatpush1.msra.mxu0 %v135
  %246 = vmatprep.subr.mxu0 %v132
  %247 = vmatpush1.msra.mxu0 %v131
  %248 = vmatprep.subr.mxu0 %v128
  %249 = vmatpush1.msra.mxu0 %v127
  %250 = vmatprep.subr.mxu0 %v124
  %251 = vmatpush1.msra.mxu0 %v123
  %252 = vmatprep.subr.mxu0 %v120
  %253 = vmatpush1.msra.mxu0 %v119
  %254 = vmatprep.subr.mxu0 %v116
  %255 = vmatpush1.msra.mxu0 %v115
  %256 = vmatprep.subr.mxu0 %v112
  %257 = vmatpush1.msra.mxu0 %v111
  %258 = vmatprep.subr.mxu0 %v108
  %259 = vmatpush1.msra.mxu0 %v107
  %260 = vmatprep.subr.mxu0 %v104
  %261 = vmatpush1.msra.mxu0 %v103
  %262 = vmatprep.subr.mxu0 %v100
  %263 = vmatpush1.msra.mxu0 %v99
  %264 = vmatprep.subr.mxu0 0.0
  %265 = vmatpush2.msra.mxu0 0.0
  %266 = vmatprep.subr.mxu0 0.0
  %267 = vmatpush2.msra.mxu0 0.0
  %268 = vmatprep.subr.mxu0 0.0
  %269 = vmatpush2.msra.mxu0 0.0
  %270 = vmatprep.subr.mxu0 0.0
  %271 = vmatpush2.msra.mxu0 0.0
  %272 = vmatprep.subr.mxu0 0.0
  %273 = vmatpush2.msra.mxu0 0.0
  %274 = vmatprep.subr.mxu0 0.0
  %275 = vmatpush2.msra.mxu0 0.0
  %276 = vmatprep.subr.mxu0 0.0
  %277 = vmatpush2.msra.mxu0 0.0
  %278 = vmatprep.subr.mxu0 0.0
  %279 = vmatpush2.msra.mxu0 0.0
  %280 = vmatprep.subr.mxu0 0.0
  %281 = vmatpush2.msra.mxu0 0.0
  %282 = vmatprep.subr.mxu0 0.0
  %283 = vmatpush2.msra.mxu0 0.0
  %284 = vmatprep.subr.mxu0 0.0
  %285 = vmatpush2.msra.mxu0 0.0
  %286 = vmatprep.subr.mxu0 0.0
  %287 = vmatpush2.msra.mxu0 0.0
  %288 = vmatprep.subr.mxu0 0.0
  %289 = vmatpush2.msra.mxu0 0.0
  %290 = vmatprep.subr.mxu0 0.0
  %291 = vmatpush2.msra.mxu0 0.0
  %292 = vmatprep.subr.mxu0 0.0
  %293 = vmatpush2.msra.mxu0 0.0
  %294 = vmatprep.subr.mxu0 0.0
  %295 = vmatpush2.msra.mxu0 0.0
  %296 = vmatprep.mubr.f32.mxu0 0.0
  %297 = vmatmul.mubr.f32.gmra.mxu0 %v96
  %v298 = vpop.f32.mrf.mxu0
  %v299 = vadd.f32 0.0, %v298
  %v300 = vpop.f32.mrf.mxu0
  %v301 = vadd.f32 0.0, %v300
  %302 = vdwg.mxu0
  %303 = vmatprep.subr.mxu0 %v93
  %304 = vmatpush1.msra.mxu0 %v92
  %305 = vmatprep.subr.mxu0 %v89
  %306 = vmatpush1.msra.mxu0 %v88
  %307 = vmatprep.subr.mxu0 %v85
  %308 = vmatpush1.msra.mxu0 %v84
  %309 = vmatprep.subr.mxu0 %v81
  %310 = vmatpush1.msra.mxu0 %v80
  %311 = vmatprep.subr.mxu0 %v77
  %312 = vmatpush1.msra.mxu0 %v76
  %313 = vmatprep.subr.mxu0 %v73
  %314 = vmatpush1.msra.mxu0 %v72
  %315 = vmatprep.subr.mxu0 %v69
  %316 = vmatpush1.msra.mxu0 %v68
  %317 = vmatprep.subr.mxu0 %v65
  %318 = vmatpush1.msra.mxu0 %v64
  %319 = vmatprep.subr.mxu0 %v61
  %320 = vmatpush1.msra.mxu0 %v60
  %321 = vmatprep.subr.mxu0 %v57
  %322 = vmatpush1.msra.mxu0 %v56
  %323 = vmatprep.subr.mxu0 %v53
  %324 = vmatpush1.msra.mxu0 %v52
  %325 = vmatprep.subr.mxu0 %v49
  %326 = vmatpush1.msra.mxu0 %v48
  %327 = vmatprep.subr.mxu0 %v45
  %328 = vmatpush1.msra.mxu0 %v44
  %329 = vmatprep.subr.mxu0 %v41
  %330 = vmatpush1.msra.mxu0 %v40
  %331 = vmatprep.subr.mxu0 %v37
  %332 = vmatpush1.msra.mxu0 %v36
  %333 = vmatprep.subr.mxu0 %v33
  %334 = vmatpush1.msra.mxu0 %v32
  %335 = vmatprep.subr.mxu0 0.0
  %336 = vmatpush2.msra.mxu0 0.0
  %337 = vmatprep.subr.mxu0 0.0
  %338 = vmatpush2.msra.mxu0 0.0
  %339 = vmatprep.subr.mxu0 0.0
  %340 = vmatpush2.msra.mxu0 0.0
  %341 = vmatprep.subr.mxu0 0.0
  %342 = vmatpush2.msra.mxu0 0.0
  %343 = vmatprep.subr.mxu0 0.0
  %344 = vmatpush2.msra.mxu0 0.0
  %345 = vmatprep.subr.mxu0 0.0
  %346 = vmatpush2.msra.mxu0 0.0
  %347 = vmatprep.subr.mxu0 0.0
  %348 = vmatpush2.msra.mxu0 0.0
  %349 = vmatprep.subr.mxu0 0.0
  %350 = vmatpush2.msra.mxu0 0.0
  %351 = vmatprep.subr.mxu0 0.0
  %352 = vmatpush2.msra.mxu0 0.0
  %353 = vmatprep.subr.mxu0 0.0
  %354 = vmatpush2.msra.mxu0 0.0
  %355 = vmatprep.subr.mxu0 0.0
  %356 = vmatpush2.msra.mxu0 0.0
  %357 = vmatprep.subr.mxu0 0.0
  %358 = vmatpush2.msra.mxu0 0.0
  %359 = vmatprep.subr.mxu0 0.0
  %360 = vmatpush2.msra.mxu0 0.0
  %361 = vmatprep.subr.mxu0 0.0
  %362 = vmatpush2.msra.mxu0 0.0
  %363 = vmatprep.subr.mxu0 0.0
  %364 = vmatpush2.msra.mxu0 0.0
  %365 = vmatprep.subr.mxu0 0.0
  %366 = vmatpush2.msra.mxu0 0.0
  %367 = vmatprep.mubr.f32.mxu0 0.0
  %368 = vmatmul.mubr.f32.gmra.mxu0 %v31
  %v369 = vpop.f32.mrf.mxu0
  %v370 = vadd.f32 %v228, %v369
  %v371 = vpop.f32.mrf.mxu0
  %v372 = vadd.f32 %v230, %v371
  %373 = vdwg.mxu0
  %374 = vmatprep.subr.mxu0 %v95
  %375 = vmatpush1.msra.mxu0 %v94
  %376 = vmatprep.subr.mxu0 %v91
  %377 = vmatpush1.msra.mxu0 %v90
  %378 = vmatprep.subr.mxu0 %v87
  %379 = vmatpush1.msra.mxu0 %v86
  %380 = vmatprep.subr.mxu0 %v83
  %381 = vmatpush1.msra.mxu0 %v82
  %382 = vmatprep.subr.mxu0 %v79
  %383 = vmatpush1.msra.mxu0 %v78
  %384 = vmatprep.subr.mxu0 %v75
  %385 = vmatpush1.msra.mxu0 %v74
  %386 = vmatprep.subr.mxu0 %v71
  %387 = vmatpush1.msra.mxu0 %v70
  %388 = vmatprep.subr.mxu0 %v67
  %389 = vmatpush1.msra.mxu0 %v66
  %390 = vmatprep.subr.mxu0 %v63
  %391 = vmatpush1.msra.mxu0 %v62
  %392 = vmatprep.subr.mxu0 %v59
  %393 = vmatpush1.msra.mxu0 %v58
  %394 = vmatprep.subr.mxu0 %v55
  %395 = vmatpush1.msra.mxu0 %v54
  %396 = vmatprep.subr.mxu0 %v51
  %397 = vmatpush1.msra.mxu0 %v50
  %398 = vmatprep.subr.mxu0 %v47
  %399 = vmatpush1.msra.mxu0 %v46
  %400 = vmatprep.subr.mxu0 %v43
  %401 = vmatpush1.msra.mxu0 %v42
  %402 = vmatprep.subr.mxu0 %v39
  %403 = vmatpush1.msra.mxu0 %v38
  %404 = vmatprep.subr.mxu0 %v35
  %405 = vmatpush1.msra.mxu0 %v34
  %406 = vmatprep.subr.mxu0 0.0
  %407 = vmatpush2.msra.mxu0 0.0
  %408 = vmatprep.subr.mxu0 0.0
  %409 = vmatpush2.msra.mxu0 0.0
  %410 = vmatprep.subr.mxu0 0.0
  %411 = vmatpush2.msra.mxu0 0.0
  %412 = vmatprep.subr.mxu0 0.0
  %413 = vmatpush2.msra.mxu0 0.0
  %414 = vmatprep.subr.mxu0 0.0
  %415 = vmatpush2.msra.mxu0 0.0
  %416 = vmatprep.subr.mxu0 0.0
  %417 = vmatpush2.msra.mxu0 0.0
  %418 = vmatprep.subr.mxu0 0.0
  %419 = vmatpush2.msra.mxu0 0.0
  %420 = vmatprep.subr.mxu0 0.0
  %421 = vmatpush2.msra.mxu0 0.0
  %422 = vmatprep.subr.mxu0 0.0
  %423 = vmatpush2.msra.mxu0 0.0
  %424 = vmatprep.subr.mxu0 0.0
  %425 = vmatpush2.msra.mxu0 0.0
  %426 = vmatprep.subr.mxu0 0.0
  %427 = vmatpush2.msra.mxu0 0.0
  %428 = vmatprep.subr.mxu0 0.0
  %429 = vmatpush2.msra.mxu0 0.0
  %430 = vmatprep.subr.mxu0 0.0
  %431 = vmatpush2.msra.mxu0 0.0
  %432 = vmatprep.subr.mxu0 0.0
  %433 = vmatpush2.msra.mxu0 0.0
  %434 = vmatprep.subr.mxu0 0.0
  %435 = vmatpush2.msra.mxu0 0.0
  %436 = vmatprep.subr.mxu0 0.0
  %437 = vmatpush2.msra.mxu0 0.0
  %438 = vmatprep.mubr.f32.mxu0 0.0
  %439 = vmatmul.mubr.f32.gmra.mxu0 %v31
  %v440 = vpop.f32.mrf.mxu0
  %v441 = vadd.f32 %v299, %v440
  %v442 = vpop.f32.mrf.mxu0
  %v443 = vadd.f32 %v301, %v442
  %444 = vdwg.mxu0
  %v445 = vld [vmem:[%s2] sm:$0xff]
  %v446 = vld [vmem:[%s6] sm:$0xff]
  %v447 = vld [vmem:[%s6 + $0x8] sm:$0xff]
  %v448 = vld [vmem:[%s6 + $0x10] sm:$0xff]
  %v449 = vld [vmem:[%s6 + $0x18] sm:$0xff]
  %v450 = vld [vmem:[%s6 + $0x20] sm:$0xff]
  %v451 = vld [vmem:[%s6 + $0x28] sm:$0xff]
  %v452 = vld [vmem:[%s6 + $0x30] sm:$0xff]
  %v453 = vld [vmem:[%s6 + $0x38] sm:$0xff]
  %v454 = vld [vmem:[%s6 + $0x40] sm:$0xff]
  %v455 = vld [vmem:[%s6 + $0x48] sm:$0xff]
  %v456 = vld [vmem:[%s6 + $0x50] sm:$0xff]
  %v457 = vld [vmem:[%s6 + $0x58] sm:$0xff]
  %v458 = vld [vmem:[%s6 + $0x60] sm:$0xff]
  %v459 = vld [vmem:[%s6 + $0x68] sm:$0xff]
  %v460 = vld [vmem:[%s6 + $0x70] sm:$0xff]
  %v461 = vld [vmem:[%s6 + $0x78] sm:$0xff]
  %v462 = vld [vmem:[%s6 + $0x80] sm:$0xff]
  %v463 = vld [vmem:[%s6 + $0x88] sm:$0xff]
  %v464 = vld [vmem:[%s6 + $0x90] sm:$0xff]
  %v465 = vld [vmem:[%s6 + $0x98] sm:$0xff]
  %v466 = vld [vmem:[%s6 + $0xa0] sm:$0xff]
  %v467 = vld [vmem:[%s6 + $0xa8] sm:$0xff]
  %v468 = vld [vmem:[%s6 + $0xb0] sm:$0xff]
  %v469 = vld [vmem:[%s6 + $0xb8] sm:$0xff]
  %v470 = vld [vmem:[%s6 + $0xc0] sm:$0xff]
  %v471 = vld [vmem:[%s6 + $0xc8] sm:$0xff]
  %v472 = vld [vmem:[%s6 + $0xd0] sm:$0xff]
  %v473 = vld [vmem:[%s6 + $0xd8] sm:$0xff]
  %v474 = vld [vmem:[%s6 + $0xe0] sm:$0xff]
  %v475 = vld [vmem:[%s6 + $0xe8] sm:$0xff]
  %v476 = vld [vmem:[%s6 + $0xf0] sm:$0xff]
  %v477 = vld [vmem:[%s6 + $0xf8] sm:$0xff]
  %v478 = vld [vmem:[%s6 + $0x100] sm:$0xff]
  %v479 = vld [vmem:[%s6 + $0x108] sm:$0xff]
  %v480 = vld [vmem:[%s6 + $0x110] sm:$0xff]
  %v481 = vld [vmem:[%s6 + $0x118] sm:$0xff]
  %v482 = vld [vmem:[%s6 + $0x120] sm:$0xff]
  %v483 = vld [vmem:[%s6 + $0x128] sm:$0xff]
  %v484 = vld [vmem:[%s6 + $0x130] sm:$0xff]
  %v485 = vld [vmem:[%s6 + $0x138] sm:$0xff]
  %v486 = vld [vmem:[%s6 + $0x140] sm:$0xff]
  %v487 = vld [vmem:[%s6 + $0x148] sm:$0xff]
  %v488 = vld [vmem:[%s6 + $0x150] sm:$0xff]
  %v489 = vld [vmem:[%s6 + $0x158] sm:$0xff]
  %v490 = vld [vmem:[%s6 + $0x160] sm:$0xff]
  %v491 = vld [vmem:[%s6 + $0x168] sm:$0xff]
  %v492 = vld [vmem:[%s6 + $0x170] sm:$0xff]
  %v493 = vld [vmem:[%s6 + $0x178] sm:$0xff]
  %v494 = vld [vmem:[%s6 + $0x180] sm:$0xff]
  %v495 = vld [vmem:[%s6 + $0x188] sm:$0xff]
  %v496 = vld [vmem:[%s6 + $0x190] sm:$0xff]
  %v497 = vld [vmem:[%s6 + $0x198] sm:$0xff]
  %v498 = vld [vmem:[%s6 + $0x1a0] sm:$0xff]
  %v499 = vld [vmem:[%s6 + $0x1a8] sm:$0xff]
  %v500 = vld [vmem:[%s6 + $0x1b0] sm:$0xff]
  %v501 = vld [vmem:[%s6 + $0x1b8] sm:$0xff]
  %v502 = vld [vmem:[%s6 + $0x1c0] sm:$0xff]
  %v503 = vld [vmem:[%s6 + $0x1c8] sm:$0xff]
  %v504 = vld [vmem:[%s6 + $0x1d0] sm:$0xff]
  %v505 = vld [vmem:[%s6 + $0x1d8] sm:$0xff]
  %v506 = vld [vmem:[%s6 + $0x1e0] sm:$0xff]
  %v507 = vld [vmem:[%s6 + $0x1e8] sm:$0xff]
  %v508 = vld [vmem:[%s6 + $0x1f0] sm:$0xff]
  %v509 = vld [vmem:[%s6 + $0x1f8] sm:$0xff]
  %510 = vmatprep.subr.mxu0 %v507
  %511 = vmatpush1.msra.mxu0 %v506
  %512 = vmatprep.subr.mxu0 %v503
  %513 = vmatpush1.msra.mxu0 %v502
  %514 = vmatprep.subr.mxu0 %v499
  %515 = vmatpush1.msra.mxu0 %v498
  %516 = vmatprep.subr.mxu0 %v495
  %517 = vmatpush1.msra.mxu0 %v494
  %518 = vmatprep.subr.mxu0 %v491
  %519 = vmatpush1.msra.mxu0 %v490
  %520 = vmatprep.subr.mxu0 %v487
  %521 = vmatpush1.msra.mxu0 %v486
  %522 = vmatprep.subr.mxu0 %v483
  %523 = vmatpush1.msra.mxu0 %v482
  %524 = vmatprep.subr.mxu0 %v479
  %525 = vmatpush1.msra.mxu0 %v478
  %526 = vmatprep.subr.mxu0 %v475
  %527 = vmatpush1.msra.mxu0 %v474
  %528 = vmatprep.subr.mxu0 %v471
  %529 = vmatpush1.msra.mxu0 %v470
  %530 = vmatprep.subr.mxu0 %v467
  %531 = vmatpush1.msra.mxu0 %v466
  %532 = vmatprep.subr.mxu0 %v463
  %533 = vmatpush1.msra.mxu0 %v462
  %534 = vmatprep.subr.mxu0 %v459
  %535 = vmatpush1.msra.mxu0 %v458
  %536 = vmatprep.subr.mxu0 %v455
  %537 = vmatpush1.msra.mxu0 %v454
  %538 = vmatprep.subr.mxu0 %v451
  %539 = vmatpush1.msra.mxu0 %v450
  %540 = vmatprep.subr.mxu0 %v447
  %541 = vmatpush1.msra.mxu0 %v446
  %542 = vmatprep.subr.mxu0 0.0
  %543 = vmatpush2.msra.mxu0 0.0
  %544 = vmatprep.subr.mxu0 0.0
  %545 = vmatpush2.msra.mxu0 0.0
  %546 = vmatprep.subr.mxu0 0.0
  %547 = vmatpush2.msra.mxu0 0.0
  %548 = vmatprep.subr.mxu0 0.0
  %549 = vmatpush2.msra.mxu0 0.0
  %550 = vmatprep.subr.mxu0 0.0
  %551 = vmatpush2.msra.mxu0 0.0
  %552 = vmatprep.subr.mxu0 0.0
  %553 = vmatpush2.msra.mxu0 0.0
  %554 = vmatprep.subr.mxu0 0.0
  %555 = vmatpush2.msra.mxu0 0.0
  %556 = vmatprep.subr.mxu0 0.0
  %557 = vmatpush2.msra.mxu0 0.0
  %558 = vmatprep.subr.mxu0 0.0
  %559 = vmatpush2.msra.mxu0 0.0
  %560 = vmatprep.subr.mxu0 0.0
  %561 = vmatpush2.msra.mxu0 0.0
  %562 = vmatprep.subr.mxu0 0.0
  %563 = vmatpush2.msra.mxu0 0.0
  %564 = vmatprep.subr.mxu0 0.0
  %565 = vmatpush2.msra.mxu0 0.0
  %566 = vmatprep.subr.mxu0 0.0
  %567 = vmatpush2.msra.mxu0 0.0
  %568 = vmatprep.subr.mxu0 0.0
  %569 = vmatpush2.msra.mxu0 0.0
  %570 = vmatprep.subr.mxu0 0.0
  %571 = vmatpush2.msra.mxu0 0.0
  %572 = vmatprep.subr.mxu0 0.0
  %573 = vmatpush2.msra.mxu0 0.0
  %574 = vmatprep.mubr.f32.mxu0 0.0
  %575 = vmatmul.mubr.f32.gmra.mxu0 %v445
  %v576 = vpop.f32.mrf.mxu0
  %v577 = vadd.f32 0.0, %v576
  %v578 = vpop.f32.mrf.mxu0
  %v579 = vadd.f32 0.0, %v578
  %580 = vdwg.mxu0
  %581 = vmatprep.subr.mxu0 %v509
  %582 = vmatpush1.msra.mxu0 %v508
  %583 = vmatprep.subr.mxu0 %v505
  %584 = vmatpush1.msra.mxu0 %v504
  %585 = vmatprep.subr.mxu0 %v501
  %586 = vmatpush1.msra.mxu0 %v500
  %587 = vmatprep.subr.mxu0 %v497
  %588 = vmatpush1.msra.mxu0 %v496
  %589 = vmatprep.subr.mxu0 %v493
  %590 = vmatpush1.msra.mxu0 %v492
  %591 = vmatprep.subr.mxu0 %v489
  %592 = vmatpush1.msra.mxu0 %v488
  %593 = vmatprep.subr.mxu0 %v485
  %594 = vmatpush1.msra.mxu0 %v484
  %595 = vmatprep.subr.mxu0 %v481
  %596 = vmatpush1.msra.mxu0 %v480
  %597 = vmatprep.subr.mxu0 %v477
  %598 = vmatpush1.msra.mxu0 %v476
  %599 = vmatprep.subr.mxu0 %v473
  %600 = vmatpush1.msra.mxu0 %v472
  %601 = vmatprep.subr.mxu0 %v469
  %602 = vmatpush1.msra.mxu0 %v468
  %603 = vmatprep.subr.mxu0 %v465
  %604 = vmatpush1.msra.mxu0 %v464
  %605 = vmatprep.subr.mxu0 %v461
  %606 = vmatpush1.msra.mxu0 %v460
  %607 = vmatprep.subr.mxu0 %v457
  %608 = vmatpush1.msra.mxu0 %v456
  %609 = vmatprep.subr.mxu0 %v453
  %610 = vmatpush1.msra.mxu0 %v452
  %611 = vmatprep.subr.mxu0 %v449
  %612 = vmatpush1.msra.mxu0 %v448
  %613 = vmatprep.subr.mxu0 0.0
  %614 = vmatpush2.msra.mxu0 0.0
  %615 = vmatprep.subr.mxu0 0.0
  %616 = vmatpush2.msra.mxu0 0.0
  %617 = vmatprep.subr.mxu0 0.0
  %618 = vmatpush2.msra.mxu0 0.0
  %619 = vmatprep.subr.mxu0 0.0
  %620 = vmatpush2.msra.mxu0 0.0
  %621 = vmatprep.subr.mxu0 0.0
  %622 = vmatpush2.msra.mxu0 0.0
  %623 = vmatprep.subr.mxu0 0.0
  %624 = vmatpush2.msra.mxu0 0.0
  %625 = vmatprep.subr.mxu0 0.0
  %626 = vmatpush2.msra.mxu0 0.0
  %627 = vmatprep.subr.mxu0 0.0
  %628 = vmatpush2.msra.mxu0 0.0
  %629 = vmatprep.subr.mxu0 0.0
  %630 = vmatpush2.msra.mxu0 0.0
  %631 = vmatprep.subr.mxu0 0.0
  %632 = vmatpush2.msra.mxu0 0.0
  %633 = vmatprep.subr.mxu0 0.0
  %634 = vmatpush2.msra.mxu0 0.0
  %635 = vmatprep.subr.mxu0 0.0
  %636 = vmatpush2.msra.mxu0 0.0
  %637 = vmatprep.subr.mxu0 0.0
  %638 = vmatpush2.msra.mxu0 0.0
  %639 = vmatprep.subr.mxu0 0.0
  %640 = vmatpush2.msra.mxu0 0.0
  %641 = vmatprep.subr.mxu0 0.0
  %642 = vmatpush2.msra.mxu0 0.0
  %643 = vmatprep.subr.mxu0 0.0
  %644 = vmatpush2.msra.mxu0 0.0
  %645 = vmatprep.mubr.f32.mxu0 0.0
  %646 = vmatmul.mubr.f32.gmra.mxu0 %v445
  %v647 = vpop.f32.mrf.mxu0
  %v648 = vadd.f32 0.0, %v647
  %v649 = vpop.f32.mrf.mxu0
  %v650 = vadd.f32 0.0, %v649
  %651 = vdwg.mxu0
  %v652 = vadd.f32 %v370, %v577
  %v653 = vadd.f32 %v372, %v579
  %v654 = vadd.f32 %v441, %v648
  %v655 = vadd.f32 %v443, %v650
  %v656 = vld [vmem:[%s7] sm:$0xf]
  %v658 = vlaneseq
  %v659 = vshrl.u32 %v658, 7
  %v660 = vsub.s32 0, %v659
  %v661 = vrot.slane %v656, %v660
  %v662 = vlaneseq
  %v663 = vshrl.u32 %v662, 7
  %v664 = vsub.s32 1, %v663
  %v665 = vrot.slane %v656, %v664
  %v666 = vlaneseq
  %v667 = vshrl.u32 %v666, 7
  %v668 = vsub.s32 2, %v667
  %v669 = vrot.slane %v656, %v668
  %v670 = vlaneseq
  %v671 = vshrl.u32 %v670, 7
  %v672 = vsub.s32 3, %v671
  %v673 = vrot.slane %v656, %v672
  %v678 = vadd.f32 %v652, %v661
  %v679 = vadd.f32 %v653, %v665
  %v680 = vadd.f32 %v654, %v669
  %v681 = vadd.f32 %v655, %v673
  %v682 = vxor.u32 %v678, 2147483648
  %v683 = vmul.f32 %v682, 1.442695
  %v684 = vpow.pop %v683
  %v685 = vadd.f32 %v684, 1.0
  %v686 = vrcp.pop %v685
  %v687 = vmul.f32 1.0, %v686
  %v688 = vxor.u32 %v679, 2147483648
  %v689 = vmul.f32 %v688, 1.442695
  %v690 = vpow.pop %v689
  %v691 = vadd.f32 %v690, 1.0
  %v692 = vrcp.pop %v691
  %v693 = vmul.f32 1.0, %v692
  %v694 = vtanh.pop %v680
  %v695 = vxor.u32 %v681, 2147483648
  %v696 = vmul.f32 %v695, 1.442695
  %v697 = vpow.pop %v696
  %v698 = vadd.f32 %v697, 1.0
  %v699 = vrcp.pop %v698
  %v700 = vmul.f32 1.0, %v699
  %v701 = vld [vmem:[%s3] sm:$0xff]
  %v702 = vmul.f32 %v693, %v701
  %v703 = vmul.f32 %v687, %v694
  %v704 = vadd.f32 %v702, %v703
  %705 = vst [vmem:[%s9] sm:$0xff] %v704
  %v706 = vtanh.pop %v704
  %v707 = vmul.f32 %v700, %v706
  %708 = vst [vmem:[%s8] sm:$0xff] %v707
  // Predicated region
  $region34: #{forward.54} parent=0 // pred_check
    _
  $region35: #{forward.54} parent=0 // pred_check_branch
    %710 = sbr.rel (0) target = $region37
  $region36: #{forward.54} parent=0 // pred_region
    _
  $region37: #{forward.54} parent=0 // pred_fallthru
    _
  // Predicated region
  $region38: #{forward.54} parent=0 // pred_check
    _
  $region39: #{forward.54} parent=0 // pred_check_branch
    %712 = sbr.rel (0) target = $region41
  $region40: #{forward.54} parent=0 // pred_region
    _
  $region41: #{forward.54} parent=0 // pred_fallthru
    _
  // Predicated region
  $region42: #{forward.54} parent=0 // pred_check
    _
  $region43: #{forward.54} parent=0 // pred_check_branch
    %714 = sbr.rel (0) target = $region45
  $region44: #{forward.54} parent=0 // pred_region
    _
  $region45: #{forward.54} parent=0 // pred_fallthru
    _
  // Predicated region
  $region46: #{forward.54} parent=0 // pred_check
    _
  $region47: #{forward.54} parent=0 // pred_check_branch
    %716 = sbr.rel (0) target = $region49
  $region48: #{forward.54} parent=0 // pred_region
    _
  $region49: #{forward.54} parent=0 // pred_fallthru
    _

// kernel: forward.51
$region0: #{forward.51}
  #allocation0 [shape = 'u32[]', space=smem, size = 0x4, offset = 0x4, fixed_abs, tag = 'smem constant byte address 0x4 - core index']
  #allocation1 [shape = 'u32[144,128]{1,0:T(1,128)}', space=vmem, size = 0x12000, scoped, tag = 'internal scratch']
  #allocation2 [shape = 'f32[8,1]{1,0:T(8,128)}', space=vmem, size = 0x1000, scoped, tag = 'scratch operand']
  #allocation3 [shape = 'f32[8,1]{1,0:T(8,128)}', space=vmem, size = 0x1000, scoped, tag = 'scratch operand']
  #allocation4 [shape = 'f32[8,128]{1,0:T(8,128)}', space=vmem, size = 0x1000, scoped, tag = 'scratch operand']
  %s0 = inlined_call_operand.vmem [shape: f32[8,8], index: 0, kind: input, shape index: {}]
  %s1 = inlined_call_operand.vmem [shape: f32[8,128], index: 1, kind: input, shape index: {}]
  %s2 = inlined_call_operand.vmem [shape: f32[8,128], index: 2, kind: input, shape index: {}]
  %s3 = inlined_call_operand.vmem [shape: f32[8,128], index: 3, kind: output, shape index: {}]
  %s4 = sld [smem:[#allocation0]]
  $region30: #{forward.51} parent=0
    _
  %s6 = ssub.s32 1, %s4
  %s7 = scalar_select 0, %s6, %s4
  // Predicated region
  $region2: #{forward.51} parent=0 // pred_check
    _
  $region3: #{forward.51} parent=0 // pred_check_branch
    %9 = sbr.rel (0) target = $region5
  $region4: #{forward.51} parent=0 // pred_region
    _
  $region5: #{forward.51} parent=0 // pred_fallthru
    _
  // Predicated region
  $region6: #{forward.51} parent=0 // pred_check
    _
  $region7: #{forward.51} parent=0 // pred_check_branch
    %11 = sbr.rel (0) target = $region9
  $region8: #{forward.51} parent=0 // pred_region
    _
  $region9: #{forward.51} parent=0 // pred_fallthru
    _
  // Predicated region
  $region10: #{forward.51} parent=0 // pred_check
    _
  $region11: #{forward.51} parent=0 // pred_check_branch
    %13 = sbr.rel (0) target = $region13
  $region12: #{forward.51} parent=0 // pred_region
    _
  $region13: #{forward.51} parent=0 // pred_fallthru
    _
  %p14 = scmp.eq.s32.totalorder 0, 0
  // Predicated region
  $region14: #{forward.51} parent=0 // pred_check
    %p15 = pneg %p14
  $region15: #{forward.51} parent=0 // pred_check_branch
    %17 = sbr.rel (%p15) target = $region17
  $region16: #{forward.51} parent=0 // pred_region
    %vm18 = vcmask 7168
    %19 = vst.msk [vmem:[#allocation2] sm:$0xff] %vm18, -1e+30
    %20 = vst.msk [vmem:[#allocation3] sm:$0xff] %vm18, 0.0
    %21 = vst [vmem:[#allocation4] sm:$0xff] 0.0
  $region17: #{forward.51} parent=0 // pred_fallthru
    _
  %v22 = vld [vmem:[%s0] sm:$0xff]
  %v23 = vld [vmem:[%s1] sm:$0xff]
  %v24 = vld [vmem:[%s2] sm:$0xff]
  %25 = vmatprep.subr.mxu0 0.0
  %26 = vmatpush1.xpose.msra.mxu0 0.0
  %27 = vmatprep.subr.mxu0 0.0
  %28 = vmatpush1.xpose.msra.mxu0 0.0
  %29 = vmatprep.subr.mxu0 0.0
  %30 = vmatpush1.xpose.msra.mxu0 0.0
  %31 = vmatprep.subr.mxu0 0.0
  %32 = vmatpush1.xpose.msra.mxu0 0.0
  %33 = vmatprep.subr.mxu0 0.0
  %34 = vmatpush1.xpose.msra.mxu0 0.0
  %35 = vmatprep.subr.mxu0 0.0
  %36 = vmatpush1.xpose.msra.mxu0 0.0
  %37 = vmatprep.subr.mxu0 0.0
  %38 = vmatpush1.xpose.msra.mxu0 0.0
  %39 = vmatprep.subr.mxu0 0.0
  %40 = vmatpush1.xpose.msra.mxu0 0.0
  %41 = vmatprep.subr.mxu0 0.0
  %42 = vmatpush1.xpose.msra.mxu0 0.0
  %43 = vmatprep.subr.mxu0 0.0
  %44 = vmatpush1.xpose.msra.mxu0 0.0
  %45 = vmatprep.subr.mxu0 0.0
  %46 = vmatpush1.xpose.msra.mxu0 0.0
  %47 = vmatprep.subr.mxu0 0.0
  %48 = vmatpush1.xpose.msra.mxu0 0.0
  %49 = vmatprep.subr.mxu0 0.0
  %50 = vmatpush1.xpose.msra.mxu0 0.0
  %51 = vmatprep.subr.mxu0 0.0
  %52 = vmatpush1.xpose.msra.mxu0 0.0
  %53 = vmatprep.subr.mxu0 0.0
  %54 = vmatpush1.xpose.msra.mxu0 0.0
  %55 = vmatprep.subr.mxu0 0.0
  %56 = vmatpush1.xpose.msra.mxu0 %v23
  %57 = vmatprep.subr.mxu0 0.0
  %58 = vmatpush2.xpose.msra.mxu0 0.0
  %59 = vmatprep.subr.mxu0 0.0
  %60 = vmatpush2.xpose.msra.mxu0 0.0
  %61 = vmatprep.subr.mxu0 0.0
  %62 = vmatpush2.xpose.msra.mxu0 0.0
  %63 = vmatprep.subr.mxu0 0.0
  %64 = vmatpush2.xpose.msra.mxu0 0.0
  %65 = vmatprep.subr.mxu0 0.0
  %66 = vmatpush2.xpose.msra.mxu0 0.0
  %67 = vmatprep.subr.mxu0 0.0
  %68 = vmatpush2.xpose.msra.mxu0 0.0
  %69 = vmatprep.subr.mxu0 0.0
  %70 = vmatpush2.xpose.msra.mxu0 0.0
  %71 = vmatprep.subr.mxu0 0.0
  %72 = vmatpush2.xpose.msra.mxu0 0.0
  %73 = vmatprep.subr.mxu0 0.0
  %74 = vmatpush2.xpose.msra.mxu0 0.0
  %75 = vmatprep.subr.mxu0 0.0
  %76 = vmatpush2.xpose.msra.mxu0 0.0
  %77 = vmatprep.subr.mxu0 0.0
  %78 = vmatpush2.xpose.msra.mxu0 0.0
  %79 = vmatprep.subr.mxu0 0.0
  %80 = vmatpush2.xpose.msra.mxu0 0.0
  %81 = vmatprep.subr.mxu0 0.0
  %82 = vmatpush2.xpose.msra.mxu0 0.0
  %83 = vmatprep.subr.mxu0 0.0
  %84 = vmatpush2.xpose.msra.mxu0 0.0
  %85 = vmatprep.subr.mxu0 0.0
  %86 = vmatpush2.xpose.msra.mxu0 0.0
  %87 = vmatprep.subr.mxu0 0.0
  %88 = vmatpush2.xpose.msra.mxu0 0.0
  %89 = vmatprep.mubr.f32.mxu0 0.0
  %90 = vmatmul.mubr.f32.gmra.mxu0 %v24
  %v91 = vpop.f32.mrf.mxu0
  %v92 = vadd.f32 0.0, %v91
  %v93 = vpop.f32.mrf.mxu0
  %94 = vdwg.mxu0
  %vm95 = vcmp.gt.f32.partialorder %v22, 0.0
  %v96 = vsel %vm95, %v92, -1e+30
  %v97 = vld [vmem:[#allocation2] sm:$0xff]
  %vm98 = vcmask 64512
  %v99 = vsel %vm98, %v96, -inf
  %100 = vmax.xlane.f32.xlu0 %v99
  %v101 = vpop.xlane.xlu0 %100
  %v102 = vmax.f32 %v97, %v101
  %v103 = vsub.f32 %v97, %v102
  %v104 = vmul.f32 %v103, 1.442695
  %v105 = vpow.pop %v104
  %107 = vset.pattern.permute.xlu0 0
  %108 = vperm.xlu0 %107, %v102
  %v109 = vpop.permute.xlu0 %108
  %v111 = vsub.f32 %v96, %v109
  %v112 = vmul.f32 %v111, 1.442695
  %v113 = vpow.pop %v112
  %v114 = vsel %vm95, %v113, 0.0
  %v115 = vld [vmem:[#allocation3] sm:$0xff]
  %v116 = vmul.f32 %v105, %v115
  %v117 = vsel %vm98, %v114, 0.0
  %118 = vadd.xlane.f32.xlu0 %v117
  %v119 = vpop.xlane.xlu0 %118
  %v120 = vadd.f32 %v116, %v119
  %vm121 = vcmask 7168
  %122 = vst.msk [vmem:[#allocation3] sm:$0xff] %vm121, %v120
  %v123 = vld [vmem:[#allocation4] sm:$0xff]
  %125 = vset.pattern.permute.xlu0 0
  %126 = vperm.xlu0 %125, %v105
  %v127 = vpop.permute.xlu0 %126
  %v129 = vmul.f32 %v127, %v123
  %v131 = vsel %vm98, %v114, 0
  %133 = vmatprep.subr.mxu0 0.0
  %134 = vmatpush1.msra.mxu0 0.0
  %135 = vmatprep.subr.mxu0 0.0
  %136 = vmatpush1.msra.mxu0 0.0
  %137 = vmatprep.subr.mxu0 0.0
  %138 = vmatpush1.msra.mxu0 0.0
  %139 = vmatprep.subr.mxu0 0.0
  %140 = vmatpush1.msra.mxu0 0.0
  %141 = vmatprep.subr.mxu0 0.0
  %142 = vmatpush1.msra.mxu0 0.0
  %143 = vmatprep.subr.mxu0 0.0
  %144 = vmatpush1.msra.mxu0 0.0
  %145 = vmatprep.subr.mxu0 0.0
  %146 = vmatpush1.msra.mxu0 0.0
  %147 = vmatprep.subr.mxu0 0.0
  %148 = vmatpush1.msra.mxu0 0.0
  %149 = vmatprep.subr.mxu0 0.0
  %150 = vmatpush1.msra.mxu0 0.0
  %151 = vmatprep.subr.mxu0 0.0
  %152 = vmatpush1.msra.mxu0 0.0
  %153 = vmatprep.subr.mxu0 0.0
  %154 = vmatpush1.msra.mxu0 0.0
  %155 = vmatprep.subr.mxu0 0.0
  %156 = vmatpush1.msra.mxu0 0.0
  %157 = vmatprep.subr.mxu0 0.0
  %158 = vmatpush1.msra.mxu0 0.0
  %159 = vmatprep.subr.mxu0 0.0
  %160 = vmatpush1.msra.mxu0 0.0
  %161 = vmatprep.subr.mxu0 0.0
  %162 = vmatpush1.msra.mxu0 0.0
  %163 = vmatprep.subr.mxu0 0.0
  %164 = vmatpush1.msra.mxu0 %v23
  %165 = vmatprep.subr.mxu0 0.0
  %166 = vmatpush2.msra.mxu0 0.0
  %167 = vmatprep.subr.mxu0 0.0
  %168 = vmatpush2.msra.mxu0 0.0
  %169 = vmatprep.subr.mxu0 0.0
  %170 = vmatpush2.msra.mxu0 0.0
  %171 = vmatprep.subr.mxu0 0.0
  %172 = vmatpush2.msra.mxu0 0.0
  %173 = vmatprep.subr.mxu0 0.0
  %174 = vmatpush2.msra.mxu0 0.0
  %175 = vmatprep.subr.mxu0 0.0
  %176 = vmatpush2.msra.mxu0 0.0
  %177 = vmatprep.subr.mxu0 0.0
  %178 = vmatpush2.msra.mxu0 0.0
  %179 = vmatprep.subr.mxu0 0.0
  %180 = vmatpush2.msra.mxu0 0.0
  %181 = vmatprep.subr.mxu0 0.0
  %182 = vmatpush2.msra.mxu0 0.0
  %183 = vmatprep.subr.mxu0 0.0
  %184 = vmatpush2.msra.mxu0 0.0
  %185 = vmatprep.subr.mxu0 0.0
  %186 = vmatpush2.msra.mxu0 0.0
  %187 = vmatprep.subr.mxu0 0.0
  %188 = vmatpush2.msra.mxu0 0.0
  %189 = vmatprep.subr.mxu0 0.0
  %190 = vmatpush2.msra.mxu0 0.0
  %191 = vmatprep.subr.mxu0 0.0
  %192 = vmatpush2.msra.mxu0 0.0
  %193 = vmatprep.subr.mxu0 0.0
  %194 = vmatpush2.msra.mxu0 0.0
  %195 = vmatprep.subr.mxu0 0.0
  %196 = vmatpush2.msra.mxu0 0.0
  %197 = vmatprep.mubr.f32.mxu0 0.0
  %198 = vmatmul.mubr.f32.gmra.mxu0 %v131
  %v199 = vpop.f32.mrf.mxu0
  %v200 = vadd.f32 0.0, %v199
  %v201 = vpop.f32.mrf.mxu0
  %202 = vdwg.mxu0
  %v203 = vadd.f32 %v129, %v200
  %204 = vst [vmem:[#allocation4] sm:$0xff] %v203
  %205 = vst.msk [vmem:[#allocation2] sm:$0xff] %vm121, %v102
  // Predicated region
  $region18: #{forward.51} parent=0 // pred_check
    %p206 = pneg %p14
  $region19: #{forward.51} parent=0 // pred_check_branch
    %208 = sbr.rel (%p206) target = $region21
  $region20: #{forward.51} parent=0 // pred_region
    %v209 = vld [vmem:[#allocation4] sm:$0xff]
    %v210 = vld [vmem:[#allocation3] sm:$0xff]
    %v211 = vmax.f32 %v210, 1.0
    %213 = vset.pattern.permute.xlu0 0
    %214 = vperm.xlu0 %213, %v211
    %v215 = vpop.permute.xlu0 %214
    %v217 = vrcp.pop %v215
    %v218 = vmul.f32 %v209, %v217
    %219 = vst [vmem:[%s3] sm:$0xff] %v218
  $region21: #{forward.51} parent=0 // pred_fallthru
    _
  // Predicated region
  $region22: #{forward.51} parent=0 // pred_check
    _
  $region23: #{forward.51} parent=0 // pred_check_branch
    %221 = sbr.rel (0) target = $region25
  $region24: #{forward.51} parent=0 // pred_region
    _
  $region25: #{forward.51} parent=0 // pred_fallthru
    _
  // Predicated region
  $region26: #{forward.51} parent=0 // pred_check
    _
  $region27: #{forward.51} parent=0 // pred_check_branch
    %223 = sbr.rel (0) target = $region29
  $region28: #{forward.51} parent=0 // pred_region
    _
  $region29: #{forward.51} parent=0 // pred_fallthru
    _

// kernel: forward.55
$region0: #{forward.55}
  #allocation0 [shape = 'u32[]', space=smem, size = 0x4, offset = 0x4, fixed_abs, tag = 'smem constant byte address 0x4 - core index']
  #allocation1 [shape = 'u32[144,128]{1,0:T(1,128)}', space=vmem, size = 0x12000, scoped, tag = 'internal scratch']
  #allocation2 [shape = 'f32[8,1]{1,0:T(8,128)}', space=vmem, size = 0x1000, scoped, tag = 'scratch operand']
  #allocation3 [shape = 'f32[8,1]{1,0:T(8,128)}', space=vmem, size = 0x1000, scoped, tag = 'scratch operand']
  #allocation4 [shape = 'f32[8,128]{1,0:T(8,128)}', space=vmem, size = 0x1000, scoped, tag = 'scratch operand']
  %s0 = inlined_call_operand.vmem [shape: f32[8,16], index: 0, kind: input, shape index: {}]
  %s1 = inlined_call_operand.vmem [shape: f32[16,128], index: 1, kind: input, shape index: {}]
  %s2 = inlined_call_operand.vmem [shape: f32[8,128], index: 2, kind: input, shape index: {}]
  %s3 = inlined_call_operand.vmem [shape: f32[8,128], index: 3, kind: output, shape index: {}]
  %s4 = sld [smem:[#allocation0]]
  $region30: #{forward.55} parent=0
    _
  %s6 = ssub.s32 1, %s4
  %s7 = scalar_select 0, %s6, %s4
  // Predicated region
  $region2: #{forward.55} parent=0 // pred_check
    _
  $region3: #{forward.55} parent=0 // pred_check_branch
    %9 = sbr.rel (0) target = $region5
  $region4: #{forward.55} parent=0 // pred_region
    _
  $region5: #{forward.55} parent=0 // pred_fallthru
    _
  // Predicated region
  $region6: #{forward.55} parent=0 // pred_check
    _
  $region7: #{forward.55} parent=0 // pred_check_branch
    %11 = sbr.rel (0) target = $region9
  $region8: #{forward.55} parent=0 // pred_region
    _
  $region9: #{forward.55} parent=0 // pred_fallthru
    _
  // Predicated region
  $region10: #{forward.55} parent=0 // pred_check
    _
  $region11: #{forward.55} parent=0 // pred_check_branch
    %13 = sbr.rel (0) target = $region13
  $region12: #{forward.55} parent=0 // pred_region
    _
  $region13: #{forward.55} parent=0 // pred_fallthru
    _
  %p14 = scmp.eq.s32.totalorder 0, 0
  // Predicated region
  $region14: #{forward.55} parent=0 // pred_check
    %p15 = pneg %p14
  $region15: #{forward.55} parent=0 // pred_check_branch
    %17 = sbr.rel (%p15) target = $region17
  $region16: #{forward.55} parent=0 // pred_region
    %vm18 = vcmask 7168
    %19 = vst.msk [vmem:[#allocation2] sm:$0xff] %vm18, -1e+30
    %20 = vst.msk [vmem:[#allocation3] sm:$0xff] %vm18, 0.0
    %21 = vst [vmem:[#allocation4] sm:$0xff] 0.0
  $region17: #{forward.55} parent=0 // pred_fallthru
    _
  %v22 = vld [vmem:[%s0] sm:$0xff]
  %v23 = vld [vmem:[%s1] sm:$0xff]
  %v24 = vld [vmem:[%s1 + $0x8] sm:$0xff]
  %v25 = vld [vmem:[%s2] sm:$0xff]
  %26 = vmatprep.subr.mxu0 0.0
  %27 = vmatpush1.xpose.msra.mxu0 0.0
  %28 = vmatprep.subr.mxu0 0.0
  %29 = vmatpush1.xpose.msra.mxu0 0.0
  %30 = vmatprep.subr.mxu0 0.0
  %31 = vmatpush1.xpose.msra.mxu0 0.0
  %32 = vmatprep.subr.mxu0 0.0
  %33 = vmatpush1.xpose.msra.mxu0 0.0
  %34 = vmatprep.subr.mxu0 0.0
  %35 = vmatpush1.xpose.msra.mxu0 0.0
  %36 = vmatprep.subr.mxu0 0.0
  %37 = vmatpush1.xpose.msra.mxu0 0.0
  %38 = vmatprep.subr.mxu0 0.0
  %39 = vmatpush1.xpose.msra.mxu0 0.0
  %40 = vmatprep.subr.mxu0 0.0
  %41 = vmatpush1.xpose.msra.mxu0 0.0
  %42 = vmatprep.subr.mxu0 0.0
  %43 = vmatpush1.xpose.msra.mxu0 0.0
  %44 = vmatprep.subr.mxu0 0.0
  %45 = vmatpush1.xpose.msra.mxu0 0.0
  %46 = vmatprep.subr.mxu0 0.0
  %47 = vmatpush1.xpose.msra.mxu0 0.0
  %48 = vmatprep.subr.mxu0 0.0
  %49 = vmatpush1.xpose.msra.mxu0 0.0
  %50 = vmatprep.subr.mxu0 0.0
  %51 = vmatpush1.xpose.msra.mxu0 0.0
  %52 = vmatprep.subr.mxu0 0.0
  %53 = vmatpush1.xpose.msra.mxu0 0.0
  %54 = vmatprep.subr.mxu0 0.0
  %55 = vmatpush1.xpose.msra.mxu0 %v24
  %56 = vmatprep.subr.mxu0 0.0
  %57 = vmatpush1.xpose.msra.mxu0 %v23
  %58 = vmatprep.subr.mxu0 0.0
  %59 = vmatpush2.xpose.msra.mxu0 0.0
  %60 = vmatprep.subr.mxu0 0.0
  %61 = vmatpush2.xpose.msra.mxu0 0.0
  %62 = vmatprep.subr.mxu0 0.0
  %63 = vmatpush2.xpose.msra.mxu0 0.0
  %64 = vmatprep.subr.mxu0 0.0
  %65 = vmatpush2.xpose.msra.mxu0 0.0
  %66 = vmatprep.subr.mxu0 0.0
  %67 = vmatpush2.xpose.msra.mxu0 0.0
  %68 = vmatprep.subr.mxu0 0.0
  %69 = vmatpush2.xpose.msra.mxu0 0.0
  %70 = vmatprep.subr.mxu0 0.0
  %71 = vmatpush2.xpose.msra.mxu0 0.0
  %72 = vmatprep.subr.mxu0 0.0
  %73 = vmatpush2.xpose.msra.mxu0 0.0
  %74 = vmatprep.subr.mxu0 0.0
  %75 = vmatpush2.xpose.msra.mxu0 0.0
  %76 = vmatprep.subr.mxu0 0.0
  %77 = vmatpush2.xpose.msra.mxu0 0.0
  %78 = vmatprep.subr.mxu0 0.0
  %79 = vmatpush2.xpose.msra.mxu0 0.0
  %80 = vmatprep.subr.mxu0 0.0
  %81 = vmatpush2.xpose.msra.mxu0 0.0
  %82 = vmatprep.subr.mxu0 0.0
  %83 = vmatpush2.xpose.msra.mxu0 0.0
  %84 = vmatprep.subr.mxu0 0.0
  %85 = vmatpush2.xpose.msra.mxu0 0.0
  %86 = vmatprep.subr.mxu0 0.0
  %87 = vmatpush2.xpose.msra.mxu0 0.0
  %88 = vmatprep.subr.mxu0 0.0
  %89 = vmatpush2.xpose.msra.mxu0 0.0
  %90 = vmatprep.mubr.f32.mxu0 0.0
  %91 = vmatmul.mubr.f32.gmra.mxu0 %v25
  %v92 = vpop.f32.mrf.mxu0
  %v93 = vadd.f32 0.0, %v92
  %v94 = vpop.f32.mrf.mxu0
  %95 = vdwg.mxu0
  %vm96 = vcmp.gt.f32.partialorder %v22, 0.0
  %v97 = vsel %vm96, %v93, -1e+30
  %v98 = vld [vmem:[#allocation2] sm:$0xff]
  %vm99 = vcmask 130048
  %v100 = vsel %vm99, %v97, -inf
  %101 = vmax.xlane.f32.xlu0 %v100
  %v102 = vpop.xlane.xlu0 %101
  %v103 = vmax.f32 %v98, %v102
  %v104 = vsub.f32 %v98, %v103
  %v105 = vmul.f32 %v104, 1.442695
  %v106 = vpow.pop %v105
  %108 = vset.pattern.permute.xlu0 0
  %109 = vperm.xlu0 %108, %v103
  %v110 = vpop.permute.xlu0 %109
  %v112 = vsub.f32 %v97, %v110
  %v113 = vmul.f32 %v112, 1.442695
  %v114 = vpow.pop %v113
  %v115 = vsel %vm96, %v114, 0.0
  %v116 = vld [vmem:[#allocation3] sm:$0xff]
  %v117 = vmul.f32 %v106, %v116
  %v118 = vsel %vm99, %v115, 0.0
  %119 = vadd.xlane.f32.xlu0 %v118
  %v120 = vpop.xlane.xlu0 %119
  %v121 = vadd.f32 %v117, %v120
  %vm122 = vcmask 7168
  %123 = vst.msk [vmem:[#allocation3] sm:$0xff] %vm122, %v121
  %v124 = vld [vmem:[#allocation4] sm:$0xff]
  %126 = vset.pattern.permute.xlu0 0
  %127 = vperm.xlu0 %126, %v106
  %v128 = vpop.permute.xlu0 %127
  %v130 = vmul.f32 %v128, %v124
  %v132 = vsel %vm99, %v115, 0
  %134 = vmatprep.subr.mxu0 0.0
  %135 = vmatpush1.msra.mxu0 0.0
  %136 = vmatprep.subr.mxu0 0.0
  %137 = vmatpush1.msra.mxu0 0.0
  %138 = vmatprep.subr.mxu0 0.0
  %139 = vmatpush1.msra.mxu0 0.0
  %140 = vmatprep.subr.mxu0 0.0
  %141 = vmatpush1.msra.mxu0 0.0
  %142 = vmatprep.subr.mxu0 0.0
  %143 = vmatpush1.msra.mxu0 0.0
  %144 = vmatprep.subr.mxu0 0.0
  %145 = vmatpush1.msra.mxu0 0.0
  %146 = vmatprep.subr.mxu0 0.0
  %147 = vmatpush1.msra.mxu0 0.0
  %148 = vmatprep.subr.mxu0 0.0
  %149 = vmatpush1.msra.mxu0 0.0
  %150 = vmatprep.subr.mxu0 0.0
  %151 = vmatpush1.msra.mxu0 0.0
  %152 = vmatprep.subr.mxu0 0.0
  %153 = vmatpush1.msra.mxu0 0.0
  %154 = vmatprep.subr.mxu0 0.0
  %155 = vmatpush1.msra.mxu0 0.0
  %156 = vmatprep.subr.mxu0 0.0
  %157 = vmatpush1.msra.mxu0 0.0
  %158 = vmatprep.subr.mxu0 0.0
  %159 = vmatpush1.msra.mxu0 0.0
  %160 = vmatprep.subr.mxu0 0.0
  %161 = vmatpush1.msra.mxu0 0.0
  %162 = vmatprep.subr.mxu0 0.0
  %163 = vmatpush1.msra.mxu0 %v24
  %164 = vmatprep.subr.mxu0 0.0
  %165 = vmatpush1.msra.mxu0 %v23
  %166 = vmatprep.subr.mxu0 0.0
  %167 = vmatpush2.msra.mxu0 0.0
  %168 = vmatprep.subr.mxu0 0.0
  %169 = vmatpush2.msra.mxu0 0.0
  %170 = vmatprep.subr.mxu0 0.0
  %171 = vmatpush2.msra.mxu0 0.0
  %172 = vmatprep.subr.mxu0 0.0
  %173 = vmatpush2.msra.mxu0 0.0
  %174 = vmatprep.subr.mxu0 0.0
  %175 = vmatpush2.msra.mxu0 0.0
  %176 = vmatprep.subr.mxu0 0.0
  %177 = vmatpush2.msra.mxu0 0.0
  %178 = vmatprep.subr.mxu0 0.0
  %179 = vmatpush2.msra.mxu0 0.0
  %180 = vmatprep.subr.mxu0 0.0
  %181 = vmatpush2.msra.mxu0 0.0
  %182 = vmatprep.subr.mxu0 0.0
  %183 = vmatpush2.msra.mxu0 0.0
  %184 = vmatprep.subr.mxu0 0.0
  %185 = vmatpush2.msra.mxu0 0.0
  %186 = vmatprep.subr.mxu0 0.0
  %187 = vmatpush2.msra.mxu0 0.0
  %188 = vmatprep.subr.mxu0 0.0
  %189 = vmatpush2.msra.mxu0 0.0
  %190 = vmatprep.subr.mxu0 0.0
  %191 = vmatpush2.msra.mxu0 0.0
  %192 = vmatprep.subr.mxu0 0.0
  %193 = vmatpush2.msra.mxu0 0.0
  %194 = vmatprep.subr.mxu0 0.0
  %195 = vmatpush2.msra.mxu0 0.0
  %196 = vmatprep.subr.mxu0 0.0
  %197 = vmatpush2.msra.mxu0 0.0
  %198 = vmatprep.mubr.f32.mxu0 0.0
  %199 = vmatmul.mubr.f32.gmra.mxu0 %v132
  %v200 = vpop.f32.mrf.mxu0
  %v201 = vadd.f32 0.0, %v200
  %v202 = vpop.f32.mrf.mxu0
  %203 = vdwg.mxu0
  %v204 = vadd.f32 %v130, %v201
  %205 = vst [vmem:[#allocation4] sm:$0xff] %v204
  %206 = vst.msk [vmem:[#allocation2] sm:$0xff] %vm122, %v103
  // Predicated region
  $region18: #{forward.55} parent=0 // pred_check
    %p207 = pneg %p14
  $region19: #{forward.55} parent=0 // pred_check_branch
    %209 = sbr.rel (%p207) target = $region21
  $region20: #{forward.55} parent=0 // pred_region
    %v210 = vld [vmem:[#allocation4] sm:$0xff]
    %v211 = vld [vmem:[#allocation3] sm:$0xff]
    %v212 = vmax.f32 %v211, 1.0
    %214 = vset.pattern.permute.xlu0 0
    %215 = vperm.xlu0 %214, %v212
    %v216 = vpop.permute.xlu0 %215
    %v218 = vrcp.pop %v216
    %v219 = vmul.f32 %v210, %v218
    %220 = vst [vmem:[%s3] sm:$0xff] %v219
  $region21: #{forward.55} parent=0 // pred_fallthru
    _
  // Predicated region
  $region22: #{forward.55} parent=0 // pred_check
    _
  $region23: #{forward.55} parent=0 // pred_check_branch
    %222 = sbr.rel (0) target = $region25
  $region24: #{forward.55} parent=0 // pred_region
    _
  $region25: #{forward.55} parent=0 // pred_fallthru
    _
  // Predicated region
  $region26: #{forward.55} parent=0 // pred_check
    _
  $region27: #{forward.55} parent=0 // pred_check_branch
    %224 = sbr.rel (0) target = $region29
  $region28: #{forward.55} parent=0 // pred_region
    _
  $region29: #{forward.55} parent=0 // pred_fallthru
    _

// kernel: forward.56
$region0: #{forward.56}
  #allocation0 [shape = 'u32[]', space=smem, size = 0x4, offset = 0x4, fixed_abs, tag = 'smem constant byte address 0x4 - core index']
  #allocation1 [shape = 'u32[144,128]{1,0:T(1,128)}', space=vmem, size = 0x12000, scoped, tag = 'internal scratch']
  %s0 = inlined_call_operand.vmem [shape: f32[8,128], index: 0, kind: input, shape index: {}, may-alias: {0,2}]
  %s1 = inlined_call_operand.vmem [shape: f32[8,128], index: 1, kind: input, shape index: {}]
  %s2 = inlined_call_operand.vmem [shape: f32[8,128], index: 2, kind: input, shape index: {}, may-alias: {0,2}]
  %s3 = inlined_call_operand.vmem [shape: f32[8,128], index: 3, kind: input, shape index: {}]
  %s4 = inlined_call_operand.vmem [shape: f32[128,512], index: 4, kind: input, shape index: {}]
  %s5 = inlined_call_operand.vmem [shape: f32[128,512], index: 5, kind: input, shape index: {}]
  %s6 = inlined_call_operand.vmem [shape: f32[128,512], index: 6, kind: input, shape index: {}]
  %s7 = inlined_call_operand.vmem [shape: f32[1,512], index: 7, kind: input, shape index: {}]
  %s8 = inlined_call_operand.vmem [shape: f32[8,128], index: 8, kind: output, shape index: {0}]
  %s9 = inlined_call_operand.hbm [shape: f32[8,128], index: 9, kind: output, shape index: {1}]
  %10 = xla_tuple %s8, %s9
  %s11 = sld [smem:[#allocation0]]
  $region50: #{forward.56} parent=0
    _
  %s13 = ssub.s32 1, %s11
  %s14 = scalar_select 0, %s13, %s11
  $region1: #{forward.56} parent=0
    #allocation2 [shape = 'u8[4096]{0}', space=vmem, size = 0x1000, scoped, tag = 'output window, operand 1, single buffered']
    #allocation3 [shape = 's32[1]{0}', space=sflag, size = 0x4, scoped, tag = 'scoped memory for forward.56']
    %15 = vsyncpa [#allocation3], 0
    // Predicated region
    $region2: #{forward.56} parent=1 // pred_check
      _
    $region3: #{forward.56} parent=1 // pred_check_branch
      %17 = sbr.rel (0) target = $region5
    $region4: #{forward.56} parent=1 // pred_region
      _
    $region5: #{forward.56} parent=1 // pred_fallthru
      _
    // Predicated region
    $region6: #{forward.56} parent=1 // pred_check
      _
    $region7: #{forward.56} parent=1 // pred_check_branch
      %19 = sbr.rel (0) target = $region9
    $region8: #{forward.56} parent=1 // pred_region
      _
    $region9: #{forward.56} parent=1 // pred_fallthru
      _
    // Predicated region
    $region10: #{forward.56} parent=1 // pred_check
      _
    $region11: #{forward.56} parent=1 // pred_check_branch
      %21 = sbr.rel (0) target = $region13
    $region12: #{forward.56} parent=1 // pred_region
      _
    $region13: #{forward.56} parent=1 // pred_fallthru
      _
    // Predicated region
    $region14: #{forward.56} parent=1 // pred_check
      _
    $region15: #{forward.56} parent=1 // pred_check_branch
      %23 = sbr.rel (0) target = $region17
    $region16: #{forward.56} parent=1 // pred_region
      _
    $region17: #{forward.56} parent=1 // pred_fallthru
      _
    // Predicated region
    $region18: #{forward.56} parent=1 // pred_check
      _
    $region19: #{forward.56} parent=1 // pred_check_branch
      %25 = sbr.rel (0) target = $region21
    $region20: #{forward.56} parent=1 // pred_region
      _
    $region21: #{forward.56} parent=1 // pred_fallthru
      _
    // Predicated region
    $region22: #{forward.56} parent=1 // pred_check
      _
    $region23: #{forward.56} parent=1 // pred_check_branch
      %27 = sbr.rel (0) target = $region25
    $region24: #{forward.56} parent=1 // pred_region
      _
    $region25: #{forward.56} parent=1 // pred_fallthru
      _
    // Predicated region
    $region26: #{forward.56} parent=1 // pred_check
      _
    $region27: #{forward.56} parent=1 // pred_check_branch
      %29 = sbr.rel (0) target = $region29
    $region28: #{forward.56} parent=1 // pred_region
      _
    $region29: #{forward.56} parent=1 // pred_fallthru
      _
    // Predicated region
    $region30: #{forward.56} parent=1 // pred_check
      _
    $region31: #{forward.56} parent=1 // pred_check_branch
      %31 = sbr.rel (0) target = $region33
    $region32: #{forward.56} parent=1 // pred_region
      _
    $region33: #{forward.56} parent=1 // pred_fallthru
      _
    %v32 = vld [vmem:[%s0] sm:$0xff]
    %v33 = vld [vmem:[%s4] sm:$0xff]
    %v34 = vld [vmem:[%s4 + $0x8] sm:$0xff]
    %v35 = vld [vmem:[%s4 + $0x10] sm:$0xff]
    %v36 = vld [vmem:[%s4 + $0x18] sm:$0xff]
    %v37 = vld [vmem:[%s4 + $0x20] sm:$0xff]
    %v38 = vld [vmem:[%s4 + $0x28] sm:$0xff]
    %v39 = vld [vmem:[%s4 + $0x30] sm:$0xff]
    %v40 = vld [vmem:[%s4 + $0x38] sm:$0xff]
    %v41 = vld [vmem:[%s4 + $0x40] sm:$0xff]
    %v42 = vld [vmem:[%s4 + $0x48] sm:$0xff]
    %v43 = vld [vmem:[%s4 + $0x50] sm:$0xff]
    %v44 = vld [vmem:[%s4 + $0x58] sm:$0xff]
    %v45 = vld [vmem:[%s4 + $0x60] sm:$0xff]
    %v46 = vld [vmem:[%s4 + $0x68] sm:$0xff]
    %v47 = vld [vmem:[%s4 + $0x70] sm:$0xff]
    %v48 = vld [vmem:[%s4 + $0x78] sm:$0xff]
    %v49 = vld [vmem:[%s4 + $0x80] sm:$0xff]
    %v50 = vld [vmem:[%s4 + $0x88] sm:$0xff]
    %v51 = vld [vmem:[%s4 + $0x90] sm:$0xff]
    %v52 = vld [vmem:[%s4 + $0x98] sm:$0xff]
    %v53 = vld [vmem:[%s4 + $0xa0] sm:$0xff]
    %v54 = vld [vmem:[%s4 + $0xa8] sm:$0xff]
    %v55 = vld [vmem:[%s4 + $0xb0] sm:$0xff]
    %v56 = vld [vmem:[%s4 + $0xb8] sm:$0xff]
    %v57 = vld [vmem:[%s4 + $0xc0] sm:$0xff]
    %v58 = vld [vmem:[%s4 + $0xc8] sm:$0xff]
    %v59 = vld [vmem:[%s4 + $0xd0] sm:$0xff]
    %v60 = vld [vmem:[%s4 + $0xd8] sm:$0xff]
    %v61 = vld [vmem:[%s4 + $0xe0] sm:$0xff]
    %v62 = vld [vmem:[%s4 + $0xe8] sm:$0xff]
    %v63 = vld [vmem:[%s4 + $0xf0] sm:$0xff]
    %v64 = vld [vmem:[%s4 + $0xf8] sm:$0xff]
    %v65 = vld [vmem:[%s4 + $0x100] sm:$0xff]
    %v66 = vld [vmem:[%s4 + $0x108] sm:$0xff]
    %v67 = vld [vmem:[%s4 + $0x110] sm:$0xff]
    %v68 = vld [vmem:[%s4 + $0x118] sm:$0xff]
    %v69 = vld [vmem:[%s4 + $0x120] sm:$0xff]
    %v70 = vld [vmem:[%s4 + $0x128] sm:$0xff]
    %v71 = vld [vmem:[%s4 + $0x130] sm:$0xff]
    %v72 = vld [vmem:[%s4 + $0x138] sm:$0xff]
    %v73 = vld [vmem:[%s4 + $0x140] sm:$0xff]
    %v74 = vld [vmem:[%s4 + $0x148] sm:$0xff]
    %v75 = vld [vmem:[%s4 + $0x150] sm:$0xff]
    %v76 = vld [vmem:[%s4 + $0x158] sm:$0xff]
    %v77 = vld [vmem:[%s4 + $0x160] sm:$0xff]
    %v78 = vld [vmem:[%s4 + $0x168] sm:$0xff]
    %v79 = vld [vmem:[%s4 + $0x170] sm:$0xff]
    %v80 = vld [vmem:[%s4 + $0x178] sm:$0xff]
    %v81 = vld [vmem:[%s4 + $0x180] sm:$0xff]
    %v82 = vld [vmem:[%s4 + $0x188] sm:$0xff]
    %v83 = vld [vmem:[%s4 + $0x190] sm:$0xff]
    %v84 = vld [vmem:[%s4 + $0x198] sm:$0xff]
    %v85 = vld [vmem:[%s4 + $0x1a0] sm:$0xff]
    %v86 = vld [vmem:[%s4 + $0x1a8] sm:$0xff]
    %v87 = vld [vmem:[%s4 + $0x1b0] sm:$0xff]
    %v88 = vld [vmem:[%s4 + $0x1b8] sm:$0xff]
    %v89 = vld [vmem:[%s4 + $0x1c0] sm:$0xff]
    %v90 = vld [vmem:[%s4 + $0x1c8] sm:$0xff]
    %v91 = vld [vmem:[%s4 + $0x1d0] sm:$0xff]
    %v92 = vld [vmem:[%s4 + $0x1d8] sm:$0xff]
    %v93 = vld [vmem:[%s4 + $0x1e0] sm:$0xff]
    %v94 = vld [vmem:[%s4 + $0x1e8] sm:$0xff]
    %v95 = vld [vmem:[%s4 + $0x1f0] sm:$0xff]
    %v96 = vld [vmem:[%s4 + $0x1f8] sm:$0xff]
    %v97 = vld [vmem:[%s1] sm:$0xff]
    %v98 = vld [vmem:[%s5] sm:$0xff]
    %v99 = vld [vmem:[%s5 + $0x8] sm:$0xff]
    %v100 = vld [vmem:[%s5 + $0x10] sm:$0xff]
    %v101 = vld [vmem:[%s5 + $0x18] sm:$0xff]
    %v102 = vld [vmem:[%s5 + $0x20] sm:$0xff]
    %v103 = vld [vmem:[%s5 + $0x28] sm:$0xff]
    %v104 = vld [vmem:[%s5 + $0x30] sm:$0xff]
    %v105 = vld [vmem:[%s5 + $0x38] sm:$0xff]
    %v106 = vld [vmem:[%s5 + $0x40] sm:$0xff]
    %v107 = vld [vmem:[%s5 + $0x48] sm:$0xff]
    %v108 = vld [vmem:[%s5 + $0x50] sm:$0xff]
    %v109 = vld [vmem:[%s5 + $0x58] sm:$0xff]
    %v110 = vld [vmem:[%s5 + $0x60] sm:$0xff]
    %v111 = vld [vmem:[%s5 + $0x68] sm:$0xff]
    %v112 = vld [vmem:[%s5 + $0x70] sm:$0xff]
    %v113 = vld [vmem:[%s5 + $0x78] sm:$0xff]
    %v114 = vld [vmem:[%s5 + $0x80] sm:$0xff]
    %v115 = vld [vmem:[%s5 + $0x88] sm:$0xff]
    %v116 = vld [vmem:[%s5 + $0x90] sm:$0xff]
    %v117 = vld [vmem:[%s5 + $0x98] sm:$0xff]
    %v118 = vld [vmem:[%s5 + $0xa0] sm:$0xff]
    %v119 = vld [vmem:[%s5 + $0xa8] sm:$0xff]
    %v120 = vld [vmem:[%s5 + $0xb0] sm:$0xff]
    %v121 = vld [vmem:[%s5 + $0xb8] sm:$0xff]
    %v122 = vld [vmem:[%s5 + $0xc0] sm:$0xff]
    %v123 = vld [vmem:[%s5 + $0xc8] sm:$0xff]
    %v124 = vld [vmem:[%s5 + $0xd0] sm:$0xff]
    %v125 = vld [vmem:[%s5 + $0xd8] sm:$0xff]
    %v126 = vld [vmem:[%s5 + $0xe0] sm:$0xff]
    %v127 = vld [vmem:[%s5 + $0xe8] sm:$0xff]
    %v128 = vld [vmem:[%s5 + $0xf0] sm:$0xff]
    %v129 = vld [vmem:[%s5 + $0xf8] sm:$0xff]
    %v130 = vld [vmem:[%s5 + $0x100] sm:$0xff]
    %v131 = vld [vmem:[%s5 + $0x108] sm:$0xff]
    %v132 = vld [vmem:[%s5 + $0x110] sm:$0xff]
    %v133 = vld [vmem:[%s5 + $0x118] sm:$0xff]
    %v134 = vld [vmem:[%s5 + $0x120] sm:$0xff]
    %v135 = vld [vmem:[%s5 + $0x128] sm:$0xff]
    %v136 = vld [vmem:[%s5 + $0x130] sm:$0xff]
    %v137 = vld [vmem:[%s5 + $0x138] sm:$0xff]
    %v138 = vld [vmem:[%s5 + $0x140] sm:$0xff]
    %v139 = vld [vmem:[%s5 + $0x148] sm:$0xff]
    %v140 = vld [vmem:[%s5 + $0x150] sm:$0xff]
    %v141 = vld [vmem:[%s5 + $0x158] sm:$0xff]
    %v142 = vld [vmem:[%s5 + $0x160] sm:$0xff]
    %v143 = vld [vmem:[%s5 + $0x168] sm:$0xff]
    %v144 = vld [vmem:[%s5 + $0x170] sm:$0xff]
    %v145 = vld [vmem:[%s5 + $0x178] sm:$0xff]
    %v146 = vld [vmem:[%s5 + $0x180] sm:$0xff]
    %v147 = vld [vmem:[%s5 + $0x188] sm:$0xff]
    %v148 = vld [vmem:[%s5 + $0x190] sm:$0xff]
    %v149 = vld [vmem:[%s5 + $0x198] sm:$0xff]
    %v150 = vld [vmem:[%s5 + $0x1a0] sm:$0xff]
    %v151 = vld [vmem:[%s5 + $0x1a8] sm:$0xff]
    %v152 = vld [vmem:[%s5 + $0x1b0] sm:$0xff]
    %v153 = vld [vmem:[%s5 + $0x1b8] sm:$0xff]
    %v154 = vld [vmem:[%s5 + $0x1c0] sm:$0xff]
    %v155 = vld [vmem:[%s5 + $0x1c8] sm:$0xff]
    %v156 = vld [vmem:[%s5 + $0x1d0] sm:$0xff]
    %v157 = vld [vmem:[%s5 + $0x1d8] sm:$0xff]
    %v158 = vld [vmem:[%s5 + $0x1e0] sm:$0xff]
    %v159 = vld [vmem:[%s5 + $0x1e8] sm:$0xff]
    %v160 = vld [vmem:[%s5 + $0x1f0] sm:$0xff]
    %v161 = vld [vmem:[%s5 + $0x1f8] sm:$0xff]
    %162 = vmatprep.subr.mxu0 %v159
    %163 = vmatpush1.msra.mxu0 %v158
    %164 = vmatprep.subr.mxu0 %v155
    %165 = vmatpush1.msra.mxu0 %v154
    %166 = vmatprep.subr.mxu0 %v151
    %167 = vmatpush1.msra.mxu0 %v150
    %168 = vmatprep.subr.mxu0 %v147
    %169 = vmatpush1.msra.mxu0 %v146
    %170 = vmatprep.subr.mxu0 %v143
    %171 = vmatpush1.msra.mxu0 %v142
    %172 = vmatprep.subr.mxu0 %v139
    %173 = vmatpush1.msra.mxu0 %v138
    %174 = vmatprep.subr.mxu0 %v135
    %175 = vmatpush1.msra.mxu0 %v134
    %176 = vmatprep.subr.mxu0 %v131
    %177 = vmatpush1.msra.mxu0 %v130
    %178 = vmatprep.subr.mxu0 %v127
    %179 = vmatpush1.msra.mxu0 %v126
    %180 = vmatprep.subr.mxu0 %v123
    %181 = vmatpush1.msra.mxu0 %v122
    %182 = vmatprep.subr.mxu0 %v119
    %183 = vmatpush1.msra.mxu0 %v118
    %184 = vmatprep.subr.mxu0 %v115
    %185 = vmatpush1.msra.mxu0 %v114
    %186 = vmatprep.subr.mxu0 %v111
    %187 = vmatpush1.msra.mxu0 %v110
    %188 = vmatprep.subr.mxu0 %v107
    %189 = vmatpush1.msra.mxu0 %v106
    %190 = vmatprep.subr.mxu0 %v103
    %191 = vmatpush1.msra.mxu0 %v102
    %192 = vmatprep.subr.mxu0 %v99
    %193 = vmatpush1.msra.mxu0 %v98
    %194 = vmatprep.subr.mxu0 0.0
    %195 = vmatpush2.msra.mxu0 0.0
    %196 = vmatprep.subr.mxu0 0.0
    %197 = vmatpush2.msra.mxu0 0.0
    %198 = vmatprep.subr.mxu0 0.0
    %199 = vmatpush2.msra.mxu0 0.0
    %200 = vmatprep.subr.mxu0 0.0
    %201 = vmatpush2.msra.mxu0 0.0
    %202 = vmatprep.subr.mxu0 0.0
    %203 = vmatpush2.msra.mxu0 0.0
    %204 = vmatprep.subr.mxu0 0.0
    %205 = vmatpush2.msra.mxu0 0.0
    %206 = vmatprep.subr.mxu0 0.0
    %207 = vmatpush2.msra.mxu0 0.0
    %208 = vmatprep.subr.mxu0 0.0
    %209 = vmatpush2.msra.mxu0 0.0
    %210 = vmatprep.subr.mxu0 0.0
    %211 = vmatpush2.msra.mxu0 0.0
    %212 = vmatprep.subr.mxu0 0.0
    %213 = vmatpush2.msra.mxu0 0.0
    %214 = vmatprep.subr.mxu0 0.0
    %215 = vmatpush2.msra.mxu0 0.0
    %216 = vmatprep.subr.mxu0 0.0
    %217 = vmatpush2.msra.mxu0 0.0
    %218 = vmatprep.subr.mxu0 0.0
    %219 = vmatpush2.msra.mxu0 0.0
    %220 = vmatprep.subr.mxu0 0.0
    %221 = vmatpush2.msra.mxu0 0.0
    %222 = vmatprep.subr.mxu0 0.0
    %223 = vmatpush2.msra.mxu0 0.0
    %224 = vmatprep.subr.mxu0 0.0
    %225 = vmatpush2.msra.mxu0 0.0
    %226 = vmatprep.mubr.f32.mxu0 0.0
    %227 = vmatmul.mubr.f32.gmra.mxu0 %v97
    %v228 = vpop.f32.mrf.mxu0
    %v229 = vadd.f32 0.0, %v228
    %v230 = vpop.f32.mrf.mxu0
    %v231 = vadd.f32 0.0, %v230
    %232 = vdwg.mxu0
    %233 = vmatprep.subr.mxu0 %v161
    %234 = vmatpush1.msra.mxu0 %v160
    %235 = vmatprep.subr.mxu0 %v157
    %236 = vmatpush1.msra.mxu0 %v156
    %237 = vmatprep.subr.mxu0 %v153
    %238 = vmatpush1.msra.mxu0 %v152
    %239 = vmatprep.subr.mxu0 %v149
    %240 = vmatpush1.msra.mxu0 %v148
    %241 = vmatprep.subr.mxu0 %v145
    %242 = vmatpush1.msra.mxu0 %v144
    %243 = vmatprep.subr.mxu0 %v141
    %244 = vmatpush1.msra.mxu0 %v140
    %245 = vmatprep.subr.mxu0 %v137
    %246 = vmatpush1.msra.mxu0 %v136
    %247 = vmatprep.subr.mxu0 %v133
    %248 = vmatpush1.msra.mxu0 %v132
    %249 = vmatprep.subr.mxu0 %v129
    %250 = vmatpush1.msra.mxu0 %v128
    %251 = vmatprep.subr.mxu0 %v125
    %252 = vmatpush1.msra.mxu0 %v124
    %253 = vmatprep.subr.mxu0 %v121
    %254 = vmatpush1.msra.mxu0 %v120
    %255 = vmatprep.subr.mxu0 %v117
    %256 = vmatpush1.msra.mxu0 %v116
    %257 = vmatprep.subr.mxu0 %v113
    %258 = vmatpush1.msra.mxu0 %v112
    %259 = vmatprep.subr.mxu0 %v109
    %260 = vmatpush1.msra.mxu0 %v108
    %261 = vmatprep.subr.mxu0 %v105
    %262 = vmatpush1.msra.mxu0 %v104
    %263 = vmatprep.subr.mxu0 %v101
    %264 = vmatpush1.msra.mxu0 %v100
    %265 = vmatprep.subr.mxu0 0.0
    %266 = vmatpush2.msra.mxu0 0.0
    %267 = vmatprep.subr.mxu0 0.0
    %268 = vmatpush2.msra.mxu0 0.0
    %269 = vmatprep.subr.mxu0 0.0
    %270 = vmatpush2.msra.mxu0 0.0
    %271 = vmatprep.subr.mxu0 0.0
    %272 = vmatpush2.msra.mxu0 0.0
    %273 = vmatprep.subr.mxu0 0.0
    %274 = vmatpush2.msra.mxu0 0.0
    %275 = vmatprep.subr.mxu0 0.0
    %276 = vmatpush2.msra.mxu0 0.0
    %277 = vmatprep.subr.mxu0 0.0
    %278 = vmatpush2.msra.mxu0 0.0
    %279 = vmatprep.subr.mxu0 0.0
    %280 = vmatpush2.msra.mxu0 0.0
    %281 = vmatprep.subr.mxu0 0.0
    %282 = vmatpush2.msra.mxu0 0.0
    %283 = vmatprep.subr.mxu0 0.0
    %284 = vmatpush2.msra.mxu0 0.0
    %285 = vmatprep.subr.mxu0 0.0
    %286 = vmatpush2.msra.mxu0 0.0
    %287 = vmatprep.subr.mxu0 0.0
    %288 = vmatpush2.msra.mxu0 0.0
    %289 = vmatprep.subr.mxu0 0.0
    %290 = vmatpush2.msra.mxu0 0.0
    %291 = vmatprep.subr.mxu0 0.0
    %292 = vmatpush2.msra.mxu0 0.0
    %293 = vmatprep.subr.mxu0 0.0
    %294 = vmatpush2.msra.mxu0 0.0
    %295 = vmatprep.subr.mxu0 0.0
    %296 = vmatpush2.msra.mxu0 0.0
    %297 = vmatprep.mubr.f32.mxu0 0.0
    %298 = vmatmul.mubr.f32.gmra.mxu0 %v97
    %v299 = vpop.f32.mrf.mxu0
    %v300 = vadd.f32 0.0, %v299
    %v301 = vpop.f32.mrf.mxu0
    %v302 = vadd.f32 0.0, %v301
    %303 = vdwg.mxu0
    %304 = vmatprep.subr.mxu0 %v94
    %305 = vmatpush1.msra.mxu0 %v93
    %306 = vmatprep.subr.mxu0 %v90
    %307 = vmatpush1.msra.mxu0 %v89
    %308 = vmatprep.subr.mxu0 %v86
    %309 = vmatpush1.msra.mxu0 %v85
    %310 = vmatprep.subr.mxu0 %v82
    %311 = vmatpush1.msra.mxu0 %v81
    %312 = vmatprep.subr.mxu0 %v78
    %313 = vmatpush1.msra.mxu0 %v77
    %314 = vmatprep.subr.mxu0 %v74
    %315 = vmatpush1.msra.mxu0 %v73
    %316 = vmatprep.subr.mxu0 %v70
    %317 = vmatpush1.msra.mxu0 %v69
    %318 = vmatprep.subr.mxu0 %v66
    %319 = vmatpush1.msra.mxu0 %v65
    %320 = vmatprep.subr.mxu0 %v62
    %321 = vmatpush1.msra.mxu0 %v61
    %322 = vmatprep.subr.mxu0 %v58
    %323 = vmatpush1.msra.mxu0 %v57
    %324 = vmatprep.subr.mxu0 %v54
    %325 = vmatpush1.msra.mxu0 %v53
    %326 = vmatprep.subr.mxu0 %v50
    %327 = vmatpush1.msra.mxu0 %v49
    %328 = vmatprep.subr.mxu0 %v46
    %329 = vmatpush1.msra.mxu0 %v45
    %330 = vmatprep.subr.mxu0 %v42
    %331 = vmatpush1.msra.mxu0 %v41
    %332 = vmatprep.subr.mxu0 %v38
    %333 = vmatpush1.msra.mxu0 %v37
    %334 = vmatprep.subr.mxu0 %v34
    %335 = vmatpush1.msra.mxu0 %v33
    %336 = vmatprep.subr.mxu0 0.0
    %337 = vmatpush2.msra.mxu0 0.0
    %338 = vmatprep.subr.mxu0 0.0
    %339 = vmatpush2.msra.mxu0 0.0
    %340 = vmatprep.subr.mxu0 0.0
    %341 = vmatpush2.msra.mxu0 0.0
    %342 = vmatprep.subr.mxu0 0.0
    %343 = vmatpush2.msra.mxu0 0.0
    %344 = vmatprep.subr.mxu0 0.0
    %345 = vmatpush2.msra.mxu0 0.0
    %346 = vmatprep.subr.mxu0 0.0
    %347 = vmatpush2.msra.mxu0 0.0
    %348 = vmatprep.subr.mxu0 0.0
    %349 = vmatpush2.msra.mxu0 0.0
    %350 = vmatprep.subr.mxu0 0.0
    %351 = vmatpush2.msra.mxu0 0.0
    %352 = vmatprep.subr.mxu0 0.0
    %353 = vmatpush2.msra.mxu0 0.0
    %354 = vmatprep.subr.mxu0 0.0
    %355 = vmatpush2.msra.mxu0 0.0
    %356 = vmatprep.subr.mxu0 0.0
    %357 = vmatpush2.msra.mxu0 0.0
    %358 = vmatprep.subr.mxu0 0.0
    %359 = vmatpush2.msra.mxu0 0.0
    %360 = vmatprep.subr.mxu0 0.0
    %361 = vmatpush2.msra.mxu0 0.0
    %362 = vmatprep.subr.mxu0 0.0
    %363 = vmatpush2.msra.mxu0 0.0
    %364 = vmatprep.subr.mxu0 0.0
    %365 = vmatpush2.msra.mxu0 0.0
    %366 = vmatprep.subr.mxu0 0.0
    %367 = vmatpush2.msra.mxu0 0.0
    %368 = vmatprep.mubr.f32.mxu0 0.0
    %369 = vmatmul.mubr.f32.gmra.mxu0 %v32
    %v370 = vpop.f32.mrf.mxu0
    %v371 = vadd.f32 %v229, %v370
    %v372 = vpop.f32.mrf.mxu0
    %v373 = vadd.f32 %v231, %v372
    %374 = vdwg.mxu0
    %375 = vmatprep.subr.mxu0 %v96
    %376 = vmatpush1.msra.mxu0 %v95
    %377 = vmatprep.subr.mxu0 %v92
    %378 = vmatpush1.msra.mxu0 %v91
    %379 = vmatprep.subr.mxu0 %v88
    %380 = vmatpush1.msra.mxu0 %v87
    %381 = vmatprep.subr.mxu0 %v84
    %382 = vmatpush1.msra.mxu0 %v83
    %383 = vmatprep.subr.mxu0 %v80
    %384 = vmatpush1.msra.mxu0 %v79
    %385 = vmatprep.subr.mxu0 %v76
    %386 = vmatpush1.msra.mxu0 %v75
    %387 = vmatprep.subr.mxu0 %v72
    %388 = vmatpush1.msra.mxu0 %v71
    %389 = vmatprep.subr.mxu0 %v68
    %390 = vmatpush1.msra.mxu0 %v67
    %391 = vmatprep.subr.mxu0 %v64
    %392 = vmatpush1.msra.mxu0 %v63
    %393 = vmatprep.subr.mxu0 %v60
    %394 = vmatpush1.msra.mxu0 %v59
    %395 = vmatprep.subr.mxu0 %v56
    %396 = vmatpush1.msra.mxu0 %v55
    %397 = vmatprep.subr.mxu0 %v52
    %398 = vmatpush1.msra.mxu0 %v51
    %399 = vmatprep.subr.mxu0 %v48
    %400 = vmatpush1.msra.mxu0 %v47
    %401 = vmatprep.subr.mxu0 %v44
    %402 = vmatpush1.msra.mxu0 %v43
    %403 = vmatprep.subr.mxu0 %v40
    %404 = vmatpush1.msra.mxu0 %v39
    %405 = vmatprep.subr.mxu0 %v36
    %406 = vmatpush1.msra.mxu0 %v35
    %407 = vmatprep.subr.mxu0 0.0
    %408 = vmatpush2.msra.mxu0 0.0
    %409 = vmatprep.subr.mxu0 0.0
    %410 = vmatpush2.msra.mxu0 0.0
    %411 = vmatprep.subr.mxu0 0.0
    %412 = vmatpush2.msra.mxu0 0.0
    %413 = vmatprep.subr.mxu0 0.0
    %414 = vmatpush2.msra.mxu0 0.0
    %415 = vmatprep.subr.mxu0 0.0
    %416 = vmatpush2.msra.mxu0 0.0
    %417 = vmatprep.subr.mxu0 0.0
    %418 = vmatpush2.msra.mxu0 0.0
    %419 = vmatprep.subr.mxu0 0.0
    %420 = vmatpush2.msra.mxu0 0.0
    %421 = vmatprep.subr.mxu0 0.0
    %422 = vmatpush2.msra.mxu0 0.0
    %423 = vmatprep.subr.mxu0 0.0
    %424 = vmatpush2.msra.mxu0 0.0
    %425 = vmatprep.subr.mxu0 0.0
    %426 = vmatpush2.msra.mxu0 0.0
    %427 = vmatprep.subr.mxu0 0.0
    %428 = vmatpush2.msra.mxu0 0.0
    %429 = vmatprep.subr.mxu0 0.0
    %430 = vmatpush2.msra.mxu0 0.0
    %431 = vmatprep.subr.mxu0 0.0
    %432 = vmatpush2.msra.mxu0 0.0
    %433 = vmatprep.subr.mxu0 0.0
    %434 = vmatpush2.msra.mxu0 0.0
    %435 = vmatprep.subr.mxu0 0.0
    %436 = vmatpush2.msra.mxu0 0.0
    %437 = vmatprep.subr.mxu0 0.0
    %438 = vmatpush2.msra.mxu0 0.0
    %439 = vmatprep.mubr.f32.mxu0 0.0
    %440 = vmatmul.mubr.f32.gmra.mxu0 %v32
    %v441 = vpop.f32.mrf.mxu0
    %v442 = vadd.f32 %v300, %v441
    %v443 = vpop.f32.mrf.mxu0
    %v444 = vadd.f32 %v302, %v443
    %445 = vdwg.mxu0
    %v446 = vld [vmem:[%s2] sm:$0xff]
    %v447 = vld [vmem:[%s6] sm:$0xff]
    %v448 = vld [vmem:[%s6 + $0x8] sm:$0xff]
    %v449 = vld [vmem:[%s6 + $0x10] sm:$0xff]
    %v450 = vld [vmem:[%s6 + $0x18] sm:$0xff]
    %v451 = vld [vmem:[%s6 + $0x20] sm:$0xff]
    %v452 = vld [vmem:[%s6 + $0x28] sm:$0xff]
    %v453 = vld [vmem:[%s6 + $0x30] sm:$0xff]
    %v454 = vld [vmem:[%s6 + $0x38] sm:$0xff]
    %v455 = vld [vmem:[%s6 + $0x40] sm:$0xff]
    %v456 = vld [vmem:[%s6 + $0x48] sm:$0xff]
    %v457 = vld [vmem:[%s6 + $0x50] sm:$0xff]
    %v458 = vld [vmem:[%s6 + $0x58] sm:$0xff]
    %v459 = vld [vmem:[%s6 + $0x60] sm:$0xff]
    %v460 = vld [vmem:[%s6 + $0x68] sm:$0xff]
    %v461 = vld [vmem:[%s6 + $0x70] sm:$0xff]
    %v462 = vld [vmem:[%s6 + $0x78] sm:$0xff]
    %v463 = vld [vmem:[%s6 + $0x80] sm:$0xff]
    %v464 = vld [vmem:[%s6 + $0x88] sm:$0xff]
    %v465 = vld [vmem:[%s6 + $0x90] sm:$0xff]
    %v466 = vld [vmem:[%s6 + $0x98] sm:$0xff]
    %v467 = vld [vmem:[%s6 + $0xa0] sm:$0xff]
    %v468 = vld [vmem:[%s6 + $0xa8] sm:$0xff]
    %v469 = vld [vmem:[%s6 + $0xb0] sm:$0xff]
    %v470 = vld [vmem:[%s6 + $0xb8] sm:$0xff]
    %v471 = vld [vmem:[%s6 + $0xc0] sm:$0xff]
    %v472 = vld [vmem:[%s6 + $0xc8] sm:$0xff]
    %v473 = vld [vmem:[%s6 + $0xd0] sm:$0xff]
    %v474 = vld [vmem:[%s6 + $0xd8] sm:$0xff]
    %v475 = vld [vmem:[%s6 + $0xe0] sm:$0xff]
    %v476 = vld [vmem:[%s6 + $0xe8] sm:$0xff]
    %v477 = vld [vmem:[%s6 + $0xf0] sm:$0xff]
    %v478 = vld [vmem:[%s6 + $0xf8] sm:$0xff]
    %v479 = vld [vmem:[%s6 + $0x100] sm:$0xff]
    %v480 = vld [vmem:[%s6 + $0x108] sm:$0xff]
    %v481 = vld [vmem:[%s6 + $0x110] sm:$0xff]
    %v482 = vld [vmem:[%s6 + $0x118] sm:$0xff]
    %v483 = vld [vmem:[%s6 + $0x120] sm:$0xff]
    %v484 = vld [vmem:[%s6 + $0x128] sm:$0xff]
    %v485 = vld [vmem:[%s6 + $0x130] sm:$0xff]
    %v486 = vld [vmem:[%s6 + $0x138] sm:$0xff]
    %v487 = vld [vmem:[%s6 + $0x140] sm:$0xff]
    %v488 = vld [vmem:[%s6 + $0x148] sm:$0xff]
    %v489 = vld [vmem:[%s6 + $0x150] sm:$0xff]
    %v490 = vld [vmem:[%s6 + $0x158] sm:$0xff]
    %v491 = vld [vmem:[%s6 + $0x160] sm:$0xff]
    %v492 = vld [vmem:[%s6 + $0x168] sm:$0xff]
    %v493 = vld [vmem:[%s6 + $0x170] sm:$0xff]
    %v494 = vld [vmem:[%s6 + $0x178] sm:$0xff]
    %v495 = vld [vmem:[%s6 + $0x180] sm:$0xff]
    %v496 = vld [vmem:[%s6 + $0x188] sm:$0xff]
    %v497 = vld [vmem:[%s6 + $0x190] sm:$0xff]
    %v498 = vld [vmem:[%s6 + $0x198] sm:$0xff]
    %v499 = vld [vmem:[%s6 + $0x1a0] sm:$0xff]
    %v500 = vld [vmem:[%s6 + $0x1a8] sm:$0xff]
    %v501 = vld [vmem:[%s6 + $0x1b0] sm:$0xff]
    %v502 = vld [vmem:[%s6 + $0x1b8] sm:$0xff]
    %v503 = vld [vmem:[%s6 + $0x1c0] sm:$0xff]
    %v504 = vld [vmem:[%s6 + $0x1c8] sm:$0xff]
    %v505 = vld [vmem:[%s6 + $0x1d0] sm:$0xff]
    %v506 = vld [vmem:[%s6 + $0x1d8] sm:$0xff]
    %v507 = vld [vmem:[%s6 + $0x1e0] sm:$0xff]
    %v508 = vld [vmem:[%s6 + $0x1e8] sm:$0xff]
    %v509 = vld [vmem:[%s6 + $0x1f0] sm:$0xff]
    %v510 = vld [vmem:[%s6 + $0x1f8] sm:$0xff]
    %511 = vmatprep.subr.mxu0 %v508
    %512 = vmatpush1.msra.mxu0 %v507
    %513 = vmatprep.subr.mxu0 %v504
    %514 = vmatpush1.msra.mxu0 %v503
    %515 = vmatprep.subr.mxu0 %v500
    %516 = vmatpush1.msra.mxu0 %v499
    %517 = vmatprep.subr.mxu0 %v496
    %518 = vmatpush1.msra.mxu0 %v495
    %519 = vmatprep.subr.mxu0 %v492
    %520 = vmatpush1.msra.mxu0 %v491
    %521 = vmatprep.subr.mxu0 %v488
    %522 = vmatpush1.msra.mxu0 %v487
    %523 = vmatprep.subr.mxu0 %v484
    %524 = vmatpush1.msra.mxu0 %v483
    %525 = vmatprep.subr.mxu0 %v480
    %526 = vmatpush1.msra.mxu0 %v479
    %527 = vmatprep.subr.mxu0 %v476
    %528 = vmatpush1.msra.mxu0 %v475
    %529 = vmatprep.subr.mxu0 %v472
    %530 = vmatpush1.msra.mxu0 %v471
    %531 = vmatprep.subr.mxu0 %v468
    %532 = vmatpush1.msra.mxu0 %v467
    %533 = vmatprep.subr.mxu0 %v464
    %534 = vmatpush1.msra.mxu0 %v463
    %535 = vmatprep.subr.mxu0 %v460
    %536 = vmatpush1.msra.mxu0 %v459
    %537 = vmatprep.subr.mxu0 %v456
    %538 = vmatpush1.msra.mxu0 %v455
    %539 = vmatprep.subr.mxu0 %v452
    %540 = vmatpush1.msra.mxu0 %v451
    %541 = vmatprep.subr.mxu0 %v448
    %542 = vmatpush1.msra.mxu0 %v447
    %543 = vmatprep.subr.mxu0 0.0
    %544 = vmatpush2.msra.mxu0 0.0
    %545 = vmatprep.subr.mxu0 0.0
    %546 = vmatpush2.msra.mxu0 0.0
    %547 = vmatprep.subr.mxu0 0.0
    %548 = vmatpush2.msra.mxu0 0.0
    %549 = vmatprep.subr.mxu0 0.0
    %550 = vmatpush2.msra.mxu0 0.0
    %551 = vmatprep.subr.mxu0 0.0
    %552 = vmatpush2.msra.mxu0 0.0
    %553 = vmatprep.subr.mxu0 0.0
    %554 = vmatpush2.msra.mxu0 0.0
    %555 = vmatprep.subr.mxu0 0.0
    %556 = vmatpush2.msra.mxu0 0.0
    %557 = vmatprep.subr.mxu0 0.0
    %558 = vmatpush2.msra.mxu0 0.0
    %559 = vmatprep.subr.mxu0 0.0
    %560 = vmatpush2.msra.mxu0 0.0
    %561 = vmatprep.subr.mxu0 0.0
    %562 = vmatpush2.msra.mxu0 0.0
    %563 = vmatprep.subr.mxu0 0.0
    %564 = vmatpush2.msra.mxu0 0.0
    %565 = vmatprep.subr.mxu0 0.0
    %566 = vmatpush2.msra.mxu0 0.0
    %567 = vmatprep.subr.mxu0 0.0
    %568 = vmatpush2.msra.mxu0 0.0
    %569 = vmatprep.subr.mxu0 0.0
    %570 = vmatpush2.msra.mxu0 0.0
    %571 = vmatprep.subr.mxu0 0.0
    %572 = vmatpush2.msra.mxu0 0.0
    %573 = vmatprep.subr.mxu0 0.0
    %574 = vmatpush2.msra.mxu0 0.0
    %575 = vmatprep.mubr.f32.mxu0 0.0
    %576 = vmatmul.mubr.f32.gmra.mxu0 %v446
    %v577 = vpop.f32.mrf.mxu0
    %v578 = vadd.f32 0.0, %v577
    %v579 = vpop.f32.mrf.mxu0
    %v580 = vadd.f32 0.0, %v579
    %581 = vdwg.mxu0
    %582 = vmatprep.subr.mxu0 %v510
    %583 = vmatpush1.msra.mxu0 %v509
    %584 = vmatprep.subr.mxu0 %v506
    %585 = vmatpush1.msra.mxu0 %v505
    %586 = vmatprep.subr.mxu0 %v502
    %587 = vmatpush1.msra.mxu0 %v501
    %588 = vmatprep.subr.mxu0 %v498
    %589 = vmatpush1.msra.mxu0 %v497
    %590 = vmatprep.subr.mxu0 %v494
    %591 = vmatpush1.msra.mxu0 %v493
    %592 = vmatprep.subr.mxu0 %v490
    %593 = vmatpush1.msra.mxu0 %v489
    %594 = vmatprep.subr.mxu0 %v486
    %595 = vmatpush1.msra.mxu0 %v485
    %596 = vmatprep.subr.mxu0 %v482
    %597 = vmatpush1.msra.mxu0 %v481
    %598 = vmatprep.subr.mxu0 %v478
    %599 = vmatpush1.msra.mxu0 %v477
    %600 = vmatprep.subr.mxu0 %v474
    %601 = vmatpush1.msra.mxu0 %v473
    %602 = vmatprep.subr.mxu0 %v470
    %603 = vmatpush1.msra.mxu0 %v469
    %604 = vmatprep.subr.mxu0 %v466
    %605 = vmatpush1.msra.mxu0 %v465
    %606 = vmatprep.subr.mxu0 %v462
    %607 = vmatpush1.msra.mxu0 %v461
    %608 = vmatprep.subr.mxu0 %v458
    %609 = vmatpush1.msra.mxu0 %v457
    %610 = vmatprep.subr.mxu0 %v454
    %611 = vmatpush1.msra.mxu0 %v453
    %612 = vmatprep.subr.mxu0 %v450
    %613 = vmatpush1.msra.mxu0 %v449
    %614 = vmatprep.subr.mxu0 0.0
    %615 = vmatpush2.msra.mxu0 0.0
    %616 = vmatprep.subr.mxu0 0.0
    %617 = vmatpush2.msra.mxu0 0.0
    %618 = vmatprep.subr.mxu0 0.0
    %619 = vmatpush2.msra.mxu0 0.0
    %620 = vmatprep.subr.mxu0 0.0
    %621 = vmatpush2.msra.mxu0 0.0
    %622 = vmatprep.subr.mxu0 0.0
    %623 = vmatpush2.msra.mxu0 0.0
    %624 = vmatprep.subr.mxu0 0.0
    %625 = vmatpush2.msra.mxu0 0.0
    %626 = vmatprep.subr.mxu0 0.0
    %627 = vmatpush2.msra.mxu0 0.0
    %628 = vmatprep.subr.mxu0 0.0
    %629 = vmatpush2.msra.mxu0 0.0
    %630 = vmatprep.subr.mxu0 0.0
    %631 = vmatpush2.msra.mxu0 0.0
    %632 = vmatprep.subr.mxu0 0.0
    %633 = vmatpush2.msra.mxu0 0.0
    %634 = vmatprep.subr.mxu0 0.0
    %635 = vmatpush2.msra.mxu0 0.0
    %636 = vmatprep.subr.mxu0 0.0
    %637 = vmatpush2.msra.mxu0 0.0
    %638 = vmatprep.subr.mxu0 0.0
    %639 = vmatpush2.msra.mxu0 0.0
    %640 = vmatprep.subr.mxu0 0.0
    %641 = vmatpush2.msra.mxu0 0.0
    %642 = vmatprep.subr.mxu0 0.0
    %643 = vmatpush2.msra.mxu0 0.0
    %644 = vmatprep.subr.mxu0 0.0
    %645 = vmatpush2.msra.mxu0 0.0
    %646 = vmatprep.mubr.f32.mxu0 0.0
    %647 = vmatmul.mubr.f32.gmra.mxu0 %v446
    %v648 = vpop.f32.mrf.mxu0
    %v649 = vadd.f32 0.0, %v648
    %v650 = vpop.f32.mrf.mxu0
    %v651 = vadd.f32 0.0, %v650
    %652 = vdwg.mxu0
    %v653 = vadd.f32 %v371, %v578
    %v654 = vadd.f32 %v373, %v580
    %v655 = vadd.f32 %v442, %v649
    %v656 = vadd.f32 %v444, %v651
    %v657 = vld [vmem:[%s7] sm:$0xf]
    %v659 = vlaneseq
    %v660 = vshrl.u32 %v659, 7
    %v661 = vsub.s32 0, %v660
    %v662 = vrot.slane %v657, %v661
    %v663 = vlaneseq
    %v664 = vshrl.u32 %v663, 7
    %v665 = vsub.s32 1, %v664
    %v666 = vrot.slane %v657, %v665
    %v667 = vlaneseq
    %v668 = vshrl.u32 %v667, 7
    %v669 = vsub.s32 2, %v668
    %v670 = vrot.slane %v657, %v669
    %v671 = vlaneseq
    %v672 = vshrl.u32 %v671, 7
    %v673 = vsub.s32 3, %v672
    %v674 = vrot.slane %v657, %v673
    %v679 = vadd.f32 %v653, %v662
    %v680 = vadd.f32 %v654, %v666
    %v681 = vadd.f32 %v655, %v670
    %v682 = vadd.f32 %v656, %v674
    %v683 = vxor.u32 %v679, 2147483648
    %v684 = vmul.f32 %v683, 1.442695
    %v685 = vpow.pop %v684
    %v686 = vadd.f32 %v685, 1.0
    %v687 = vrcp.pop %v686
    %v688 = vmul.f32 1.0, %v687
    %v689 = vxor.u32 %v680, 2147483648
    %v690 = vmul.f32 %v689, 1.442695
    %v691 = vpow.pop %v690
    %v692 = vadd.f32 %v691, 1.0
    %v693 = vrcp.pop %v692
    %v694 = vmul.f32 1.0, %v693
    %v695 = vtanh.pop %v681
    %v696 = vxor.u32 %v682, 2147483648
    %v697 = vmul.f32 %v696, 1.442695
    %v698 = vpow.pop %v697
    %v699 = vadd.f32 %v698, 1.0
    %v700 = vrcp.pop %v699
    %v701 = vmul.f32 1.0, %v700
    %v702 = vld [vmem:[%s3] sm:$0xff]
    %v703 = vmul.f32 %v694, %v702
    %v704 = vmul.f32 %v688, %v695
    %v705 = vadd.f32 %v703, %v704
    %706 = vst [vmem:[#allocation2] sm:$0xff] %v705
    %v707 = vtanh.pop %v705
    %v708 = vmul.f32 %v701, %v707
    %709 = vst [vmem:[%s8] sm:$0xff] %v708
    // Predicated region
    $region34: #{forward.56} parent=1 // pred_check
      _
    $region35: #{forward.56} parent=1 // pred_check_branch
      %711 = sbr.rel (0) target = $region37
    $region36: #{forward.56} parent=1 // pred_region
      _
    $region37: #{forward.56} parent=1 // pred_fallthru
      _
    // Predicated region
    $region38: #{forward.56} parent=1 // pred_check
      _
    $region39: #{forward.56} parent=1 // pred_check_branch
      %713 = sbr.rel (0) target = $region41
    $region40: #{forward.56} parent=1 // pred_region
      %s715 = ssub.s32 128, 128
      %716 = vsyncadd [#allocation3], %s715
      %s718 = sshll.u32 [#allocation2], 4
      %s719 = int_to_ptr.vmem [resolvable:$true] %s718
      %721 = dma.vmem_to_hbm [thread:$0]  %s719, 128, %s9, [#allocation3]
    $region41: #{forward.56} parent=1 // pred_fallthru
      _
    // Predicated region
    $region42: #{forward.56} parent=1 // pred_check
      _
    $region43: #{forward.56} parent=1 // pred_check_branch
      %723 = sbr.rel (0) target = $region45
    $region44: #{forward.56} parent=1 // pred_region
      _
    $region45: #{forward.56} parent=1 // pred_fallthru
      _
    // Predicated region
    $region46: #{forward.56} parent=1 // pred_check
      _
    $region47: #{forward.56} parent=1 // pred_check_branch
      %725 = sbr.rel (0) target = $region49
    $region48: #{forward.56} parent=1 // pred_region
      %726 = dma.done [#allocation3], 128
    $region49: #{forward.56} parent=1 // pred_fallthru
      _
    %727 = vsyncpa [#allocation3], 1

// kernel: forward.61
$region0: #{forward.61}
  #allocation0 [shape = 'u32[]', space=smem, size = 0x4, offset = 0x4, fixed_abs, tag = 'smem constant byte address 0x4 - core index']
  #allocation1 [shape = 'u32[144,128]{1,0:T(1,128)}', space=vmem, size = 0x12000, scoped, tag = 'internal scratch']
  %s0 = inlined_call_operand.vmem [shape: f32[8,128], index: 0, kind: input, shape index: {}]
  %s1 = inlined_call_operand.vmem [shape: f32[8,128], index: 1, kind: input, shape index: {}]
  %s2 = inlined_call_operand.vmem [shape: f32[256,128], index: 2, kind: input, shape index: {}]
  %s3 = inlined_call_operand.vmem [shape: f32[1,128], index: 3, kind: input, shape index: {}]
  %s4 = inlined_call_operand.vmem [shape: f32[128,128], index: 4, kind: input, shape index: {}]
  %s5 = inlined_call_operand.vmem [shape: f32[1,128], index: 5, kind: input, shape index: {}]
  %s6 = inlined_call_operand.vmem [shape: f32[8,128], index: 6, kind: output, shape index: {}]
  %s7 = sld [smem:[#allocation0]]
  $region34: #{forward.61} parent=0
    _
  %s9 = ssub.s32 1, %s7
  %s10 = scalar_select 0, %s9, %s7
  // Predicated region
  $region2: #{forward.61} parent=0 // pred_check
    _
  $region3: #{forward.61} parent=0 // pred_check_branch
    %12 = sbr.rel (0) target = $region5
  $region4: #{forward.61} parent=0 // pred_region
    _
  $region5: #{forward.61} parent=0 // pred_fallthru
    _
  // Predicated region
  $region6: #{forward.61} parent=0 // pred_check
    _
  $region7: #{forward.61} parent=0 // pred_check_branch
    %14 = sbr.rel (0) target = $region9
  $region8: #{forward.61} parent=0 // pred_region
    _
  $region9: #{forward.61} parent=0 // pred_fallthru
    _
  // Predicated region
  $region10: #{forward.61} parent=0 // pred_check
    _
  $region11: #{forward.61} parent=0 // pred_check_branch
    %16 = sbr.rel (0) target = $region13
  $region12: #{forward.61} parent=0 // pred_region
    _
  $region13: #{forward.61} parent=0 // pred_fallthru
    _
  // Predicated region
  $region14: #{forward.61} parent=0 // pred_check
    _
  $region15: #{forward.61} parent=0 // pred_check_branch
    %18 = sbr.rel (0) target = $region17
  $region16: #{forward.61} parent=0 // pred_region
    _
  $region17: #{forward.61} parent=0 // pred_fallthru
    _
  // Predicated region
  $region18: #{forward.61} parent=0 // pred_check
    _
  $region19: #{forward.61} parent=0 // pred_check_branch
    %20 = sbr.rel (0) target = $region21
  $region20: #{forward.61} parent=0 // pred_region
    _
  $region21: #{forward.61} parent=0 // pred_fallthru
    _
  // Predicated region
  $region22: #{forward.61} parent=0 // pred_check
    _
  $region23: #{forward.61} parent=0 // pred_check_branch
    %22 = sbr.rel (0) target = $region25
  $region24: #{forward.61} parent=0 // pred_region
    _
  $region25: #{forward.61} parent=0 // pred_fallthru
    _
  %v23 = vld [vmem:[%s0] sm:$0xff]
  %v24 = vld [vmem:[%s1] sm:$0xff]
  %v25 = vld [vmem:[%s2] sm:$0xff]
  %v26 = vld [vmem:[%s2 + $0x8] sm:$0xff]
  %v27 = vld [vmem:[%s2 + $0x10] sm:$0xff]
  %v28 = vld [vmem:[%s2 + $0x18] sm:$0xff]
  %v29 = vld [vmem:[%s2 + $0x20] sm:$0xff]
  %v30 = vld [vmem:[%s2 + $0x28] sm:$0xff]
  %v31 = vld [vmem:[%s2 + $0x30] sm:$0xff]
  %v32 = vld [vmem:[%s2 + $0x38] sm:$0xff]
  %v33 = vld [vmem:[%s2 + $0x40] sm:$0xff]
  %v34 = vld [vmem:[%s2 + $0x48] sm:$0xff]
  %v35 = vld [vmem:[%s2 + $0x50] sm:$0xff]
  %v36 = vld [vmem:[%s2 + $0x58] sm:$0xff]
  %v37 = vld [vmem:[%s2 + $0x60] sm:$0xff]
  %v38 = vld [vmem:[%s2 + $0x68] sm:$0xff]
  %v39 = vld [vmem:[%s2 + $0x70] sm:$0xff]
  %v40 = vld [vmem:[%s2 + $0x78] sm:$0xff]
  %v41 = vld [vmem:[%s2 + $0x80] sm:$0xff]
  %v42 = vld [vmem:[%s2 + $0x88] sm:$0xff]
  %v43 = vld [vmem:[%s2 + $0x90] sm:$0xff]
  %v44 = vld [vmem:[%s2 + $0x98] sm:$0xff]
  %v45 = vld [vmem:[%s2 + $0xa0] sm:$0xff]
  %v46 = vld [vmem:[%s2 + $0xa8] sm:$0xff]
  %v47 = vld [vmem:[%s2 + $0xb0] sm:$0xff]
  %v48 = vld [vmem:[%s2 + $0xb8] sm:$0xff]
  %v49 = vld [vmem:[%s2 + $0xc0] sm:$0xff]
  %v50 = vld [vmem:[%s2 + $0xc8] sm:$0xff]
  %v51 = vld [vmem:[%s2 + $0xd0] sm:$0xff]
  %v52 = vld [vmem:[%s2 + $0xd8] sm:$0xff]
  %v53 = vld [vmem:[%s2 + $0xe0] sm:$0xff]
  %v54 = vld [vmem:[%s2 + $0xe8] sm:$0xff]
  %v55 = vld [vmem:[%s2 + $0xf0] sm:$0xff]
  %v56 = vld [vmem:[%s2 + $0xf8] sm:$0xff]
  %v57 = vld [vmem:[%s3] sm:$0x1]
  %v59 = vlaneseq
  %v60 = vshrl.u32 %v59, 7
  %v61 = vsub.s32 0, %v60
  %v62 = vrot.slane %v57, %v61
  %64 = vmatprep.subr.mxu0 0.0
  %65 = vmatpush1.msra.mxu0 %v40
  %66 = vmatprep.subr.mxu0 0.0
  %67 = vmatpush1.msra.mxu0 %v39
  %68 = vmatprep.subr.mxu0 0.0
  %69 = vmatpush1.msra.mxu0 %v38
  %70 = vmatprep.subr.mxu0 0.0
  %71 = vmatpush1.msra.mxu0 %v37
  %72 = vmatprep.subr.mxu0 0.0
  %73 = vmatpush1.msra.mxu0 %v36
  %74 = vmatprep.subr.mxu0 0.0
  %75 = vmatpush1.msra.mxu0 %v35
  %76 = vmatprep.subr.mxu0 0.0
  %77 = vmatpush1.msra.mxu0 %v34
  %78 = vmatprep.subr.mxu0 0.0
  %79 = vmatpush1.msra.mxu0 %v33
  %80 = vmatprep.subr.mxu0 0.0
  %81 = vmatpush1.msra.mxu0 %v32
  %82 = vmatprep.subr.mxu0 0.0
  %83 = vmatpush1.msra.mxu0 %v31
  %84 = vmatprep.subr.mxu0 0.0
  %85 = vmatpush1.msra.mxu0 %v30
  %86 = vmatprep.subr.mxu0 0.0
  %87 = vmatpush1.msra.mxu0 %v29
  %88 = vmatprep.subr.mxu0 0.0
  %89 = vmatpush1.msra.mxu0 %v28
  %90 = vmatprep.subr.mxu0 0.0
  %91 = vmatpush1.msra.mxu0 %v27
  %92 = vmatprep.subr.mxu0 0.0
  %93 = vmatpush1.msra.mxu0 %v26
  %94 = vmatprep.subr.mxu0 0.0
  %95 = vmatpush1.msra.mxu0 %v25
  %96 = vmatprep.subr.mxu0 0.0
  %97 = vmatpush2.msra.mxu0 %v56
  %98 = vmatprep.subr.mxu0 0.0
  %99 = vmatpush2.msra.mxu0 %v55
  %100 = vmatprep.subr.mxu0 0.0
  %101 = vmatpush2.msra.mxu0 %v54
  %102 = vmatprep.subr.mxu0 0.0
  %103 = vmatpush2.msra.mxu0 %v53
  %104 = vmatprep.subr.mxu0 0.0
  %105 = vmatpush2.msra.mxu0 %v52
  %106 = vmatprep.subr.mxu0 0.0
  %107 = vmatpush2.msra.mxu0 %v51
  %108 = vmatprep.subr.mxu0 0.0
  %109 = vmatpush2.msra.mxu0 %v50
  %110 = vmatprep.subr.mxu0 0.0
  %111 = vmatpush2.msra.mxu0 %v49
  %112 = vmatprep.subr.mxu0 0.0
  %113 = vmatpush2.msra.mxu0 %v48
  %114 = vmatprep.subr.mxu0 0.0
  %115 = vmatpush2.msra.mxu0 %v47
  %116 = vmatprep.subr.mxu0 0.0
  %117 = vmatpush2.msra.mxu0 %v46
  %118 = vmatprep.subr.mxu0 0.0
  %119 = vmatpush2.msra.mxu0 %v45
  %120 = vmatprep.subr.mxu0 0.0
  %121 = vmatpush2.msra.mxu0 %v44
  %122 = vmatprep.subr.mxu0 0.0
  %123 = vmatpush2.msra.mxu0 %v43
  %124 = vmatprep.subr.mxu0 0.0
  %125 = vmatpush2.msra.mxu0 %v42
  %126 = vmatprep.subr.mxu0 0.0
  %127 = vmatpush2.msra.mxu0 %v41
  %128 = vmatprep.mubr.f32.mxu0 %v24
  %129 = vmatmul.mubr.f32.gmra.mxu0 %v23
  %v130 = vpop.f32.mrf.mxu0
  %v131 = vadd.f32 %v62, %v130
  %v132 = vpop.f32.mrf.mxu0
  %133 = vdwg.mxu0
  %vm134 = vcmp.gt.f32.partialorder %v131, 0.0
  %v135 = vmul.f32 %v131, 0.01
  %v136 = vsel %vm134, %v131, %v135
  %v137 = vld [vmem:[%s4] sm:$0xff]
  %v138 = vld [vmem:[%s4 + $0x8] sm:$0xff]
  %v139 = vld [vmem:[%s4 + $0x10] sm:$0xff]
  %v140 = vld [vmem:[%s4 + $0x18] sm:$0xff]
  %v141 = vld [vmem:[%s4 + $0x20] sm:$0xff]
  %v142 = vld [vmem:[%s4 + $0x28] sm:$0xff]
  %v143 = vld [vmem:[%s4 + $0x30] sm:$0xff]
  %v144 = vld [vmem:[%s4 + $0x38] sm:$0xff]
  %v145 = vld [vmem:[%s4 + $0x40] sm:$0xff]
  %v146 = vld [vmem:[%s4 + $0x48] sm:$0xff]
  %v147 = vld [vmem:[%s4 + $0x50] sm:$0xff]
  %v148 = vld [vmem:[%s4 + $0x58] sm:$0xff]
  %v149 = vld [vmem:[%s4 + $0x60] sm:$0xff]
  %v150 = vld [vmem:[%s4 + $0x68] sm:$0xff]
  %v151 = vld [vmem:[%s4 + $0x70] sm:$0xff]
  %v152 = vld [vmem:[%s4 + $0x78] sm:$0xff]
  %v153 = vld [vmem:[%s5] sm:$0x1]
  %v155 = vlaneseq
  %v156 = vshrl.u32 %v155, 7
  %v157 = vsub.s32 0, %v156
  %v158 = vrot.slane %v153, %v157
  %160 = vmatprep.subr.mxu0 0.0
  %161 = vmatpush1.msra.mxu0 %v152
  %162 = vmatprep.subr.mxu0 0.0
  %163 = vmatpush1.msra.mxu0 %v151
  %164 = vmatprep.subr.mxu0 0.0
  %165 = vmatpush1.msra.mxu0 %v150
  %166 = vmatprep.subr.mxu0 0.0
  %167 = vmatpush1.msra.mxu0 %v149
  %168 = vmatprep.subr.mxu0 0.0
  %169 = vmatpush1.msra.mxu0 %v148
  %170 = vmatprep.subr.mxu0 0.0
  %171 = vmatpush1.msra.mxu0 %v147
  %172 = vmatprep.subr.mxu0 0.0
  %173 = vmatpush1.msra.mxu0 %v146
  %174 = vmatprep.subr.mxu0 0.0
  %175 = vmatpush1.msra.mxu0 %v145
  %176 = vmatprep.subr.mxu0 0.0
  %177 = vmatpush1.msra.mxu0 %v144
  %178 = vmatprep.subr.mxu0 0.0
  %179 = vmatpush1.msra.mxu0 %v143
  %180 = vmatprep.subr.mxu0 0.0
  %181 = vmatpush1.msra.mxu0 %v142
  %182 = vmatprep.subr.mxu0 0.0
  %183 = vmatpush1.msra.mxu0 %v141
  %184 = vmatprep.subr.mxu0 0.0
  %185 = vmatpush1.msra.mxu0 %v140
  %186 = vmatprep.subr.mxu0 0.0
  %187 = vmatpush1.msra.mxu0 %v139
  %188 = vmatprep.subr.mxu0 0.0
  %189 = vmatpush1.msra.mxu0 %v138
  %190 = vmatprep.subr.mxu0 0.0
  %191 = vmatpush1.msra.mxu0 %v137
  %192 = vmatprep.subr.mxu0 0.0
  %193 = vmatpush2.msra.mxu0 0.0
  %194 = vmatprep.subr.mxu0 0.0
  %195 = vmatpush2.msra.mxu0 0.0
  %196 = vmatprep.subr.mxu0 0.0
  %197 = vmatpush2.msra.mxu0 0.0
  %198 = vmatprep.subr.mxu0 0.0
  %199 = vmatpush2.msra.mxu0 0.0
  %200 = vmatprep.subr.mxu0 0.0
  %201 = vmatpush2.msra.mxu0 0.0
  %202 = vmatprep.subr.mxu0 0.0
  %203 = vmatpush2.msra.mxu0 0.0
  %204 = vmatprep.subr.mxu0 0.0
  %205 = vmatpush2.msra.mxu0 0.0
  %206 = vmatprep.subr.mxu0 0.0
  %207 = vmatpush2.msra.mxu0 0.0
  %208 = vmatprep.subr.mxu0 0.0
  %209 = vmatpush2.msra.mxu0 0.0
  %210 = vmatprep.subr.mxu0 0.0
  %211 = vmatpush2.msra.mxu0 0.0
  %212 = vmatprep.subr.mxu0 0.0
  %213 = vmatpush2.msra.mxu0 0.0
  %214 = vmatprep.subr.mxu0 0.0
  %215 = vmatpush2.msra.mxu0 0.0
  %216 = vmatprep.subr.mxu0 0.0
  %217 = vmatpush2.msra.mxu0 0.0
  %218 = vmatprep.subr.mxu0 0.0
  %219 = vmatpush2.msra.mxu0 0.0
  %220 = vmatprep.subr.mxu0 0.0
  %221 = vmatpush2.msra.mxu0 0.0
  %222 = vmatprep.subr.mxu0 0.0
  %223 = vmatpush2.msra.mxu0 0.0
  %224 = vmatprep.mubr.f32.mxu0 0.0
  %225 = vmatmul.mubr.f32.gmra.mxu0 %v136
  %v226 = vpop.f32.mrf.mxu0
  %v227 = vadd.f32 %v158, %v226
  %v228 = vpop.f32.mrf.mxu0
  %229 = vdwg.mxu0
  %230 = vst [vmem:[%s6] sm:$0xff] %v227
  // Predicated region
  $region26: #{forward.61} parent=0 // pred_check
    _
  $region27: #{forward.61} parent=0 // pred_check_branch
    %232 = sbr.rel (0) target = $region29
  $region28: #{forward.61} parent=0 // pred_region
    _
  $region29: #{forward.61} parent=0 // pred_fallthru
    _
  // Predicated region
  $region30: #{forward.61} parent=0 // pred_check
    _
  $region31: #{forward.61} parent=0 // pred_check_branch
    %234 = sbr.rel (0) target = $region33
  $region32: #{forward.61} parent=0 // pred_region
    _
  $region33: #{forward.61} parent=0 // pred_fallthru
    _

// kernel: forward.58
$region0: #{forward.58}
  #allocation0 [shape = 'u32[]', space=smem, size = 0x4, offset = 0x4, fixed_abs, tag = 'smem constant byte address 0x4 - core index']
  #allocation1 [shape = 'u32[144,128]{1,0:T(1,128)}', space=vmem, size = 0x12000, scoped, tag = 'internal scratch']
  %s0 = inlined_call_operand.vmem [shape: f32[8,128], index: 0, kind: input, shape index: {}]
  %s1 = inlined_call_operand.vmem [shape: f32[8,128], index: 1, kind: input, shape index: {}]
  %s2 = inlined_call_operand.vmem [shape: f32[8,128], index: 2, kind: input, shape index: {}]
  %s3 = inlined_call_operand.vmem [shape: f32[8,128], index: 3, kind: input, shape index: {}]
  %s4 = inlined_call_operand.vmem [shape: f32[8,128], index: 4, kind: input, shape index: {}]
  %s5 = inlined_call_operand.vmem [shape: f32[640,128], index: 5, kind: input, shape index: {}]
  %s6 = inlined_call_operand.vmem [shape: f32[1,128], index: 6, kind: input, shape index: {}]
  %s7 = inlined_call_operand.vmem [shape: f32[128,128], index: 7, kind: input, shape index: {}]
  %s8 = inlined_call_operand.vmem [shape: f32[1,128], index: 8, kind: input, shape index: {}]
  %s9 = inlined_call_operand.vmem [shape: f32[8,128], index: 9, kind: output, shape index: {}]
  %s10 = sld [smem:[#allocation0]]
  $region46: #{forward.58} parent=0
    _
  %s12 = ssub.s32 1, %s10
  %s13 = scalar_select 0, %s12, %s10
  // Predicated region
  $region2: #{forward.58} parent=0 // pred_check
    _
  $region3: #{forward.58} parent=0 // pred_check_branch
    %15 = sbr.rel (0) target = $region5
  $region4: #{forward.58} parent=0 // pred_region
    _
  $region5: #{forward.58} parent=0 // pred_fallthru
    _
  // Predicated region
  $region6: #{forward.58} parent=0 // pred_check
    _
  $region7: #{forward.58} parent=0 // pred_check_branch
    %17 = sbr.rel (0) target = $region9
  $region8: #{forward.58} parent=0 // pred_region
    _
  $region9: #{forward.58} parent=0 // pred_fallthru
    _
  // Predicated region
  $region10: #{forward.58} parent=0 // pred_check
    _
  $region11: #{forward.58} parent=0 // pred_check_branch
    %19 = sbr.rel (0) target = $region13
  $region12: #{forward.58} parent=0 // pred_region
    _
  $region13: #{forward.58} parent=0 // pred_fallthru
    _
  // Predicated region
  $region14: #{forward.58} parent=0 // pred_check
    _
  $region15: #{forward.58} parent=0 // pred_check_branch
    %21 = sbr.rel (0) target = $region17
  $region16: #{forward.58} parent=0 // pred_region
    _
  $region17: #{forward.58} parent=0 // pred_fallthru
    _
  // Predicated region
  $region18: #{forward.58} parent=0 // pred_check
    _
  $region19: #{forward.58} parent=0 // pred_check_branch
    %23 = sbr.rel (0) target = $region21
  $region20: #{forward.58} parent=0 // pred_region
    _
  $region21: #{forward.58} parent=0 // pred_fallthru
    _
  // Predicated region
  $region22: #{forward.58} parent=0 // pred_check
    _
  $region23: #{forward.58} parent=0 // pred_check_branch
    %25 = sbr.rel (0) target = $region25
  $region24: #{forward.58} parent=0 // pred_region
    _
  $region25: #{forward.58} parent=0 // pred_fallthru
    _
  // Predicated region
  $region26: #{forward.58} parent=0 // pred_check
    _
  $region27: #{forward.58} parent=0 // pred_check_branch
    %27 = sbr.rel (0) target = $region29
  $region28: #{forward.58} parent=0 // pred_region
    _
  $region29: #{forward.58} parent=0 // pred_fallthru
    _
  // Predicated region
  $region30: #{forward.58} parent=0 // pred_check
    _
  $region31: #{forward.58} parent=0 // pred_check_branch
    %29 = sbr.rel (0) target = $region33
  $region32: #{forward.58} parent=0 // pred_region
    _
  $region33: #{forward.58} parent=0 // pred_fallthru
    _
  // Predicated region
  $region34: #{forward.58} parent=0 // pred_check
    _
  $region35: #{forward.58} parent=0 // pred_check_branch
    %31 = sbr.rel (0) target = $region37
  $region36: #{forward.58} parent=0 // pred_region
    _
  $region37: #{forward.58} parent=0 // pred_fallthru
    _
  %v32 = vld [vmem:[%s0] sm:$0xff]
  %v33 = vld [vmem:[%s1] sm:$0xff]
  %v34 = vld [vmem:[%s2] sm:$0xff]
  %v35 = vld [vmem:[%s3] sm:$0xff]
  %v36 = vld [vmem:[%s4] sm:$0xff]
  %v37 = vld [vmem:[%s5] sm:$0xff]
  %v38 = vld [vmem:[%s5 + $0x8] sm:$0xff]
  %v39 = vld [vmem:[%s5 + $0x10] sm:$0xff]
  %v40 = vld [vmem:[%s5 + $0x18] sm:$0xff]
  %v41 = vld [vmem:[%s5 + $0x20] sm:$0xff]
  %v42 = vld [vmem:[%s5 + $0x28] sm:$0xff]
  %v43 = vld [vmem:[%s5 + $0x30] sm:$0xff]
  %v44 = vld [vmem:[%s5 + $0x38] sm:$0xff]
  %v45 = vld [vmem:[%s5 + $0x40] sm:$0xff]
  %v46 = vld [vmem:[%s5 + $0x48] sm:$0xff]
  %v47 = vld [vmem:[%s5 + $0x50] sm:$0xff]
  %v48 = vld [vmem:[%s5 + $0x58] sm:$0xff]
  %v49 = vld [vmem:[%s5 + $0x60] sm:$0xff]
  %v50 = vld [vmem:[%s5 + $0x68] sm:$0xff]
  %v51 = vld [vmem:[%s5 + $0x70] sm:$0xff]
  %v52 = vld [vmem:[%s5 + $0x78] sm:$0xff]
  %v53 = vld [vmem:[%s5 + $0x80] sm:$0xff]
  %v54 = vld [vmem:[%s5 + $0x88] sm:$0xff]
  %v55 = vld [vmem:[%s5 + $0x90] sm:$0xff]
  %v56 = vld [vmem:[%s5 + $0x98] sm:$0xff]
  %v57 = vld [vmem:[%s5 + $0xa0] sm:$0xff]
  %v58 = vld [vmem:[%s5 + $0xa8] sm:$0xff]
  %v59 = vld [vmem:[%s5 + $0xb0] sm:$0xff]
  %v60 = vld [vmem:[%s5 + $0xb8] sm:$0xff]
  %v61 = vld [vmem:[%s5 + $0xc0] sm:$0xff]
  %v62 = vld [vmem:[%s5 + $0xc8] sm:$0xff]
  %v63 = vld [vmem:[%s5 + $0xd0] sm:$0xff]
  %v64 = vld [vmem:[%s5 + $0xd8] sm:$0xff]
  %v65 = vld [vmem:[%s5 + $0xe0] sm:$0xff]
  %v66 = vld [vmem:[%s5 + $0xe8] sm:$0xff]
  %v67 = vld [vmem:[%s5 + $0xf0] sm:$0xff]
  %v68 = vld [vmem:[%s5 + $0xf8] sm:$0xff]
  %v69 = vld [vmem:[%s5 + $0x100] sm:$0xff]
  %v70 = vld [vmem:[%s5 + $0x108] sm:$0xff]
  %v71 = vld [vmem:[%s5 + $0x110] sm:$0xff]
  %v72 = vld [vmem:[%s5 + $0x118] sm:$0xff]
  %v73 = vld [vmem:[%s5 + $0x120] sm:$0xff]
  %v74 = vld [vmem:[%s5 + $0x128] sm:$0xff]
  %v75 = vld [vmem:[%s5 + $0x130] sm:$0xff]
  %v76 = vld [vmem:[%s5 + $0x138] sm:$0xff]
  %v77 = vld [vmem:[%s5 + $0x140] sm:$0xff]
  %v78 = vld [vmem:[%s5 + $0x148] sm:$0xff]
  %v79 = vld [vmem:[%s5 + $0x150] sm:$0xff]
  %v80 = vld [vmem:[%s5 + $0x158] sm:$0xff]
  %v81 = vld [vmem:[%s5 + $0x160] sm:$0xff]
  %v82 = vld [vmem:[%s5 + $0x168] sm:$0xff]
  %v83 = vld [vmem:[%s5 + $0x170] sm:$0xff]
  %v84 = vld [vmem:[%s5 + $0x178] sm:$0xff]
  %v85 = vld [vmem:[%s5 + $0x180] sm:$0xff]
  %v86 = vld [vmem:[%s5 + $0x188] sm:$0xff]
  %v87 = vld [vmem:[%s5 + $0x190] sm:$0xff]
  %v88 = vld [vmem:[%s5 + $0x198] sm:$0xff]
  %v89 = vld [vmem:[%s5 + $0x1a0] sm:$0xff]
  %v90 = vld [vmem:[%s5 + $0x1a8] sm:$0xff]
  %v91 = vld [vmem:[%s5 + $0x1b0] sm:$0xff]
  %v92 = vld [vmem:[%s5 + $0x1b8] sm:$0xff]
  %v93 = vld [vmem:[%s5 + $0x1c0] sm:$0xff]
  %v94 = vld [vmem:[%s5 + $0x1c8] sm:$0xff]
  %v95 = vld [vmem:[%s5 + $0x1d0] sm:$0xff]
  %v96 = vld [vmem:[%s5 + $0x1d8] sm:$0xff]
  %v97 = vld [vmem:[%s5 + $0x1e0] sm:$0xff]
  %v98 = vld [vmem:[%s5 + $0x1e8] sm:$0xff]
  %v99 = vld [vmem:[%s5 + $0x1f0] sm:$0xff]
  %v100 = vld [vmem:[%s5 + $0x1f8] sm:$0xff]
  %v101 = vld [vmem:[%s5 + $0x200] sm:$0xff]
  %v102 = vld [vmem:[%s5 + $0x208] sm:$0xff]
  %v103 = vld [vmem:[%s5 + $0x210] sm:$0xff]
  %v104 = vld [vmem:[%s5 + $0x218] sm:$0xff]
  %v105 = vld [vmem:[%s5 + $0x220] sm:$0xff]
  %v106 = vld [vmem:[%s5 + $0x228] sm:$0xff]
  %v107 = vld [vmem:[%s5 + $0x230] sm:$0xff]
  %v108 = vld [vmem:[%s5 + $0x238] sm:$0xff]
  %v109 = vld [vmem:[%s5 + $0x240] sm:$0xff]
  %v110 = vld [vmem:[%s5 + $0x248] sm:$0xff]
  %v111 = vld [vmem:[%s5 + $0x250] sm:$0xff]
  %v112 = vld [vmem:[%s5 + $0x258] sm:$0xff]
  %v113 = vld [vmem:[%s5 + $0x260] sm:$0xff]
  %v114 = vld [vmem:[%s5 + $0x268] sm:$0xff]
  %v115 = vld [vmem:[%s5 + $0x270] sm:$0xff]
  %v116 = vld [vmem:[%s5 + $0x278] sm:$0xff]
  %v117 = vld [vmem:[%s6] sm:$0x1]
  %v119 = vlaneseq
  %v120 = vshrl.u32 %v119, 7
  %v121 = vsub.s32 0, %v120
  %v122 = vrot.slane %v117, %v121
  %124 = vmatprep.subr.mxu0 0.0
  %125 = vmatpush1.msra.mxu0 %v52
  %126 = vmatprep.subr.mxu0 0.0
  %127 = vmatpush1.msra.mxu0 %v51
  %128 = vmatprep.subr.mxu0 0.0
  %129 = vmatpush1.msra.mxu0 %v50
  %130 = vmatprep.subr.mxu0 0.0
  %131 = vmatpush1.msra.mxu0 %v49
  %132 = vmatprep.subr.mxu0 0.0
  %133 = vmatpush1.msra.mxu0 %v48
  %134 = vmatprep.subr.mxu0 0.0
  %135 = vmatpush1.msra.mxu0 %v47
  %136 = vmatprep.subr.mxu0 0.0
  %137 = vmatpush1.msra.mxu0 %v46
  %138 = vmatprep.subr.mxu0 0.0
  %139 = vmatpush1.msra.mxu0 %v45
  %140 = vmatprep.subr.mxu0 0.0
  %141 = vmatpush1.msra.mxu0 %v44
  %142 = vmatprep.subr.mxu0 0.0
  %143 = vmatpush1.msra.mxu0 %v43
  %144 = vmatprep.subr.mxu0 0.0
  %145 = vmatpush1.msra.mxu0 %v42
  %146 = vmatprep.subr.mxu0 0.0
  %147 = vmatpush1.msra.mxu0 %v41
  %148 = vmatprep.subr.mxu0 0.0
  %149 = vmatpush1.msra.mxu0 %v40
  %150 = vmatprep.subr.mxu0 0.0
  %151 = vmatpush1.msra.mxu0 %v39
  %152 = vmatprep.subr.mxu0 0.0
  %153 = vmatpush1.msra.mxu0 %v38
  %154 = vmatprep.subr.mxu0 0.0
  %155 = vmatpush1.msra.mxu0 %v37
  %156 = vmatprep.subr.mxu0 0.0
  %157 = vmatpush2.msra.mxu0 %v68
  %158 = vmatprep.subr.mxu0 0.0
  %159 = vmatpush2.msra.mxu0 %v67
  %160 = vmatprep.subr.mxu0 0.0
  %161 = vmatpush2.msra.mxu0 %v66
  %162 = vmatprep.subr.mxu0 0.0
  %163 = vmatpush2.msra.mxu0 %v65
  %164 = vmatprep.subr.mxu0 0.0
  %165 = vmatpush2.msra.mxu0 %v64
  %166 = vmatprep.subr.mxu0 0.0
  %167 = vmatpush2.msra.mxu0 %v63
  %168 = vmatprep.subr.mxu0 0.0
  %169 = vmatpush2.msra.mxu0 %v62
  %170 = vmatprep.subr.mxu0 0.0
  %171 = vmatpush2.msra.mxu0 %v61
  %172 = vmatprep.subr.mxu0 0.0
  %173 = vmatpush2.msra.mxu0 %v60
  %174 = vmatprep.subr.mxu0 0.0
  %175 = vmatpush2.msra.mxu0 %v59
  %176 = vmatprep.subr.mxu0 0.0
  %177 = vmatpush2.msra.mxu0 %v58
  %178 = vmatprep.subr.mxu0 0.0
  %179 = vmatpush2.msra.mxu0 %v57
  %180 = vmatprep.subr.mxu0 0.0
  %181 = vmatpush2.msra.mxu0 %v56
  %182 = vmatprep.subr.mxu0 0.0
  %183 = vmatpush2.msra.mxu0 %v55
  %184 = vmatprep.subr.mxu0 0.0
  %185 = vmatpush2.msra.mxu0 %v54
  %186 = vmatprep.subr.mxu0 0.0
  %187 = vmatpush2.msra.mxu0 %v53
  %188 = vmatprep.mubr.f32.mxu0 %v33
  %189 = vmatmul.mubr.f32.gmra.mxu0 %v32
  %v190 = vpop.f32.mrf.mxu0
  %v191 = vadd.f32 %v122, %v190
  %v192 = vpop.f32.mrf.mxu0
  %193 = vdwg.mxu0
  %194 = vmatprep.subr.mxu0 0.0
  %195 = vmatpush1.msra.mxu0 %v84
  %196 = vmatprep.subr.mxu0 0.0
  %197 = vmatpush1.msra.mxu0 %v83
  %198 = vmatprep.subr.mxu0 0.0
  %199 = vmatpush1.msra.mxu0 %v82
  %200 = vmatprep.subr.mxu0 0.0
  %201 = vmatpush1.msra.mxu0 %v81
  %202 = vmatprep.subr.mxu0 0.0
  %203 = vmatpush1.msra.mxu0 %v80
  %204 = vmatprep.subr.mxu0 0.0
  %205 = vmatpush1.msra.mxu0 %v79
  %206 = vmatprep.subr.mxu0 0.0
  %207 = vmatpush1.msra.mxu0 %v78
  %208 = vmatprep.subr.mxu0 0.0
  %209 = vmatpush1.msra.mxu0 %v77
  %210 = vmatprep.subr.mxu0 0.0
  %211 = vmatpush1.msra.mxu0 %v76
  %212 = vmatprep.subr.mxu0 0.0
  %213 = vmatpush1.msra.mxu0 %v75
  %214 = vmatprep.subr.mxu0 0.0
  %215 = vmatpush1.msra.mxu0 %v74
  %216 = vmatprep.subr.mxu0 0.0
  %217 = vmatpush1.msra.mxu0 %v73
  %218 = vmatprep.subr.mxu0 0.0
  %219 = vmatpush1.msra.mxu0 %v72
  %220 = vmatprep.subr.mxu0 0.0
  %221 = vmatpush1.msra.mxu0 %v71
  %222 = vmatprep.subr.mxu0 0.0
  %223 = vmatpush1.msra.mxu0 %v70
  %224 = vmatprep.subr.mxu0 0.0
  %225 = vmatpush1.msra.mxu0 %v69
  %226 = vmatprep.subr.mxu0 0.0
  %227 = vmatpush2.msra.mxu0 %v100
  %228 = vmatprep.subr.mxu0 0.0
  %229 = vmatpush2.msra.mxu0 %v99
  %230 = vmatprep.subr.mxu0 0.0
  %231 = vmatpush2.msra.mxu0 %v98
  %232 = vmatprep.subr.mxu0 0.0
  %233 = vmatpush2.msra.mxu0 %v97
  %234 = vmatprep.subr.mxu0 0.0
  %235 = vmatpush2.msra.mxu0 %v96
  %236 = vmatprep.subr.mxu0 0.0
  %237 = vmatpush2.msra.mxu0 %v95
  %238 = vmatprep.subr.mxu0 0.0
  %239 = vmatpush2.msra.mxu0 %v94
  %240 = vmatprep.subr.mxu0 0.0
  %241 = vmatpush2.msra.mxu0 %v93
  %242 = vmatprep.subr.mxu0 0.0
  %243 = vmatpush2.msra.mxu0 %v92
  %244 = vmatprep.subr.mxu0 0.0
  %245 = vmatpush2.msra.mxu0 %v91
  %246 = vmatprep.subr.mxu0 0.0
  %247 = vmatpush2.msra.mxu0 %v90
  %248 = vmatprep.subr.mxu0 0.0
  %249 = vmatpush2.msra.mxu0 %v89
  %250 = vmatprep.subr.mxu0 0.0
  %251 = vmatpush2.msra.mxu0 %v88
  %252 = vmatprep.subr.mxu0 0.0
  %253 = vmatpush2.msra.mxu0 %v87
  %254 = vmatprep.subr.mxu0 0.0
  %255 = vmatpush2.msra.mxu0 %v86
  %256 = vmatprep.subr.mxu0 0.0
  %257 = vmatpush2.msra.mxu0 %v85
  %258 = vmatprep.mubr.f32.mxu0 %v35
  %259 = vmatmul.mubr.f32.gmra.mxu0 %v34
  %v260 = vpop.f32.mrf.mxu0
  %v261 = vadd.f32 %v191, %v260
  %v262 = vpop.f32.mrf.mxu0
  %263 = vdwg.mxu0
  %264 = vmatprep.subr.mxu0 0.0
  %265 = vmatpush1.msra.mxu0 %v116
  %266 = vmatprep.subr.mxu0 0.0
  %267 = vmatpush1.msra.mxu0 %v115
  %268 = vmatprep.subr.mxu0 0.0
  %269 = vmatpush1.msra.mxu0 %v114
  %270 = vmatprep.subr.mxu0 0.0
  %271 = vmatpush1.msra.mxu0 %v113
  %272 = vmatprep.subr.mxu0 0.0
  %273 = vmatpush1.msra.mxu0 %v112
  %274 = vmatprep.subr.mxu0 0.0
  %275 = vmatpush1.msra.mxu0 %v111
  %276 = vmatprep.subr.mxu0 0.0
  %277 = vmatpush1.msra.mxu0 %v110
  %278 = vmatprep.subr.mxu0 0.0
  %279 = vmatpush1.msra.mxu0 %v109
  %280 = vmatprep.subr.mxu0 0.0
  %281 = vmatpush1.msra.mxu0 %v108
  %282 = vmatprep.subr.mxu0 0.0
  %283 = vmatpush1.msra.mxu0 %v107
  %284 = vmatprep.subr.mxu0 0.0
  %285 = vmatpush1.msra.mxu0 %v106
  %286 = vmatprep.subr.mxu0 0.0
  %287 = vmatpush1.msra.mxu0 %v105
  %288 = vmatprep.subr.mxu0 0.0
  %289 = vmatpush1.msra.mxu0 %v104
  %290 = vmatprep.subr.mxu0 0.0
  %291 = vmatpush1.msra.mxu0 %v103
  %292 = vmatprep.subr.mxu0 0.0
  %293 = vmatpush1.msra.mxu0 %v102
  %294 = vmatprep.subr.mxu0 0.0
  %295 = vmatpush1.msra.mxu0 %v101
  %296 = vmatprep.subr.mxu0 0.0
  %297 = vmatpush2.msra.mxu0 0.0
  %298 = vmatprep.subr.mxu0 0.0
  %299 = vmatpush2.msra.mxu0 0.0
  %300 = vmatprep.subr.mxu0 0.0
  %301 = vmatpush2.msra.mxu0 0.0
  %302 = vmatprep.subr.mxu0 0.0
  %303 = vmatpush2.msra.mxu0 0.0
  %304 = vmatprep.subr.mxu0 0.0
  %305 = vmatpush2.msra.mxu0 0.0
  %306 = vmatprep.subr.mxu0 0.0
  %307 = vmatpush2.msra.mxu0 0.0
  %308 = vmatprep.subr.mxu0 0.0
  %309 = vmatpush2.msra.mxu0 0.0
  %310 = vmatprep.subr.mxu0 0.0
  %311 = vmatpush2.msra.mxu0 0.0
  %312 = vmatprep.subr.mxu0 0.0
  %313 = vmatpush2.msra.mxu0 0.0
  %314 = vmatprep.subr.mxu0 0.0
  %315 = vmatpush2.msra.mxu0 0.0
  %316 = vmatprep.subr.mxu0 0.0
  %317 = vmatpush2.msra.mxu0 0.0
  %318 = vmatprep.subr.mxu0 0.0
  %319 = vmatpush2.msra.mxu0 0.0
  %320 = vmatprep.subr.mxu0 0.0
  %321 = vmatpush2.msra.mxu0 0.0
  %322 = vmatprep.subr.mxu0 0.0
  %323 = vmatpush2.msra.mxu0 0.0
  %324 = vmatprep.subr.mxu0 0.0
  %325 = vmatpush2.msra.mxu0 0.0
  %326 = vmatprep.subr.mxu0 0.0
  %327 = vmatpush2.msra.mxu0 0.0
  %328 = vmatprep.mubr.f32.mxu0 0.0
  %329 = vmatmul.mubr.f32.gmra.mxu0 %v36
  %v330 = vpop.f32.mrf.mxu0
  %v331 = vadd.f32 %v261, %v330
  %v332 = vpop.f32.mrf.mxu0
  %333 = vdwg.mxu0
  %vm334 = vcmp.gt.f32.partialorder %v331, 0.0
  %v335 = vmul.f32 %v331, 0.01
  %v336 = vsel %vm334, %v331, %v335
  %v337 = vld [vmem:[%s7] sm:$0xff]
  %v338 = vld [vmem:[%s7 + $0x8] sm:$0xff]
  %v339 = vld [vmem:[%s7 + $0x10] sm:$0xff]
  %v340 = vld [vmem:[%s7 + $0x18] sm:$0xff]
  %v341 = vld [vmem:[%s7 + $0x20] sm:$0xff]
  %v342 = vld [vmem:[%s7 + $0x28] sm:$0xff]
  %v343 = vld [vmem:[%s7 + $0x30] sm:$0xff]
  %v344 = vld [vmem:[%s7 + $0x38] sm:$0xff]
  %v345 = vld [vmem:[%s7 + $0x40] sm:$0xff]
  %v346 = vld [vmem:[%s7 + $0x48] sm:$0xff]
  %v347 = vld [vmem:[%s7 + $0x50] sm:$0xff]
  %v348 = vld [vmem:[%s7 + $0x58] sm:$0xff]
  %v349 = vld [vmem:[%s7 + $0x60] sm:$0xff]
  %v350 = vld [vmem:[%s7 + $0x68] sm:$0xff]
  %v351 = vld [vmem:[%s7 + $0x70] sm:$0xff]
  %v352 = vld [vmem:[%s7 + $0x78] sm:$0xff]
  %v353 = vld [vmem:[%s8] sm:$0x1]
  %v355 = vlaneseq
  %v356 = vshrl.u32 %v355, 7
  %v357 = vsub.s32 0, %v356
  %v358 = vrot.slane %v353, %v357
  %360 = vmatprep.subr.mxu0 0.0
  %361 = vmatpush1.msra.mxu0 %v352
  %362 = vmatprep.subr.mxu0 0.0
  %363 = vmatpush1.msra.mxu0 %v351
  %364 = vmatprep.subr.mxu0 0.0
  %365 = vmatpush1.msra.mxu0 %v350
  %366 = vmatprep.subr.mxu0 0.0
  %367 = vmatpush1.msra.mxu0 %v349
  %368 = vmatprep.subr.mxu0 0.0
  %369 = vmatpush1.msra.mxu0 %v348
  %370 = vmatprep.subr.mxu0 0.0
  %371 = vmatpush1.msra.mxu0 %v347
  %372 = vmatprep.subr.mxu0 0.0
  %373 = vmatpush1.msra.mxu0 %v346
  %374 = vmatprep.subr.mxu0 0.0
  %375 = vmatpush1.msra.mxu0 %v345
  %376 = vmatprep.subr.mxu0 0.0
  %377 = vmatpush1.msra.mxu0 %v344
  %378 = vmatprep.subr.mxu0 0.0
  %379 = vmatpush1.msra.mxu0 %v343
  %380 = vmatprep.subr.mxu0 0.0
  %381 = vmatpush1.msra.mxu0 %v342
  %382 = vmatprep.subr.mxu0 0.0
  %383 = vmatpush1.msra.mxu0 %v341
  %384 = vmatprep.subr.mxu0 0.0
  %385 = vmatpush1.msra.mxu0 %v340
  %386 = vmatprep.subr.mxu0 0.0
  %387 = vmatpush1.msra.mxu0 %v339
  %388 = vmatprep.subr.mxu0 0.0
  %389 = vmatpush1.msra.mxu0 %v338
  %390 = vmatprep.subr.mxu0 0.0
  %391 = vmatpush1.msra.mxu0 %v337
  %392 = vmatprep.subr.mxu0 0.0
  %393 = vmatpush2.msra.mxu0 0.0
  %394 = vmatprep.subr.mxu0 0.0
  %395 = vmatpush2.msra.mxu0 0.0
  %396 = vmatprep.subr.mxu0 0.0
  %397 = vmatpush2.msra.mxu0 0.0
  %398 = vmatprep.subr.mxu0 0.0
  %399 = vmatpush2.msra.mxu0 0.0
  %400 = vmatprep.subr.mxu0 0.0
  %401 = vmatpush2.msra.mxu0 0.0
  %402 = vmatprep.subr.mxu0 0.0
  %403 = vmatpush2.msra.mxu0 0.0
  %404 = vmatprep.subr.mxu0 0.0
  %405 = vmatpush2.msra.mxu0 0.0
  %406 = vmatprep.subr.mxu0 0.0
  %407 = vmatpush2.msra.mxu0 0.0
  %408 = vmatprep.subr.mxu0 0.0
  %409 = vmatpush2.msra.mxu0 0.0
  %410 = vmatprep.subr.mxu0 0.0
  %411 = vmatpush2.msra.mxu0 0.0
  %412 = vmatprep.subr.mxu0 0.0
  %413 = vmatpush2.msra.mxu0 0.0
  %414 = vmatprep.subr.mxu0 0.0
  %415 = vmatpush2.msra.mxu0 0.0
  %416 = vmatprep.subr.mxu0 0.0
  %417 = vmatpush2.msra.mxu0 0.0
  %418 = vmatprep.subr.mxu0 0.0
  %419 = vmatpush2.msra.mxu0 0.0
  %420 = vmatprep.subr.mxu0 0.0
  %421 = vmatpush2.msra.mxu0 0.0
  %422 = vmatprep.subr.mxu0 0.0
  %423 = vmatpush2.msra.mxu0 0.0
  %424 = vmatprep.mubr.f32.mxu0 0.0
  %425 = vmatmul.mubr.f32.gmra.mxu0 %v336
  %v426 = vpop.f32.mrf.mxu0
  %v427 = vadd.f32 %v358, %v426
  %v428 = vpop.f32.mrf.mxu0
  %429 = vdwg.mxu0
  %430 = vst [vmem:[%s9] sm:$0xff] %v427
  // Predicated region
  $region38: #{forward.58} parent=0 // pred_check
    _
  $region39: #{forward.58} parent=0 // pred_check_branch
    %432 = sbr.rel (0) target = $region41
  $region40: #{forward.58} parent=0 // pred_region
    _
  $region41: #{forward.58} parent=0 // pred_fallthru
    _
  // Predicated region
  $region42: #{forward.58} parent=0 // pred_check
    _
  $region43: #{forward.58} parent=0 // pred_check_branch
    %434 = sbr.rel (0) target = $region45
  $region44: #{forward.58} parent=0 // pred_region
    _
  $region45: #{forward.58} parent=0 // pred_fallthru
    _

</llo_original>
